<compile_context>
chip_gen: v6e
topology: v6e:2x2x1
jax: 0.10.0
libtpu: 0.0.40
codegen_flags: <defaults>
</compile_context>

<pallas_src>
import jax
import jax.numpy as jnp
from jax import lax
from jax.experimental import pallas as pl
from jax.experimental.pallas import tpu as pltpu


def _se1d_kernel(xf_ref, p_ref, w1_ref, w2_ref, bcast_ref, o_ref):
    # xf_ref   : (TB, N)   lane-dense flat view of x, N = C*L
    # p_ref    : (N, C)    pooling matrix, P[c*L+l, c] = 1/L
    # w1_ref   : (C, H)    first Linear
    # w2_ref   : (H, C)    second Linear
    # bcast_ref: (C, N)    one-hot channel -> position broadcast matrix
    # o_ref    : (TB, N)
    xf = xf_ref[...].astype(jnp.float32)                                    # (TB, N)

    # Squeeze: mean over L as a grid-invariant MXU matmul (f32 accumulate).
    y = jnp.dot(xf, p_ref[...], preferred_element_type=jnp.float32,
                precision=lax.Precision.HIGHEST)                            # (TB, C)

    # Excitation: Linear -> ReLU -> Linear -> Sigmoid (narrow: B*C sigmoids).
    h = jnp.maximum(
        jnp.dot(y, w1_ref[...], preferred_element_type=jnp.float32,
                precision=lax.Precision.HIGHEST), 0.0)                      # (TB, H)
    g = jax.nn.sigmoid(
        jnp.dot(h, w2_ref[...], preferred_element_type=jnp.float32,
                precision=lax.Precision.HIGHEST))                           # (TB, C)

    # Broadcast the per-channel gate to per-position via one-hot MXU matmul
    # (keeps everything lane-dense, no in-kernel reshape/relayout).
    s = jnp.dot(g, bcast_ref[...], preferred_element_type=jnp.float32,
                precision=lax.Precision.HIGHEST)                            # (TB, N)

    # Scale in f32 (matches reference numerics), store in the input dtype.
    o_ref[...] = (xf * s).astype(o_ref.dtype)


_POOL_CACHE = {}


def _pool_and_bcast(C, L):
    """One-time (per (C, L)) constants: pooling matrix and broadcast matrix."""
    key = (C, L)
    if key not in _POOL_CACHE:
        chan = jnp.arange(C * L, dtype=jnp.int32) // L                      # (N,)
        onehot = (chan[:, None] == jnp.arange(C, dtype=jnp.int32)[None, :])
        pool = onehot.astype(jnp.float32) * (1.0 / L)                       # (N, C)
        bcast = jnp.transpose(onehot.astype(jnp.float32))                   # (C, N)
        _POOL_CACHE[key] = (pool, bcast)
    return _POOL_CACHE[key]


def _pick_batch_tile(batch, row_bytes, target_bytes):
    """Largest batch tile TB that divides B, keeps the flat (TB, N) block
    sublane-legal (TB % 8 == 0 or TB == B), fits the per-buffer VMEM target,
    and — when possible — leaves >=4 grid steps (>=2 per TensorCore on v7x),
    falling back to >=2 steps, then a single step."""
    legal = [d for d in range(1, batch + 1)
             if batch % d == 0 and (d % 8 == 0 or d == batch)]
    fits = [d for d in legal if d * row_bytes <= target_bytes] or [min(legal)]
    for min_steps in (4, 2):
        multi = [d for d in fits if batch // d >= min_steps]
        if multi:
            return max(multi)
    return max(fits)


def se_layer_1d(x, w1, w2, *, target_block_bytes=2 * 1024 * 1024):
    """x: (B, C, L); w1: (C, C//r); w2: (C//r, C).  Returns (B, C, L)."""
    B, C, L = x.shape
    hidden = w1.shape[1]
    assert w1.shape == (C, hidden) and w2.shape == (hidden, C)
    N = C * L
    # Lane-dense stores require N % 128 == 0 (true for C=64, L=16); other
    # shapes remain correct but fall back to masked stores.
    # TODO(synk): pad N (or fold batch into lanes) when C*L % 128 != 0.

    x_flat = x.reshape(B, N)                     # free row-major reshape
    pool, bcast = _pool_and_bcast(C, L)          # cached, not re-built per call
    w1f = w1.astype(jnp.float32)
    w2f = w2.astype(jnp.float32)

    itemsize = jnp.dtype(x.dtype).itemsize
    tb = _pick_batch_tile(B, N * itemsize, target_block_bytes)
    grid = (B // tb,)

    weight_bytes = (N * C + C * hidden + hidden * C + C * N) * 4
    # Double-buffered x/out blocks + grid-invariant weights + slack; clamp to
    # 64 MiB so the limit is valid on v7x while giving v5e/v6e headroom.
    vmem_needed = 2 * 2 * tb * N * itemsize + weight_bytes + (4 << 20)
    vmem_limit = int(min(max(32 << 20, vmem_needed), 64 << 20))

    flops = (2 * B * N * C                      # pooling matmul (squeeze)
             + 2 * B * C * hidden               # fc1
             + 2 * B * hidden * C               # fc2
             + 2 * B * C * N                    # broadcast matmul
             + B * N)                           # elementwise scale
    bytes_accessed = 2 * B * N * itemsize + weight_bytes   # x read + out write

    out_flat = pl.pallas_call(
        _se1d_kernel,
        out_shape=jax.ShapeDtypeStruct((B, N), x.dtype),
        grid_spec=pltpu.PrefetchScalarGridSpec(
            num_scalar_prefetch=0,
            grid=grid,
            in_specs=[
                pl.BlockSpec((tb, N), lambda i: (i, 0)),          # x (flat, lane-dense)
                pl.BlockSpec((N, C), lambda i: (0, 0)),           # pooling matrix
                pl.BlockSpec((C, hidden), lambda i: (0, 0)),      # w1
                pl.BlockSpec((hidden, C), lambda i: (0, 0)),      # w2
                pl.BlockSpec((C, N), lambda i: (0, 0)),           # broadcast matrix
            ],
            out_specs=pl.BlockSpec((tb, N), lambda i: (i, 0)),
        ),
        compiler_params=pltpu.CompilerParams(
            dimension_semantics=("parallel",),
            vmem_limit_bytes=vmem_limit,
        ),
        cost_estimate=pl.CostEstimate(
            flops=flops,
            transcendentals=B * C,              # narrow sigmoid
            bytes_accessed=bytes_accessed,
        ),
    )(x_flat, pool, w1f, w2f, bcast)

    return out_flat.reshape(B, C, L)


def se_layer_1d_ref(x, w1, w2):
    """Pure-JAX reference mirroring the PyTorch forward (f32 math)."""
    y = jnp.mean(x.astype(jnp.float32), axis=-1)                            # (B, C)
    h = jnp.maximum(jnp.dot(y, w1.astype(jnp.float32),
                            precision=lax.Precision.HIGHEST), 0.0)
    s = jax.nn.sigmoid(jnp.dot(h, w2.astype(jnp.float32),
                               precision=lax.Precision.HIGHEST))
    return (x.astype(jnp.float32) * s[:, :, None]).astype(x.dtype)


if __name__ == "__main__":
    # Small shapes consistent with the module: channel=64, reduction=16 -> hidden=4.
    B, C, L = 2, 64, 16
    reduction = 16
    hidden = C // reduction

    key = jax.random.PRNGKey(0)
    kx, k1, k2 = jax.random.split(key, 3)

    x = jax.random.normal(kx, (B, C, L), dtype=jnp.float32)
    # Deterministic synthetic weights (PyTorch Linear weights, transposed for y @ W).
    w1 = jax.random.normal(k1, (C, hidden), dtype=jnp.float32) * 0.1
    w2 = jax.random.normal(k2, (hidden, C), dtype=jnp.float32) * 0.1

    out = jax.block_until_ready(se_layer_1d(x, w1, w2))
    ref = se_layer_1d_ref(x, w1, w2)

    assert out.shape == (B, C, L)
    assert jnp.allclose(out, ref, atol=1e-5, rtol=1e-5)

    print("KERNEL_OK")
</pallas_src>

<mosaic_0001>
module attributes {stable_mosaic.version = 11 : i64} {
  func.func @_se1d_kernel(%arg0: i32, %arg1: memref<2x1024xf32, #tpu.memory_space<vmem>>, %arg2: memref<1024x64xf32, #tpu.memory_space<vmem>>, %arg3: memref<64x4xf32, #tpu.memory_space<vmem>>, %arg4: memref<4x64xf32, #tpu.memory_space<vmem>>, %arg5: memref<64x1024xf32, #tpu.memory_space<vmem>>, %arg6: memref<2x1024xf32, #tpu.memory_space<vmem>>) attributes {dimension_semantics = [#tpu.dimension_semantics<parallel>], iteration_bounds = array<i64: 1>, scalar_prefetch = 0 : i64, scratch_operands = 0 : i64, tpu.core_type = #tpu.core_type<tc>, window_params = [{transform_indices = @transform_0, window_bounds = array<i64: 2, 1024>}, {pipeline_mode = #tpu.pipeline_mode<synchronous>, transform_indices = @transform_1, window_bounds = array<i64: 1024, 64>}, {pipeline_mode = #tpu.pipeline_mode<synchronous>, transform_indices = @transform_2, window_bounds = array<i64: 64, 4>}, {pipeline_mode = #tpu.pipeline_mode<synchronous>, transform_indices = @transform_3, window_bounds = array<i64: 4, 64>}, {pipeline_mode = #tpu.pipeline_mode<synchronous>, transform_indices = @transform_4, window_bounds = array<i64: 64, 1024>}, {transform_indices = @transform_5, window_bounds = array<i64: 2, 1024>}]} {
    %c0 = arith.constant 0 : index
    %c0_0 = arith.constant 0 : index
    %0 = vector.load %arg1[%c0, %c0_0] : memref<2x1024xf32, #tpu.memory_space<vmem>>, vector<2x1024xf32>
    %c0_1 = arith.constant 0 : index
    %c0_2 = arith.constant 0 : index
    %1 = vector.load %arg2[%c0_1, %c0_2] : memref<1024x64xf32, #tpu.memory_space<vmem>>, vector<1024x64xf32>
    %cst = arith.constant dense<0.000000e+00> : vector<2x64xf32>
    %2 = tpu.matmul %0, %1, %cst {dimension_numbers = #tpu.dot_dimension_numbers<[1], [0], [0], [1], [0, 0, 1, 1], [], []>, precision = #tpu.contract_precision<fp32>} : vector<2x1024xf32>, vector<1024x64xf32>, vector<2x64xf32> -> vector<2x64xf32>
    %c0_3 = arith.constant 0 : index
    %c0_4 = arith.constant 0 : index
    %3 = vector.load %arg3[%c0_3, %c0_4] : memref<64x4xf32, #tpu.memory_space<vmem>>, vector<64x4xf32>
    %cst_5 = arith.constant dense<0.000000e+00> : vector<2x4xf32>
    %4 = tpu.matmul %2, %3, %cst_5 {dimension_numbers = #tpu.dot_dimension_numbers<[1], [0], [0], [1], [0, 0, 1, 1], [], []>, precision = #tpu.contract_precision<fp32>} : vector<2x64xf32>, vector<64x4xf32>, vector<2x4xf32> -> vector<2x4xf32>
    %cst_6 = arith.constant 0.000000e+00 : f32
    %5 = vector.broadcast %cst_6 : f32 to vector<2x4xf32>
    %6 = arith.maximumf %4, %5 : vector<2x4xf32>
    %c0_7 = arith.constant 0 : index
    %c0_8 = arith.constant 0 : index
    %7 = vector.load %arg4[%c0_7, %c0_8] : memref<4x64xf32, #tpu.memory_space<vmem>>, vector<4x64xf32>
    %cst_9 = arith.constant dense<0.000000e+00> : vector<2x64xf32>
    %8 = tpu.matmul %6, %7, %cst_9 {dimension_numbers = #tpu.dot_dimension_numbers<[1], [0], [0], [1], [0, 0, 1, 1], [], []>, precision = #tpu.contract_precision<fp32>} : vector<2x4xf32>, vector<4x64xf32>, vector<2x64xf32> -> vector<2x64xf32>
    %9 = arith.negf %8 : vector<2x64xf32>
    %10 = math.exp %9 : vector<2x64xf32>
    %cst_10 = arith.constant 1.000000e+00 : f32
    %11 = vector.broadcast %cst_10 : f32 to vector<2x64xf32>
    %12 = arith.addf %11, %10 : vector<2x64xf32>
    %13 = arith.divf %11, %12 : vector<2x64xf32>
    %c0_11 = arith.constant 0 : index
    %c0_12 = arith.constant 0 : index
    %14 = vector.load %arg5[%c0_11, %c0_12] : memref<64x1024xf32, #tpu.memory_space<vmem>>, vector<64x1024xf32>
    %cst_13 = arith.constant dense<0.000000e+00> : vector<2x1024xf32>
    %15 = tpu.matmul %13, %14, %cst_13 {dimension_numbers = #tpu.dot_dimension_numbers<[1], [0], [0], [1], [0, 0, 1, 1], [], []>, precision = #tpu.contract_precision<fp32>} : vector<2x64xf32>, vector<64x1024xf32>, vector<2x1024xf32> -> vector<2x1024xf32>
    %16 = arith.mulf %0, %15 : vector<2x1024xf32>
    %c0_14 = arith.constant 0 : index
    %c0_15 = arith.constant 0 : index
    %17 = vector.load %arg6[%c0_14, %c0_15] : memref<2x1024xf32, #tpu.memory_space<vmem>>, vector<2x1024xf32>
    tpu.vector_store %arg6[%c0_14, %c0_15], %16 {strides = array<i32>} : memref<2x1024xf32, #tpu.memory_space<vmem>>, vector<2x1024xf32>,
    return
  }
  func.func @transform_0(%arg0: i32) -> (i32, i32) {
    %c0_i32 = arith.constant 0 : i32
    %c0_i32_0 = arith.constant 0 : i32
    return %arg0, %c0_i32 : i32, i32
  }
  func.func @transform_1(%arg0: i32) -> (i32, i32) {
    %c0_i32 = arith.constant 0 : i32
    %c0_i32_0 = arith.constant 0 : i32
    %c0_i32_1 = arith.constant 0 : i32
    return %c0_i32, %c0_i32_0 : i32, i32
  }
  func.func @transform_2(%arg0: i32) -> (i32, i32) {
    %c0_i32 = arith.constant 0 : i32
    %c0_i32_0 = arith.constant 0 : i32
    %c0_i32_1 = arith.constant 0 : i32
    return %c0_i32, %c0_i32_0 : i32, i32
  }
  func.func @transform_3(%arg0: i32) -> (i32, i32) {
    %c0_i32 = arith.constant 0 : i32
    %c0_i32_0 = arith.constant 0 : i32
    %c0_i32_1 = arith.constant 0 : i32
    return %c0_i32, %c0_i32_0 : i32, i32
  }
  func.func @transform_4(%arg0: i32) -> (i32, i32) {
    %c0_i32 = arith.constant 0 : i32
    %c0_i32_0 = arith.constant 0 : i32
    %c0_i32_1 = arith.constant 0 : i32
    return %c0_i32, %c0_i32_0 : i32, i32
  }
  func.func @transform_5(%arg0: i32) -> (i32, i32) {
    %c0_i32 = arith.constant 0 : i32
    %c0_i32_0 = arith.constant 0 : i32
    return %arg0, %c0_i32 : i32, i32
  }
}

</mosaic_0001>

<llo_original>
// kernel: tpu_custom_call.1
$region0: #{tpu_custom_call.1}
  #allocation0 [shape = 'u32[]', space=smem, size = 0x4, offset = 0x4, fixed_abs, tag = 'smem constant byte address 0x4 - core index']
  #allocation1 [shape = 'u32[144,128]{1,0:T(1,128)}', space=vmem, size = 0x12000, scoped, tag = 'internal scratch']
  %s0 = inlined_call_operand.vmem [shape: f32[2,1024], index: 0, kind: input, shape index: {}]
  %s1 = inlined_call_operand.vmem [shape: f32[1024,64], index: 1, kind: input, shape index: {}]
  %s2 = inlined_call_operand.vmem [shape: f32[64,4], index: 2, kind: input, shape index: {}]
  %s3 = inlined_call_operand.vmem [shape: f32[4,64], index: 3, kind: input, shape index: {}]
  %s4 = inlined_call_operand.vmem [shape: f32[64,1024], index: 4, kind: input, shape index: {}]
  %s5 = inlined_call_operand.hbm [shape: f32[2,1024], index: 5, kind: output, shape index: {}]
  %s6 = sld [smem:[#allocation0]]
  $region30: #{tpu_custom_call.1} parent=0
    _
  %s8 = ssub.s32 1, %s6
  %s9 = scalar_select 0, %s8, %s6
  $region1: #{tpu_custom_call.1} parent=0
    #allocation2 [shape = 'u8[8192]{0}', space=vmem, size = 0x2000, scoped, tag = 'output window, operand 0, single buffered']
    #allocation3 [shape = 's32[1]{0}', space=sflag, size = 0x4, scoped, tag = 'scoped memory for tpu_custom_call.1']
    %10 = vsyncpa [#allocation3], 0
    // Predicated region
    $region2: #{tpu_custom_call.1} parent=1 // pred_check
      _
    $region3: #{tpu_custom_call.1} parent=1 // pred_check_branch
      %12 = sbr.rel (0) target = $region5
    $region4: #{tpu_custom_call.1} parent=1 // pred_region
      _
    $region5: #{tpu_custom_call.1} parent=1 // pred_fallthru
      _
    // Predicated region
    $region6: #{tpu_custom_call.1} parent=1 // pred_check
      _
    $region7: #{tpu_custom_call.1} parent=1 // pred_check_branch
      %14 = sbr.rel (0) target = $region9
    $region8: #{tpu_custom_call.1} parent=1 // pred_region
      _
    $region9: #{tpu_custom_call.1} parent=1 // pred_fallthru
      _
    // Predicated region
    $region10: #{tpu_custom_call.1} parent=1 // pred_check
      _
    $region11: #{tpu_custom_call.1} parent=1 // pred_check_branch
      %16 = sbr.rel (0) target = $region13
    $region12: #{tpu_custom_call.1} parent=1 // pred_region
      _
    $region13: #{tpu_custom_call.1} parent=1 // pred_fallthru
      _
    // Predicated region
    $region14: #{tpu_custom_call.1} parent=1 // pred_check
      _
    $region15: #{tpu_custom_call.1} parent=1 // pred_check_branch
      %18 = sbr.rel (0) target = $region17
    $region16: #{tpu_custom_call.1} parent=1 // pred_region
      _
    $region17: #{tpu_custom_call.1} parent=1 // pred_fallthru
      _
    // Predicated region
    $region18: #{tpu_custom_call.1} parent=1 // pred_check
      _
    $region19: #{tpu_custom_call.1} parent=1 // pred_check_branch
      %20 = sbr.rel (0) target = $region21
    $region20: #{tpu_custom_call.1} parent=1 // pred_region
      _
    $region21: #{tpu_custom_call.1} parent=1 // pred_fallthru
      _
    %v21 = vld [vmem:[%s0] sm:$0xff]
    %v22 = vld [vmem:[%s0 + $0x8] sm:$0xff]
    %v23 = vld [vmem:[%s1] sm:$0xff]
    %v24 = vld [vmem:[%s1 + $0x8] sm:$0xff]
    %v25 = vld [vmem:[%s1 + $0x10] sm:$0xff]
    %v26 = vld [vmem:[%s1 + $0x18] sm:$0xff]
    %v27 = vld [vmem:[%s1 + $0x20] sm:$0xff]
    %v28 = vld [vmem:[%s1 + $0x28] sm:$0xff]
    %v29 = vld [vmem:[%s1 + $0x30] sm:$0xff]
    %v30 = vld [vmem:[%s1 + $0x38] sm:$0xff]
    %v31 = vld [vmem:[%s1 + $0x40] sm:$0xff]
    %v32 = vld [vmem:[%s1 + $0x48] sm:$0xff]
    %v33 = vld [vmem:[%s1 + $0x50] sm:$0xff]
    %v34 = vld [vmem:[%s1 + $0x58] sm:$0xff]
    %v35 = vld [vmem:[%s1 + $0x60] sm:$0xff]
    %v36 = vld [vmem:[%s1 + $0x68] sm:$0xff]
    %v37 = vld [vmem:[%s1 + $0x70] sm:$0xff]
    %v38 = vld [vmem:[%s1 + $0x78] sm:$0xff]
    %v39 = vld [vmem:[%s1 + $0x80] sm:$0xff]
    %v40 = vld [vmem:[%s1 + $0x88] sm:$0xff]
    %v41 = vld [vmem:[%s1 + $0x90] sm:$0xff]
    %v42 = vld [vmem:[%s1 + $0x98] sm:$0xff]
    %v43 = vld [vmem:[%s1 + $0xa0] sm:$0xff]
    %v44 = vld [vmem:[%s1 + $0xa8] sm:$0xff]
    %v45 = vld [vmem:[%s1 + $0xb0] sm:$0xff]
    %v46 = vld [vmem:[%s1 + $0xb8] sm:$0xff]
    %v47 = vld [vmem:[%s1 + $0xc0] sm:$0xff]
    %v48 = vld [vmem:[%s1 + $0xc8] sm:$0xff]
    %v49 = vld [vmem:[%s1 + $0xd0] sm:$0xff]
    %v50 = vld [vmem:[%s1 + $0xd8] sm:$0xff]
    %v51 = vld [vmem:[%s1 + $0xe0] sm:$0xff]
    %v52 = vld [vmem:[%s1 + $0xe8] sm:$0xff]
    %v53 = vld [vmem:[%s1 + $0xf0] sm:$0xff]
    %v54 = vld [vmem:[%s1 + $0xf8] sm:$0xff]
    %v55 = vld [vmem:[%s1 + $0x100] sm:$0xff]
    %v56 = vld [vmem:[%s1 + $0x108] sm:$0xff]
    %v57 = vld [vmem:[%s1 + $0x110] sm:$0xff]
    %v58 = vld [vmem:[%s1 + $0x118] sm:$0xff]
    %v59 = vld [vmem:[%s1 + $0x120] sm:$0xff]
    %v60 = vld [vmem:[%s1 + $0x128] sm:$0xff]
    %v61 = vld [vmem:[%s1 + $0x130] sm:$0xff]
    %v62 = vld [vmem:[%s1 + $0x138] sm:$0xff]
    %v63 = vld [vmem:[%s1 + $0x140] sm:$0xff]
    %v64 = vld [vmem:[%s1 + $0x148] sm:$0xff]
    %v65 = vld [vmem:[%s1 + $0x150] sm:$0xff]
    %v66 = vld [vmem:[%s1 + $0x158] sm:$0xff]
    %v67 = vld [vmem:[%s1 + $0x160] sm:$0xff]
    %v68 = vld [vmem:[%s1 + $0x168] sm:$0xff]
    %v69 = vld [vmem:[%s1 + $0x170] sm:$0xff]
    %v70 = vld [vmem:[%s1 + $0x178] sm:$0xff]
    %v71 = vld [vmem:[%s1 + $0x180] sm:$0xff]
    %v72 = vld [vmem:[%s1 + $0x188] sm:$0xff]
    %v73 = vld [vmem:[%s1 + $0x190] sm:$0xff]
    %v74 = vld [vmem:[%s1 + $0x198] sm:$0xff]
    %v75 = vld [vmem:[%s1 + $0x1a0] sm:$0xff]
    %v76 = vld [vmem:[%s1 + $0x1a8] sm:$0xff]
    %v77 = vld [vmem:[%s1 + $0x1b0] sm:$0xff]
    %v78 = vld [vmem:[%s1 + $0x1b8] sm:$0xff]
    %v79 = vld [vmem:[%s1 + $0x1c0] sm:$0xff]
    %v80 = vld [vmem:[%s1 + $0x1c8] sm:$0xff]
    %v81 = vld [vmem:[%s1 + $0x1d0] sm:$0xff]
    %v82 = vld [vmem:[%s1 + $0x1d8] sm:$0xff]
    %v83 = vld [vmem:[%s1 + $0x1e0] sm:$0xff]
    %v84 = vld [vmem:[%s1 + $0x1e8] sm:$0xff]
    %v85 = vld [vmem:[%s1 + $0x1f0] sm:$0xff]
    %v86 = vld [vmem:[%s1 + $0x1f8] sm:$0xff]
    %v87 = vld [vmem:[%s1 + $0x200] sm:$0xff]
    %v88 = vld [vmem:[%s1 + $0x208] sm:$0xff]
    %v89 = vld [vmem:[%s1 + $0x210] sm:$0xff]
    %v90 = vld [vmem:[%s1 + $0x218] sm:$0xff]
    %v91 = vld [vmem:[%s1 + $0x220] sm:$0xff]
    %v92 = vld [vmem:[%s1 + $0x228] sm:$0xff]
    %v93 = vld [vmem:[%s1 + $0x230] sm:$0xff]
    %v94 = vld [vmem:[%s1 + $0x238] sm:$0xff]
    %v95 = vld [vmem:[%s1 + $0x240] sm:$0xff]
    %v96 = vld [vmem:[%s1 + $0x248] sm:$0xff]
    %v97 = vld [vmem:[%s1 + $0x250] sm:$0xff]
    %v98 = vld [vmem:[%s1 + $0x258] sm:$0xff]
    %v99 = vld [vmem:[%s1 + $0x260] sm:$0xff]
    %v100 = vld [vmem:[%s1 + $0x268] sm:$0xff]
    %v101 = vld [vmem:[%s1 + $0x270] sm:$0xff]
    %v102 = vld [vmem:[%s1 + $0x278] sm:$0xff]
    %v103 = vld [vmem:[%s1 + $0x280] sm:$0xff]
    %v104 = vld [vmem:[%s1 + $0x288] sm:$0xff]
    %v105 = vld [vmem:[%s1 + $0x290] sm:$0xff]
    %v106 = vld [vmem:[%s1 + $0x298] sm:$0xff]
    %v107 = vld [vmem:[%s1 + $0x2a0] sm:$0xff]
    %v108 = vld [vmem:[%s1 + $0x2a8] sm:$0xff]
    %v109 = vld [vmem:[%s1 + $0x2b0] sm:$0xff]
    %v110 = vld [vmem:[%s1 + $0x2b8] sm:$0xff]
    %v111 = vld [vmem:[%s1 + $0x2c0] sm:$0xff]
    %v112 = vld [vmem:[%s1 + $0x2c8] sm:$0xff]
    %v113 = vld [vmem:[%s1 + $0x2d0] sm:$0xff]
    %v114 = vld [vmem:[%s1 + $0x2d8] sm:$0xff]
    %v115 = vld [vmem:[%s1 + $0x2e0] sm:$0xff]
    %v116 = vld [vmem:[%s1 + $0x2e8] sm:$0xff]
    %v117 = vld [vmem:[%s1 + $0x2f0] sm:$0xff]
    %v118 = vld [vmem:[%s1 + $0x2f8] sm:$0xff]
    %v119 = vld [vmem:[%s1 + $0x300] sm:$0xff]
    %v120 = vld [vmem:[%s1 + $0x308] sm:$0xff]
    %v121 = vld [vmem:[%s1 + $0x310] sm:$0xff]
    %v122 = vld [vmem:[%s1 + $0x318] sm:$0xff]
    %v123 = vld [vmem:[%s1 + $0x320] sm:$0xff]
    %v124 = vld [vmem:[%s1 + $0x328] sm:$0xff]
    %v125 = vld [vmem:[%s1 + $0x330] sm:$0xff]
    %v126 = vld [vmem:[%s1 + $0x338] sm:$0xff]
    %v127 = vld [vmem:[%s1 + $0x340] sm:$0xff]
    %v128 = vld [vmem:[%s1 + $0x348] sm:$0xff]
    %v129 = vld [vmem:[%s1 + $0x350] sm:$0xff]
    %v130 = vld [vmem:[%s1 + $0x358] sm:$0xff]
    %v131 = vld [vmem:[%s1 + $0x360] sm:$0xff]
    %v132 = vld [vmem:[%s1 + $0x368] sm:$0xff]
    %v133 = vld [vmem:[%s1 + $0x370] sm:$0xff]
    %v134 = vld [vmem:[%s1 + $0x378] sm:$0xff]
    %v135 = vld [vmem:[%s1 + $0x380] sm:$0xff]
    %v136 = vld [vmem:[%s1 + $0x388] sm:$0xff]
    %v137 = vld [vmem:[%s1 + $0x390] sm:$0xff]
    %v138 = vld [vmem:[%s1 + $0x398] sm:$0xff]
    %v139 = vld [vmem:[%s1 + $0x3a0] sm:$0xff]
    %v140 = vld [vmem:[%s1 + $0x3a8] sm:$0xff]
    %v141 = vld [vmem:[%s1 + $0x3b0] sm:$0xff]
    %v142 = vld [vmem:[%s1 + $0x3b8] sm:$0xff]
    %v143 = vld [vmem:[%s1 + $0x3c0] sm:$0xff]
    %v144 = vld [vmem:[%s1 + $0x3c8] sm:$0xff]
    %v145 = vld [vmem:[%s1 + $0x3d0] sm:$0xff]
    %v146 = vld [vmem:[%s1 + $0x3d8] sm:$0xff]
    %v147 = vld [vmem:[%s1 + $0x3e0] sm:$0xff]
    %v148 = vld [vmem:[%s1 + $0x3e8] sm:$0xff]
    %v149 = vld [vmem:[%s1 + $0x3f0] sm:$0xff]
    %v150 = vld [vmem:[%s1 + $0x3f8] sm:$0xff]
    %v153 = vcombine.high %v21, %v21
    %v155 = vunpack.c.l.s4 1983009808
    %v156 = vunpack.c.0.s8 %v155
    %v157 = vlaneseq
    %v158 = vshrl.u32 %v157, 7
    %v159 = vsub.s32 %v156, %v158
    %v160 = vrot.slane %v21, %v159
    %v162 = vunpack.c.l.s4 1983009808
    %v163 = vunpack.c.0.s8 %v162
    %v164 = vlaneseq
    %v165 = vshrl.u32 %v164, 7
    %v166 = vsub.s32 %v163, %v165
    %v167 = vrot.slane %v153, %v166
    %v168 = vcombine.high %v160, %v160
    %v169 = vcombine.high %v167, %v167
    %v170 = vcombine.high %v22, %v22
    %v172 = vunpack.c.l.s4 1983009808
    %v173 = vunpack.c.0.s8 %v172
    %v174 = vlaneseq
    %v175 = vshrl.u32 %v174, 7
    %v176 = vsub.s32 %v173, %v175
    %v177 = vrot.slane %v22, %v176
    %v179 = vunpack.c.l.s4 1983009808
    %v180 = vunpack.c.0.s8 %v179
    %v181 = vlaneseq
    %v182 = vshrl.u32 %v181, 7
    %v183 = vsub.s32 %v180, %v182
    %v184 = vrot.slane %v170, %v183
    %v185 = vcombine.high %v177, %v177
    %v186 = vcombine.high %v184, %v184
    %195 = vmatprep.subr.mxu0 0.0
    %v196 = vand.u32 %v38, 4294901760
    %197 = vmatpush1.msra.mxu0 %v196
    %198 = vmatprep.subr.mxu0 0.0
    %v199 = vand.u32 %v37, 4294901760
    %200 = vmatpush1.msra.mxu0 %v199
    %201 = vmatprep.subr.mxu0 0.0
    %v202 = vand.u32 %v36, 4294901760
    %203 = vmatpush1.msra.mxu0 %v202
    %204 = vmatprep.subr.mxu0 0.0
    %v205 = vand.u32 %v35, 4294901760
    %206 = vmatpush1.msra.mxu0 %v205
    %207 = vmatprep.subr.mxu0 0.0
    %v208 = vand.u32 %v34, 4294901760
    %209 = vmatpush1.msra.mxu0 %v208
    %210 = vmatprep.subr.mxu0 0.0
    %v211 = vand.u32 %v33, 4294901760
    %212 = vmatpush1.msra.mxu0 %v211
    %213 = vmatprep.subr.mxu0 0.0
    %v214 = vand.u32 %v32, 4294901760
    %215 = vmatpush1.msra.mxu0 %v214
    %216 = vmatprep.subr.mxu0 0.0
    %v217 = vand.u32 %v31, 4294901760
    %218 = vmatpush1.msra.mxu0 %v217
    %219 = vmatprep.subr.mxu0 0.0
    %v220 = vand.u32 %v30, 4294901760
    %221 = vmatpush1.msra.mxu0 %v220
    %222 = vmatprep.subr.mxu0 0.0
    %v223 = vand.u32 %v29, 4294901760
    %224 = vmatpush1.msra.mxu0 %v223
    %225 = vmatprep.subr.mxu0 0.0
    %v226 = vand.u32 %v28, 4294901760
    %227 = vmatpush1.msra.mxu0 %v226
    %228 = vmatprep.subr.mxu0 0.0
    %v229 = vand.u32 %v27, 4294901760
    %230 = vmatpush1.msra.mxu0 %v229
    %231 = vmatprep.subr.mxu0 0.0
    %v232 = vand.u32 %v26, 4294901760
    %233 = vmatpush1.msra.mxu0 %v232
    %234 = vmatprep.subr.mxu0 0.0
    %v235 = vand.u32 %v25, 4294901760
    %236 = vmatpush1.msra.mxu0 %v235
    %237 = vmatprep.subr.mxu0 0.0
    %v238 = vand.u32 %v24, 4294901760
    %239 = vmatpush1.msra.mxu0 %v238
    %240 = vmatprep.subr.mxu0 0.0
    %v241 = vand.u32 %v23, 4294901760
    %242 = vmatpush1.msra.mxu0 %v241
    %243 = vmatprep.subr.mxu0 0.0
    %v244 = vand.u32 %v54, 4294901760
    %245 = vmatpush2.msra.mxu0 %v244
    %246 = vmatprep.subr.mxu0 0.0
    %v247 = vand.u32 %v53, 4294901760
    %248 = vmatpush2.msra.mxu0 %v247
    %249 = vmatprep.subr.mxu0 0.0
    %v250 = vand.u32 %v52, 4294901760
    %251 = vmatpush2.msra.mxu0 %v250
    %252 = vmatprep.subr.mxu0 0.0
    %v253 = vand.u32 %v51, 4294901760
    %254 = vmatpush2.msra.mxu0 %v253
    %255 = vmatprep.subr.mxu0 0.0
    %v256 = vand.u32 %v50, 4294901760
    %257 = vmatpush2.msra.mxu0 %v256
    %258 = vmatprep.subr.mxu0 0.0
    %v259 = vand.u32 %v49, 4294901760
    %260 = vmatpush2.msra.mxu0 %v259
    %261 = vmatprep.subr.mxu0 0.0
    %v262 = vand.u32 %v48, 4294901760
    %263 = vmatpush2.msra.mxu0 %v262
    %264 = vmatprep.subr.mxu0 0.0
    %v265 = vand.u32 %v47, 4294901760
    %266 = vmatpush2.msra.mxu0 %v265
    %267 = vmatprep.subr.mxu0 0.0
    %v268 = vand.u32 %v46, 4294901760
    %269 = vmatpush2.msra.mxu0 %v268
    %270 = vmatprep.subr.mxu0 0.0
    %v271 = vand.u32 %v45, 4294901760
    %272 = vmatpush2.msra.mxu0 %v271
    %273 = vmatprep.subr.mxu0 0.0
    %v274 = vand.u32 %v44, 4294901760
    %275 = vmatpush2.msra.mxu0 %v274
    %276 = vmatprep.subr.mxu0 0.0
    %v277 = vand.u32 %v43, 4294901760
    %278 = vmatpush2.msra.mxu0 %v277
    %279 = vmatprep.subr.mxu0 0.0
    %v280 = vand.u32 %v42, 4294901760
    %281 = vmatpush2.msra.mxu0 %v280
    %282 = vmatprep.subr.mxu0 0.0
    %v283 = vand.u32 %v41, 4294901760
    %284 = vmatpush2.msra.mxu0 %v283
    %285 = vmatprep.subr.mxu0 0.0
    %v286 = vand.u32 %v40, 4294901760
    %287 = vmatpush2.msra.mxu0 %v286
    %288 = vmatprep.subr.mxu0 0.0
    %v289 = vand.u32 %v39, 4294901760
    %290 = vmatpush2.msra.mxu0 %v289
    %v291 = vand.u32 %v168, 4294901760
    %v292 = vsub.f32 %v168, %v291
    %v293 = vand.u32 %v292, 4294901760
    %v294 = vsub.f32 %v292, %v293
    %v295 = vand.u32 %v294, 4294901760
    %296 = vmatprep.mubr.f32.mxu0 %v295
    %v297 = vand.u32 %v160, 4294901760
    %v298 = vsub.f32 %v160, %v297
    %v299 = vand.u32 %v298, 4294901760
    %v300 = vsub.f32 %v298, %v299
    %v301 = vand.u32 %v300, 4294901760
    %302 = vmatmul.mubr.f32.gmra.mxu0 %v301
    %v303 = vpop.f32.mrf.mxu0
    %v304 = vadd.f32 0.0, %v303
    %v305 = vpop.f32.mrf.mxu0
    %306 = vdwg.mxu0
    %307 = vmatprep.subr.mxu0 0.0
    %v308 = vand.u32 %v38, 4294901760
    %v309 = vsub.f32 %v38, %v308
    %v310 = vand.u32 %v309, 4294901760
    %v311 = vsub.f32 %v309, %v310
    %v312 = vand.u32 %v311, 4294901760
    %313 = vmatpush1.msra.mxu0 %v312
    %314 = vmatprep.subr.mxu0 0.0
    %v315 = vand.u32 %v37, 4294901760
    %v316 = vsub.f32 %v37, %v315
    %v317 = vand.u32 %v316, 4294901760
    %v318 = vsub.f32 %v316, %v317
    %v319 = vand.u32 %v318, 4294901760
    %320 = vmatpush1.msra.mxu0 %v319
    %321 = vmatprep.subr.mxu0 0.0
    %v322 = vand.u32 %v36, 4294901760
    %v323 = vsub.f32 %v36, %v322
    %v324 = vand.u32 %v323, 4294901760
    %v325 = vsub.f32 %v323, %v324
    %v326 = vand.u32 %v325, 4294901760
    %327 = vmatpush1.msra.mxu0 %v326
    %328 = vmatprep.subr.mxu0 0.0
    %v329 = vand.u32 %v35, 4294901760
    %v330 = vsub.f32 %v35, %v329
    %v331 = vand.u32 %v330, 4294901760
    %v332 = vsub.f32 %v330, %v331
    %v333 = vand.u32 %v332, 4294901760
    %334 = vmatpush1.msra.mxu0 %v333
    %335 = vmatprep.subr.mxu0 0.0
    %v336 = vand.u32 %v34, 4294901760
    %v337 = vsub.f32 %v34, %v336
    %v338 = vand.u32 %v337, 4294901760
    %v339 = vsub.f32 %v337, %v338
    %v340 = vand.u32 %v339, 4294901760
    %341 = vmatpush1.msra.mxu0 %v340
    %342 = vmatprep.subr.mxu0 0.0
    %v343 = vand.u32 %v33, 4294901760
    %v344 = vsub.f32 %v33, %v343
    %v345 = vand.u32 %v344, 4294901760
    %v346 = vsub.f32 %v344, %v345
    %v347 = vand.u32 %v346, 4294901760
    %348 = vmatpush1.msra.mxu0 %v347
    %349 = vmatprep.subr.mxu0 0.0
    %v350 = vand.u32 %v32, 4294901760
    %v351 = vsub.f32 %v32, %v350
    %v352 = vand.u32 %v351, 4294901760
    %v353 = vsub.f32 %v351, %v352
    %v354 = vand.u32 %v353, 4294901760
    %355 = vmatpush1.msra.mxu0 %v354
    %356 = vmatprep.subr.mxu0 0.0
    %v357 = vand.u32 %v31, 4294901760
    %v358 = vsub.f32 %v31, %v357
    %v359 = vand.u32 %v358, 4294901760
    %v360 = vsub.f32 %v358, %v359
    %v361 = vand.u32 %v360, 4294901760
    %362 = vmatpush1.msra.mxu0 %v361
    %363 = vmatprep.subr.mxu0 0.0
    %v364 = vand.u32 %v30, 4294901760
    %v365 = vsub.f32 %v30, %v364
    %v366 = vand.u32 %v365, 4294901760
    %v367 = vsub.f32 %v365, %v366
    %v368 = vand.u32 %v367, 4294901760
    %369 = vmatpush1.msra.mxu0 %v368
    %370 = vmatprep.subr.mxu0 0.0
    %v371 = vand.u32 %v29, 4294901760
    %v372 = vsub.f32 %v29, %v371
    %v373 = vand.u32 %v372, 4294901760
    %v374 = vsub.f32 %v372, %v373
    %v375 = vand.u32 %v374, 4294901760
    %376 = vmatpush1.msra.mxu0 %v375
    %377 = vmatprep.subr.mxu0 0.0
    %v378 = vand.u32 %v28, 4294901760
    %v379 = vsub.f32 %v28, %v378
    %v380 = vand.u32 %v379, 4294901760
    %v381 = vsub.f32 %v379, %v380
    %v382 = vand.u32 %v381, 4294901760
    %383 = vmatpush1.msra.mxu0 %v382
    %384 = vmatprep.subr.mxu0 0.0
    %v385 = vand.u32 %v27, 4294901760
    %v386 = vsub.f32 %v27, %v385
    %v387 = vand.u32 %v386, 4294901760
    %v388 = vsub.f32 %v386, %v387
    %v389 = vand.u32 %v388, 4294901760
    %390 = vmatpush1.msra.mxu0 %v389
    %391 = vmatprep.subr.mxu0 0.0
    %v392 = vand.u32 %v26, 4294901760
    %v393 = vsub.f32 %v26, %v392
    %v394 = vand.u32 %v393, 4294901760
    %v395 = vsub.f32 %v393, %v394
    %v396 = vand.u32 %v395, 4294901760
    %397 = vmatpush1.msra.mxu0 %v396
    %398 = vmatprep.subr.mxu0 0.0
    %v399 = vand.u32 %v25, 4294901760
    %v400 = vsub.f32 %v25, %v399
    %v401 = vand.u32 %v400, 4294901760
    %v402 = vsub.f32 %v400, %v401
    %v403 = vand.u32 %v402, 4294901760
    %404 = vmatpush1.msra.mxu0 %v403
    %405 = vmatprep.subr.mxu0 0.0
    %v406 = vand.u32 %v24, 4294901760
    %v407 = vsub.f32 %v24, %v406
    %v408 = vand.u32 %v407, 4294901760
    %v409 = vsub.f32 %v407, %v408
    %v410 = vand.u32 %v409, 4294901760
    %411 = vmatpush1.msra.mxu0 %v410
    %412 = vmatprep.subr.mxu0 0.0
    %v413 = vand.u32 %v23, 4294901760
    %v414 = vsub.f32 %v23, %v413
    %v415 = vand.u32 %v414, 4294901760
    %v416 = vsub.f32 %v414, %v415
    %v417 = vand.u32 %v416, 4294901760
    %418 = vmatpush1.msra.mxu0 %v417
    %419 = vmatprep.subr.mxu0 0.0
    %v420 = vand.u32 %v54, 4294901760
    %v421 = vsub.f32 %v54, %v420
    %v422 = vand.u32 %v421, 4294901760
    %v423 = vsub.f32 %v421, %v422
    %v424 = vand.u32 %v423, 4294901760
    %425 = vmatpush2.msra.mxu0 %v424
    %426 = vmatprep.subr.mxu0 0.0
    %v427 = vand.u32 %v53, 4294901760
    %v428 = vsub.f32 %v53, %v427
    %v429 = vand.u32 %v428, 4294901760
    %v430 = vsub.f32 %v428, %v429
    %v431 = vand.u32 %v430, 4294901760
    %432 = vmatpush2.msra.mxu0 %v431
    %433 = vmatprep.subr.mxu0 0.0
    %v434 = vand.u32 %v52, 4294901760
    %v435 = vsub.f32 %v52, %v434
    %v436 = vand.u32 %v435, 4294901760
    %v437 = vsub.f32 %v435, %v436
    %v438 = vand.u32 %v437, 4294901760
    %439 = vmatpush2.msra.mxu0 %v438
    %440 = vmatprep.subr.mxu0 0.0
    %v441 = vand.u32 %v51, 4294901760
    %v442 = vsub.f32 %v51, %v441
    %v443 = vand.u32 %v442, 4294901760
    %v444 = vsub.f32 %v442, %v443
    %v445 = vand.u32 %v444, 4294901760
    %446 = vmatpush2.msra.mxu0 %v445
    %447 = vmatprep.subr.mxu0 0.0
    %v448 = vand.u32 %v50, 4294901760
    %v449 = vsub.f32 %v50, %v448
    %v450 = vand.u32 %v449, 4294901760
    %v451 = vsub.f32 %v449, %v450
    %v452 = vand.u32 %v451, 4294901760
    %453 = vmatpush2.msra.mxu0 %v452
    %454 = vmatprep.subr.mxu0 0.0
    %v455 = vand.u32 %v49, 4294901760
    %v456 = vsub.f32 %v49, %v455
    %v457 = vand.u32 %v456, 4294901760
    %v458 = vsub.f32 %v456, %v457
    %v459 = vand.u32 %v458, 4294901760
    %460 = vmatpush2.msra.mxu0 %v459
    %461 = vmatprep.subr.mxu0 0.0
    %v462 = vand.u32 %v48, 4294901760
    %v463 = vsub.f32 %v48, %v462
    %v464 = vand.u32 %v463, 4294901760
    %v465 = vsub.f32 %v463, %v464
    %v466 = vand.u32 %v465, 4294901760
    %467 = vmatpush2.msra.mxu0 %v466
    %468 = vmatprep.subr.mxu0 0.0
    %v469 = vand.u32 %v47, 4294901760
    %v470 = vsub.f32 %v47, %v469
    %v471 = vand.u32 %v470, 4294901760
    %v472 = vsub.f32 %v470, %v471
    %v473 = vand.u32 %v472, 4294901760
    %474 = vmatpush2.msra.mxu0 %v473
    %475 = vmatprep.subr.mxu0 0.0
    %v476 = vand.u32 %v46, 4294901760
    %v477 = vsub.f32 %v46, %v476
    %v478 = vand.u32 %v477, 4294901760
    %v479 = vsub.f32 %v477, %v478
    %v480 = vand.u32 %v479, 4294901760
    %481 = vmatpush2.msra.mxu0 %v480
    %482 = vmatprep.subr.mxu0 0.0
    %v483 = vand.u32 %v45, 4294901760
    %v484 = vsub.f32 %v45, %v483
    %v485 = vand.u32 %v484, 4294901760
    %v486 = vsub.f32 %v484, %v485
    %v487 = vand.u32 %v486, 4294901760
    %488 = vmatpush2.msra.mxu0 %v487
    %489 = vmatprep.subr.mxu0 0.0
    %v490 = vand.u32 %v44, 4294901760
    %v491 = vsub.f32 %v44, %v490
    %v492 = vand.u32 %v491, 4294901760
    %v493 = vsub.f32 %v491, %v492
    %v494 = vand.u32 %v493, 4294901760
    %495 = vmatpush2.msra.mxu0 %v494
    %496 = vmatprep.subr.mxu0 0.0
    %v497 = vand.u32 %v43, 4294901760
    %v498 = vsub.f32 %v43, %v497
    %v499 = vand.u32 %v498, 4294901760
    %v500 = vsub.f32 %v498, %v499
    %v501 = vand.u32 %v500, 4294901760
    %502 = vmatpush2.msra.mxu0 %v501
    %503 = vmatprep.subr.mxu0 0.0
    %v504 = vand.u32 %v42, 4294901760
    %v505 = vsub.f32 %v42, %v504
    %v506 = vand.u32 %v505, 4294901760
    %v507 = vsub.f32 %v505, %v506
    %v508 = vand.u32 %v507, 4294901760
    %509 = vmatpush2.msra.mxu0 %v508
    %510 = vmatprep.subr.mxu0 0.0
    %v511 = vand.u32 %v41, 4294901760
    %v512 = vsub.f32 %v41, %v511
    %v513 = vand.u32 %v512, 4294901760
    %v514 = vsub.f32 %v512, %v513
    %v515 = vand.u32 %v514, 4294901760
    %516 = vmatpush2.msra.mxu0 %v515
    %517 = vmatprep.subr.mxu0 0.0
    %v518 = vand.u32 %v40, 4294901760
    %v519 = vsub.f32 %v40, %v518
    %v520 = vand.u32 %v519, 4294901760
    %v521 = vsub.f32 %v519, %v520
    %v522 = vand.u32 %v521, 4294901760
    %523 = vmatpush2.msra.mxu0 %v522
    %524 = vmatprep.subr.mxu0 0.0
    %v525 = vand.u32 %v39, 4294901760
    %v526 = vsub.f32 %v39, %v525
    %v527 = vand.u32 %v526, 4294901760
    %v528 = vsub.f32 %v526, %v527
    %v529 = vand.u32 %v528, 4294901760
    %530 = vmatpush2.msra.mxu0 %v529
    %v531 = vand.u32 %v168, 4294901760
    %532 = vmatprep.mubr.f32.mxu0 %v531
    %v533 = vand.u32 %v160, 4294901760
    %534 = vmatmul.mubr.f32.gmra.mxu0 %v533
    %v535 = vpop.f32.mrf.mxu0
    %v536 = vadd.f32 %v304, %v535
    %v537 = vpop.f32.mrf.mxu0
    %538 = vdwg.mxu0
    %539 = vmatprep.subr.mxu0 0.0
    %v540 = vand.u32 %v38, 4294901760
    %v541 = vsub.f32 %v38, %v540
    %542 = vmatpush1.msra.mxu0 %v541
    %543 = vmatprep.subr.mxu0 0.0
    %v544 = vand.u32 %v37, 4294901760
    %v545 = vsub.f32 %v37, %v544
    %546 = vmatpush1.msra.mxu0 %v545
    %547 = vmatprep.subr.mxu0 0.0
    %v548 = vand.u32 %v36, 4294901760
    %v549 = vsub.f32 %v36, %v548
    %550 = vmatpush1.msra.mxu0 %v549
    %551 = vmatprep.subr.mxu0 0.0
    %v552 = vand.u32 %v35, 4294901760
    %v553 = vsub.f32 %v35, %v552
    %554 = vmatpush1.msra.mxu0 %v553
    %555 = vmatprep.subr.mxu0 0.0
    %v556 = vand.u32 %v34, 4294901760
    %v557 = vsub.f32 %v34, %v556
    %558 = vmatpush1.msra.mxu0 %v557
    %559 = vmatprep.subr.mxu0 0.0
    %v560 = vand.u32 %v33, 4294901760
    %v561 = vsub.f32 %v33, %v560
    %562 = vmatpush1.msra.mxu0 %v561
    %563 = vmatprep.subr.mxu0 0.0
    %v564 = vand.u32 %v32, 4294901760
    %v565 = vsub.f32 %v32, %v564
    %566 = vmatpush1.msra.mxu0 %v565
    %567 = vmatprep.subr.mxu0 0.0
    %v568 = vand.u32 %v31, 4294901760
    %v569 = vsub.f32 %v31, %v568
    %570 = vmatpush1.msra.mxu0 %v569
    %571 = vmatprep.subr.mxu0 0.0
    %v572 = vand.u32 %v30, 4294901760
    %v573 = vsub.f32 %v30, %v572
    %574 = vmatpush1.msra.mxu0 %v573
    %575 = vmatprep.subr.mxu0 0.0
    %v576 = vand.u32 %v29, 4294901760
    %v577 = vsub.f32 %v29, %v576
    %578 = vmatpush1.msra.mxu0 %v577
    %579 = vmatprep.subr.mxu0 0.0
    %v580 = vand.u32 %v28, 4294901760
    %v581 = vsub.f32 %v28, %v580
    %582 = vmatpush1.msra.mxu0 %v581
    %583 = vmatprep.subr.mxu0 0.0
    %v584 = vand.u32 %v27, 4294901760
    %v585 = vsub.f32 %v27, %v584
    %586 = vmatpush1.msra.mxu0 %v585
    %587 = vmatprep.subr.mxu0 0.0
    %v588 = vand.u32 %v26, 4294901760
    %v589 = vsub.f32 %v26, %v588
    %590 = vmatpush1.msra.mxu0 %v589
    %591 = vmatprep.subr.mxu0 0.0
    %v592 = vand.u32 %v25, 4294901760
    %v593 = vsub.f32 %v25, %v592
    %594 = vmatpush1.msra.mxu0 %v593
    %595 = vmatprep.subr.mxu0 0.0
    %v596 = vand.u32 %v24, 4294901760
    %v597 = vsub.f32 %v24, %v596
    %598 = vmatpush1.msra.mxu0 %v597
    %599 = vmatprep.subr.mxu0 0.0
    %v600 = vand.u32 %v23, 4294901760
    %v601 = vsub.f32 %v23, %v600
    %602 = vmatpush1.msra.mxu0 %v601
    %603 = vmatprep.subr.mxu0 0.0
    %v604 = vand.u32 %v54, 4294901760
    %v605 = vsub.f32 %v54, %v604
    %606 = vmatpush2.msra.mxu0 %v605
    %607 = vmatprep.subr.mxu0 0.0
    %v608 = vand.u32 %v53, 4294901760
    %v609 = vsub.f32 %v53, %v608
    %610 = vmatpush2.msra.mxu0 %v609
    %611 = vmatprep.subr.mxu0 0.0
    %v612 = vand.u32 %v52, 4294901760
    %v613 = vsub.f32 %v52, %v612
    %614 = vmatpush2.msra.mxu0 %v613
    %615 = vmatprep.subr.mxu0 0.0
    %v616 = vand.u32 %v51, 4294901760
    %v617 = vsub.f32 %v51, %v616
    %618 = vmatpush2.msra.mxu0 %v617
    %619 = vmatprep.subr.mxu0 0.0
    %v620 = vand.u32 %v50, 4294901760
    %v621 = vsub.f32 %v50, %v620
    %622 = vmatpush2.msra.mxu0 %v621
    %623 = vmatprep.subr.mxu0 0.0
    %v624 = vand.u32 %v49, 4294901760
    %v625 = vsub.f32 %v49, %v624
    %626 = vmatpush2.msra.mxu0 %v625
    %627 = vmatprep.subr.mxu0 0.0
    %v628 = vand.u32 %v48, 4294901760
    %v629 = vsub.f32 %v48, %v628
    %630 = vmatpush2.msra.mxu0 %v629
    %631 = vmatprep.subr.mxu0 0.0
    %v632 = vand.u32 %v47, 4294901760
    %v633 = vsub.f32 %v47, %v632
    %634 = vmatpush2.msra.mxu0 %v633
    %635 = vmatprep.subr.mxu0 0.0
    %v636 = vand.u32 %v46, 4294901760
    %v637 = vsub.f32 %v46, %v636
    %638 = vmatpush2.msra.mxu0 %v637
    %639 = vmatprep.subr.mxu0 0.0
    %v640 = vand.u32 %v45, 4294901760
    %v641 = vsub.f32 %v45, %v640
    %642 = vmatpush2.msra.mxu0 %v641
    %643 = vmatprep.subr.mxu0 0.0
    %v644 = vand.u32 %v44, 4294901760
    %v645 = vsub.f32 %v44, %v644
    %646 = vmatpush2.msra.mxu0 %v645
    %647 = vmatprep.subr.mxu0 0.0
    %v648 = vand.u32 %v43, 4294901760
    %v649 = vsub.f32 %v43, %v648
    %650 = vmatpush2.msra.mxu0 %v649
    %651 = vmatprep.subr.mxu0 0.0
    %v652 = vand.u32 %v42, 4294901760
    %v653 = vsub.f32 %v42, %v652
    %654 = vmatpush2.msra.mxu0 %v653
    %655 = vmatprep.subr.mxu0 0.0
    %v656 = vand.u32 %v41, 4294901760
    %v657 = vsub.f32 %v41, %v656
    %658 = vmatpush2.msra.mxu0 %v657
    %659 = vmatprep.subr.mxu0 0.0
    %v660 = vand.u32 %v40, 4294901760
    %v661 = vsub.f32 %v40, %v660
    %662 = vmatpush2.msra.mxu0 %v661
    %663 = vmatprep.subr.mxu0 0.0
    %v664 = vand.u32 %v39, 4294901760
    %v665 = vsub.f32 %v39, %v664
    %666 = vmatpush2.msra.mxu0 %v665
    %v667 = vand.u32 %v168, 4294901760
    %v668 = vsub.f32 %v168, %v667
    %669 = vmatprep.mubr.f32.mxu0 %v668
    %v670 = vand.u32 %v160, 4294901760
    %v671 = vsub.f32 %v160, %v670
    %672 = vmatmul.mubr.f32.gmra.mxu0 %v671
    %v673 = vpop.f32.mrf.mxu0
    %v674 = vadd.f32 %v536, %v673
    %v675 = vpop.f32.mrf.mxu0
    %676 = vdwg.mxu0
    %677 = vmatprep.subr.mxu0 0.0
    %v678 = vand.u32 %v38, 4294901760
    %679 = vmatpush1.msra.mxu0 %v678
    %680 = vmatprep.subr.mxu0 0.0
    %v681 = vand.u32 %v37, 4294901760
    %682 = vmatpush1.msra.mxu0 %v681
    %683 = vmatprep.subr.mxu0 0.0
    %v684 = vand.u32 %v36, 4294901760
    %685 = vmatpush1.msra.mxu0 %v684
    %686 = vmatprep.subr.mxu0 0.0
    %v687 = vand.u32 %v35, 4294901760
    %688 = vmatpush1.msra.mxu0 %v687
    %689 = vmatprep.subr.mxu0 0.0
    %v690 = vand.u32 %v34, 4294901760
    %691 = vmatpush1.msra.mxu0 %v690
    %692 = vmatprep.subr.mxu0 0.0
    %v693 = vand.u32 %v33, 4294901760
    %694 = vmatpush1.msra.mxu0 %v693
    %695 = vmatprep.subr.mxu0 0.0
    %v696 = vand.u32 %v32, 4294901760
    %697 = vmatpush1.msra.mxu0 %v696
    %698 = vmatprep.subr.mxu0 0.0
    %v699 = vand.u32 %v31, 4294901760
    %700 = vmatpush1.msra.mxu0 %v699
    %701 = vmatprep.subr.mxu0 0.0
    %v702 = vand.u32 %v30, 4294901760
    %703 = vmatpush1.msra.mxu0 %v702
    %704 = vmatprep.subr.mxu0 0.0
    %v705 = vand.u32 %v29, 4294901760
    %706 = vmatpush1.msra.mxu0 %v705
    %707 = vmatprep.subr.mxu0 0.0
    %v708 = vand.u32 %v28, 4294901760
    %709 = vmatpush1.msra.mxu0 %v708
    %710 = vmatprep.subr.mxu0 0.0
    %v711 = vand.u32 %v27, 4294901760
    %712 = vmatpush1.msra.mxu0 %v711
    %713 = vmatprep.subr.mxu0 0.0
    %v714 = vand.u32 %v26, 4294901760
    %715 = vmatpush1.msra.mxu0 %v714
    %716 = vmatprep.subr.mxu0 0.0
    %v717 = vand.u32 %v25, 4294901760
    %718 = vmatpush1.msra.mxu0 %v717
    %719 = vmatprep.subr.mxu0 0.0
    %v720 = vand.u32 %v24, 4294901760
    %721 = vmatpush1.msra.mxu0 %v720
    %722 = vmatprep.subr.mxu0 0.0
    %v723 = vand.u32 %v23, 4294901760
    %724 = vmatpush1.msra.mxu0 %v723
    %725 = vmatprep.subr.mxu0 0.0
    %v726 = vand.u32 %v54, 4294901760
    %727 = vmatpush2.msra.mxu0 %v726
    %728 = vmatprep.subr.mxu0 0.0
    %v729 = vand.u32 %v53, 4294901760
    %730 = vmatpush2.msra.mxu0 %v729
    %731 = vmatprep.subr.mxu0 0.0
    %v732 = vand.u32 %v52, 4294901760
    %733 = vmatpush2.msra.mxu0 %v732
    %734 = vmatprep.subr.mxu0 0.0
    %v735 = vand.u32 %v51, 4294901760
    %736 = vmatpush2.msra.mxu0 %v735
    %737 = vmatprep.subr.mxu0 0.0
    %v738 = vand.u32 %v50, 4294901760
    %739 = vmatpush2.msra.mxu0 %v738
    %740 = vmatprep.subr.mxu0 0.0
    %v741 = vand.u32 %v49, 4294901760
    %742 = vmatpush2.msra.mxu0 %v741
    %743 = vmatprep.subr.mxu0 0.0
    %v744 = vand.u32 %v48, 4294901760
    %745 = vmatpush2.msra.mxu0 %v744
    %746 = vmatprep.subr.mxu0 0.0
    %v747 = vand.u32 %v47, 4294901760
    %748 = vmatpush2.msra.mxu0 %v747
    %749 = vmatprep.subr.mxu0 0.0
    %v750 = vand.u32 %v46, 4294901760
    %751 = vmatpush2.msra.mxu0 %v750
    %752 = vmatprep.subr.mxu0 0.0
    %v753 = vand.u32 %v45, 4294901760
    %754 = vmatpush2.msra.mxu0 %v753
    %755 = vmatprep.subr.mxu0 0.0
    %v756 = vand.u32 %v44, 4294901760
    %757 = vmatpush2.msra.mxu0 %v756
    %758 = vmatprep.subr.mxu0 0.0
    %v759 = vand.u32 %v43, 4294901760
    %760 = vmatpush2.msra.mxu0 %v759
    %761 = vmatprep.subr.mxu0 0.0
    %v762 = vand.u32 %v42, 4294901760
    %763 = vmatpush2.msra.mxu0 %v762
    %764 = vmatprep.subr.mxu0 0.0
    %v765 = vand.u32 %v41, 4294901760
    %766 = vmatpush2.msra.mxu0 %v765
    %767 = vmatprep.subr.mxu0 0.0
    %v768 = vand.u32 %v40, 4294901760
    %769 = vmatpush2.msra.mxu0 %v768
    %770 = vmatprep.subr.mxu0 0.0
    %v771 = vand.u32 %v39, 4294901760
    %772 = vmatpush2.msra.mxu0 %v771
    %v773 = vand.u32 %v168, 4294901760
    %v774 = vsub.f32 %v168, %v773
    %v775 = vand.u32 %v774, 4294901760
    %776 = vmatprep.mubr.f32.mxu0 %v775
    %v777 = vand.u32 %v160, 4294901760
    %v778 = vsub.f32 %v160, %v777
    %v779 = vand.u32 %v778, 4294901760
    %780 = vmatmul.mubr.f32.gmra.mxu0 %v779
    %v781 = vpop.f32.mrf.mxu0
    %v782 = vadd.f32 %v674, %v781
    %v783 = vpop.f32.mrf.mxu0
    %784 = vdwg.mxu0
    %785 = vmatprep.subr.mxu0 0.0
    %v786 = vand.u32 %v38, 4294901760
    %v787 = vsub.f32 %v38, %v786
    %v788 = vand.u32 %v787, 4294901760
    %789 = vmatpush1.msra.mxu0 %v788
    %790 = vmatprep.subr.mxu0 0.0
    %v791 = vand.u32 %v37, 4294901760
    %v792 = vsub.f32 %v37, %v791
    %v793 = vand.u32 %v792, 4294901760
    %794 = vmatpush1.msra.mxu0 %v793
    %795 = vmatprep.subr.mxu0 0.0
    %v796 = vand.u32 %v36, 4294901760
    %v797 = vsub.f32 %v36, %v796
    %v798 = vand.u32 %v797, 4294901760
    %799 = vmatpush1.msra.mxu0 %v798
    %800 = vmatprep.subr.mxu0 0.0
    %v801 = vand.u32 %v35, 4294901760
    %v802 = vsub.f32 %v35, %v801
    %v803 = vand.u32 %v802, 4294901760
    %804 = vmatpush1.msra.mxu0 %v803
    %805 = vmatprep.subr.mxu0 0.0
    %v806 = vand.u32 %v34, 4294901760
    %v807 = vsub.f32 %v34, %v806
    %v808 = vand.u32 %v807, 4294901760
    %809 = vmatpush1.msra.mxu0 %v808
    %810 = vmatprep.subr.mxu0 0.0
    %v811 = vand.u32 %v33, 4294901760
    %v812 = vsub.f32 %v33, %v811
    %v813 = vand.u32 %v812, 4294901760
    %814 = vmatpush1.msra.mxu0 %v813
    %815 = vmatprep.subr.mxu0 0.0
    %v816 = vand.u32 %v32, 4294901760
    %v817 = vsub.f32 %v32, %v816
    %v818 = vand.u32 %v817, 4294901760
    %819 = vmatpush1.msra.mxu0 %v818
    %820 = vmatprep.subr.mxu0 0.0
    %v821 = vand.u32 %v31, 4294901760
    %v822 = vsub.f32 %v31, %v821
    %v823 = vand.u32 %v822, 4294901760
    %824 = vmatpush1.msra.mxu0 %v823
    %825 = vmatprep.subr.mxu0 0.0
    %v826 = vand.u32 %v30, 4294901760
    %v827 = vsub.f32 %v30, %v826
    %v828 = vand.u32 %v827, 4294901760
    %829 = vmatpush1.msra.mxu0 %v828
    %830 = vmatprep.subr.mxu0 0.0
    %v831 = vand.u32 %v29, 4294901760
    %v832 = vsub.f32 %v29, %v831
    %v833 = vand.u32 %v832, 4294901760
    %834 = vmatpush1.msra.mxu0 %v833
    %835 = vmatprep.subr.mxu0 0.0
    %v836 = vand.u32 %v28, 4294901760
    %v837 = vsub.f32 %v28, %v836
    %v838 = vand.u32 %v837, 4294901760
    %839 = vmatpush1.msra.mxu0 %v838
    %840 = vmatprep.subr.mxu0 0.0
    %v841 = vand.u32 %v27, 4294901760
    %v842 = vsub.f32 %v27, %v841
    %v843 = vand.u32 %v842, 4294901760
    %844 = vmatpush1.msra.mxu0 %v843
    %845 = vmatprep.subr.mxu0 0.0
    %v846 = vand.u32 %v26, 4294901760
    %v847 = vsub.f32 %v26, %v846
    %v848 = vand.u32 %v847, 4294901760
    %849 = vmatpush1.msra.mxu0 %v848
    %850 = vmatprep.subr.mxu0 0.0
    %v851 = vand.u32 %v25, 4294901760
    %v852 = vsub.f32 %v25, %v851
    %v853 = vand.u32 %v852, 4294901760
    %854 = vmatpush1.msra.mxu0 %v853
    %855 = vmatprep.subr.mxu0 0.0
    %v856 = vand.u32 %v24, 4294901760
    %v857 = vsub.f32 %v24, %v856
    %v858 = vand.u32 %v857, 4294901760
    %859 = vmatpush1.msra.mxu0 %v858
    %860 = vmatprep.subr.mxu0 0.0
    %v861 = vand.u32 %v23, 4294901760
    %v862 = vsub.f32 %v23, %v861
    %v863 = vand.u32 %v862, 4294901760
    %864 = vmatpush1.msra.mxu0 %v863
    %865 = vmatprep.subr.mxu0 0.0
    %v866 = vand.u32 %v54, 4294901760
    %v867 = vsub.f32 %v54, %v866
    %v868 = vand.u32 %v867, 4294901760
    %869 = vmatpush2.msra.mxu0 %v868
    %870 = vmatprep.subr.mxu0 0.0
    %v871 = vand.u32 %v53, 4294901760
    %v872 = vsub.f32 %v53, %v871
    %v873 = vand.u32 %v872, 4294901760
    %874 = vmatpush2.msra.mxu0 %v873
    %875 = vmatprep.subr.mxu0 0.0
    %v876 = vand.u32 %v52, 4294901760
    %v877 = vsub.f32 %v52, %v876
    %v878 = vand.u32 %v877, 4294901760
    %879 = vmatpush2.msra.mxu0 %v878
    %880 = vmatprep.subr.mxu0 0.0
    %v881 = vand.u32 %v51, 4294901760
    %v882 = vsub.f32 %v51, %v881
    %v883 = vand.u32 %v882, 4294901760
    %884 = vmatpush2.msra.mxu0 %v883
    %885 = vmatprep.subr.mxu0 0.0
    %v886 = vand.u32 %v50, 4294901760
    %v887 = vsub.f32 %v50, %v886
    %v888 = vand.u32 %v887, 4294901760
    %889 = vmatpush2.msra.mxu0 %v888
    %890 = vmatprep.subr.mxu0 0.0
    %v891 = vand.u32 %v49, 4294901760
    %v892 = vsub.f32 %v49, %v891
    %v893 = vand.u32 %v892, 4294901760
    %894 = vmatpush2.msra.mxu0 %v893
    %895 = vmatprep.subr.mxu0 0.0
    %v896 = vand.u32 %v48, 4294901760
    %v897 = vsub.f32 %v48, %v896
    %v898 = vand.u32 %v897, 4294901760
    %899 = vmatpush2.msra.mxu0 %v898
    %900 = vmatprep.subr.mxu0 0.0
    %v901 = vand.u32 %v47, 4294901760
    %v902 = vsub.f32 %v47, %v901
    %v903 = vand.u32 %v902, 4294901760
    %904 = vmatpush2.msra.mxu0 %v903
    %905 = vmatprep.subr.mxu0 0.0
    %v906 = vand.u32 %v46, 4294901760
    %v907 = vsub.f32 %v46, %v906
    %v908 = vand.u32 %v907, 4294901760
    %909 = vmatpush2.msra.mxu0 %v908
    %910 = vmatprep.subr.mxu0 0.0
    %v911 = vand.u32 %v45, 4294901760
    %v912 = vsub.f32 %v45, %v911
    %v913 = vand.u32 %v912, 4294901760
    %914 = vmatpush2.msra.mxu0 %v913
    %915 = vmatprep.subr.mxu0 0.0
    %v916 = vand.u32 %v44, 4294901760
    %v917 = vsub.f32 %v44, %v916
    %v918 = vand.u32 %v917, 4294901760
    %919 = vmatpush2.msra.mxu0 %v918
    %920 = vmatprep.subr.mxu0 0.0
    %v921 = vand.u32 %v43, 4294901760
    %v922 = vsub.f32 %v43, %v921
    %v923 = vand.u32 %v922, 4294901760
    %924 = vmatpush2.msra.mxu0 %v923
    %925 = vmatprep.subr.mxu0 0.0
    %v926 = vand.u32 %v42, 4294901760
    %v927 = vsub.f32 %v42, %v926
    %v928 = vand.u32 %v927, 4294901760
    %929 = vmatpush2.msra.mxu0 %v928
    %930 = vmatprep.subr.mxu0 0.0
    %v931 = vand.u32 %v41, 4294901760
    %v932 = vsub.f32 %v41, %v931
    %v933 = vand.u32 %v932, 4294901760
    %934 = vmatpush2.msra.mxu0 %v933
    %935 = vmatprep.subr.mxu0 0.0
    %v936 = vand.u32 %v40, 4294901760
    %v937 = vsub.f32 %v40, %v936
    %v938 = vand.u32 %v937, 4294901760
    %939 = vmatpush2.msra.mxu0 %v938
    %940 = vmatprep.subr.mxu0 0.0
    %v941 = vand.u32 %v39, 4294901760
    %v942 = vsub.f32 %v39, %v941
    %v943 = vand.u32 %v942, 4294901760
    %944 = vmatpush2.msra.mxu0 %v943
    %v945 = vand.u32 %v168, 4294901760
    %946 = vmatprep.mubr.f32.mxu0 %v945
    %v947 = vand.u32 %v160, 4294901760
    %948 = vmatmul.mubr.f32.gmra.mxu0 %v947
    %v949 = vpop.f32.mrf.mxu0
    %v950 = vadd.f32 %v782, %v949
    %v951 = vpop.f32.mrf.mxu0
    %952 = vdwg.mxu0
    %953 = vmatprep.subr.mxu0 0.0
    %v954 = vand.u32 %v38, 4294901760
    %955 = vmatpush1.msra.mxu0 %v954
    %956 = vmatprep.subr.mxu0 0.0
    %v957 = vand.u32 %v37, 4294901760
    %958 = vmatpush1.msra.mxu0 %v957
    %959 = vmatprep.subr.mxu0 0.0
    %v960 = vand.u32 %v36, 4294901760
    %961 = vmatpush1.msra.mxu0 %v960
    %962 = vmatprep.subr.mxu0 0.0
    %v963 = vand.u32 %v35, 4294901760
    %964 = vmatpush1.msra.mxu0 %v963
    %965 = vmatprep.subr.mxu0 0.0
    %v966 = vand.u32 %v34, 4294901760
    %967 = vmatpush1.msra.mxu0 %v966
    %968 = vmatprep.subr.mxu0 0.0
    %v969 = vand.u32 %v33, 4294901760
    %970 = vmatpush1.msra.mxu0 %v969
    %971 = vmatprep.subr.mxu0 0.0
    %v972 = vand.u32 %v32, 4294901760
    %973 = vmatpush1.msra.mxu0 %v972
    %974 = vmatprep.subr.mxu0 0.0
    %v975 = vand.u32 %v31, 4294901760
    %976 = vmatpush1.msra.mxu0 %v975
    %977 = vmatprep.subr.mxu0 0.0
    %v978 = vand.u32 %v30, 4294901760
    %979 = vmatpush1.msra.mxu0 %v978
    %980 = vmatprep.subr.mxu0 0.0
    %v981 = vand.u32 %v29, 4294901760
    %982 = vmatpush1.msra.mxu0 %v981
    %983 = vmatprep.subr.mxu0 0.0
    %v984 = vand.u32 %v28, 4294901760
    %985 = vmatpush1.msra.mxu0 %v984
    %986 = vmatprep.subr.mxu0 0.0
    %v987 = vand.u32 %v27, 4294901760
    %988 = vmatpush1.msra.mxu0 %v987
    %989 = vmatprep.subr.mxu0 0.0
    %v990 = vand.u32 %v26, 4294901760
    %991 = vmatpush1.msra.mxu0 %v990
    %992 = vmatprep.subr.mxu0 0.0
    %v993 = vand.u32 %v25, 4294901760
    %994 = vmatpush1.msra.mxu0 %v993
    %995 = vmatprep.subr.mxu0 0.0
    %v996 = vand.u32 %v24, 4294901760
    %997 = vmatpush1.msra.mxu0 %v996
    %998 = vmatprep.subr.mxu0 0.0
    %v999 = vand.u32 %v23, 4294901760
    %1000 = vmatpush1.msra.mxu0 %v999
    %1001 = vmatprep.subr.mxu0 0.0
    %v1002 = vand.u32 %v54, 4294901760
    %1003 = vmatpush2.msra.mxu0 %v1002
    %1004 = vmatprep.subr.mxu0 0.0
    %v1005 = vand.u32 %v53, 4294901760
    %1006 = vmatpush2.msra.mxu0 %v1005
    %1007 = vmatprep.subr.mxu0 0.0
    %v1008 = vand.u32 %v52, 4294901760
    %1009 = vmatpush2.msra.mxu0 %v1008
    %1010 = vmatprep.subr.mxu0 0.0
    %v1011 = vand.u32 %v51, 4294901760
    %1012 = vmatpush2.msra.mxu0 %v1011
    %1013 = vmatprep.subr.mxu0 0.0
    %v1014 = vand.u32 %v50, 4294901760
    %1015 = vmatpush2.msra.mxu0 %v1014
    %1016 = vmatprep.subr.mxu0 0.0
    %v1017 = vand.u32 %v49, 4294901760
    %1018 = vmatpush2.msra.mxu0 %v1017
    %1019 = vmatprep.subr.mxu0 0.0
    %v1020 = vand.u32 %v48, 4294901760
    %1021 = vmatpush2.msra.mxu0 %v1020
    %1022 = vmatprep.subr.mxu0 0.0
    %v1023 = vand.u32 %v47, 4294901760
    %1024 = vmatpush2.msra.mxu0 %v1023
    %1025 = vmatprep.subr.mxu0 0.0
    %v1026 = vand.u32 %v46, 4294901760
    %1027 = vmatpush2.msra.mxu0 %v1026
    %1028 = vmatprep.subr.mxu0 0.0
    %v1029 = vand.u32 %v45, 4294901760
    %1030 = vmatpush2.msra.mxu0 %v1029
    %1031 = vmatprep.subr.mxu0 0.0
    %v1032 = vand.u32 %v44, 4294901760
    %1033 = vmatpush2.msra.mxu0 %v1032
    %1034 = vmatprep.subr.mxu0 0.0
    %v1035 = vand.u32 %v43, 4294901760
    %1036 = vmatpush2.msra.mxu0 %v1035
    %1037 = vmatprep.subr.mxu0 0.0
    %v1038 = vand.u32 %v42, 4294901760
    %1039 = vmatpush2.msra.mxu0 %v1038
    %1040 = vmatprep.subr.mxu0 0.0
    %v1041 = vand.u32 %v41, 4294901760
    %1042 = vmatpush2.msra.mxu0 %v1041
    %1043 = vmatprep.subr.mxu0 0.0
    %v1044 = vand.u32 %v40, 4294901760
    %1045 = vmatpush2.msra.mxu0 %v1044
    %1046 = vmatprep.subr.mxu0 0.0
    %v1047 = vand.u32 %v39, 4294901760
    %1048 = vmatpush2.msra.mxu0 %v1047
    %v1049 = vand.u32 %v168, 4294901760
    %1050 = vmatprep.mubr.f32.mxu0 %v1049
    %v1051 = vand.u32 %v160, 4294901760
    %1052 = vmatmul.mubr.f32.gmra.mxu0 %v1051
    %v1053 = vpop.f32.mrf.mxu0
    %v1054 = vadd.f32 %v950, %v1053
    %v1055 = vpop.f32.mrf.mxu0
    %1056 = vdwg.mxu0
    %1057 = vmatprep.subr.mxu0 0.0
    %v1058 = vand.u32 %v70, 4294901760
    %1059 = vmatpush1.msra.mxu0 %v1058
    %1060 = vmatprep.subr.mxu0 0.0
    %v1061 = vand.u32 %v69, 4294901760
    %1062 = vmatpush1.msra.mxu0 %v1061
    %1063 = vmatprep.subr.mxu0 0.0
    %v1064 = vand.u32 %v68, 4294901760
    %1065 = vmatpush1.msra.mxu0 %v1064
    %1066 = vmatprep.subr.mxu0 0.0
    %v1067 = vand.u32 %v67, 4294901760
    %1068 = vmatpush1.msra.mxu0 %v1067
    %1069 = vmatprep.subr.mxu0 0.0
    %v1070 = vand.u32 %v66, 4294901760
    %1071 = vmatpush1.msra.mxu0 %v1070
    %1072 = vmatprep.subr.mxu0 0.0
    %v1073 = vand.u32 %v65, 4294901760
    %1074 = vmatpush1.msra.mxu0 %v1073
    %1075 = vmatprep.subr.mxu0 0.0
    %v1076 = vand.u32 %v64, 4294901760
    %1077 = vmatpush1.msra.mxu0 %v1076
    %1078 = vmatprep.subr.mxu0 0.0
    %v1079 = vand.u32 %v63, 4294901760
    %1080 = vmatpush1.msra.mxu0 %v1079
    %1081 = vmatprep.subr.mxu0 0.0
    %v1082 = vand.u32 %v62, 4294901760
    %1083 = vmatpush1.msra.mxu0 %v1082
    %1084 = vmatprep.subr.mxu0 0.0
    %v1085 = vand.u32 %v61, 4294901760
    %1086 = vmatpush1.msra.mxu0 %v1085
    %1087 = vmatprep.subr.mxu0 0.0
    %v1088 = vand.u32 %v60, 4294901760
    %1089 = vmatpush1.msra.mxu0 %v1088
    %1090 = vmatprep.subr.mxu0 0.0
    %v1091 = vand.u32 %v59, 4294901760
    %1092 = vmatpush1.msra.mxu0 %v1091
    %1093 = vmatprep.subr.mxu0 0.0
    %v1094 = vand.u32 %v58, 4294901760
    %1095 = vmatpush1.msra.mxu0 %v1094
    %1096 = vmatprep.subr.mxu0 0.0
    %v1097 = vand.u32 %v57, 4294901760
    %1098 = vmatpush1.msra.mxu0 %v1097
    %1099 = vmatprep.subr.mxu0 0.0
    %v1100 = vand.u32 %v56, 4294901760
    %1101 = vmatpush1.msra.mxu0 %v1100
    %1102 = vmatprep.subr.mxu0 0.0
    %v1103 = vand.u32 %v55, 4294901760
    %1104 = vmatpush1.msra.mxu0 %v1103
    %1105 = vmatprep.subr.mxu0 0.0
    %v1106 = vand.u32 %v86, 4294901760
    %1107 = vmatpush2.msra.mxu0 %v1106
    %1108 = vmatprep.subr.mxu0 0.0
    %v1109 = vand.u32 %v85, 4294901760
    %1110 = vmatpush2.msra.mxu0 %v1109
    %1111 = vmatprep.subr.mxu0 0.0
    %v1112 = vand.u32 %v84, 4294901760
    %1113 = vmatpush2.msra.mxu0 %v1112
    %1114 = vmatprep.subr.mxu0 0.0
    %v1115 = vand.u32 %v83, 4294901760
    %1116 = vmatpush2.msra.mxu0 %v1115
    %1117 = vmatprep.subr.mxu0 0.0
    %v1118 = vand.u32 %v82, 4294901760
    %1119 = vmatpush2.msra.mxu0 %v1118
    %1120 = vmatprep.subr.mxu0 0.0
    %v1121 = vand.u32 %v81, 4294901760
    %1122 = vmatpush2.msra.mxu0 %v1121
    %1123 = vmatprep.subr.mxu0 0.0
    %v1124 = vand.u32 %v80, 4294901760
    %1125 = vmatpush2.msra.mxu0 %v1124
    %1126 = vmatprep.subr.mxu0 0.0
    %v1127 = vand.u32 %v79, 4294901760
    %1128 = vmatpush2.msra.mxu0 %v1127
    %1129 = vmatprep.subr.mxu0 0.0
    %v1130 = vand.u32 %v78, 4294901760
    %1131 = vmatpush2.msra.mxu0 %v1130
    %1132 = vmatprep.subr.mxu0 0.0
    %v1133 = vand.u32 %v77, 4294901760
    %1134 = vmatpush2.msra.mxu0 %v1133
    %1135 = vmatprep.subr.mxu0 0.0
    %v1136 = vand.u32 %v76, 4294901760
    %1137 = vmatpush2.msra.mxu0 %v1136
    %1138 = vmatprep.subr.mxu0 0.0
    %v1139 = vand.u32 %v75, 4294901760
    %1140 = vmatpush2.msra.mxu0 %v1139
    %1141 = vmatprep.subr.mxu0 0.0
    %v1142 = vand.u32 %v74, 4294901760
    %1143 = vmatpush2.msra.mxu0 %v1142
    %1144 = vmatprep.subr.mxu0 0.0
    %v1145 = vand.u32 %v73, 4294901760
    %1146 = vmatpush2.msra.mxu0 %v1145
    %1147 = vmatprep.subr.mxu0 0.0
    %v1148 = vand.u32 %v72, 4294901760
    %1149 = vmatpush2.msra.mxu0 %v1148
    %1150 = vmatprep.subr.mxu0 0.0
    %v1151 = vand.u32 %v71, 4294901760
    %1152 = vmatpush2.msra.mxu0 %v1151
    %v1153 = vand.u32 %v169, 4294901760
    %v1154 = vsub.f32 %v169, %v1153
    %v1155 = vand.u32 %v1154, 4294901760
    %v1156 = vsub.f32 %v1154, %v1155
    %v1157 = vand.u32 %v1156, 4294901760
    %1158 = vmatprep.mubr.f32.mxu0 %v1157
    %v1159 = vand.u32 %v167, 4294901760
    %v1160 = vsub.f32 %v167, %v1159
    %v1161 = vand.u32 %v1160, 4294901760
    %v1162 = vsub.f32 %v1160, %v1161
    %v1163 = vand.u32 %v1162, 4294901760
    %1164 = vmatmul.mubr.f32.gmra.mxu0 %v1163
    %v1165 = vpop.f32.mrf.mxu0
    %v1166 = vadd.f32 %v1054, %v1165
    %v1167 = vpop.f32.mrf.mxu0
    %1168 = vdwg.mxu0
    %1169 = vmatprep.subr.mxu0 0.0
    %v1170 = vand.u32 %v70, 4294901760
    %v1171 = vsub.f32 %v70, %v1170
    %v1172 = vand.u32 %v1171, 4294901760
    %v1173 = vsub.f32 %v1171, %v1172
    %v1174 = vand.u32 %v1173, 4294901760
    %1175 = vmatpush1.msra.mxu0 %v1174
    %1176 = vmatprep.subr.mxu0 0.0
    %v1177 = vand.u32 %v69, 4294901760
    %v1178 = vsub.f32 %v69, %v1177
    %v1179 = vand.u32 %v1178, 4294901760
    %v1180 = vsub.f32 %v1178, %v1179
    %v1181 = vand.u32 %v1180, 4294901760
    %1182 = vmatpush1.msra.mxu0 %v1181
    %1183 = vmatprep.subr.mxu0 0.0
    %v1184 = vand.u32 %v68, 4294901760
    %v1185 = vsub.f32 %v68, %v1184
    %v1186 = vand.u32 %v1185, 4294901760
    %v1187 = vsub.f32 %v1185, %v1186
    %v1188 = vand.u32 %v1187, 4294901760
    %1189 = vmatpush1.msra.mxu0 %v1188
    %1190 = vmatprep.subr.mxu0 0.0
    %v1191 = vand.u32 %v67, 4294901760
    %v1192 = vsub.f32 %v67, %v1191
    %v1193 = vand.u32 %v1192, 4294901760
    %v1194 = vsub.f32 %v1192, %v1193
    %v1195 = vand.u32 %v1194, 4294901760
    %1196 = vmatpush1.msra.mxu0 %v1195
    %1197 = vmatprep.subr.mxu0 0.0
    %v1198 = vand.u32 %v66, 4294901760
    %v1199 = vsub.f32 %v66, %v1198
    %v1200 = vand.u32 %v1199, 4294901760
    %v1201 = vsub.f32 %v1199, %v1200
    %v1202 = vand.u32 %v1201, 4294901760
    %1203 = vmatpush1.msra.mxu0 %v1202
    %1204 = vmatprep.subr.mxu0 0.0
    %v1205 = vand.u32 %v65, 4294901760
    %v1206 = vsub.f32 %v65, %v1205
    %v1207 = vand.u32 %v1206, 4294901760
    %v1208 = vsub.f32 %v1206, %v1207
    %v1209 = vand.u32 %v1208, 4294901760
    %1210 = vmatpush1.msra.mxu0 %v1209
    %1211 = vmatprep.subr.mxu0 0.0
    %v1212 = vand.u32 %v64, 4294901760
    %v1213 = vsub.f32 %v64, %v1212
    %v1214 = vand.u32 %v1213, 4294901760
    %v1215 = vsub.f32 %v1213, %v1214
    %v1216 = vand.u32 %v1215, 4294901760
    %1217 = vmatpush1.msra.mxu0 %v1216
    %1218 = vmatprep.subr.mxu0 0.0
    %v1219 = vand.u32 %v63, 4294901760
    %v1220 = vsub.f32 %v63, %v1219
    %v1221 = vand.u32 %v1220, 4294901760
    %v1222 = vsub.f32 %v1220, %v1221
    %v1223 = vand.u32 %v1222, 4294901760
    %1224 = vmatpush1.msra.mxu0 %v1223
    %1225 = vmatprep.subr.mxu0 0.0
    %v1226 = vand.u32 %v62, 4294901760
    %v1227 = vsub.f32 %v62, %v1226
    %v1228 = vand.u32 %v1227, 4294901760
    %v1229 = vsub.f32 %v1227, %v1228
    %v1230 = vand.u32 %v1229, 4294901760
    %1231 = vmatpush1.msra.mxu0 %v1230
    %1232 = vmatprep.subr.mxu0 0.0
    %v1233 = vand.u32 %v61, 4294901760
    %v1234 = vsub.f32 %v61, %v1233
    %v1235 = vand.u32 %v1234, 4294901760
    %v1236 = vsub.f32 %v1234, %v1235
    %v1237 = vand.u32 %v1236, 4294901760
    %1238 = vmatpush1.msra.mxu0 %v1237
    %1239 = vmatprep.subr.mxu0 0.0
    %v1240 = vand.u32 %v60, 4294901760
    %v1241 = vsub.f32 %v60, %v1240
    %v1242 = vand.u32 %v1241, 4294901760
    %v1243 = vsub.f32 %v1241, %v1242
    %v1244 = vand.u32 %v1243, 4294901760
    %1245 = vmatpush1.msra.mxu0 %v1244
    %1246 = vmatprep.subr.mxu0 0.0
    %v1247 = vand.u32 %v59, 4294901760
    %v1248 = vsub.f32 %v59, %v1247
    %v1249 = vand.u32 %v1248, 4294901760
    %v1250 = vsub.f32 %v1248, %v1249
    %v1251 = vand.u32 %v1250, 4294901760
    %1252 = vmatpush1.msra.mxu0 %v1251
    %1253 = vmatprep.subr.mxu0 0.0
    %v1254 = vand.u32 %v58, 4294901760
    %v1255 = vsub.f32 %v58, %v1254
    %v1256 = vand.u32 %v1255, 4294901760
    %v1257 = vsub.f32 %v1255, %v1256
    %v1258 = vand.u32 %v1257, 4294901760
    %1259 = vmatpush1.msra.mxu0 %v1258
    %1260 = vmatprep.subr.mxu0 0.0
    %v1261 = vand.u32 %v57, 4294901760
    %v1262 = vsub.f32 %v57, %v1261
    %v1263 = vand.u32 %v1262, 4294901760
    %v1264 = vsub.f32 %v1262, %v1263
    %v1265 = vand.u32 %v1264, 4294901760
    %1266 = vmatpush1.msra.mxu0 %v1265
    %1267 = vmatprep.subr.mxu0 0.0
    %v1268 = vand.u32 %v56, 4294901760
    %v1269 = vsub.f32 %v56, %v1268
    %v1270 = vand.u32 %v1269, 4294901760
    %v1271 = vsub.f32 %v1269, %v1270
    %v1272 = vand.u32 %v1271, 4294901760
    %1273 = vmatpush1.msra.mxu0 %v1272
    %1274 = vmatprep.subr.mxu0 0.0
    %v1275 = vand.u32 %v55, 4294901760
    %v1276 = vsub.f32 %v55, %v1275
    %v1277 = vand.u32 %v1276, 4294901760
    %v1278 = vsub.f32 %v1276, %v1277
    %v1279 = vand.u32 %v1278, 4294901760
    %1280 = vmatpush1.msra.mxu0 %v1279
    %1281 = vmatprep.subr.mxu0 0.0
    %v1282 = vand.u32 %v86, 4294901760
    %v1283 = vsub.f32 %v86, %v1282
    %v1284 = vand.u32 %v1283, 4294901760
    %v1285 = vsub.f32 %v1283, %v1284
    %v1286 = vand.u32 %v1285, 4294901760
    %1287 = vmatpush2.msra.mxu0 %v1286
    %1288 = vmatprep.subr.mxu0 0.0
    %v1289 = vand.u32 %v85, 4294901760
    %v1290 = vsub.f32 %v85, %v1289
    %v1291 = vand.u32 %v1290, 4294901760
    %v1292 = vsub.f32 %v1290, %v1291
    %v1293 = vand.u32 %v1292, 4294901760
    %1294 = vmatpush2.msra.mxu0 %v1293
    %1295 = vmatprep.subr.mxu0 0.0
    %v1296 = vand.u32 %v84, 4294901760
    %v1297 = vsub.f32 %v84, %v1296
    %v1298 = vand.u32 %v1297, 4294901760
    %v1299 = vsub.f32 %v1297, %v1298
    %v1300 = vand.u32 %v1299, 4294901760
    %1301 = vmatpush2.msra.mxu0 %v1300
    %1302 = vmatprep.subr.mxu0 0.0
    %v1303 = vand.u32 %v83, 4294901760
    %v1304 = vsub.f32 %v83, %v1303
    %v1305 = vand.u32 %v1304, 4294901760
    %v1306 = vsub.f32 %v1304, %v1305
    %v1307 = vand.u32 %v1306, 4294901760
    %1308 = vmatpush2.msra.mxu0 %v1307
    %1309 = vmatprep.subr.mxu0 0.0
    %v1310 = vand.u32 %v82, 4294901760
    %v1311 = vsub.f32 %v82, %v1310
    %v1312 = vand.u32 %v1311, 4294901760
    %v1313 = vsub.f32 %v1311, %v1312
    %v1314 = vand.u32 %v1313, 4294901760
    %1315 = vmatpush2.msra.mxu0 %v1314
    %1316 = vmatprep.subr.mxu0 0.0
    %v1317 = vand.u32 %v81, 4294901760
    %v1318 = vsub.f32 %v81, %v1317
    %v1319 = vand.u32 %v1318, 4294901760
    %v1320 = vsub.f32 %v1318, %v1319
    %v1321 = vand.u32 %v1320, 4294901760
    %1322 = vmatpush2.msra.mxu0 %v1321
    %1323 = vmatprep.subr.mxu0 0.0
    %v1324 = vand.u32 %v80, 4294901760
    %v1325 = vsub.f32 %v80, %v1324
    %v1326 = vand.u32 %v1325, 4294901760
    %v1327 = vsub.f32 %v1325, %v1326
    %v1328 = vand.u32 %v1327, 4294901760
    %1329 = vmatpush2.msra.mxu0 %v1328
    %1330 = vmatprep.subr.mxu0 0.0
    %v1331 = vand.u32 %v79, 4294901760
    %v1332 = vsub.f32 %v79, %v1331
    %v1333 = vand.u32 %v1332, 4294901760
    %v1334 = vsub.f32 %v1332, %v1333
    %v1335 = vand.u32 %v1334, 4294901760
    %1336 = vmatpush2.msra.mxu0 %v1335
    %1337 = vmatprep.subr.mxu0 0.0
    %v1338 = vand.u32 %v78, 4294901760
    %v1339 = vsub.f32 %v78, %v1338
    %v1340 = vand.u32 %v1339, 4294901760
    %v1341 = vsub.f32 %v1339, %v1340
    %v1342 = vand.u32 %v1341, 4294901760
    %1343 = vmatpush2.msra.mxu0 %v1342
    %1344 = vmatprep.subr.mxu0 0.0
    %v1345 = vand.u32 %v77, 4294901760
    %v1346 = vsub.f32 %v77, %v1345
    %v1347 = vand.u32 %v1346, 4294901760
    %v1348 = vsub.f32 %v1346, %v1347
    %v1349 = vand.u32 %v1348, 4294901760
    %1350 = vmatpush2.msra.mxu0 %v1349
    %1351 = vmatprep.subr.mxu0 0.0
    %v1352 = vand.u32 %v76, 4294901760
    %v1353 = vsub.f32 %v76, %v1352
    %v1354 = vand.u32 %v1353, 4294901760
    %v1355 = vsub.f32 %v1353, %v1354
    %v1356 = vand.u32 %v1355, 4294901760
    %1357 = vmatpush2.msra.mxu0 %v1356
    %1358 = vmatprep.subr.mxu0 0.0
    %v1359 = vand.u32 %v75, 4294901760
    %v1360 = vsub.f32 %v75, %v1359
    %v1361 = vand.u32 %v1360, 4294901760
    %v1362 = vsub.f32 %v1360, %v1361
    %v1363 = vand.u32 %v1362, 4294901760
    %1364 = vmatpush2.msra.mxu0 %v1363
    %1365 = vmatprep.subr.mxu0 0.0
    %v1366 = vand.u32 %v74, 4294901760
    %v1367 = vsub.f32 %v74, %v1366
    %v1368 = vand.u32 %v1367, 4294901760
    %v1369 = vsub.f32 %v1367, %v1368
    %v1370 = vand.u32 %v1369, 4294901760
    %1371 = vmatpush2.msra.mxu0 %v1370
    %1372 = vmatprep.subr.mxu0 0.0
    %v1373 = vand.u32 %v73, 4294901760
    %v1374 = vsub.f32 %v73, %v1373
    %v1375 = vand.u32 %v1374, 4294901760
    %v1376 = vsub.f32 %v1374, %v1375
    %v1377 = vand.u32 %v1376, 4294901760
    %1378 = vmatpush2.msra.mxu0 %v1377
    %1379 = vmatprep.subr.mxu0 0.0
    %v1380 = vand.u32 %v72, 4294901760
    %v1381 = vsub.f32 %v72, %v1380
    %v1382 = vand.u32 %v1381, 4294901760
    %v1383 = vsub.f32 %v1381, %v1382
    %v1384 = vand.u32 %v1383, 4294901760
    %1385 = vmatpush2.msra.mxu0 %v1384
    %1386 = vmatprep.subr.mxu0 0.0
    %v1387 = vand.u32 %v71, 4294901760
    %v1388 = vsub.f32 %v71, %v1387
    %v1389 = vand.u32 %v1388, 4294901760
    %v1390 = vsub.f32 %v1388, %v1389
    %v1391 = vand.u32 %v1390, 4294901760
    %1392 = vmatpush2.msra.mxu0 %v1391
    %v1393 = vand.u32 %v169, 4294901760
    %1394 = vmatprep.mubr.f32.mxu0 %v1393
    %v1395 = vand.u32 %v167, 4294901760
    %1396 = vmatmul.mubr.f32.gmra.mxu0 %v1395
    %v1397 = vpop.f32.mrf.mxu0
    %v1398 = vadd.f32 %v1166, %v1397
    %v1399 = vpop.f32.mrf.mxu0
    %1400 = vdwg.mxu0
    %1401 = vmatprep.subr.mxu0 0.0
    %v1402 = vand.u32 %v70, 4294901760
    %v1403 = vsub.f32 %v70, %v1402
    %1404 = vmatpush1.msra.mxu0 %v1403
    %1405 = vmatprep.subr.mxu0 0.0
    %v1406 = vand.u32 %v69, 4294901760
    %v1407 = vsub.f32 %v69, %v1406
    %1408 = vmatpush1.msra.mxu0 %v1407
    %1409 = vmatprep.subr.mxu0 0.0
    %v1410 = vand.u32 %v68, 4294901760
    %v1411 = vsub.f32 %v68, %v1410
    %1412 = vmatpush1.msra.mxu0 %v1411
    %1413 = vmatprep.subr.mxu0 0.0
    %v1414 = vand.u32 %v67, 4294901760
    %v1415 = vsub.f32 %v67, %v1414
    %1416 = vmatpush1.msra.mxu0 %v1415
    %1417 = vmatprep.subr.mxu0 0.0
    %v1418 = vand.u32 %v66, 4294901760
    %v1419 = vsub.f32 %v66, %v1418
    %1420 = vmatpush1.msra.mxu0 %v1419
    %1421 = vmatprep.subr.mxu0 0.0
    %v1422 = vand.u32 %v65, 4294901760
    %v1423 = vsub.f32 %v65, %v1422
    %1424 = vmatpush1.msra.mxu0 %v1423
    %1425 = vmatprep.subr.mxu0 0.0
    %v1426 = vand.u32 %v64, 4294901760
    %v1427 = vsub.f32 %v64, %v1426
    %1428 = vmatpush1.msra.mxu0 %v1427
    %1429 = vmatprep.subr.mxu0 0.0
    %v1430 = vand.u32 %v63, 4294901760
    %v1431 = vsub.f32 %v63, %v1430
    %1432 = vmatpush1.msra.mxu0 %v1431
    %1433 = vmatprep.subr.mxu0 0.0
    %v1434 = vand.u32 %v62, 4294901760
    %v1435 = vsub.f32 %v62, %v1434
    %1436 = vmatpush1.msra.mxu0 %v1435
    %1437 = vmatprep.subr.mxu0 0.0
    %v1438 = vand.u32 %v61, 4294901760
    %v1439 = vsub.f32 %v61, %v1438
    %1440 = vmatpush1.msra.mxu0 %v1439
    %1441 = vmatprep.subr.mxu0 0.0
    %v1442 = vand.u32 %v60, 4294901760
    %v1443 = vsub.f32 %v60, %v1442
    %1444 = vmatpush1.msra.mxu0 %v1443
    %1445 = vmatprep.subr.mxu0 0.0
    %v1446 = vand.u32 %v59, 4294901760
    %v1447 = vsub.f32 %v59, %v1446
    %1448 = vmatpush1.msra.mxu0 %v1447
    %1449 = vmatprep.subr.mxu0 0.0
    %v1450 = vand.u32 %v58, 4294901760
    %v1451 = vsub.f32 %v58, %v1450
    %1452 = vmatpush1.msra.mxu0 %v1451
    %1453 = vmatprep.subr.mxu0 0.0
    %v1454 = vand.u32 %v57, 4294901760
    %v1455 = vsub.f32 %v57, %v1454
    %1456 = vmatpush1.msra.mxu0 %v1455
    %1457 = vmatprep.subr.mxu0 0.0
    %v1458 = vand.u32 %v56, 4294901760
    %v1459 = vsub.f32 %v56, %v1458
    %1460 = vmatpush1.msra.mxu0 %v1459
    %1461 = vmatprep.subr.mxu0 0.0
    %v1462 = vand.u32 %v55, 4294901760
    %v1463 = vsub.f32 %v55, %v1462
    %1464 = vmatpush1.msra.mxu0 %v1463
    %1465 = vmatprep.subr.mxu0 0.0
    %v1466 = vand.u32 %v86, 4294901760
    %v1467 = vsub.f32 %v86, %v1466
    %1468 = vmatpush2.msra.mxu0 %v1467
    %1469 = vmatprep.subr.mxu0 0.0
    %v1470 = vand.u32 %v85, 4294901760
    %v1471 = vsub.f32 %v85, %v1470
    %1472 = vmatpush2.msra.mxu0 %v1471
    %1473 = vmatprep.subr.mxu0 0.0
    %v1474 = vand.u32 %v84, 4294901760
    %v1475 = vsub.f32 %v84, %v1474
    %1476 = vmatpush2.msra.mxu0 %v1475
    %1477 = vmatprep.subr.mxu0 0.0
    %v1478 = vand.u32 %v83, 4294901760
    %v1479 = vsub.f32 %v83, %v1478
    %1480 = vmatpush2.msra.mxu0 %v1479
    %1481 = vmatprep.subr.mxu0 0.0
    %v1482 = vand.u32 %v82, 4294901760
    %v1483 = vsub.f32 %v82, %v1482
    %1484 = vmatpush2.msra.mxu0 %v1483
    %1485 = vmatprep.subr.mxu0 0.0
    %v1486 = vand.u32 %v81, 4294901760
    %v1487 = vsub.f32 %v81, %v1486
    %1488 = vmatpush2.msra.mxu0 %v1487
    %1489 = vmatprep.subr.mxu0 0.0
    %v1490 = vand.u32 %v80, 4294901760
    %v1491 = vsub.f32 %v80, %v1490
    %1492 = vmatpush2.msra.mxu0 %v1491
    %1493 = vmatprep.subr.mxu0 0.0
    %v1494 = vand.u32 %v79, 4294901760
    %v1495 = vsub.f32 %v79, %v1494
    %1496 = vmatpush2.msra.mxu0 %v1495
    %1497 = vmatprep.subr.mxu0 0.0
    %v1498 = vand.u32 %v78, 4294901760
    %v1499 = vsub.f32 %v78, %v1498
    %1500 = vmatpush2.msra.mxu0 %v1499
    %1501 = vmatprep.subr.mxu0 0.0
    %v1502 = vand.u32 %v77, 4294901760
    %v1503 = vsub.f32 %v77, %v1502
    %1504 = vmatpush2.msra.mxu0 %v1503
    %1505 = vmatprep.subr.mxu0 0.0
    %v1506 = vand.u32 %v76, 4294901760
    %v1507 = vsub.f32 %v76, %v1506
    %1508 = vmatpush2.msra.mxu0 %v1507
    %1509 = vmatprep.subr.mxu0 0.0
    %v1510 = vand.u32 %v75, 4294901760
    %v1511 = vsub.f32 %v75, %v1510
    %1512 = vmatpush2.msra.mxu0 %v1511
    %1513 = vmatprep.subr.mxu0 0.0
    %v1514 = vand.u32 %v74, 4294901760
    %v1515 = vsub.f32 %v74, %v1514
    %1516 = vmatpush2.msra.mxu0 %v1515
    %1517 = vmatprep.subr.mxu0 0.0
    %v1518 = vand.u32 %v73, 4294901760
    %v1519 = vsub.f32 %v73, %v1518
    %1520 = vmatpush2.msra.mxu0 %v1519
    %1521 = vmatprep.subr.mxu0 0.0
    %v1522 = vand.u32 %v72, 4294901760
    %v1523 = vsub.f32 %v72, %v1522
    %1524 = vmatpush2.msra.mxu0 %v1523
    %1525 = vmatprep.subr.mxu0 0.0
    %v1526 = vand.u32 %v71, 4294901760
    %v1527 = vsub.f32 %v71, %v1526
    %1528 = vmatpush2.msra.mxu0 %v1527
    %v1529 = vand.u32 %v169, 4294901760
    %v1530 = vsub.f32 %v169, %v1529
    %1531 = vmatprep.mubr.f32.mxu0 %v1530
    %v1532 = vand.u32 %v167, 4294901760
    %v1533 = vsub.f32 %v167, %v1532
    %1534 = vmatmul.mubr.f32.gmra.mxu0 %v1533
    %v1535 = vpop.f32.mrf.mxu0
    %v1536 = vadd.f32 %v1398, %v1535
    %v1537 = vpop.f32.mrf.mxu0
    %1538 = vdwg.mxu0
    %1539 = vmatprep.subr.mxu0 0.0
    %v1540 = vand.u32 %v70, 4294901760
    %1541 = vmatpush1.msra.mxu0 %v1540
    %1542 = vmatprep.subr.mxu0 0.0
    %v1543 = vand.u32 %v69, 4294901760
    %1544 = vmatpush1.msra.mxu0 %v1543
    %1545 = vmatprep.subr.mxu0 0.0
    %v1546 = vand.u32 %v68, 4294901760
    %1547 = vmatpush1.msra.mxu0 %v1546
    %1548 = vmatprep.subr.mxu0 0.0
    %v1549 = vand.u32 %v67, 4294901760
    %1550 = vmatpush1.msra.mxu0 %v1549
    %1551 = vmatprep.subr.mxu0 0.0
    %v1552 = vand.u32 %v66, 4294901760
    %1553 = vmatpush1.msra.mxu0 %v1552
    %1554 = vmatprep.subr.mxu0 0.0
    %v1555 = vand.u32 %v65, 4294901760
    %1556 = vmatpush1.msra.mxu0 %v1555
    %1557 = vmatprep.subr.mxu0 0.0
    %v1558 = vand.u32 %v64, 4294901760
    %1559 = vmatpush1.msra.mxu0 %v1558
    %1560 = vmatprep.subr.mxu0 0.0
    %v1561 = vand.u32 %v63, 4294901760
    %1562 = vmatpush1.msra.mxu0 %v1561
    %1563 = vmatprep.subr.mxu0 0.0
    %v1564 = vand.u32 %v62, 4294901760
    %1565 = vmatpush1.msra.mxu0 %v1564
    %1566 = vmatprep.subr.mxu0 0.0
    %v1567 = vand.u32 %v61, 4294901760
    %1568 = vmatpush1.msra.mxu0 %v1567
    %1569 = vmatprep.subr.mxu0 0.0
    %v1570 = vand.u32 %v60, 4294901760
    %1571 = vmatpush1.msra.mxu0 %v1570
    %1572 = vmatprep.subr.mxu0 0.0
    %v1573 = vand.u32 %v59, 4294901760
    %1574 = vmatpush1.msra.mxu0 %v1573
    %1575 = vmatprep.subr.mxu0 0.0
    %v1576 = vand.u32 %v58, 4294901760
    %1577 = vmatpush1.msra.mxu0 %v1576
    %1578 = vmatprep.subr.mxu0 0.0
    %v1579 = vand.u32 %v57, 4294901760
    %1580 = vmatpush1.msra.mxu0 %v1579
    %1581 = vmatprep.subr.mxu0 0.0
    %v1582 = vand.u32 %v56, 4294901760
    %1583 = vmatpush1.msra.mxu0 %v1582
    %1584 = vmatprep.subr.mxu0 0.0
    %v1585 = vand.u32 %v55, 4294901760
    %1586 = vmatpush1.msra.mxu0 %v1585
    %1587 = vmatprep.subr.mxu0 0.0
    %v1588 = vand.u32 %v86, 4294901760
    %1589 = vmatpush2.msra.mxu0 %v1588
    %1590 = vmatprep.subr.mxu0 0.0
    %v1591 = vand.u32 %v85, 4294901760
    %1592 = vmatpush2.msra.mxu0 %v1591
    %1593 = vmatprep.subr.mxu0 0.0
    %v1594 = vand.u32 %v84, 4294901760
    %1595 = vmatpush2.msra.mxu0 %v1594
    %1596 = vmatprep.subr.mxu0 0.0
    %v1597 = vand.u32 %v83, 4294901760
    %1598 = vmatpush2.msra.mxu0 %v1597
    %1599 = vmatprep.subr.mxu0 0.0
    %v1600 = vand.u32 %v82, 4294901760
    %1601 = vmatpush2.msra.mxu0 %v1600
    %1602 = vmatprep.subr.mxu0 0.0
    %v1603 = vand.u32 %v81, 4294901760
    %1604 = vmatpush2.msra.mxu0 %v1603
    %1605 = vmatprep.subr.mxu0 0.0
    %v1606 = vand.u32 %v80, 4294901760
    %1607 = vmatpush2.msra.mxu0 %v1606
    %1608 = vmatprep.subr.mxu0 0.0
    %v1609 = vand.u32 %v79, 4294901760
    %1610 = vmatpush2.msra.mxu0 %v1609
    %1611 = vmatprep.subr.mxu0 0.0
    %v1612 = vand.u32 %v78, 4294901760
    %1613 = vmatpush2.msra.mxu0 %v1612
    %1614 = vmatprep.subr.mxu0 0.0
    %v1615 = vand.u32 %v77, 4294901760
    %1616 = vmatpush2.msra.mxu0 %v1615
    %1617 = vmatprep.subr.mxu0 0.0
    %v1618 = vand.u32 %v76, 4294901760
    %1619 = vmatpush2.msra.mxu0 %v1618
    %1620 = vmatprep.subr.mxu0 0.0
    %v1621 = vand.u32 %v75, 4294901760
    %1622 = vmatpush2.msra.mxu0 %v1621
    %1623 = vmatprep.subr.mxu0 0.0
    %v1624 = vand.u32 %v74, 4294901760
    %1625 = vmatpush2.msra.mxu0 %v1624
    %1626 = vmatprep.subr.mxu0 0.0
    %v1627 = vand.u32 %v73, 4294901760
    %1628 = vmatpush2.msra.mxu0 %v1627
    %1629 = vmatprep.subr.mxu0 0.0
    %v1630 = vand.u32 %v72, 4294901760
    %1631 = vmatpush2.msra.mxu0 %v1630
    %1632 = vmatprep.subr.mxu0 0.0
    %v1633 = vand.u32 %v71, 4294901760
    %1634 = vmatpush2.msra.mxu0 %v1633
    %v1635 = vand.u32 %v169, 4294901760
    %v1636 = vsub.f32 %v169, %v1635
    %v1637 = vand.u32 %v1636, 4294901760
    %1638 = vmatprep.mubr.f32.mxu0 %v1637
    %v1639 = vand.u32 %v167, 4294901760
    %v1640 = vsub.f32 %v167, %v1639
    %v1641 = vand.u32 %v1640, 4294901760
    %1642 = vmatmul.mubr.f32.gmra.mxu0 %v1641
    %v1643 = vpop.f32.mrf.mxu0
    %v1644 = vadd.f32 %v1536, %v1643
    %v1645 = vpop.f32.mrf.mxu0
    %1646 = vdwg.mxu0
    %1647 = vmatprep.subr.mxu0 0.0
    %v1648 = vand.u32 %v70, 4294901760
    %v1649 = vsub.f32 %v70, %v1648
    %v1650 = vand.u32 %v1649, 4294901760
    %1651 = vmatpush1.msra.mxu0 %v1650
    %1652 = vmatprep.subr.mxu0 0.0
    %v1653 = vand.u32 %v69, 4294901760
    %v1654 = vsub.f32 %v69, %v1653
    %v1655 = vand.u32 %v1654, 4294901760
    %1656 = vmatpush1.msra.mxu0 %v1655
    %1657 = vmatprep.subr.mxu0 0.0
    %v1658 = vand.u32 %v68, 4294901760
    %v1659 = vsub.f32 %v68, %v1658
    %v1660 = vand.u32 %v1659, 4294901760
    %1661 = vmatpush1.msra.mxu0 %v1660
    %1662 = vmatprep.subr.mxu0 0.0
    %v1663 = vand.u32 %v67, 4294901760
    %v1664 = vsub.f32 %v67, %v1663
    %v1665 = vand.u32 %v1664, 4294901760
    %1666 = vmatpush1.msra.mxu0 %v1665
    %1667 = vmatprep.subr.mxu0 0.0
    %v1668 = vand.u32 %v66, 4294901760
    %v1669 = vsub.f32 %v66, %v1668
    %v1670 = vand.u32 %v1669, 4294901760
    %1671 = vmatpush1.msra.mxu0 %v1670
    %1672 = vmatprep.subr.mxu0 0.0
    %v1673 = vand.u32 %v65, 4294901760
    %v1674 = vsub.f32 %v65, %v1673
    %v1675 = vand.u32 %v1674, 4294901760
    %1676 = vmatpush1.msra.mxu0 %v1675
    %1677 = vmatprep.subr.mxu0 0.0
    %v1678 = vand.u32 %v64, 4294901760
    %v1679 = vsub.f32 %v64, %v1678
    %v1680 = vand.u32 %v1679, 4294901760
    %1681 = vmatpush1.msra.mxu0 %v1680
    %1682 = vmatprep.subr.mxu0 0.0
    %v1683 = vand.u32 %v63, 4294901760
    %v1684 = vsub.f32 %v63, %v1683
    %v1685 = vand.u32 %v1684, 4294901760
    %1686 = vmatpush1.msra.mxu0 %v1685
    %1687 = vmatprep.subr.mxu0 0.0
    %v1688 = vand.u32 %v62, 4294901760
    %v1689 = vsub.f32 %v62, %v1688
    %v1690 = vand.u32 %v1689, 4294901760
    %1691 = vmatpush1.msra.mxu0 %v1690
    %1692 = vmatprep.subr.mxu0 0.0
    %v1693 = vand.u32 %v61, 4294901760
    %v1694 = vsub.f32 %v61, %v1693
    %v1695 = vand.u32 %v1694, 4294901760
    %1696 = vmatpush1.msra.mxu0 %v1695
    %1697 = vmatprep.subr.mxu0 0.0
    %v1698 = vand.u32 %v60, 4294901760
    %v1699 = vsub.f32 %v60, %v1698
    %v1700 = vand.u32 %v1699, 4294901760
    %1701 = vmatpush1.msra.mxu0 %v1700
    %1702 = vmatprep.subr.mxu0 0.0
    %v1703 = vand.u32 %v59, 4294901760
    %v1704 = vsub.f32 %v59, %v1703
    %v1705 = vand.u32 %v1704, 4294901760
    %1706 = vmatpush1.msra.mxu0 %v1705
    %1707 = vmatprep.subr.mxu0 0.0
    %v1708 = vand.u32 %v58, 4294901760
    %v1709 = vsub.f32 %v58, %v1708
    %v1710 = vand.u32 %v1709, 4294901760
    %1711 = vmatpush1.msra.mxu0 %v1710
    %1712 = vmatprep.subr.mxu0 0.0
    %v1713 = vand.u32 %v57, 4294901760
    %v1714 = vsub.f32 %v57, %v1713
    %v1715 = vand.u32 %v1714, 4294901760
    %1716 = vmatpush1.msra.mxu0 %v1715
    %1717 = vmatprep.subr.mxu0 0.0
    %v1718 = vand.u32 %v56, 4294901760
    %v1719 = vsub.f32 %v56, %v1718
    %v1720 = vand.u32 %v1719, 4294901760
    %1721 = vmatpush1.msra.mxu0 %v1720
    %1722 = vmatprep.subr.mxu0 0.0
    %v1723 = vand.u32 %v55, 4294901760
    %v1724 = vsub.f32 %v55, %v1723
    %v1725 = vand.u32 %v1724, 4294901760
    %1726 = vmatpush1.msra.mxu0 %v1725
    %1727 = vmatprep.subr.mxu0 0.0
    %v1728 = vand.u32 %v86, 4294901760
    %v1729 = vsub.f32 %v86, %v1728
    %v1730 = vand.u32 %v1729, 4294901760
    %1731 = vmatpush2.msra.mxu0 %v1730
    %1732 = vmatprep.subr.mxu0 0.0
    %v1733 = vand.u32 %v85, 4294901760
    %v1734 = vsub.f32 %v85, %v1733
    %v1735 = vand.u32 %v1734, 4294901760
    %1736 = vmatpush2.msra.mxu0 %v1735
    %1737 = vmatprep.subr.mxu0 0.0
    %v1738 = vand.u32 %v84, 4294901760
    %v1739 = vsub.f32 %v84, %v1738
    %v1740 = vand.u32 %v1739, 4294901760
    %1741 = vmatpush2.msra.mxu0 %v1740
    %1742 = vmatprep.subr.mxu0 0.0
    %v1743 = vand.u32 %v83, 4294901760
    %v1744 = vsub.f32 %v83, %v1743
    %v1745 = vand.u32 %v1744, 4294901760
    %1746 = vmatpush2.msra.mxu0 %v1745
    %1747 = vmatprep.subr.mxu0 0.0
    %v1748 = vand.u32 %v82, 4294901760
    %v1749 = vsub.f32 %v82, %v1748
    %v1750 = vand.u32 %v1749, 4294901760
    %1751 = vmatpush2.msra.mxu0 %v1750
    %1752 = vmatprep.subr.mxu0 0.0
    %v1753 = vand.u32 %v81, 4294901760
    %v1754 = vsub.f32 %v81, %v1753
    %v1755 = vand.u32 %v1754, 4294901760
    %1756 = vmatpush2.msra.mxu0 %v1755
    %1757 = vmatprep.subr.mxu0 0.0
    %v1758 = vand.u32 %v80, 4294901760
    %v1759 = vsub.f32 %v80, %v1758
    %v1760 = vand.u32 %v1759, 4294901760
    %1761 = vmatpush2.msra.mxu0 %v1760
    %1762 = vmatprep.subr.mxu0 0.0
    %v1763 = vand.u32 %v79, 4294901760
    %v1764 = vsub.f32 %v79, %v1763
    %v1765 = vand.u32 %v1764, 4294901760
    %1766 = vmatpush2.msra.mxu0 %v1765
    %1767 = vmatprep.subr.mxu0 0.0
    %v1768 = vand.u32 %v78, 4294901760
    %v1769 = vsub.f32 %v78, %v1768
    %v1770 = vand.u32 %v1769, 4294901760
    %1771 = vmatpush2.msra.mxu0 %v1770
    %1772 = vmatprep.subr.mxu0 0.0
    %v1773 = vand.u32 %v77, 4294901760
    %v1774 = vsub.f32 %v77, %v1773
    %v1775 = vand.u32 %v1774, 4294901760
    %1776 = vmatpush2.msra.mxu0 %v1775
    %1777 = vmatprep.subr.mxu0 0.0
    %v1778 = vand.u32 %v76, 4294901760
    %v1779 = vsub.f32 %v76, %v1778
    %v1780 = vand.u32 %v1779, 4294901760
    %1781 = vmatpush2.msra.mxu0 %v1780
    %1782 = vmatprep.subr.mxu0 0.0
    %v1783 = vand.u32 %v75, 4294901760
    %v1784 = vsub.f32 %v75, %v1783
    %v1785 = vand.u32 %v1784, 4294901760
    %1786 = vmatpush2.msra.mxu0 %v1785
    %1787 = vmatprep.subr.mxu0 0.0
    %v1788 = vand.u32 %v74, 4294901760
    %v1789 = vsub.f32 %v74, %v1788
    %v1790 = vand.u32 %v1789, 4294901760
    %1791 = vmatpush2.msra.mxu0 %v1790
    %1792 = vmatprep.subr.mxu0 0.0
    %v1793 = vand.u32 %v73, 4294901760
    %v1794 = vsub.f32 %v73, %v1793
    %v1795 = vand.u32 %v1794, 4294901760
    %1796 = vmatpush2.msra.mxu0 %v1795
    %1797 = vmatprep.subr.mxu0 0.0
    %v1798 = vand.u32 %v72, 4294901760
    %v1799 = vsub.f32 %v72, %v1798
    %v1800 = vand.u32 %v1799, 4294901760
    %1801 = vmatpush2.msra.mxu0 %v1800
    %1802 = vmatprep.subr.mxu0 0.0
    %v1803 = vand.u32 %v71, 4294901760
    %v1804 = vsub.f32 %v71, %v1803
    %v1805 = vand.u32 %v1804, 4294901760
    %1806 = vmatpush2.msra.mxu0 %v1805
    %v1807 = vand.u32 %v169, 4294901760
    %1808 = vmatprep.mubr.f32.mxu0 %v1807
    %v1809 = vand.u32 %v167, 4294901760
    %1810 = vmatmul.mubr.f32.gmra.mxu0 %v1809
    %v1811 = vpop.f32.mrf.mxu0
    %v1812 = vadd.f32 %v1644, %v1811
    %v1813 = vpop.f32.mrf.mxu0
    %1814 = vdwg.mxu0
    %1815 = vmatprep.subr.mxu0 0.0
    %v1816 = vand.u32 %v70, 4294901760
    %1817 = vmatpush1.msra.mxu0 %v1816
    %1818 = vmatprep.subr.mxu0 0.0
    %v1819 = vand.u32 %v69, 4294901760
    %1820 = vmatpush1.msra.mxu0 %v1819
    %1821 = vmatprep.subr.mxu0 0.0
    %v1822 = vand.u32 %v68, 4294901760
    %1823 = vmatpush1.msra.mxu0 %v1822
    %1824 = vmatprep.subr.mxu0 0.0
    %v1825 = vand.u32 %v67, 4294901760
    %1826 = vmatpush1.msra.mxu0 %v1825
    %1827 = vmatprep.subr.mxu0 0.0
    %v1828 = vand.u32 %v66, 4294901760
    %1829 = vmatpush1.msra.mxu0 %v1828
    %1830 = vmatprep.subr.mxu0 0.0
    %v1831 = vand.u32 %v65, 4294901760
    %1832 = vmatpush1.msra.mxu0 %v1831
    %1833 = vmatprep.subr.mxu0 0.0
    %v1834 = vand.u32 %v64, 4294901760
    %1835 = vmatpush1.msra.mxu0 %v1834
    %1836 = vmatprep.subr.mxu0 0.0
    %v1837 = vand.u32 %v63, 4294901760
    %1838 = vmatpush1.msra.mxu0 %v1837
    %1839 = vmatprep.subr.mxu0 0.0
    %v1840 = vand.u32 %v62, 4294901760
    %1841 = vmatpush1.msra.mxu0 %v1840
    %1842 = vmatprep.subr.mxu0 0.0
    %v1843 = vand.u32 %v61, 4294901760
    %1844 = vmatpush1.msra.mxu0 %v1843
    %1845 = vmatprep.subr.mxu0 0.0
    %v1846 = vand.u32 %v60, 4294901760
    %1847 = vmatpush1.msra.mxu0 %v1846
    %1848 = vmatprep.subr.mxu0 0.0
    %v1849 = vand.u32 %v59, 4294901760
    %1850 = vmatpush1.msra.mxu0 %v1849
    %1851 = vmatprep.subr.mxu0 0.0
    %v1852 = vand.u32 %v58, 4294901760
    %1853 = vmatpush1.msra.mxu0 %v1852
    %1854 = vmatprep.subr.mxu0 0.0
    %v1855 = vand.u32 %v57, 4294901760
    %1856 = vmatpush1.msra.mxu0 %v1855
    %1857 = vmatprep.subr.mxu0 0.0
    %v1858 = vand.u32 %v56, 4294901760
    %1859 = vmatpush1.msra.mxu0 %v1858
    %1860 = vmatprep.subr.mxu0 0.0
    %v1861 = vand.u32 %v55, 4294901760
    %1862 = vmatpush1.msra.mxu0 %v1861
    %1863 = vmatprep.subr.mxu0 0.0
    %v1864 = vand.u32 %v86, 4294901760
    %1865 = vmatpush2.msra.mxu0 %v1864
    %1866 = vmatprep.subr.mxu0 0.0
    %v1867 = vand.u32 %v85, 4294901760
    %1868 = vmatpush2.msra.mxu0 %v1867
    %1869 = vmatprep.subr.mxu0 0.0
    %v1870 = vand.u32 %v84, 4294901760
    %1871 = vmatpush2.msra.mxu0 %v1870
    %1872 = vmatprep.subr.mxu0 0.0
    %v1873 = vand.u32 %v83, 4294901760
    %1874 = vmatpush2.msra.mxu0 %v1873
    %1875 = vmatprep.subr.mxu0 0.0
    %v1876 = vand.u32 %v82, 4294901760
    %1877 = vmatpush2.msra.mxu0 %v1876
    %1878 = vmatprep.subr.mxu0 0.0
    %v1879 = vand.u32 %v81, 4294901760
    %1880 = vmatpush2.msra.mxu0 %v1879
    %1881 = vmatprep.subr.mxu0 0.0
    %v1882 = vand.u32 %v80, 4294901760
    %1883 = vmatpush2.msra.mxu0 %v1882
    %1884 = vmatprep.subr.mxu0 0.0
    %v1885 = vand.u32 %v79, 4294901760
    %1886 = vmatpush2.msra.mxu0 %v1885
    %1887 = vmatprep.subr.mxu0 0.0
    %v1888 = vand.u32 %v78, 4294901760
    %1889 = vmatpush2.msra.mxu0 %v1888
    %1890 = vmatprep.subr.mxu0 0.0
    %v1891 = vand.u32 %v77, 4294901760
    %1892 = vmatpush2.msra.mxu0 %v1891
    %1893 = vmatprep.subr.mxu0 0.0
    %v1894 = vand.u32 %v76, 4294901760
    %1895 = vmatpush2.msra.mxu0 %v1894
    %1896 = vmatprep.subr.mxu0 0.0
    %v1897 = vand.u32 %v75, 4294901760
    %1898 = vmatpush2.msra.mxu0 %v1897
    %1899 = vmatprep.subr.mxu0 0.0
    %v1900 = vand.u32 %v74, 4294901760
    %1901 = vmatpush2.msra.mxu0 %v1900
    %1902 = vmatprep.subr.mxu0 0.0
    %v1903 = vand.u32 %v73, 4294901760
    %1904 = vmatpush2.msra.mxu0 %v1903
    %1905 = vmatprep.subr.mxu0 0.0
    %v1906 = vand.u32 %v72, 4294901760
    %1907 = vmatpush2.msra.mxu0 %v1906
    %1908 = vmatprep.subr.mxu0 0.0
    %v1909 = vand.u32 %v71, 4294901760
    %1910 = vmatpush2.msra.mxu0 %v1909
    %v1911 = vand.u32 %v169, 4294901760
    %1912 = vmatprep.mubr.f32.mxu0 %v1911
    %v1913 = vand.u32 %v167, 4294901760
    %1914 = vmatmul.mubr.f32.gmra.mxu0 %v1913
    %v1915 = vpop.f32.mrf.mxu0
    %v1916 = vadd.f32 %v1812, %v1915
    %v1917 = vpop.f32.mrf.mxu0
    %1918 = vdwg.mxu0
    %1919 = vmatprep.subr.mxu0 0.0
    %v1920 = vand.u32 %v102, 4294901760
    %1921 = vmatpush1.msra.mxu0 %v1920
    %1922 = vmatprep.subr.mxu0 0.0
    %v1923 = vand.u32 %v101, 4294901760
    %1924 = vmatpush1.msra.mxu0 %v1923
    %1925 = vmatprep.subr.mxu0 0.0
    %v1926 = vand.u32 %v100, 4294901760
    %1927 = vmatpush1.msra.mxu0 %v1926
    %1928 = vmatprep.subr.mxu0 0.0
    %v1929 = vand.u32 %v99, 4294901760
    %1930 = vmatpush1.msra.mxu0 %v1929
    %1931 = vmatprep.subr.mxu0 0.0
    %v1932 = vand.u32 %v98, 4294901760
    %1933 = vmatpush1.msra.mxu0 %v1932
    %1934 = vmatprep.subr.mxu0 0.0
    %v1935 = vand.u32 %v97, 4294901760
    %1936 = vmatpush1.msra.mxu0 %v1935
    %1937 = vmatprep.subr.mxu0 0.0
    %v1938 = vand.u32 %v96, 4294901760
    %1939 = vmatpush1.msra.mxu0 %v1938
    %1940 = vmatprep.subr.mxu0 0.0
    %v1941 = vand.u32 %v95, 4294901760
    %1942 = vmatpush1.msra.mxu0 %v1941
    %1943 = vmatprep.subr.mxu0 0.0
    %v1944 = vand.u32 %v94, 4294901760
    %1945 = vmatpush1.msra.mxu0 %v1944
    %1946 = vmatprep.subr.mxu0 0.0
    %v1947 = vand.u32 %v93, 4294901760
    %1948 = vmatpush1.msra.mxu0 %v1947
    %1949 = vmatprep.subr.mxu0 0.0
    %v1950 = vand.u32 %v92, 4294901760
    %1951 = vmatpush1.msra.mxu0 %v1950
    %1952 = vmatprep.subr.mxu0 0.0
    %v1953 = vand.u32 %v91, 4294901760
    %1954 = vmatpush1.msra.mxu0 %v1953
    %1955 = vmatprep.subr.mxu0 0.0
    %v1956 = vand.u32 %v90, 4294901760
    %1957 = vmatpush1.msra.mxu0 %v1956
    %1958 = vmatprep.subr.mxu0 0.0
    %v1959 = vand.u32 %v89, 4294901760
    %1960 = vmatpush1.msra.mxu0 %v1959
    %1961 = vmatprep.subr.mxu0 0.0
    %v1962 = vand.u32 %v88, 4294901760
    %1963 = vmatpush1.msra.mxu0 %v1962
    %1964 = vmatprep.subr.mxu0 0.0
    %v1965 = vand.u32 %v87, 4294901760
    %1966 = vmatpush1.msra.mxu0 %v1965
    %1967 = vmatprep.subr.mxu0 0.0
    %v1968 = vand.u32 %v118, 4294901760
    %1969 = vmatpush2.msra.mxu0 %v1968
    %1970 = vmatprep.subr.mxu0 0.0
    %v1971 = vand.u32 %v117, 4294901760
    %1972 = vmatpush2.msra.mxu0 %v1971
    %1973 = vmatprep.subr.mxu0 0.0
    %v1974 = vand.u32 %v116, 4294901760
    %1975 = vmatpush2.msra.mxu0 %v1974
    %1976 = vmatprep.subr.mxu0 0.0
    %v1977 = vand.u32 %v115, 4294901760
    %1978 = vmatpush2.msra.mxu0 %v1977
    %1979 = vmatprep.subr.mxu0 0.0
    %v1980 = vand.u32 %v114, 4294901760
    %1981 = vmatpush2.msra.mxu0 %v1980
    %1982 = vmatprep.subr.mxu0 0.0
    %v1983 = vand.u32 %v113, 4294901760
    %1984 = vmatpush2.msra.mxu0 %v1983
    %1985 = vmatprep.subr.mxu0 0.0
    %v1986 = vand.u32 %v112, 4294901760
    %1987 = vmatpush2.msra.mxu0 %v1986
    %1988 = vmatprep.subr.mxu0 0.0
    %v1989 = vand.u32 %v111, 4294901760
    %1990 = vmatpush2.msra.mxu0 %v1989
    %1991 = vmatprep.subr.mxu0 0.0
    %v1992 = vand.u32 %v110, 4294901760
    %1993 = vmatpush2.msra.mxu0 %v1992
    %1994 = vmatprep.subr.mxu0 0.0
    %v1995 = vand.u32 %v109, 4294901760
    %1996 = vmatpush2.msra.mxu0 %v1995
    %1997 = vmatprep.subr.mxu0 0.0
    %v1998 = vand.u32 %v108, 4294901760
    %1999 = vmatpush2.msra.mxu0 %v1998
    %2000 = vmatprep.subr.mxu0 0.0
    %v2001 = vand.u32 %v107, 4294901760
    %2002 = vmatpush2.msra.mxu0 %v2001
    %2003 = vmatprep.subr.mxu0 0.0
    %v2004 = vand.u32 %v106, 4294901760
    %2005 = vmatpush2.msra.mxu0 %v2004
    %2006 = vmatprep.subr.mxu0 0.0
    %v2007 = vand.u32 %v105, 4294901760
    %2008 = vmatpush2.msra.mxu0 %v2007
    %2009 = vmatprep.subr.mxu0 0.0
    %v2010 = vand.u32 %v104, 4294901760
    %2011 = vmatpush2.msra.mxu0 %v2010
    %2012 = vmatprep.subr.mxu0 0.0
    %v2013 = vand.u32 %v103, 4294901760
    %2014 = vmatpush2.msra.mxu0 %v2013
    %v2015 = vand.u32 %v185, 4294901760
    %v2016 = vsub.f32 %v185, %v2015
    %v2017 = vand.u32 %v2016, 4294901760
    %v2018 = vsub.f32 %v2016, %v2017
    %v2019 = vand.u32 %v2018, 4294901760
    %2020 = vmatprep.mubr.f32.mxu0 %v2019
    %v2021 = vand.u32 %v177, 4294901760
    %v2022 = vsub.f32 %v177, %v2021
    %v2023 = vand.u32 %v2022, 4294901760
    %v2024 = vsub.f32 %v2022, %v2023
    %v2025 = vand.u32 %v2024, 4294901760
    %2026 = vmatmul.mubr.f32.gmra.mxu0 %v2025
    %v2027 = vpop.f32.mrf.mxu0
    %v2028 = vadd.f32 %v1916, %v2027
    %v2029 = vpop.f32.mrf.mxu0
    %2030 = vdwg.mxu0
    %2031 = vmatprep.subr.mxu0 0.0
    %v2032 = vand.u32 %v102, 4294901760
    %v2033 = vsub.f32 %v102, %v2032
    %v2034 = vand.u32 %v2033, 4294901760
    %v2035 = vsub.f32 %v2033, %v2034
    %v2036 = vand.u32 %v2035, 4294901760
    %2037 = vmatpush1.msra.mxu0 %v2036
    %2038 = vmatprep.subr.mxu0 0.0
    %v2039 = vand.u32 %v101, 4294901760
    %v2040 = vsub.f32 %v101, %v2039
    %v2041 = vand.u32 %v2040, 4294901760
    %v2042 = vsub.f32 %v2040, %v2041
    %v2043 = vand.u32 %v2042, 4294901760
    %2044 = vmatpush1.msra.mxu0 %v2043
    %2045 = vmatprep.subr.mxu0 0.0
    %v2046 = vand.u32 %v100, 4294901760
    %v2047 = vsub.f32 %v100, %v2046
    %v2048 = vand.u32 %v2047, 4294901760
    %v2049 = vsub.f32 %v2047, %v2048
    %v2050 = vand.u32 %v2049, 4294901760
    %2051 = vmatpush1.msra.mxu0 %v2050
    %2052 = vmatprep.subr.mxu0 0.0
    %v2053 = vand.u32 %v99, 4294901760
    %v2054 = vsub.f32 %v99, %v2053
    %v2055 = vand.u32 %v2054, 4294901760
    %v2056 = vsub.f32 %v2054, %v2055
    %v2057 = vand.u32 %v2056, 4294901760
    %2058 = vmatpush1.msra.mxu0 %v2057
    %2059 = vmatprep.subr.mxu0 0.0
    %v2060 = vand.u32 %v98, 4294901760
    %v2061 = vsub.f32 %v98, %v2060
    %v2062 = vand.u32 %v2061, 4294901760
    %v2063 = vsub.f32 %v2061, %v2062
    %v2064 = vand.u32 %v2063, 4294901760
    %2065 = vmatpush1.msra.mxu0 %v2064
    %2066 = vmatprep.subr.mxu0 0.0
    %v2067 = vand.u32 %v97, 4294901760
    %v2068 = vsub.f32 %v97, %v2067
    %v2069 = vand.u32 %v2068, 4294901760
    %v2070 = vsub.f32 %v2068, %v2069
    %v2071 = vand.u32 %v2070, 4294901760
    %2072 = vmatpush1.msra.mxu0 %v2071
    %2073 = vmatprep.subr.mxu0 0.0
    %v2074 = vand.u32 %v96, 4294901760
    %v2075 = vsub.f32 %v96, %v2074
    %v2076 = vand.u32 %v2075, 4294901760
    %v2077 = vsub.f32 %v2075, %v2076
    %v2078 = vand.u32 %v2077, 4294901760
    %2079 = vmatpush1.msra.mxu0 %v2078
    %2080 = vmatprep.subr.mxu0 0.0
    %v2081 = vand.u32 %v95, 4294901760
    %v2082 = vsub.f32 %v95, %v2081
    %v2083 = vand.u32 %v2082, 4294901760
    %v2084 = vsub.f32 %v2082, %v2083
    %v2085 = vand.u32 %v2084, 4294901760
    %2086 = vmatpush1.msra.mxu0 %v2085
    %2087 = vmatprep.subr.mxu0 0.0
    %v2088 = vand.u32 %v94, 4294901760
    %v2089 = vsub.f32 %v94, %v2088
    %v2090 = vand.u32 %v2089, 4294901760
    %v2091 = vsub.f32 %v2089, %v2090
    %v2092 = vand.u32 %v2091, 4294901760
    %2093 = vmatpush1.msra.mxu0 %v2092
    %2094 = vmatprep.subr.mxu0 0.0
    %v2095 = vand.u32 %v93, 4294901760
    %v2096 = vsub.f32 %v93, %v2095
    %v2097 = vand.u32 %v2096, 4294901760
    %v2098 = vsub.f32 %v2096, %v2097
    %v2099 = vand.u32 %v2098, 4294901760
    %2100 = vmatpush1.msra.mxu0 %v2099
    %2101 = vmatprep.subr.mxu0 0.0
    %v2102 = vand.u32 %v92, 4294901760
    %v2103 = vsub.f32 %v92, %v2102
    %v2104 = vand.u32 %v2103, 4294901760
    %v2105 = vsub.f32 %v2103, %v2104
    %v2106 = vand.u32 %v2105, 4294901760
    %2107 = vmatpush1.msra.mxu0 %v2106
    %2108 = vmatprep.subr.mxu0 0.0
    %v2109 = vand.u32 %v91, 4294901760
    %v2110 = vsub.f32 %v91, %v2109
    %v2111 = vand.u32 %v2110, 4294901760
    %v2112 = vsub.f32 %v2110, %v2111
    %v2113 = vand.u32 %v2112, 4294901760
    %2114 = vmatpush1.msra.mxu0 %v2113
    %2115 = vmatprep.subr.mxu0 0.0
    %v2116 = vand.u32 %v90, 4294901760
    %v2117 = vsub.f32 %v90, %v2116
    %v2118 = vand.u32 %v2117, 4294901760
    %v2119 = vsub.f32 %v2117, %v2118
    %v2120 = vand.u32 %v2119, 4294901760
    %2121 = vmatpush1.msra.mxu0 %v2120
    %2122 = vmatprep.subr.mxu0 0.0
    %v2123 = vand.u32 %v89, 4294901760
    %v2124 = vsub.f32 %v89, %v2123
    %v2125 = vand.u32 %v2124, 4294901760
    %v2126 = vsub.f32 %v2124, %v2125
    %v2127 = vand.u32 %v2126, 4294901760
    %2128 = vmatpush1.msra.mxu0 %v2127
    %2129 = vmatprep.subr.mxu0 0.0
    %v2130 = vand.u32 %v88, 4294901760
    %v2131 = vsub.f32 %v88, %v2130
    %v2132 = vand.u32 %v2131, 4294901760
    %v2133 = vsub.f32 %v2131, %v2132
    %v2134 = vand.u32 %v2133, 4294901760
    %2135 = vmatpush1.msra.mxu0 %v2134
    %2136 = vmatprep.subr.mxu0 0.0
    %v2137 = vand.u32 %v87, 4294901760
    %v2138 = vsub.f32 %v87, %v2137
    %v2139 = vand.u32 %v2138, 4294901760
    %v2140 = vsub.f32 %v2138, %v2139
    %v2141 = vand.u32 %v2140, 4294901760
    %2142 = vmatpush1.msra.mxu0 %v2141
    %2143 = vmatprep.subr.mxu0 0.0
    %v2144 = vand.u32 %v118, 4294901760
    %v2145 = vsub.f32 %v118, %v2144
    %v2146 = vand.u32 %v2145, 4294901760
    %v2147 = vsub.f32 %v2145, %v2146
    %v2148 = vand.u32 %v2147, 4294901760
    %2149 = vmatpush2.msra.mxu0 %v2148
    %2150 = vmatprep.subr.mxu0 0.0
    %v2151 = vand.u32 %v117, 4294901760
    %v2152 = vsub.f32 %v117, %v2151
    %v2153 = vand.u32 %v2152, 4294901760
    %v2154 = vsub.f32 %v2152, %v2153
    %v2155 = vand.u32 %v2154, 4294901760
    %2156 = vmatpush2.msra.mxu0 %v2155
    %2157 = vmatprep.subr.mxu0 0.0
    %v2158 = vand.u32 %v116, 4294901760
    %v2159 = vsub.f32 %v116, %v2158
    %v2160 = vand.u32 %v2159, 4294901760
    %v2161 = vsub.f32 %v2159, %v2160
    %v2162 = vand.u32 %v2161, 4294901760
    %2163 = vmatpush2.msra.mxu0 %v2162
    %2164 = vmatprep.subr.mxu0 0.0
    %v2165 = vand.u32 %v115, 4294901760
    %v2166 = vsub.f32 %v115, %v2165
    %v2167 = vand.u32 %v2166, 4294901760
    %v2168 = vsub.f32 %v2166, %v2167
    %v2169 = vand.u32 %v2168, 4294901760
    %2170 = vmatpush2.msra.mxu0 %v2169
    %2171 = vmatprep.subr.mxu0 0.0
    %v2172 = vand.u32 %v114, 4294901760
    %v2173 = vsub.f32 %v114, %v2172
    %v2174 = vand.u32 %v2173, 4294901760
    %v2175 = vsub.f32 %v2173, %v2174
    %v2176 = vand.u32 %v2175, 4294901760
    %2177 = vmatpush2.msra.mxu0 %v2176
    %2178 = vmatprep.subr.mxu0 0.0
    %v2179 = vand.u32 %v113, 4294901760
    %v2180 = vsub.f32 %v113, %v2179
    %v2181 = vand.u32 %v2180, 4294901760
    %v2182 = vsub.f32 %v2180, %v2181
    %v2183 = vand.u32 %v2182, 4294901760
    %2184 = vmatpush2.msra.mxu0 %v2183
    %2185 = vmatprep.subr.mxu0 0.0
    %v2186 = vand.u32 %v112, 4294901760
    %v2187 = vsub.f32 %v112, %v2186
    %v2188 = vand.u32 %v2187, 4294901760
    %v2189 = vsub.f32 %v2187, %v2188
    %v2190 = vand.u32 %v2189, 4294901760
    %2191 = vmatpush2.msra.mxu0 %v2190
    %2192 = vmatprep.subr.mxu0 0.0
    %v2193 = vand.u32 %v111, 4294901760
    %v2194 = vsub.f32 %v111, %v2193
    %v2195 = vand.u32 %v2194, 4294901760
    %v2196 = vsub.f32 %v2194, %v2195
    %v2197 = vand.u32 %v2196, 4294901760
    %2198 = vmatpush2.msra.mxu0 %v2197
    %2199 = vmatprep.subr.mxu0 0.0
    %v2200 = vand.u32 %v110, 4294901760
    %v2201 = vsub.f32 %v110, %v2200
    %v2202 = vand.u32 %v2201, 4294901760
    %v2203 = vsub.f32 %v2201, %v2202
    %v2204 = vand.u32 %v2203, 4294901760
    %2205 = vmatpush2.msra.mxu0 %v2204
    %2206 = vmatprep.subr.mxu0 0.0
    %v2207 = vand.u32 %v109, 4294901760
    %v2208 = vsub.f32 %v109, %v2207
    %v2209 = vand.u32 %v2208, 4294901760
    %v2210 = vsub.f32 %v2208, %v2209
    %v2211 = vand.u32 %v2210, 4294901760
    %2212 = vmatpush2.msra.mxu0 %v2211
    %2213 = vmatprep.subr.mxu0 0.0
    %v2214 = vand.u32 %v108, 4294901760
    %v2215 = vsub.f32 %v108, %v2214
    %v2216 = vand.u32 %v2215, 4294901760
    %v2217 = vsub.f32 %v2215, %v2216
    %v2218 = vand.u32 %v2217, 4294901760
    %2219 = vmatpush2.msra.mxu0 %v2218
    %2220 = vmatprep.subr.mxu0 0.0
    %v2221 = vand.u32 %v107, 4294901760
    %v2222 = vsub.f32 %v107, %v2221
    %v2223 = vand.u32 %v2222, 4294901760
    %v2224 = vsub.f32 %v2222, %v2223
    %v2225 = vand.u32 %v2224, 4294901760
    %2226 = vmatpush2.msra.mxu0 %v2225
    %2227 = vmatprep.subr.mxu0 0.0
    %v2228 = vand.u32 %v106, 4294901760
    %v2229 = vsub.f32 %v106, %v2228
    %v2230 = vand.u32 %v2229, 4294901760
    %v2231 = vsub.f32 %v2229, %v2230
    %v2232 = vand.u32 %v2231, 4294901760
    %2233 = vmatpush2.msra.mxu0 %v2232
    %2234 = vmatprep.subr.mxu0 0.0
    %v2235 = vand.u32 %v105, 4294901760
    %v2236 = vsub.f32 %v105, %v2235
    %v2237 = vand.u32 %v2236, 4294901760
    %v2238 = vsub.f32 %v2236, %v2237
    %v2239 = vand.u32 %v2238, 4294901760
    %2240 = vmatpush2.msra.mxu0 %v2239
    %2241 = vmatprep.subr.mxu0 0.0
    %v2242 = vand.u32 %v104, 4294901760
    %v2243 = vsub.f32 %v104, %v2242
    %v2244 = vand.u32 %v2243, 4294901760
    %v2245 = vsub.f32 %v2243, %v2244
    %v2246 = vand.u32 %v2245, 4294901760
    %2247 = vmatpush2.msra.mxu0 %v2246
    %2248 = vmatprep.subr.mxu0 0.0
    %v2249 = vand.u32 %v103, 4294901760
    %v2250 = vsub.f32 %v103, %v2249
    %v2251 = vand.u32 %v2250, 4294901760
    %v2252 = vsub.f32 %v2250, %v2251
    %v2253 = vand.u32 %v2252, 4294901760
    %2254 = vmatpush2.msra.mxu0 %v2253
    %v2255 = vand.u32 %v185, 4294901760
    %2256 = vmatprep.mubr.f32.mxu0 %v2255
    %v2257 = vand.u32 %v177, 4294901760
    %2258 = vmatmul.mubr.f32.gmra.mxu0 %v2257
    %v2259 = vpop.f32.mrf.mxu0
    %v2260 = vadd.f32 %v2028, %v2259
    %v2261 = vpop.f32.mrf.mxu0
    %2262 = vdwg.mxu0
    %2263 = vmatprep.subr.mxu0 0.0
    %v2264 = vand.u32 %v102, 4294901760
    %v2265 = vsub.f32 %v102, %v2264
    %2266 = vmatpush1.msra.mxu0 %v2265
    %2267 = vmatprep.subr.mxu0 0.0
    %v2268 = vand.u32 %v101, 4294901760
    %v2269 = vsub.f32 %v101, %v2268
    %2270 = vmatpush1.msra.mxu0 %v2269
    %2271 = vmatprep.subr.mxu0 0.0
    %v2272 = vand.u32 %v100, 4294901760
    %v2273 = vsub.f32 %v100, %v2272
    %2274 = vmatpush1.msra.mxu0 %v2273
    %2275 = vmatprep.subr.mxu0 0.0
    %v2276 = vand.u32 %v99, 4294901760
    %v2277 = vsub.f32 %v99, %v2276
    %2278 = vmatpush1.msra.mxu0 %v2277
    %2279 = vmatprep.subr.mxu0 0.0
    %v2280 = vand.u32 %v98, 4294901760
    %v2281 = vsub.f32 %v98, %v2280
    %2282 = vmatpush1.msra.mxu0 %v2281
    %2283 = vmatprep.subr.mxu0 0.0
    %v2284 = vand.u32 %v97, 4294901760
    %v2285 = vsub.f32 %v97, %v2284
    %2286 = vmatpush1.msra.mxu0 %v2285
    %2287 = vmatprep.subr.mxu0 0.0
    %v2288 = vand.u32 %v96, 4294901760
    %v2289 = vsub.f32 %v96, %v2288
    %2290 = vmatpush1.msra.mxu0 %v2289
    %2291 = vmatprep.subr.mxu0 0.0
    %v2292 = vand.u32 %v95, 4294901760
    %v2293 = vsub.f32 %v95, %v2292
    %2294 = vmatpush1.msra.mxu0 %v2293
    %2295 = vmatprep.subr.mxu0 0.0
    %v2296 = vand.u32 %v94, 4294901760
    %v2297 = vsub.f32 %v94, %v2296
    %2298 = vmatpush1.msra.mxu0 %v2297
    %2299 = vmatprep.subr.mxu0 0.0
    %v2300 = vand.u32 %v93, 4294901760
    %v2301 = vsub.f32 %v93, %v2300
    %2302 = vmatpush1.msra.mxu0 %v2301
    %2303 = vmatprep.subr.mxu0 0.0
    %v2304 = vand.u32 %v92, 4294901760
    %v2305 = vsub.f32 %v92, %v2304
    %2306 = vmatpush1.msra.mxu0 %v2305
    %2307 = vmatprep.subr.mxu0 0.0
    %v2308 = vand.u32 %v91, 4294901760
    %v2309 = vsub.f32 %v91, %v2308
    %2310 = vmatpush1.msra.mxu0 %v2309
    %2311 = vmatprep.subr.mxu0 0.0
    %v2312 = vand.u32 %v90, 4294901760
    %v2313 = vsub.f32 %v90, %v2312
    %2314 = vmatpush1.msra.mxu0 %v2313
    %2315 = vmatprep.subr.mxu0 0.0
    %v2316 = vand.u32 %v89, 4294901760
    %v2317 = vsub.f32 %v89, %v2316
    %2318 = vmatpush1.msra.mxu0 %v2317
    %2319 = vmatprep.subr.mxu0 0.0
    %v2320 = vand.u32 %v88, 4294901760
    %v2321 = vsub.f32 %v88, %v2320
    %2322 = vmatpush1.msra.mxu0 %v2321
    %2323 = vmatprep.subr.mxu0 0.0
    %v2324 = vand.u32 %v87, 4294901760
    %v2325 = vsub.f32 %v87, %v2324
    %2326 = vmatpush1.msra.mxu0 %v2325
    %2327 = vmatprep.subr.mxu0 0.0
    %v2328 = vand.u32 %v118, 4294901760
    %v2329 = vsub.f32 %v118, %v2328
    %2330 = vmatpush2.msra.mxu0 %v2329
    %2331 = vmatprep.subr.mxu0 0.0
    %v2332 = vand.u32 %v117, 4294901760
    %v2333 = vsub.f32 %v117, %v2332
    %2334 = vmatpush2.msra.mxu0 %v2333
    %2335 = vmatprep.subr.mxu0 0.0
    %v2336 = vand.u32 %v116, 4294901760
    %v2337 = vsub.f32 %v116, %v2336
    %2338 = vmatpush2.msra.mxu0 %v2337
    %2339 = vmatprep.subr.mxu0 0.0
    %v2340 = vand.u32 %v115, 4294901760
    %v2341 = vsub.f32 %v115, %v2340
    %2342 = vmatpush2.msra.mxu0 %v2341
    %2343 = vmatprep.subr.mxu0 0.0
    %v2344 = vand.u32 %v114, 4294901760
    %v2345 = vsub.f32 %v114, %v2344
    %2346 = vmatpush2.msra.mxu0 %v2345
    %2347 = vmatprep.subr.mxu0 0.0
    %v2348 = vand.u32 %v113, 4294901760
    %v2349 = vsub.f32 %v113, %v2348
    %2350 = vmatpush2.msra.mxu0 %v2349
    %2351 = vmatprep.subr.mxu0 0.0
    %v2352 = vand.u32 %v112, 4294901760
    %v2353 = vsub.f32 %v112, %v2352
    %2354 = vmatpush2.msra.mxu0 %v2353
    %2355 = vmatprep.subr.mxu0 0.0
    %v2356 = vand.u32 %v111, 4294901760
    %v2357 = vsub.f32 %v111, %v2356
    %2358 = vmatpush2.msra.mxu0 %v2357
    %2359 = vmatprep.subr.mxu0 0.0
    %v2360 = vand.u32 %v110, 4294901760
    %v2361 = vsub.f32 %v110, %v2360
    %2362 = vmatpush2.msra.mxu0 %v2361
    %2363 = vmatprep.subr.mxu0 0.0
    %v2364 = vand.u32 %v109, 4294901760
    %v2365 = vsub.f32 %v109, %v2364
    %2366 = vmatpush2.msra.mxu0 %v2365
    %2367 = vmatprep.subr.mxu0 0.0
    %v2368 = vand.u32 %v108, 4294901760
    %v2369 = vsub.f32 %v108, %v2368
    %2370 = vmatpush2.msra.mxu0 %v2369
    %2371 = vmatprep.subr.mxu0 0.0
    %v2372 = vand.u32 %v107, 4294901760
    %v2373 = vsub.f32 %v107, %v2372
    %2374 = vmatpush2.msra.mxu0 %v2373
    %2375 = vmatprep.subr.mxu0 0.0
    %v2376 = vand.u32 %v106, 4294901760
    %v2377 = vsub.f32 %v106, %v2376
    %2378 = vmatpush2.msra.mxu0 %v2377
    %2379 = vmatprep.subr.mxu0 0.0
    %v2380 = vand.u32 %v105, 4294901760
    %v2381 = vsub.f32 %v105, %v2380
    %2382 = vmatpush2.msra.mxu0 %v2381
    %2383 = vmatprep.subr.mxu0 0.0
    %v2384 = vand.u32 %v104, 4294901760
    %v2385 = vsub.f32 %v104, %v2384
    %2386 = vmatpush2.msra.mxu0 %v2385
    %2387 = vmatprep.subr.mxu0 0.0
    %v2388 = vand.u32 %v103, 4294901760
    %v2389 = vsub.f32 %v103, %v2388
    %2390 = vmatpush2.msra.mxu0 %v2389
    %v2391 = vand.u32 %v185, 4294901760
    %v2392 = vsub.f32 %v185, %v2391
    %2393 = vmatprep.mubr.f32.mxu0 %v2392
    %v2394 = vand.u32 %v177, 4294901760
    %v2395 = vsub.f32 %v177, %v2394
    %2396 = vmatmul.mubr.f32.gmra.mxu0 %v2395
    %v2397 = vpop.f32.mrf.mxu0
    %v2398 = vadd.f32 %v2260, %v2397
    %v2399 = vpop.f32.mrf.mxu0
    %2400 = vdwg.mxu0
    %2401 = vmatprep.subr.mxu0 0.0
    %v2402 = vand.u32 %v102, 4294901760
    %2403 = vmatpush1.msra.mxu0 %v2402
    %2404 = vmatprep.subr.mxu0 0.0
    %v2405 = vand.u32 %v101, 4294901760
    %2406 = vmatpush1.msra.mxu0 %v2405
    %2407 = vmatprep.subr.mxu0 0.0
    %v2408 = vand.u32 %v100, 4294901760
    %2409 = vmatpush1.msra.mxu0 %v2408
    %2410 = vmatprep.subr.mxu0 0.0
    %v2411 = vand.u32 %v99, 4294901760
    %2412 = vmatpush1.msra.mxu0 %v2411
    %2413 = vmatprep.subr.mxu0 0.0
    %v2414 = vand.u32 %v98, 4294901760
    %2415 = vmatpush1.msra.mxu0 %v2414
    %2416 = vmatprep.subr.mxu0 0.0
    %v2417 = vand.u32 %v97, 4294901760
    %2418 = vmatpush1.msra.mxu0 %v2417
    %2419 = vmatprep.subr.mxu0 0.0
    %v2420 = vand.u32 %v96, 4294901760
    %2421 = vmatpush1.msra.mxu0 %v2420
    %2422 = vmatprep.subr.mxu0 0.0
    %v2423 = vand.u32 %v95, 4294901760
    %2424 = vmatpush1.msra.mxu0 %v2423
    %2425 = vmatprep.subr.mxu0 0.0
    %v2426 = vand.u32 %v94, 4294901760
    %2427 = vmatpush1.msra.mxu0 %v2426
    %2428 = vmatprep.subr.mxu0 0.0
    %v2429 = vand.u32 %v93, 4294901760
    %2430 = vmatpush1.msra.mxu0 %v2429
    %2431 = vmatprep.subr.mxu0 0.0
    %v2432 = vand.u32 %v92, 4294901760
    %2433 = vmatpush1.msra.mxu0 %v2432
    %2434 = vmatprep.subr.mxu0 0.0
    %v2435 = vand.u32 %v91, 4294901760
    %2436 = vmatpush1.msra.mxu0 %v2435
    %2437 = vmatprep.subr.mxu0 0.0
    %v2438 = vand.u32 %v90, 4294901760
    %2439 = vmatpush1.msra.mxu0 %v2438
    %2440 = vmatprep.subr.mxu0 0.0
    %v2441 = vand.u32 %v89, 4294901760
    %2442 = vmatpush1.msra.mxu0 %v2441
    %2443 = vmatprep.subr.mxu0 0.0
    %v2444 = vand.u32 %v88, 4294901760
    %2445 = vmatpush1.msra.mxu0 %v2444
    %2446 = vmatprep.subr.mxu0 0.0
    %v2447 = vand.u32 %v87, 4294901760
    %2448 = vmatpush1.msra.mxu0 %v2447
    %2449 = vmatprep.subr.mxu0 0.0
    %v2450 = vand.u32 %v118, 4294901760
    %2451 = vmatpush2.msra.mxu0 %v2450
    %2452 = vmatprep.subr.mxu0 0.0
    %v2453 = vand.u32 %v117, 4294901760
    %2454 = vmatpush2.msra.mxu0 %v2453
    %2455 = vmatprep.subr.mxu0 0.0
    %v2456 = vand.u32 %v116, 4294901760
    %2457 = vmatpush2.msra.mxu0 %v2456
    %2458 = vmatprep.subr.mxu0 0.0
    %v2459 = vand.u32 %v115, 4294901760
    %2460 = vmatpush2.msra.mxu0 %v2459
    %2461 = vmatprep.subr.mxu0 0.0
    %v2462 = vand.u32 %v114, 4294901760
    %2463 = vmatpush2.msra.mxu0 %v2462
    %2464 = vmatprep.subr.mxu0 0.0
    %v2465 = vand.u32 %v113, 4294901760
    %2466 = vmatpush2.msra.mxu0 %v2465
    %2467 = vmatprep.subr.mxu0 0.0
    %v2468 = vand.u32 %v112, 4294901760
    %2469 = vmatpush2.msra.mxu0 %v2468
    %2470 = vmatprep.subr.mxu0 0.0
    %v2471 = vand.u32 %v111, 4294901760
    %2472 = vmatpush2.msra.mxu0 %v2471
    %2473 = vmatprep.subr.mxu0 0.0
    %v2474 = vand.u32 %v110, 4294901760
    %2475 = vmatpush2.msra.mxu0 %v2474
    %2476 = vmatprep.subr.mxu0 0.0
    %v2477 = vand.u32 %v109, 4294901760
    %2478 = vmatpush2.msra.mxu0 %v2477
    %2479 = vmatprep.subr.mxu0 0.0
    %v2480 = vand.u32 %v108, 4294901760
    %2481 = vmatpush2.msra.mxu0 %v2480
    %2482 = vmatprep.subr.mxu0 0.0
    %v2483 = vand.u32 %v107, 4294901760
    %2484 = vmatpush2.msra.mxu0 %v2483
    %2485 = vmatprep.subr.mxu0 0.0
    %v2486 = vand.u32 %v106, 4294901760
    %2487 = vmatpush2.msra.mxu0 %v2486
    %2488 = vmatprep.subr.mxu0 0.0
    %v2489 = vand.u32 %v105, 4294901760
    %2490 = vmatpush2.msra.mxu0 %v2489
    %2491 = vmatprep.subr.mxu0 0.0
    %v2492 = vand.u32 %v104, 4294901760
    %2493 = vmatpush2.msra.mxu0 %v2492
    %2494 = vmatprep.subr.mxu0 0.0
    %v2495 = vand.u32 %v103, 4294901760
    %2496 = vmatpush2.msra.mxu0 %v2495
    %v2497 = vand.u32 %v185, 4294901760
    %v2498 = vsub.f32 %v185, %v2497
    %v2499 = vand.u32 %v2498, 4294901760
    %2500 = vmatprep.mubr.f32.mxu0 %v2499
    %v2501 = vand.u32 %v177, 4294901760
    %v2502 = vsub.f32 %v177, %v2501
    %v2503 = vand.u32 %v2502, 4294901760
    %2504 = vmatmul.mubr.f32.gmra.mxu0 %v2503
    %v2505 = vpop.f32.mrf.mxu0
    %v2506 = vadd.f32 %v2398, %v2505
    %v2507 = vpop.f32.mrf.mxu0
    %2508 = vdwg.mxu0
    %2509 = vmatprep.subr.mxu0 0.0
    %v2510 = vand.u32 %v102, 4294901760
    %v2511 = vsub.f32 %v102, %v2510
    %v2512 = vand.u32 %v2511, 4294901760
    %2513 = vmatpush1.msra.mxu0 %v2512
    %2514 = vmatprep.subr.mxu0 0.0
    %v2515 = vand.u32 %v101, 4294901760
    %v2516 = vsub.f32 %v101, %v2515
    %v2517 = vand.u32 %v2516, 4294901760
    %2518 = vmatpush1.msra.mxu0 %v2517
    %2519 = vmatprep.subr.mxu0 0.0
    %v2520 = vand.u32 %v100, 4294901760
    %v2521 = vsub.f32 %v100, %v2520
    %v2522 = vand.u32 %v2521, 4294901760
    %2523 = vmatpush1.msra.mxu0 %v2522
    %2524 = vmatprep.subr.mxu0 0.0
    %v2525 = vand.u32 %v99, 4294901760
    %v2526 = vsub.f32 %v99, %v2525
    %v2527 = vand.u32 %v2526, 4294901760
    %2528 = vmatpush1.msra.mxu0 %v2527
    %2529 = vmatprep.subr.mxu0 0.0
    %v2530 = vand.u32 %v98, 4294901760
    %v2531 = vsub.f32 %v98, %v2530
    %v2532 = vand.u32 %v2531, 4294901760
    %2533 = vmatpush1.msra.mxu0 %v2532
    %2534 = vmatprep.subr.mxu0 0.0
    %v2535 = vand.u32 %v97, 4294901760
    %v2536 = vsub.f32 %v97, %v2535
    %v2537 = vand.u32 %v2536, 4294901760
    %2538 = vmatpush1.msra.mxu0 %v2537
    %2539 = vmatprep.subr.mxu0 0.0
    %v2540 = vand.u32 %v96, 4294901760
    %v2541 = vsub.f32 %v96, %v2540
    %v2542 = vand.u32 %v2541, 4294901760
    %2543 = vmatpush1.msra.mxu0 %v2542
    %2544 = vmatprep.subr.mxu0 0.0
    %v2545 = vand.u32 %v95, 4294901760
    %v2546 = vsub.f32 %v95, %v2545
    %v2547 = vand.u32 %v2546, 4294901760
    %2548 = vmatpush1.msra.mxu0 %v2547
    %2549 = vmatprep.subr.mxu0 0.0
    %v2550 = vand.u32 %v94, 4294901760
    %v2551 = vsub.f32 %v94, %v2550
    %v2552 = vand.u32 %v2551, 4294901760
    %2553 = vmatpush1.msra.mxu0 %v2552
    %2554 = vmatprep.subr.mxu0 0.0
    %v2555 = vand.u32 %v93, 4294901760
    %v2556 = vsub.f32 %v93, %v2555
    %v2557 = vand.u32 %v2556, 4294901760
    %2558 = vmatpush1.msra.mxu0 %v2557
    %2559 = vmatprep.subr.mxu0 0.0
    %v2560 = vand.u32 %v92, 4294901760
    %v2561 = vsub.f32 %v92, %v2560
    %v2562 = vand.u32 %v2561, 4294901760
    %2563 = vmatpush1.msra.mxu0 %v2562
    %2564 = vmatprep.subr.mxu0 0.0
    %v2565 = vand.u32 %v91, 4294901760
    %v2566 = vsub.f32 %v91, %v2565
    %v2567 = vand.u32 %v2566, 4294901760
    %2568 = vmatpush1.msra.mxu0 %v2567
    %2569 = vmatprep.subr.mxu0 0.0
    %v2570 = vand.u32 %v90, 4294901760
    %v2571 = vsub.f32 %v90, %v2570
    %v2572 = vand.u32 %v2571, 4294901760
    %2573 = vmatpush1.msra.mxu0 %v2572
    %2574 = vmatprep.subr.mxu0 0.0
    %v2575 = vand.u32 %v89, 4294901760
    %v2576 = vsub.f32 %v89, %v2575
    %v2577 = vand.u32 %v2576, 4294901760
    %2578 = vmatpush1.msra.mxu0 %v2577
    %2579 = vmatprep.subr.mxu0 0.0
    %v2580 = vand.u32 %v88, 4294901760
    %v2581 = vsub.f32 %v88, %v2580
    %v2582 = vand.u32 %v2581, 4294901760
    %2583 = vmatpush1.msra.mxu0 %v2582
    %2584 = vmatprep.subr.mxu0 0.0
    %v2585 = vand.u32 %v87, 4294901760
    %v2586 = vsub.f32 %v87, %v2585
    %v2587 = vand.u32 %v2586, 4294901760
    %2588 = vmatpush1.msra.mxu0 %v2587
    %2589 = vmatprep.subr.mxu0 0.0
    %v2590 = vand.u32 %v118, 4294901760
    %v2591 = vsub.f32 %v118, %v2590
    %v2592 = vand.u32 %v2591, 4294901760
    %2593 = vmatpush2.msra.mxu0 %v2592
    %2594 = vmatprep.subr.mxu0 0.0
    %v2595 = vand.u32 %v117, 4294901760
    %v2596 = vsub.f32 %v117, %v2595
    %v2597 = vand.u32 %v2596, 4294901760
    %2598 = vmatpush2.msra.mxu0 %v2597
    %2599 = vmatprep.subr.mxu0 0.0
    %v2600 = vand.u32 %v116, 4294901760
    %v2601 = vsub.f32 %v116, %v2600
    %v2602 = vand.u32 %v2601, 4294901760
    %2603 = vmatpush2.msra.mxu0 %v2602
    %2604 = vmatprep.subr.mxu0 0.0
    %v2605 = vand.u32 %v115, 4294901760
    %v2606 = vsub.f32 %v115, %v2605
    %v2607 = vand.u32 %v2606, 4294901760
    %2608 = vmatpush2.msra.mxu0 %v2607
    %2609 = vmatprep.subr.mxu0 0.0
    %v2610 = vand.u32 %v114, 4294901760
    %v2611 = vsub.f32 %v114, %v2610
    %v2612 = vand.u32 %v2611, 4294901760
    %2613 = vmatpush2.msra.mxu0 %v2612
    %2614 = vmatprep.subr.mxu0 0.0
    %v2615 = vand.u32 %v113, 4294901760
    %v2616 = vsub.f32 %v113, %v2615
    %v2617 = vand.u32 %v2616, 4294901760
    %2618 = vmatpush2.msra.mxu0 %v2617
    %2619 = vmatprep.subr.mxu0 0.0
    %v2620 = vand.u32 %v112, 4294901760
    %v2621 = vsub.f32 %v112, %v2620
    %v2622 = vand.u32 %v2621, 4294901760
    %2623 = vmatpush2.msra.mxu0 %v2622
    %2624 = vmatprep.subr.mxu0 0.0
    %v2625 = vand.u32 %v111, 4294901760
    %v2626 = vsub.f32 %v111, %v2625
    %v2627 = vand.u32 %v2626, 4294901760
    %2628 = vmatpush2.msra.mxu0 %v2627
    %2629 = vmatprep.subr.mxu0 0.0
    %v2630 = vand.u32 %v110, 4294901760
    %v2631 = vsub.f32 %v110, %v2630
    %v2632 = vand.u32 %v2631, 4294901760
    %2633 = vmatpush2.msra.mxu0 %v2632
    %2634 = vmatprep.subr.mxu0 0.0
    %v2635 = vand.u32 %v109, 4294901760
    %v2636 = vsub.f32 %v109, %v2635
    %v2637 = vand.u32 %v2636, 4294901760
    %2638 = vmatpush2.msra.mxu0 %v2637
    %2639 = vmatprep.subr.mxu0 0.0
    %v2640 = vand.u32 %v108, 4294901760
    %v2641 = vsub.f32 %v108, %v2640
    %v2642 = vand.u32 %v2641, 4294901760
    %2643 = vmatpush2.msra.mxu0 %v2642
    %2644 = vmatprep.subr.mxu0 0.0
    %v2645 = vand.u32 %v107, 4294901760
    %v2646 = vsub.f32 %v107, %v2645
    %v2647 = vand.u32 %v2646, 4294901760
    %2648 = vmatpush2.msra.mxu0 %v2647
    %2649 = vmatprep.subr.mxu0 0.0
    %v2650 = vand.u32 %v106, 4294901760
    %v2651 = vsub.f32 %v106, %v2650
    %v2652 = vand.u32 %v2651, 4294901760
    %2653 = vmatpush2.msra.mxu0 %v2652
    %2654 = vmatprep.subr.mxu0 0.0
    %v2655 = vand.u32 %v105, 4294901760
    %v2656 = vsub.f32 %v105, %v2655
    %v2657 = vand.u32 %v2656, 4294901760
    %2658 = vmatpush2.msra.mxu0 %v2657
    %2659 = vmatprep.subr.mxu0 0.0
    %v2660 = vand.u32 %v104, 4294901760
    %v2661 = vsub.f32 %v104, %v2660
    %v2662 = vand.u32 %v2661, 4294901760
    %2663 = vmatpush2.msra.mxu0 %v2662
    %2664 = vmatprep.subr.mxu0 0.0
    %v2665 = vand.u32 %v103, 4294901760
    %v2666 = vsub.f32 %v103, %v2665
    %v2667 = vand.u32 %v2666, 4294901760
    %2668 = vmatpush2.msra.mxu0 %v2667
    %v2669 = vand.u32 %v185, 4294901760
    %2670 = vmatprep.mubr.f32.mxu0 %v2669
    %v2671 = vand.u32 %v177, 4294901760
    %2672 = vmatmul.mubr.f32.gmra.mxu0 %v2671
    %v2673 = vpop.f32.mrf.mxu0
    %v2674 = vadd.f32 %v2506, %v2673
    %v2675 = vpop.f32.mrf.mxu0
    %2676 = vdwg.mxu0
    %2677 = vmatprep.subr.mxu0 0.0
    %v2678 = vand.u32 %v102, 4294901760
    %2679 = vmatpush1.msra.mxu0 %v2678
    %2680 = vmatprep.subr.mxu0 0.0
    %v2681 = vand.u32 %v101, 4294901760
    %2682 = vmatpush1.msra.mxu0 %v2681
    %2683 = vmatprep.subr.mxu0 0.0
    %v2684 = vand.u32 %v100, 4294901760
    %2685 = vmatpush1.msra.mxu0 %v2684
    %2686 = vmatprep.subr.mxu0 0.0
    %v2687 = vand.u32 %v99, 4294901760
    %2688 = vmatpush1.msra.mxu0 %v2687
    %2689 = vmatprep.subr.mxu0 0.0
    %v2690 = vand.u32 %v98, 4294901760
    %2691 = vmatpush1.msra.mxu0 %v2690
    %2692 = vmatprep.subr.mxu0 0.0
    %v2693 = vand.u32 %v97, 4294901760
    %2694 = vmatpush1.msra.mxu0 %v2693
    %2695 = vmatprep.subr.mxu0 0.0
    %v2696 = vand.u32 %v96, 4294901760
    %2697 = vmatpush1.msra.mxu0 %v2696
    %2698 = vmatprep.subr.mxu0 0.0
    %v2699 = vand.u32 %v95, 4294901760
    %2700 = vmatpush1.msra.mxu0 %v2699
    %2701 = vmatprep.subr.mxu0 0.0
    %v2702 = vand.u32 %v94, 4294901760
    %2703 = vmatpush1.msra.mxu0 %v2702
    %2704 = vmatprep.subr.mxu0 0.0
    %v2705 = vand.u32 %v93, 4294901760
    %2706 = vmatpush1.msra.mxu0 %v2705
    %2707 = vmatprep.subr.mxu0 0.0
    %v2708 = vand.u32 %v92, 4294901760
    %2709 = vmatpush1.msra.mxu0 %v2708
    %2710 = vmatprep.subr.mxu0 0.0
    %v2711 = vand.u32 %v91, 4294901760
    %2712 = vmatpush1.msra.mxu0 %v2711
    %2713 = vmatprep.subr.mxu0 0.0
    %v2714 = vand.u32 %v90, 4294901760
    %2715 = vmatpush1.msra.mxu0 %v2714
    %2716 = vmatprep.subr.mxu0 0.0
    %v2717 = vand.u32 %v89, 4294901760
    %2718 = vmatpush1.msra.mxu0 %v2717
    %2719 = vmatprep.subr.mxu0 0.0
    %v2720 = vand.u32 %v88, 4294901760
    %2721 = vmatpush1.msra.mxu0 %v2720
    %2722 = vmatprep.subr.mxu0 0.0
    %v2723 = vand.u32 %v87, 4294901760
    %2724 = vmatpush1.msra.mxu0 %v2723
    %2725 = vmatprep.subr.mxu0 0.0
    %v2726 = vand.u32 %v118, 4294901760
    %2727 = vmatpush2.msra.mxu0 %v2726
    %2728 = vmatprep.subr.mxu0 0.0
    %v2729 = vand.u32 %v117, 4294901760
    %2730 = vmatpush2.msra.mxu0 %v2729
    %2731 = vmatprep.subr.mxu0 0.0
    %v2732 = vand.u32 %v116, 4294901760
    %2733 = vmatpush2.msra.mxu0 %v2732
    %2734 = vmatprep.subr.mxu0 0.0
    %v2735 = vand.u32 %v115, 4294901760
    %2736 = vmatpush2.msra.mxu0 %v2735
    %2737 = vmatprep.subr.mxu0 0.0
    %v2738 = vand.u32 %v114, 4294901760
    %2739 = vmatpush2.msra.mxu0 %v2738
    %2740 = vmatprep.subr.mxu0 0.0
    %v2741 = vand.u32 %v113, 4294901760
    %2742 = vmatpush2.msra.mxu0 %v2741
    %2743 = vmatprep.subr.mxu0 0.0
    %v2744 = vand.u32 %v112, 4294901760
    %2745 = vmatpush2.msra.mxu0 %v2744
    %2746 = vmatprep.subr.mxu0 0.0
    %v2747 = vand.u32 %v111, 4294901760
    %2748 = vmatpush2.msra.mxu0 %v2747
    %2749 = vmatprep.subr.mxu0 0.0
    %v2750 = vand.u32 %v110, 4294901760
    %2751 = vmatpush2.msra.mxu0 %v2750
    %2752 = vmatprep.subr.mxu0 0.0
    %v2753 = vand.u32 %v109, 4294901760
    %2754 = vmatpush2.msra.mxu0 %v2753
    %2755 = vmatprep.subr.mxu0 0.0
    %v2756 = vand.u32 %v108, 4294901760
    %2757 = vmatpush2.msra.mxu0 %v2756
    %2758 = vmatprep.subr.mxu0 0.0
    %v2759 = vand.u32 %v107, 4294901760
    %2760 = vmatpush2.msra.mxu0 %v2759
    %2761 = vmatprep.subr.mxu0 0.0
    %v2762 = vand.u32 %v106, 4294901760
    %2763 = vmatpush2.msra.mxu0 %v2762
    %2764 = vmatprep.subr.mxu0 0.0
    %v2765 = vand.u32 %v105, 4294901760
    %2766 = vmatpush2.msra.mxu0 %v2765
    %2767 = vmatprep.subr.mxu0 0.0
    %v2768 = vand.u32 %v104, 4294901760
    %2769 = vmatpush2.msra.mxu0 %v2768
    %2770 = vmatprep.subr.mxu0 0.0
    %v2771 = vand.u32 %v103, 4294901760
    %2772 = vmatpush2.msra.mxu0 %v2771
    %v2773 = vand.u32 %v185, 4294901760
    %2774 = vmatprep.mubr.f32.mxu0 %v2773
    %v2775 = vand.u32 %v177, 4294901760
    %2776 = vmatmul.mubr.f32.gmra.mxu0 %v2775
    %v2777 = vpop.f32.mrf.mxu0
    %v2778 = vadd.f32 %v2674, %v2777
    %v2779 = vpop.f32.mrf.mxu0
    %2780 = vdwg.mxu0
    %2781 = vmatprep.subr.mxu0 0.0
    %v2782 = vand.u32 %v134, 4294901760
    %2783 = vmatpush1.msra.mxu0 %v2782
    %2784 = vmatprep.subr.mxu0 0.0
    %v2785 = vand.u32 %v133, 4294901760
    %2786 = vmatpush1.msra.mxu0 %v2785
    %2787 = vmatprep.subr.mxu0 0.0
    %v2788 = vand.u32 %v132, 4294901760
    %2789 = vmatpush1.msra.mxu0 %v2788
    %2790 = vmatprep.subr.mxu0 0.0
    %v2791 = vand.u32 %v131, 4294901760
    %2792 = vmatpush1.msra.mxu0 %v2791
    %2793 = vmatprep.subr.mxu0 0.0
    %v2794 = vand.u32 %v130, 4294901760
    %2795 = vmatpush1.msra.mxu0 %v2794
    %2796 = vmatprep.subr.mxu0 0.0
    %v2797 = vand.u32 %v129, 4294901760
    %2798 = vmatpush1.msra.mxu0 %v2797
    %2799 = vmatprep.subr.mxu0 0.0
    %v2800 = vand.u32 %v128, 4294901760
    %2801 = vmatpush1.msra.mxu0 %v2800
    %2802 = vmatprep.subr.mxu0 0.0
    %v2803 = vand.u32 %v127, 4294901760
    %2804 = vmatpush1.msra.mxu0 %v2803
    %2805 = vmatprep.subr.mxu0 0.0
    %v2806 = vand.u32 %v126, 4294901760
    %2807 = vmatpush1.msra.mxu0 %v2806
    %2808 = vmatprep.subr.mxu0 0.0
    %v2809 = vand.u32 %v125, 4294901760
    %2810 = vmatpush1.msra.mxu0 %v2809
    %2811 = vmatprep.subr.mxu0 0.0
    %v2812 = vand.u32 %v124, 4294901760
    %2813 = vmatpush1.msra.mxu0 %v2812
    %2814 = vmatprep.subr.mxu0 0.0
    %v2815 = vand.u32 %v123, 4294901760
    %2816 = vmatpush1.msra.mxu0 %v2815
    %2817 = vmatprep.subr.mxu0 0.0
    %v2818 = vand.u32 %v122, 4294901760
    %2819 = vmatpush1.msra.mxu0 %v2818
    %2820 = vmatprep.subr.mxu0 0.0
    %v2821 = vand.u32 %v121, 4294901760
    %2822 = vmatpush1.msra.mxu0 %v2821
    %2823 = vmatprep.subr.mxu0 0.0
    %v2824 = vand.u32 %v120, 4294901760
    %2825 = vmatpush1.msra.mxu0 %v2824
    %2826 = vmatprep.subr.mxu0 0.0
    %v2827 = vand.u32 %v119, 4294901760
    %2828 = vmatpush1.msra.mxu0 %v2827
    %2829 = vmatprep.subr.mxu0 0.0
    %v2830 = vand.u32 %v150, 4294901760
    %2831 = vmatpush2.msra.mxu0 %v2830
    %2832 = vmatprep.subr.mxu0 0.0
    %v2833 = vand.u32 %v149, 4294901760
    %2834 = vmatpush2.msra.mxu0 %v2833
    %2835 = vmatprep.subr.mxu0 0.0
    %v2836 = vand.u32 %v148, 4294901760
    %2837 = vmatpush2.msra.mxu0 %v2836
    %2838 = vmatprep.subr.mxu0 0.0
    %v2839 = vand.u32 %v147, 4294901760
    %2840 = vmatpush2.msra.mxu0 %v2839
    %2841 = vmatprep.subr.mxu0 0.0
    %v2842 = vand.u32 %v146, 4294901760
    %2843 = vmatpush2.msra.mxu0 %v2842
    %2844 = vmatprep.subr.mxu0 0.0
    %v2845 = vand.u32 %v145, 4294901760
    %2846 = vmatpush2.msra.mxu0 %v2845
    %2847 = vmatprep.subr.mxu0 0.0
    %v2848 = vand.u32 %v144, 4294901760
    %2849 = vmatpush2.msra.mxu0 %v2848
    %2850 = vmatprep.subr.mxu0 0.0
    %v2851 = vand.u32 %v143, 4294901760
    %2852 = vmatpush2.msra.mxu0 %v2851
    %2853 = vmatprep.subr.mxu0 0.0
    %v2854 = vand.u32 %v142, 4294901760
    %2855 = vmatpush2.msra.mxu0 %v2854
    %2856 = vmatprep.subr.mxu0 0.0
    %v2857 = vand.u32 %v141, 4294901760
    %2858 = vmatpush2.msra.mxu0 %v2857
    %2859 = vmatprep.subr.mxu0 0.0
    %v2860 = vand.u32 %v140, 4294901760
    %2861 = vmatpush2.msra.mxu0 %v2860
    %2862 = vmatprep.subr.mxu0 0.0
    %v2863 = vand.u32 %v139, 4294901760
    %2864 = vmatpush2.msra.mxu0 %v2863
    %2865 = vmatprep.subr.mxu0 0.0
    %v2866 = vand.u32 %v138, 4294901760
    %2867 = vmatpush2.msra.mxu0 %v2866
    %2868 = vmatprep.subr.mxu0 0.0
    %v2869 = vand.u32 %v137, 4294901760
    %2870 = vmatpush2.msra.mxu0 %v2869
    %2871 = vmatprep.subr.mxu0 0.0
    %v2872 = vand.u32 %v136, 4294901760
    %2873 = vmatpush2.msra.mxu0 %v2872
    %2874 = vmatprep.subr.mxu0 0.0
    %v2875 = vand.u32 %v135, 4294901760
    %2876 = vmatpush2.msra.mxu0 %v2875
    %v2877 = vand.u32 %v186, 4294901760
    %v2878 = vsub.f32 %v186, %v2877
    %v2879 = vand.u32 %v2878, 4294901760
    %v2880 = vsub.f32 %v2878, %v2879
    %v2881 = vand.u32 %v2880, 4294901760
    %2882 = vmatprep.mubr.f32.mxu0 %v2881
    %v2883 = vand.u32 %v184, 4294901760
    %v2884 = vsub.f32 %v184, %v2883
    %v2885 = vand.u32 %v2884, 4294901760
    %v2886 = vsub.f32 %v2884, %v2885
    %v2887 = vand.u32 %v2886, 4294901760
    %2888 = vmatmul.mubr.f32.gmra.mxu0 %v2887
    %v2889 = vpop.f32.mrf.mxu0
    %v2890 = vadd.f32 %v2778, %v2889
    %v2891 = vpop.f32.mrf.mxu0
    %2892 = vdwg.mxu0
    %2893 = vmatprep.subr.mxu0 0.0
    %v2894 = vand.u32 %v134, 4294901760
    %v2895 = vsub.f32 %v134, %v2894
    %v2896 = vand.u32 %v2895, 4294901760
    %v2897 = vsub.f32 %v2895, %v2896
    %v2898 = vand.u32 %v2897, 4294901760
    %2899 = vmatpush1.msra.mxu0 %v2898
    %2900 = vmatprep.subr.mxu0 0.0
    %v2901 = vand.u32 %v133, 4294901760
    %v2902 = vsub.f32 %v133, %v2901
    %v2903 = vand.u32 %v2902, 4294901760
    %v2904 = vsub.f32 %v2902, %v2903
    %v2905 = vand.u32 %v2904, 4294901760
    %2906 = vmatpush1.msra.mxu0 %v2905
    %2907 = vmatprep.subr.mxu0 0.0
    %v2908 = vand.u32 %v132, 4294901760
    %v2909 = vsub.f32 %v132, %v2908
    %v2910 = vand.u32 %v2909, 4294901760
    %v2911 = vsub.f32 %v2909, %v2910
    %v2912 = vand.u32 %v2911, 4294901760
    %2913 = vmatpush1.msra.mxu0 %v2912
    %2914 = vmatprep.subr.mxu0 0.0
    %v2915 = vand.u32 %v131, 4294901760
    %v2916 = vsub.f32 %v131, %v2915
    %v2917 = vand.u32 %v2916, 4294901760
    %v2918 = vsub.f32 %v2916, %v2917
    %v2919 = vand.u32 %v2918, 4294901760
    %2920 = vmatpush1.msra.mxu0 %v2919
    %2921 = vmatprep.subr.mxu0 0.0
    %v2922 = vand.u32 %v130, 4294901760
    %v2923 = vsub.f32 %v130, %v2922
    %v2924 = vand.u32 %v2923, 4294901760
    %v2925 = vsub.f32 %v2923, %v2924
    %v2926 = vand.u32 %v2925, 4294901760
    %2927 = vmatpush1.msra.mxu0 %v2926
    %2928 = vmatprep.subr.mxu0 0.0
    %v2929 = vand.u32 %v129, 4294901760
    %v2930 = vsub.f32 %v129, %v2929
    %v2931 = vand.u32 %v2930, 4294901760
    %v2932 = vsub.f32 %v2930, %v2931
    %v2933 = vand.u32 %v2932, 4294901760
    %2934 = vmatpush1.msra.mxu0 %v2933
    %2935 = vmatprep.subr.mxu0 0.0
    %v2936 = vand.u32 %v128, 4294901760
    %v2937 = vsub.f32 %v128, %v2936
    %v2938 = vand.u32 %v2937, 4294901760
    %v2939 = vsub.f32 %v2937, %v2938
    %v2940 = vand.u32 %v2939, 4294901760
    %2941 = vmatpush1.msra.mxu0 %v2940
    %2942 = vmatprep.subr.mxu0 0.0
    %v2943 = vand.u32 %v127, 4294901760
    %v2944 = vsub.f32 %v127, %v2943
    %v2945 = vand.u32 %v2944, 4294901760
    %v2946 = vsub.f32 %v2944, %v2945
    %v2947 = vand.u32 %v2946, 4294901760
    %2948 = vmatpush1.msra.mxu0 %v2947
    %2949 = vmatprep.subr.mxu0 0.0
    %v2950 = vand.u32 %v126, 4294901760
    %v2951 = vsub.f32 %v126, %v2950
    %v2952 = vand.u32 %v2951, 4294901760
    %v2953 = vsub.f32 %v2951, %v2952
    %v2954 = vand.u32 %v2953, 4294901760
    %2955 = vmatpush1.msra.mxu0 %v2954
    %2956 = vmatprep.subr.mxu0 0.0
    %v2957 = vand.u32 %v125, 4294901760
    %v2958 = vsub.f32 %v125, %v2957
    %v2959 = vand.u32 %v2958, 4294901760
    %v2960 = vsub.f32 %v2958, %v2959
    %v2961 = vand.u32 %v2960, 4294901760
    %2962 = vmatpush1.msra.mxu0 %v2961
    %2963 = vmatprep.subr.mxu0 0.0
    %v2964 = vand.u32 %v124, 4294901760
    %v2965 = vsub.f32 %v124, %v2964
    %v2966 = vand.u32 %v2965, 4294901760
    %v2967 = vsub.f32 %v2965, %v2966
    %v2968 = vand.u32 %v2967, 4294901760
    %2969 = vmatpush1.msra.mxu0 %v2968
    %2970 = vmatprep.subr.mxu0 0.0
    %v2971 = vand.u32 %v123, 4294901760
    %v2972 = vsub.f32 %v123, %v2971
    %v2973 = vand.u32 %v2972, 4294901760
    %v2974 = vsub.f32 %v2972, %v2973
    %v2975 = vand.u32 %v2974, 4294901760
    %2976 = vmatpush1.msra.mxu0 %v2975
    %2977 = vmatprep.subr.mxu0 0.0
    %v2978 = vand.u32 %v122, 4294901760
    %v2979 = vsub.f32 %v122, %v2978
    %v2980 = vand.u32 %v2979, 4294901760
    %v2981 = vsub.f32 %v2979, %v2980
    %v2982 = vand.u32 %v2981, 4294901760
    %2983 = vmatpush1.msra.mxu0 %v2982
    %2984 = vmatprep.subr.mxu0 0.0
    %v2985 = vand.u32 %v121, 4294901760
    %v2986 = vsub.f32 %v121, %v2985
    %v2987 = vand.u32 %v2986, 4294901760
    %v2988 = vsub.f32 %v2986, %v2987
    %v2989 = vand.u32 %v2988, 4294901760
    %2990 = vmatpush1.msra.mxu0 %v2989
    %2991 = vmatprep.subr.mxu0 0.0
    %v2992 = vand.u32 %v120, 4294901760
    %v2993 = vsub.f32 %v120, %v2992
    %v2994 = vand.u32 %v2993, 4294901760
    %v2995 = vsub.f32 %v2993, %v2994
    %v2996 = vand.u32 %v2995, 4294901760
    %2997 = vmatpush1.msra.mxu0 %v2996
    %2998 = vmatprep.subr.mxu0 0.0
    %v2999 = vand.u32 %v119, 4294901760
    %v3000 = vsub.f32 %v119, %v2999
    %v3001 = vand.u32 %v3000, 4294901760
    %v3002 = vsub.f32 %v3000, %v3001
    %v3003 = vand.u32 %v3002, 4294901760
    %3004 = vmatpush1.msra.mxu0 %v3003
    %3005 = vmatprep.subr.mxu0 0.0
    %v3006 = vand.u32 %v150, 4294901760
    %v3007 = vsub.f32 %v150, %v3006
    %v3008 = vand.u32 %v3007, 4294901760
    %v3009 = vsub.f32 %v3007, %v3008
    %v3010 = vand.u32 %v3009, 4294901760
    %3011 = vmatpush2.msra.mxu0 %v3010
    %3012 = vmatprep.subr.mxu0 0.0
    %v3013 = vand.u32 %v149, 4294901760
    %v3014 = vsub.f32 %v149, %v3013
    %v3015 = vand.u32 %v3014, 4294901760
    %v3016 = vsub.f32 %v3014, %v3015
    %v3017 = vand.u32 %v3016, 4294901760
    %3018 = vmatpush2.msra.mxu0 %v3017
    %3019 = vmatprep.subr.mxu0 0.0
    %v3020 = vand.u32 %v148, 4294901760
    %v3021 = vsub.f32 %v148, %v3020
    %v3022 = vand.u32 %v3021, 4294901760
    %v3023 = vsub.f32 %v3021, %v3022
    %v3024 = vand.u32 %v3023, 4294901760
    %3025 = vmatpush2.msra.mxu0 %v3024
    %3026 = vmatprep.subr.mxu0 0.0
    %v3027 = vand.u32 %v147, 4294901760
    %v3028 = vsub.f32 %v147, %v3027
    %v3029 = vand.u32 %v3028, 4294901760
    %v3030 = vsub.f32 %v3028, %v3029
    %v3031 = vand.u32 %v3030, 4294901760
    %3032 = vmatpush2.msra.mxu0 %v3031
    %3033 = vmatprep.subr.mxu0 0.0
    %v3034 = vand.u32 %v146, 4294901760
    %v3035 = vsub.f32 %v146, %v3034
    %v3036 = vand.u32 %v3035, 4294901760
    %v3037 = vsub.f32 %v3035, %v3036
    %v3038 = vand.u32 %v3037, 4294901760
    %3039 = vmatpush2.msra.mxu0 %v3038
    %3040 = vmatprep.subr.mxu0 0.0
    %v3041 = vand.u32 %v145, 4294901760
    %v3042 = vsub.f32 %v145, %v3041
    %v3043 = vand.u32 %v3042, 4294901760
    %v3044 = vsub.f32 %v3042, %v3043
    %v3045 = vand.u32 %v3044, 4294901760
    %3046 = vmatpush2.msra.mxu0 %v3045
    %3047 = vmatprep.subr.mxu0 0.0
    %v3048 = vand.u32 %v144, 4294901760
    %v3049 = vsub.f32 %v144, %v3048
    %v3050 = vand.u32 %v3049, 4294901760
    %v3051 = vsub.f32 %v3049, %v3050
    %v3052 = vand.u32 %v3051, 4294901760
    %3053 = vmatpush2.msra.mxu0 %v3052
    %3054 = vmatprep.subr.mxu0 0.0
    %v3055 = vand.u32 %v143, 4294901760
    %v3056 = vsub.f32 %v143, %v3055
    %v3057 = vand.u32 %v3056, 4294901760
    %v3058 = vsub.f32 %v3056, %v3057
    %v3059 = vand.u32 %v3058, 4294901760
    %3060 = vmatpush2.msra.mxu0 %v3059
    %3061 = vmatprep.subr.mxu0 0.0
    %v3062 = vand.u32 %v142, 4294901760
    %v3063 = vsub.f32 %v142, %v3062
    %v3064 = vand.u32 %v3063, 4294901760
    %v3065 = vsub.f32 %v3063, %v3064
    %v3066 = vand.u32 %v3065, 4294901760
    %3067 = vmatpush2.msra.mxu0 %v3066
    %3068 = vmatprep.subr.mxu0 0.0
    %v3069 = vand.u32 %v141, 4294901760
    %v3070 = vsub.f32 %v141, %v3069
    %v3071 = vand.u32 %v3070, 4294901760
    %v3072 = vsub.f32 %v3070, %v3071
    %v3073 = vand.u32 %v3072, 4294901760
    %3074 = vmatpush2.msra.mxu0 %v3073
    %3075 = vmatprep.subr.mxu0 0.0
    %v3076 = vand.u32 %v140, 4294901760
    %v3077 = vsub.f32 %v140, %v3076
    %v3078 = vand.u32 %v3077, 4294901760
    %v3079 = vsub.f32 %v3077, %v3078
    %v3080 = vand.u32 %v3079, 4294901760
    %3081 = vmatpush2.msra.mxu0 %v3080
    %3082 = vmatprep.subr.mxu0 0.0
    %v3083 = vand.u32 %v139, 4294901760
    %v3084 = vsub.f32 %v139, %v3083
    %v3085 = vand.u32 %v3084, 4294901760
    %v3086 = vsub.f32 %v3084, %v3085
    %v3087 = vand.u32 %v3086, 4294901760
    %3088 = vmatpush2.msra.mxu0 %v3087
    %3089 = vmatprep.subr.mxu0 0.0
    %v3090 = vand.u32 %v138, 4294901760
    %v3091 = vsub.f32 %v138, %v3090
    %v3092 = vand.u32 %v3091, 4294901760
    %v3093 = vsub.f32 %v3091, %v3092
    %v3094 = vand.u32 %v3093, 4294901760
    %3095 = vmatpush2.msra.mxu0 %v3094
    %3096 = vmatprep.subr.mxu0 0.0
    %v3097 = vand.u32 %v137, 4294901760
    %v3098 = vsub.f32 %v137, %v3097
    %v3099 = vand.u32 %v3098, 4294901760
    %v3100 = vsub.f32 %v3098, %v3099
    %v3101 = vand.u32 %v3100, 4294901760
    %3102 = vmatpush2.msra.mxu0 %v3101
    %3103 = vmatprep.subr.mxu0 0.0
    %v3104 = vand.u32 %v136, 4294901760
    %v3105 = vsub.f32 %v136, %v3104
    %v3106 = vand.u32 %v3105, 4294901760
    %v3107 = vsub.f32 %v3105, %v3106
    %v3108 = vand.u32 %v3107, 4294901760
    %3109 = vmatpush2.msra.mxu0 %v3108
    %3110 = vmatprep.subr.mxu0 0.0
    %v3111 = vand.u32 %v135, 4294901760
    %v3112 = vsub.f32 %v135, %v3111
    %v3113 = vand.u32 %v3112, 4294901760
    %v3114 = vsub.f32 %v3112, %v3113
    %v3115 = vand.u32 %v3114, 4294901760
    %3116 = vmatpush2.msra.mxu0 %v3115
    %v3117 = vand.u32 %v186, 4294901760
    %3118 = vmatprep.mubr.f32.mxu0 %v3117
    %v3119 = vand.u32 %v184, 4294901760
    %3120 = vmatmul.mubr.f32.gmra.mxu0 %v3119
    %v3121 = vpop.f32.mrf.mxu0
    %v3122 = vadd.f32 %v2890, %v3121
    %v3123 = vpop.f32.mrf.mxu0
    %3124 = vdwg.mxu0
    %3125 = vmatprep.subr.mxu0 0.0
    %v3126 = vand.u32 %v134, 4294901760
    %v3127 = vsub.f32 %v134, %v3126
    %3128 = vmatpush1.msra.mxu0 %v3127
    %3129 = vmatprep.subr.mxu0 0.0
    %v3130 = vand.u32 %v133, 4294901760
    %v3131 = vsub.f32 %v133, %v3130
    %3132 = vmatpush1.msra.mxu0 %v3131
    %3133 = vmatprep.subr.mxu0 0.0
    %v3134 = vand.u32 %v132, 4294901760
    %v3135 = vsub.f32 %v132, %v3134
    %3136 = vmatpush1.msra.mxu0 %v3135
    %3137 = vmatprep.subr.mxu0 0.0
    %v3138 = vand.u32 %v131, 4294901760
    %v3139 = vsub.f32 %v131, %v3138
    %3140 = vmatpush1.msra.mxu0 %v3139
    %3141 = vmatprep.subr.mxu0 0.0
    %v3142 = vand.u32 %v130, 4294901760
    %v3143 = vsub.f32 %v130, %v3142
    %3144 = vmatpush1.msra.mxu0 %v3143
    %3145 = vmatprep.subr.mxu0 0.0
    %v3146 = vand.u32 %v129, 4294901760
    %v3147 = vsub.f32 %v129, %v3146
    %3148 = vmatpush1.msra.mxu0 %v3147
    %3149 = vmatprep.subr.mxu0 0.0
    %v3150 = vand.u32 %v128, 4294901760
    %v3151 = vsub.f32 %v128, %v3150
    %3152 = vmatpush1.msra.mxu0 %v3151
    %3153 = vmatprep.subr.mxu0 0.0
    %v3154 = vand.u32 %v127, 4294901760
    %v3155 = vsub.f32 %v127, %v3154
    %3156 = vmatpush1.msra.mxu0 %v3155
    %3157 = vmatprep.subr.mxu0 0.0
    %v3158 = vand.u32 %v126, 4294901760
    %v3159 = vsub.f32 %v126, %v3158
    %3160 = vmatpush1.msra.mxu0 %v3159
    %3161 = vmatprep.subr.mxu0 0.0
    %v3162 = vand.u32 %v125, 4294901760
    %v3163 = vsub.f32 %v125, %v3162
    %3164 = vmatpush1.msra.mxu0 %v3163
    %3165 = vmatprep.subr.mxu0 0.0
    %v3166 = vand.u32 %v124, 4294901760
    %v3167 = vsub.f32 %v124, %v3166
    %3168 = vmatpush1.msra.mxu0 %v3167
    %3169 = vmatprep.subr.mxu0 0.0
    %v3170 = vand.u32 %v123, 4294901760
    %v3171 = vsub.f32 %v123, %v3170
    %3172 = vmatpush1.msra.mxu0 %v3171
    %3173 = vmatprep.subr.mxu0 0.0
    %v3174 = vand.u32 %v122, 4294901760
    %v3175 = vsub.f32 %v122, %v3174
    %3176 = vmatpush1.msra.mxu0 %v3175
    %3177 = vmatprep.subr.mxu0 0.0
    %v3178 = vand.u32 %v121, 4294901760
    %v3179 = vsub.f32 %v121, %v3178
    %3180 = vmatpush1.msra.mxu0 %v3179
    %3181 = vmatprep.subr.mxu0 0.0
    %v3182 = vand.u32 %v120, 4294901760
    %v3183 = vsub.f32 %v120, %v3182
    %3184 = vmatpush1.msra.mxu0 %v3183
    %3185 = vmatprep.subr.mxu0 0.0
    %v3186 = vand.u32 %v119, 4294901760
    %v3187 = vsub.f32 %v119, %v3186
    %3188 = vmatpush1.msra.mxu0 %v3187
    %3189 = vmatprep.subr.mxu0 0.0
    %v3190 = vand.u32 %v150, 4294901760
    %v3191 = vsub.f32 %v150, %v3190
    %3192 = vmatpush2.msra.mxu0 %v3191
    %3193 = vmatprep.subr.mxu0 0.0
    %v3194 = vand.u32 %v149, 4294901760
    %v3195 = vsub.f32 %v149, %v3194
    %3196 = vmatpush2.msra.mxu0 %v3195
    %3197 = vmatprep.subr.mxu0 0.0
    %v3198 = vand.u32 %v148, 4294901760
    %v3199 = vsub.f32 %v148, %v3198
    %3200 = vmatpush2.msra.mxu0 %v3199
    %3201 = vmatprep.subr.mxu0 0.0
    %v3202 = vand.u32 %v147, 4294901760
    %v3203 = vsub.f32 %v147, %v3202
    %3204 = vmatpush2.msra.mxu0 %v3203
    %3205 = vmatprep.subr.mxu0 0.0
    %v3206 = vand.u32 %v146, 4294901760
    %v3207 = vsub.f32 %v146, %v3206
    %3208 = vmatpush2.msra.mxu0 %v3207
    %3209 = vmatprep.subr.mxu0 0.0
    %v3210 = vand.u32 %v145, 4294901760
    %v3211 = vsub.f32 %v145, %v3210
    %3212 = vmatpush2.msra.mxu0 %v3211
    %3213 = vmatprep.subr.mxu0 0.0
    %v3214 = vand.u32 %v144, 4294901760
    %v3215 = vsub.f32 %v144, %v3214
    %3216 = vmatpush2.msra.mxu0 %v3215
    %3217 = vmatprep.subr.mxu0 0.0
    %v3218 = vand.u32 %v143, 4294901760
    %v3219 = vsub.f32 %v143, %v3218
    %3220 = vmatpush2.msra.mxu0 %v3219
    %3221 = vmatprep.subr.mxu0 0.0
    %v3222 = vand.u32 %v142, 4294901760
    %v3223 = vsub.f32 %v142, %v3222
    %3224 = vmatpush2.msra.mxu0 %v3223
    %3225 = vmatprep.subr.mxu0 0.0
    %v3226 = vand.u32 %v141, 4294901760
    %v3227 = vsub.f32 %v141, %v3226
    %3228 = vmatpush2.msra.mxu0 %v3227
    %3229 = vmatprep.subr.mxu0 0.0
    %v3230 = vand.u32 %v140, 4294901760
    %v3231 = vsub.f32 %v140, %v3230
    %3232 = vmatpush2.msra.mxu0 %v3231
    %3233 = vmatprep.subr.mxu0 0.0
    %v3234 = vand.u32 %v139, 4294901760
    %v3235 = vsub.f32 %v139, %v3234
    %3236 = vmatpush2.msra.mxu0 %v3235
    %3237 = vmatprep.subr.mxu0 0.0
    %v3238 = vand.u32 %v138, 4294901760
    %v3239 = vsub.f32 %v138, %v3238
    %3240 = vmatpush2.msra.mxu0 %v3239
    %3241 = vmatprep.subr.mxu0 0.0
    %v3242 = vand.u32 %v137, 4294901760
    %v3243 = vsub.f32 %v137, %v3242
    %3244 = vmatpush2.msra.mxu0 %v3243
    %3245 = vmatprep.subr.mxu0 0.0
    %v3246 = vand.u32 %v136, 4294901760
    %v3247 = vsub.f32 %v136, %v3246
    %3248 = vmatpush2.msra.mxu0 %v3247
    %3249 = vmatprep.subr.mxu0 0.0
    %v3250 = vand.u32 %v135, 4294901760
    %v3251 = vsub.f32 %v135, %v3250
    %3252 = vmatpush2.msra.mxu0 %v3251
    %v3253 = vand.u32 %v186, 4294901760
    %v3254 = vsub.f32 %v186, %v3253
    %3255 = vmatprep.mubr.f32.mxu0 %v3254
    %v3256 = vand.u32 %v184, 4294901760
    %v3257 = vsub.f32 %v184, %v3256
    %3258 = vmatmul.mubr.f32.gmra.mxu0 %v3257
    %v3259 = vpop.f32.mrf.mxu0
    %v3260 = vadd.f32 %v3122, %v3259
    %v3261 = vpop.f32.mrf.mxu0
    %3262 = vdwg.mxu0
    %3263 = vmatprep.subr.mxu0 0.0
    %v3264 = vand.u32 %v134, 4294901760
    %3265 = vmatpush1.msra.mxu0 %v3264
    %3266 = vmatprep.subr.mxu0 0.0
    %v3267 = vand.u32 %v133, 4294901760
    %3268 = vmatpush1.msra.mxu0 %v3267
    %3269 = vmatprep.subr.mxu0 0.0
    %v3270 = vand.u32 %v132, 4294901760
    %3271 = vmatpush1.msra.mxu0 %v3270
    %3272 = vmatprep.subr.mxu0 0.0
    %v3273 = vand.u32 %v131, 4294901760
    %3274 = vmatpush1.msra.mxu0 %v3273
    %3275 = vmatprep.subr.mxu0 0.0
    %v3276 = vand.u32 %v130, 4294901760
    %3277 = vmatpush1.msra.mxu0 %v3276
    %3278 = vmatprep.subr.mxu0 0.0
    %v3279 = vand.u32 %v129, 4294901760
    %3280 = vmatpush1.msra.mxu0 %v3279
    %3281 = vmatprep.subr.mxu0 0.0
    %v3282 = vand.u32 %v128, 4294901760
    %3283 = vmatpush1.msra.mxu0 %v3282
    %3284 = vmatprep.subr.mxu0 0.0
    %v3285 = vand.u32 %v127, 4294901760
    %3286 = vmatpush1.msra.mxu0 %v3285
    %3287 = vmatprep.subr.mxu0 0.0
    %v3288 = vand.u32 %v126, 4294901760
    %3289 = vmatpush1.msra.mxu0 %v3288
    %3290 = vmatprep.subr.mxu0 0.0
    %v3291 = vand.u32 %v125, 4294901760
    %3292 = vmatpush1.msra.mxu0 %v3291
    %3293 = vmatprep.subr.mxu0 0.0
    %v3294 = vand.u32 %v124, 4294901760
    %3295 = vmatpush1.msra.mxu0 %v3294
    %3296 = vmatprep.subr.mxu0 0.0
    %v3297 = vand.u32 %v123, 4294901760
    %3298 = vmatpush1.msra.mxu0 %v3297
    %3299 = vmatprep.subr.mxu0 0.0
    %v3300 = vand.u32 %v122, 4294901760
    %3301 = vmatpush1.msra.mxu0 %v3300
    %3302 = vmatprep.subr.mxu0 0.0
    %v3303 = vand.u32 %v121, 4294901760
    %3304 = vmatpush1.msra.mxu0 %v3303
    %3305 = vmatprep.subr.mxu0 0.0
    %v3306 = vand.u32 %v120, 4294901760
    %3307 = vmatpush1.msra.mxu0 %v3306
    %3308 = vmatprep.subr.mxu0 0.0
    %v3309 = vand.u32 %v119, 4294901760
    %3310 = vmatpush1.msra.mxu0 %v3309
    %3311 = vmatprep.subr.mxu0 0.0
    %v3312 = vand.u32 %v150, 4294901760
    %3313 = vmatpush2.msra.mxu0 %v3312
    %3314 = vmatprep.subr.mxu0 0.0
    %v3315 = vand.u32 %v149, 4294901760
    %3316 = vmatpush2.msra.mxu0 %v3315
    %3317 = vmatprep.subr.mxu0 0.0
    %v3318 = vand.u32 %v148, 4294901760
    %3319 = vmatpush2.msra.mxu0 %v3318
    %3320 = vmatprep.subr.mxu0 0.0
    %v3321 = vand.u32 %v147, 4294901760
    %3322 = vmatpush2.msra.mxu0 %v3321
    %3323 = vmatprep.subr.mxu0 0.0
    %v3324 = vand.u32 %v146, 4294901760
    %3325 = vmatpush2.msra.mxu0 %v3324
    %3326 = vmatprep.subr.mxu0 0.0
    %v3327 = vand.u32 %v145, 4294901760
    %3328 = vmatpush2.msra.mxu0 %v3327
    %3329 = vmatprep.subr.mxu0 0.0
    %v3330 = vand.u32 %v144, 4294901760
    %3331 = vmatpush2.msra.mxu0 %v3330
    %3332 = vmatprep.subr.mxu0 0.0
    %v3333 = vand.u32 %v143, 4294901760
    %3334 = vmatpush2.msra.mxu0 %v3333
    %3335 = vmatprep.subr.mxu0 0.0
    %v3336 = vand.u32 %v142, 4294901760
    %3337 = vmatpush2.msra.mxu0 %v3336
    %3338 = vmatprep.subr.mxu0 0.0
    %v3339 = vand.u32 %v141, 4294901760
    %3340 = vmatpush2.msra.mxu0 %v3339
    %3341 = vmatprep.subr.mxu0 0.0
    %v3342 = vand.u32 %v140, 4294901760
    %3343 = vmatpush2.msra.mxu0 %v3342
    %3344 = vmatprep.subr.mxu0 0.0
    %v3345 = vand.u32 %v139, 4294901760
    %3346 = vmatpush2.msra.mxu0 %v3345
    %3347 = vmatprep.subr.mxu0 0.0
    %v3348 = vand.u32 %v138, 4294901760
    %3349 = vmatpush2.msra.mxu0 %v3348
    %3350 = vmatprep.subr.mxu0 0.0
    %v3351 = vand.u32 %v137, 4294901760
    %3352 = vmatpush2.msra.mxu0 %v3351
    %3353 = vmatprep.subr.mxu0 0.0
    %v3354 = vand.u32 %v136, 4294901760
    %3355 = vmatpush2.msra.mxu0 %v3354
    %3356 = vmatprep.subr.mxu0 0.0
    %v3357 = vand.u32 %v135, 4294901760
    %3358 = vmatpush2.msra.mxu0 %v3357
    %v3359 = vand.u32 %v186, 4294901760
    %v3360 = vsub.f32 %v186, %v3359
    %v3361 = vand.u32 %v3360, 4294901760
    %3362 = vmatprep.mubr.f32.mxu0 %v3361
    %v3363 = vand.u32 %v184, 4294901760
    %v3364 = vsub.f32 %v184, %v3363
    %v3365 = vand.u32 %v3364, 4294901760
    %3366 = vmatmul.mubr.f32.gmra.mxu0 %v3365
    %v3367 = vpop.f32.mrf.mxu0
    %v3368 = vadd.f32 %v3260, %v3367
    %v3369 = vpop.f32.mrf.mxu0
    %3370 = vdwg.mxu0
    %3371 = vmatprep.subr.mxu0 0.0
    %v3372 = vand.u32 %v134, 4294901760
    %v3373 = vsub.f32 %v134, %v3372
    %v3374 = vand.u32 %v3373, 4294901760
    %3375 = vmatpush1.msra.mxu0 %v3374
    %3376 = vmatprep.subr.mxu0 0.0
    %v3377 = vand.u32 %v133, 4294901760
    %v3378 = vsub.f32 %v133, %v3377
    %v3379 = vand.u32 %v3378, 4294901760
    %3380 = vmatpush1.msra.mxu0 %v3379
    %3381 = vmatprep.subr.mxu0 0.0
    %v3382 = vand.u32 %v132, 4294901760
    %v3383 = vsub.f32 %v132, %v3382
    %v3384 = vand.u32 %v3383, 4294901760
    %3385 = vmatpush1.msra.mxu0 %v3384
    %3386 = vmatprep.subr.mxu0 0.0
    %v3387 = vand.u32 %v131, 4294901760
    %v3388 = vsub.f32 %v131, %v3387
    %v3389 = vand.u32 %v3388, 4294901760
    %3390 = vmatpush1.msra.mxu0 %v3389
    %3391 = vmatprep.subr.mxu0 0.0
    %v3392 = vand.u32 %v130, 4294901760
    %v3393 = vsub.f32 %v130, %v3392
    %v3394 = vand.u32 %v3393, 4294901760
    %3395 = vmatpush1.msra.mxu0 %v3394
    %3396 = vmatprep.subr.mxu0 0.0
    %v3397 = vand.u32 %v129, 4294901760
    %v3398 = vsub.f32 %v129, %v3397
    %v3399 = vand.u32 %v3398, 4294901760
    %3400 = vmatpush1.msra.mxu0 %v3399
    %3401 = vmatprep.subr.mxu0 0.0
    %v3402 = vand.u32 %v128, 4294901760
    %v3403 = vsub.f32 %v128, %v3402
    %v3404 = vand.u32 %v3403, 4294901760
    %3405 = vmatpush1.msra.mxu0 %v3404
    %3406 = vmatprep.subr.mxu0 0.0
    %v3407 = vand.u32 %v127, 4294901760
    %v3408 = vsub.f32 %v127, %v3407
    %v3409 = vand.u32 %v3408, 4294901760
    %3410 = vmatpush1.msra.mxu0 %v3409
    %3411 = vmatprep.subr.mxu0 0.0
    %v3412 = vand.u32 %v126, 4294901760
    %v3413 = vsub.f32 %v126, %v3412
    %v3414 = vand.u32 %v3413, 4294901760
    %3415 = vmatpush1.msra.mxu0 %v3414
    %3416 = vmatprep.subr.mxu0 0.0
    %v3417 = vand.u32 %v125, 4294901760
    %v3418 = vsub.f32 %v125, %v3417
    %v3419 = vand.u32 %v3418, 4294901760
    %3420 = vmatpush1.msra.mxu0 %v3419
    %3421 = vmatprep.subr.mxu0 0.0
    %v3422 = vand.u32 %v124, 4294901760
    %v3423 = vsub.f32 %v124, %v3422
    %v3424 = vand.u32 %v3423, 4294901760
    %3425 = vmatpush1.msra.mxu0 %v3424
    %3426 = vmatprep.subr.mxu0 0.0
    %v3427 = vand.u32 %v123, 4294901760
    %v3428 = vsub.f32 %v123, %v3427
    %v3429 = vand.u32 %v3428, 4294901760
    %3430 = vmatpush1.msra.mxu0 %v3429
    %3431 = vmatprep.subr.mxu0 0.0
    %v3432 = vand.u32 %v122, 4294901760
    %v3433 = vsub.f32 %v122, %v3432
    %v3434 = vand.u32 %v3433, 4294901760
    %3435 = vmatpush1.msra.mxu0 %v3434
    %3436 = vmatprep.subr.mxu0 0.0
    %v3437 = vand.u32 %v121, 4294901760
    %v3438 = vsub.f32 %v121, %v3437
    %v3439 = vand.u32 %v3438, 4294901760
    %3440 = vmatpush1.msra.mxu0 %v3439
    %3441 = vmatprep.subr.mxu0 0.0
    %v3442 = vand.u32 %v120, 4294901760
    %v3443 = vsub.f32 %v120, %v3442
    %v3444 = vand.u32 %v3443, 4294901760
    %3445 = vmatpush1.msra.mxu0 %v3444
    %3446 = vmatprep.subr.mxu0 0.0
    %v3447 = vand.u32 %v119, 4294901760
    %v3448 = vsub.f32 %v119, %v3447
    %v3449 = vand.u32 %v3448, 4294901760
    %3450 = vmatpush1.msra.mxu0 %v3449
    %3451 = vmatprep.subr.mxu0 0.0
    %v3452 = vand.u32 %v150, 4294901760
    %v3453 = vsub.f32 %v150, %v3452
    %v3454 = vand.u32 %v3453, 4294901760
    %3455 = vmatpush2.msra.mxu0 %v3454
    %3456 = vmatprep.subr.mxu0 0.0
    %v3457 = vand.u32 %v149, 4294901760
    %v3458 = vsub.f32 %v149, %v3457
    %v3459 = vand.u32 %v3458, 4294901760
    %3460 = vmatpush2.msra.mxu0 %v3459
    %3461 = vmatprep.subr.mxu0 0.0
    %v3462 = vand.u32 %v148, 4294901760
    %v3463 = vsub.f32 %v148, %v3462
    %v3464 = vand.u32 %v3463, 4294901760
    %3465 = vmatpush2.msra.mxu0 %v3464
    %3466 = vmatprep.subr.mxu0 0.0
    %v3467 = vand.u32 %v147, 4294901760
    %v3468 = vsub.f32 %v147, %v3467
    %v3469 = vand.u32 %v3468, 4294901760
    %3470 = vmatpush2.msra.mxu0 %v3469
    %3471 = vmatprep.subr.mxu0 0.0
    %v3472 = vand.u32 %v146, 4294901760
    %v3473 = vsub.f32 %v146, %v3472
    %v3474 = vand.u32 %v3473, 4294901760
    %3475 = vmatpush2.msra.mxu0 %v3474
    %3476 = vmatprep.subr.mxu0 0.0
    %v3477 = vand.u32 %v145, 4294901760
    %v3478 = vsub.f32 %v145, %v3477
    %v3479 = vand.u32 %v3478, 4294901760
    %3480 = vmatpush2.msra.mxu0 %v3479
    %3481 = vmatprep.subr.mxu0 0.0
    %v3482 = vand.u32 %v144, 4294901760
    %v3483 = vsub.f32 %v144, %v3482
    %v3484 = vand.u32 %v3483, 4294901760
    %3485 = vmatpush2.msra.mxu0 %v3484
    %3486 = vmatprep.subr.mxu0 0.0
    %v3487 = vand.u32 %v143, 4294901760
    %v3488 = vsub.f32 %v143, %v3487
    %v3489 = vand.u32 %v3488, 4294901760
    %3490 = vmatpush2.msra.mxu0 %v3489
    %3491 = vmatprep.subr.mxu0 0.0
    %v3492 = vand.u32 %v142, 4294901760
    %v3493 = vsub.f32 %v142, %v3492
    %v3494 = vand.u32 %v3493, 4294901760
    %3495 = vmatpush2.msra.mxu0 %v3494
    %3496 = vmatprep.subr.mxu0 0.0
    %v3497 = vand.u32 %v141, 4294901760
    %v3498 = vsub.f32 %v141, %v3497
    %v3499 = vand.u32 %v3498, 4294901760
    %3500 = vmatpush2.msra.mxu0 %v3499
    %3501 = vmatprep.subr.mxu0 0.0
    %v3502 = vand.u32 %v140, 4294901760
    %v3503 = vsub.f32 %v140, %v3502
    %v3504 = vand.u32 %v3503, 4294901760
    %3505 = vmatpush2.msra.mxu0 %v3504
    %3506 = vmatprep.subr.mxu0 0.0
    %v3507 = vand.u32 %v139, 4294901760
    %v3508 = vsub.f32 %v139, %v3507
    %v3509 = vand.u32 %v3508, 4294901760
    %3510 = vmatpush2.msra.mxu0 %v3509
    %3511 = vmatprep.subr.mxu0 0.0
    %v3512 = vand.u32 %v138, 4294901760
    %v3513 = vsub.f32 %v138, %v3512
    %v3514 = vand.u32 %v3513, 4294901760
    %3515 = vmatpush2.msra.mxu0 %v3514
    %3516 = vmatprep.subr.mxu0 0.0
    %v3517 = vand.u32 %v137, 4294901760
    %v3518 = vsub.f32 %v137, %v3517
    %v3519 = vand.u32 %v3518, 4294901760
    %3520 = vmatpush2.msra.mxu0 %v3519
    %3521 = vmatprep.subr.mxu0 0.0
    %v3522 = vand.u32 %v136, 4294901760
    %v3523 = vsub.f32 %v136, %v3522
    %v3524 = vand.u32 %v3523, 4294901760
    %3525 = vmatpush2.msra.mxu0 %v3524
    %3526 = vmatprep.subr.mxu0 0.0
    %v3527 = vand.u32 %v135, 4294901760
    %v3528 = vsub.f32 %v135, %v3527
    %v3529 = vand.u32 %v3528, 4294901760
    %3530 = vmatpush2.msra.mxu0 %v3529
    %v3531 = vand.u32 %v186, 4294901760
    %3532 = vmatprep.mubr.f32.mxu0 %v3531
    %v3533 = vand.u32 %v184, 4294901760
    %3534 = vmatmul.mubr.f32.gmra.mxu0 %v3533
    %v3535 = vpop.f32.mrf.mxu0
    %v3536 = vadd.f32 %v3368, %v3535
    %v3537 = vpop.f32.mrf.mxu0
    %3538 = vdwg.mxu0
    %3539 = vmatprep.subr.mxu0 0.0
    %v3540 = vand.u32 %v134, 4294901760
    %3541 = vmatpush1.msra.mxu0 %v3540
    %3542 = vmatprep.subr.mxu0 0.0
    %v3543 = vand.u32 %v133, 4294901760
    %3544 = vmatpush1.msra.mxu0 %v3543
    %3545 = vmatprep.subr.mxu0 0.0
    %v3546 = vand.u32 %v132, 4294901760
    %3547 = vmatpush1.msra.mxu0 %v3546
    %3548 = vmatprep.subr.mxu0 0.0
    %v3549 = vand.u32 %v131, 4294901760
    %3550 = vmatpush1.msra.mxu0 %v3549
    %3551 = vmatprep.subr.mxu0 0.0
    %v3552 = vand.u32 %v130, 4294901760
    %3553 = vmatpush1.msra.mxu0 %v3552
    %3554 = vmatprep.subr.mxu0 0.0
    %v3555 = vand.u32 %v129, 4294901760
    %3556 = vmatpush1.msra.mxu0 %v3555
    %3557 = vmatprep.subr.mxu0 0.0
    %v3558 = vand.u32 %v128, 4294901760
    %3559 = vmatpush1.msra.mxu0 %v3558
    %3560 = vmatprep.subr.mxu0 0.0
    %v3561 = vand.u32 %v127, 4294901760
    %3562 = vmatpush1.msra.mxu0 %v3561
    %3563 = vmatprep.subr.mxu0 0.0
    %v3564 = vand.u32 %v126, 4294901760
    %3565 = vmatpush1.msra.mxu0 %v3564
    %3566 = vmatprep.subr.mxu0 0.0
    %v3567 = vand.u32 %v125, 4294901760
    %3568 = vmatpush1.msra.mxu0 %v3567
    %3569 = vmatprep.subr.mxu0 0.0
    %v3570 = vand.u32 %v124, 4294901760
    %3571 = vmatpush1.msra.mxu0 %v3570
    %3572 = vmatprep.subr.mxu0 0.0
    %v3573 = vand.u32 %v123, 4294901760
    %3574 = vmatpush1.msra.mxu0 %v3573
    %3575 = vmatprep.subr.mxu0 0.0
    %v3576 = vand.u32 %v122, 4294901760
    %3577 = vmatpush1.msra.mxu0 %v3576
    %3578 = vmatprep.subr.mxu0 0.0
    %v3579 = vand.u32 %v121, 4294901760
    %3580 = vmatpush1.msra.mxu0 %v3579
    %3581 = vmatprep.subr.mxu0 0.0
    %v3582 = vand.u32 %v120, 4294901760
    %3583 = vmatpush1.msra.mxu0 %v3582
    %3584 = vmatprep.subr.mxu0 0.0
    %v3585 = vand.u32 %v119, 4294901760
    %3586 = vmatpush1.msra.mxu0 %v3585
    %3587 = vmatprep.subr.mxu0 0.0
    %v3588 = vand.u32 %v150, 4294901760
    %3589 = vmatpush2.msra.mxu0 %v3588
    %3590 = vmatprep.subr.mxu0 0.0
    %v3591 = vand.u32 %v149, 4294901760
    %3592 = vmatpush2.msra.mxu0 %v3591
    %3593 = vmatprep.subr.mxu0 0.0
    %v3594 = vand.u32 %v148, 4294901760
    %3595 = vmatpush2.msra.mxu0 %v3594
    %3596 = vmatprep.subr.mxu0 0.0
    %v3597 = vand.u32 %v147, 4294901760
    %3598 = vmatpush2.msra.mxu0 %v3597
    %3599 = vmatprep.subr.mxu0 0.0
    %v3600 = vand.u32 %v146, 4294901760
    %3601 = vmatpush2.msra.mxu0 %v3600
    %3602 = vmatprep.subr.mxu0 0.0
    %v3603 = vand.u32 %v145, 4294901760
    %3604 = vmatpush2.msra.mxu0 %v3603
    %3605 = vmatprep.subr.mxu0 0.0
    %v3606 = vand.u32 %v144, 4294901760
    %3607 = vmatpush2.msra.mxu0 %v3606
    %3608 = vmatprep.subr.mxu0 0.0
    %v3609 = vand.u32 %v143, 4294901760
    %3610 = vmatpush2.msra.mxu0 %v3609
    %3611 = vmatprep.subr.mxu0 0.0
    %v3612 = vand.u32 %v142, 4294901760
    %3613 = vmatpush2.msra.mxu0 %v3612
    %3614 = vmatprep.subr.mxu0 0.0
    %v3615 = vand.u32 %v141, 4294901760
    %3616 = vmatpush2.msra.mxu0 %v3615
    %3617 = vmatprep.subr.mxu0 0.0
    %v3618 = vand.u32 %v140, 4294901760
    %3619 = vmatpush2.msra.mxu0 %v3618
    %3620 = vmatprep.subr.mxu0 0.0
    %v3621 = vand.u32 %v139, 4294901760
    %3622 = vmatpush2.msra.mxu0 %v3621
    %3623 = vmatprep.subr.mxu0 0.0
    %v3624 = vand.u32 %v138, 4294901760
    %3625 = vmatpush2.msra.mxu0 %v3624
    %3626 = vmatprep.subr.mxu0 0.0
    %v3627 = vand.u32 %v137, 4294901760
    %3628 = vmatpush2.msra.mxu0 %v3627
    %3629 = vmatprep.subr.mxu0 0.0
    %v3630 = vand.u32 %v136, 4294901760
    %3631 = vmatpush2.msra.mxu0 %v3630
    %3632 = vmatprep.subr.mxu0 0.0
    %v3633 = vand.u32 %v135, 4294901760
    %3634 = vmatpush2.msra.mxu0 %v3633
    %v3635 = vand.u32 %v186, 4294901760
    %3636 = vmatprep.mubr.f32.mxu0 %v3635
    %v3637 = vand.u32 %v184, 4294901760
    %3638 = vmatmul.mubr.f32.gmra.mxu0 %v3637
    %v3639 = vpop.f32.mrf.mxu0
    %v3640 = vadd.f32 %v3536, %v3639
    %v3641 = vpop.f32.mrf.mxu0
    %3642 = vdwg.mxu0
    %v3643 = vld [vmem:[%s2] sm:$0xff]
    %v3644 = vld [vmem:[%s2 + $0x8] sm:$0xff]
    %v3645 = vld [vmem:[%s2 + $0x10] sm:$0xff]
    %v3646 = vld [vmem:[%s2 + $0x18] sm:$0xff]
    %v3647 = vld [vmem:[%s2 + $0x20] sm:$0xff]
    %v3648 = vld [vmem:[%s2 + $0x28] sm:$0xff]
    %v3649 = vld [vmem:[%s2 + $0x30] sm:$0xff]
    %v3650 = vld [vmem:[%s2 + $0x38] sm:$0xff]
    %vm3651 = vcmask 523264
    %v3653 = vsel %vm3651, %v3640, 0
    %3655 = vmatprep.subr.mxu0 0.0
    %3656 = vmatpush1.msra.mxu0 0.0
    %3657 = vmatprep.subr.mxu0 0.0
    %3658 = vmatpush1.msra.mxu0 0.0
    %3659 = vmatprep.subr.mxu0 0.0
    %3660 = vmatpush1.msra.mxu0 0.0
    %3661 = vmatprep.subr.mxu0 0.0
    %3662 = vmatpush1.msra.mxu0 0.0
    %3663 = vmatprep.subr.mxu0 0.0
    %3664 = vmatpush1.msra.mxu0 0.0
    %3665 = vmatprep.subr.mxu0 0.0
    %3666 = vmatpush1.msra.mxu0 0.0
    %3667 = vmatprep.subr.mxu0 0.0
    %3668 = vmatpush1.msra.mxu0 0.0
    %3669 = vmatprep.subr.mxu0 0.0
    %3670 = vmatpush1.msra.mxu0 0.0
    %3671 = vmatprep.subr.mxu0 0.0
    %v3672 = vand.u32 %v3650, 4294901760
    %3673 = vmatpush1.msra.mxu0 %v3672
    %3674 = vmatprep.subr.mxu0 0.0
    %v3675 = vand.u32 %v3649, 4294901760
    %3676 = vmatpush1.msra.mxu0 %v3675
    %3677 = vmatprep.subr.mxu0 0.0
    %v3678 = vand.u32 %v3648, 4294901760
    %3679 = vmatpush1.msra.mxu0 %v3678
    %3680 = vmatprep.subr.mxu0 0.0
    %v3681 = vand.u32 %v3647, 4294901760
    %3682 = vmatpush1.msra.mxu0 %v3681
    %3683 = vmatprep.subr.mxu0 0.0
    %v3684 = vand.u32 %v3646, 4294901760
    %3685 = vmatpush1.msra.mxu0 %v3684
    %3686 = vmatprep.subr.mxu0 0.0
    %v3687 = vand.u32 %v3645, 4294901760
    %3688 = vmatpush1.msra.mxu0 %v3687
    %3689 = vmatprep.subr.mxu0 0.0
    %v3690 = vand.u32 %v3644, 4294901760
    %3691 = vmatpush1.msra.mxu0 %v3690
    %3692 = vmatprep.subr.mxu0 0.0
    %v3693 = vand.u32 %v3643, 4294901760
    %3694 = vmatpush1.msra.mxu0 %v3693
    %3695 = vmatprep.subr.mxu0 0.0
    %3696 = vmatpush2.msra.mxu0 0.0
    %3697 = vmatprep.subr.mxu0 0.0
    %3698 = vmatpush2.msra.mxu0 0.0
    %3699 = vmatprep.subr.mxu0 0.0
    %3700 = vmatpush2.msra.mxu0 0.0
    %3701 = vmatprep.subr.mxu0 0.0
    %3702 = vmatpush2.msra.mxu0 0.0
    %3703 = vmatprep.subr.mxu0 0.0
    %3704 = vmatpush2.msra.mxu0 0.0
    %3705 = vmatprep.subr.mxu0 0.0
    %3706 = vmatpush2.msra.mxu0 0.0
    %3707 = vmatprep.subr.mxu0 0.0
    %3708 = vmatpush2.msra.mxu0 0.0
    %3709 = vmatprep.subr.mxu0 0.0
    %3710 = vmatpush2.msra.mxu0 0.0
    %3711 = vmatprep.subr.mxu0 0.0
    %3712 = vmatpush2.msra.mxu0 0.0
    %3713 = vmatprep.subr.mxu0 0.0
    %3714 = vmatpush2.msra.mxu0 0.0
    %3715 = vmatprep.subr.mxu0 0.0
    %3716 = vmatpush2.msra.mxu0 0.0
    %3717 = vmatprep.subr.mxu0 0.0
    %3718 = vmatpush2.msra.mxu0 0.0
    %3719 = vmatprep.subr.mxu0 0.0
    %3720 = vmatpush2.msra.mxu0 0.0
    %3721 = vmatprep.subr.mxu0 0.0
    %3722 = vmatpush2.msra.mxu0 0.0
    %3723 = vmatprep.subr.mxu0 0.0
    %3724 = vmatpush2.msra.mxu0 0.0
    %3725 = vmatprep.subr.mxu0 0.0
    %3726 = vmatpush2.msra.mxu0 0.0
    %3727 = vmatprep.mubr.f32.mxu0 0.0
    %v3728 = vand.u32 %v3653, 4294901760
    %v3729 = vsub.f32 %v3653, %v3728
    %v3730 = vand.u32 %v3729, 4294901760
    %v3731 = vsub.f32 %v3729, %v3730
    %v3732 = vand.u32 %v3731, 4294901760
    %3733 = vmatmul.mubr.f32.gmra.mxu0 %v3732
    %v3734 = vpop.f32.mrf.mxu0
    %v3735 = vadd.f32 0.0, %v3734
    %v3736 = vpop.f32.mrf.mxu0
    %3737 = vdwg.mxu0
    %3738 = vmatprep.subr.mxu0 0.0
    %3739 = vmatpush1.msra.mxu0 0.0
    %3740 = vmatprep.subr.mxu0 0.0
    %3741 = vmatpush1.msra.mxu0 0.0
    %3742 = vmatprep.subr.mxu0 0.0
    %3743 = vmatpush1.msra.mxu0 0.0
    %3744 = vmatprep.subr.mxu0 0.0
    %3745 = vmatpush1.msra.mxu0 0.0
    %3746 = vmatprep.subr.mxu0 0.0
    %3747 = vmatpush1.msra.mxu0 0.0
    %3748 = vmatprep.subr.mxu0 0.0
    %3749 = vmatpush1.msra.mxu0 0.0
    %3750 = vmatprep.subr.mxu0 0.0
    %3751 = vmatpush1.msra.mxu0 0.0
    %3752 = vmatprep.subr.mxu0 0.0
    %3753 = vmatpush1.msra.mxu0 0.0
    %3754 = vmatprep.subr.mxu0 0.0
    %v3755 = vand.u32 %v3650, 4294901760
    %v3756 = vsub.f32 %v3650, %v3755
    %v3757 = vand.u32 %v3756, 4294901760
    %v3758 = vsub.f32 %v3756, %v3757
    %v3759 = vand.u32 %v3758, 4294901760
    %3760 = vmatpush1.msra.mxu0 %v3759
    %3761 = vmatprep.subr.mxu0 0.0
    %v3762 = vand.u32 %v3649, 4294901760
    %v3763 = vsub.f32 %v3649, %v3762
    %v3764 = vand.u32 %v3763, 4294901760
    %v3765 = vsub.f32 %v3763, %v3764
    %v3766 = vand.u32 %v3765, 4294901760
    %3767 = vmatpush1.msra.mxu0 %v3766
    %3768 = vmatprep.subr.mxu0 0.0
    %v3769 = vand.u32 %v3648, 4294901760
    %v3770 = vsub.f32 %v3648, %v3769
    %v3771 = vand.u32 %v3770, 4294901760
    %v3772 = vsub.f32 %v3770, %v3771
    %v3773 = vand.u32 %v3772, 4294901760
    %3774 = vmatpush1.msra.mxu0 %v3773
    %3775 = vmatprep.subr.mxu0 0.0
    %v3776 = vand.u32 %v3647, 4294901760
    %v3777 = vsub.f32 %v3647, %v3776
    %v3778 = vand.u32 %v3777, 4294901760
    %v3779 = vsub.f32 %v3777, %v3778
    %v3780 = vand.u32 %v3779, 4294901760
    %3781 = vmatpush1.msra.mxu0 %v3780
    %3782 = vmatprep.subr.mxu0 0.0
    %v3783 = vand.u32 %v3646, 4294901760
    %v3784 = vsub.f32 %v3646, %v3783
    %v3785 = vand.u32 %v3784, 4294901760
    %v3786 = vsub.f32 %v3784, %v3785
    %v3787 = vand.u32 %v3786, 4294901760
    %3788 = vmatpush1.msra.mxu0 %v3787
    %3789 = vmatprep.subr.mxu0 0.0
    %v3790 = vand.u32 %v3645, 4294901760
    %v3791 = vsub.f32 %v3645, %v3790
    %v3792 = vand.u32 %v3791, 4294901760
    %v3793 = vsub.f32 %v3791, %v3792
    %v3794 = vand.u32 %v3793, 4294901760
    %3795 = vmatpush1.msra.mxu0 %v3794
    %3796 = vmatprep.subr.mxu0 0.0
    %v3797 = vand.u32 %v3644, 4294901760
    %v3798 = vsub.f32 %v3644, %v3797
    %v3799 = vand.u32 %v3798, 4294901760
    %v3800 = vsub.f32 %v3798, %v3799
    %v3801 = vand.u32 %v3800, 4294901760
    %3802 = vmatpush1.msra.mxu0 %v3801
    %3803 = vmatprep.subr.mxu0 0.0
    %v3804 = vand.u32 %v3643, 4294901760
    %v3805 = vsub.f32 %v3643, %v3804
    %v3806 = vand.u32 %v3805, 4294901760
    %v3807 = vsub.f32 %v3805, %v3806
    %v3808 = vand.u32 %v3807, 4294901760
    %3809 = vmatpush1.msra.mxu0 %v3808
    %3810 = vmatprep.subr.mxu0 0.0
    %3811 = vmatpush2.msra.mxu0 0.0
    %3812 = vmatprep.subr.mxu0 0.0
    %3813 = vmatpush2.msra.mxu0 0.0
    %3814 = vmatprep.subr.mxu0 0.0
    %3815 = vmatpush2.msra.mxu0 0.0
    %3816 = vmatprep.subr.mxu0 0.0
    %3817 = vmatpush2.msra.mxu0 0.0
    %3818 = vmatprep.subr.mxu0 0.0
    %3819 = vmatpush2.msra.mxu0 0.0
    %3820 = vmatprep.subr.mxu0 0.0
    %3821 = vmatpush2.msra.mxu0 0.0
    %3822 = vmatprep.subr.mxu0 0.0
    %3823 = vmatpush2.msra.mxu0 0.0
    %3824 = vmatprep.subr.mxu0 0.0
    %3825 = vmatpush2.msra.mxu0 0.0
    %3826 = vmatprep.subr.mxu0 0.0
    %3827 = vmatpush2.msra.mxu0 0.0
    %3828 = vmatprep.subr.mxu0 0.0
    %3829 = vmatpush2.msra.mxu0 0.0
    %3830 = vmatprep.subr.mxu0 0.0
    %3831 = vmatpush2.msra.mxu0 0.0
    %3832 = vmatprep.subr.mxu0 0.0
    %3833 = vmatpush2.msra.mxu0 0.0
    %3834 = vmatprep.subr.mxu0 0.0
    %3835 = vmatpush2.msra.mxu0 0.0
    %3836 = vmatprep.subr.mxu0 0.0
    %3837 = vmatpush2.msra.mxu0 0.0
    %3838 = vmatprep.subr.mxu0 0.0
    %3839 = vmatpush2.msra.mxu0 0.0
    %3840 = vmatprep.subr.mxu0 0.0
    %3841 = vmatpush2.msra.mxu0 0.0
    %3842 = vmatprep.mubr.f32.mxu0 0.0
    %v3843 = vand.u32 %v3653, 4294901760
    %3844 = vmatmul.mubr.f32.gmra.mxu0 %v3843
    %v3845 = vpop.f32.mrf.mxu0
    %v3846 = vadd.f32 %v3735, %v3845
    %v3847 = vpop.f32.mrf.mxu0
    %3848 = vdwg.mxu0
    %3849 = vmatprep.subr.mxu0 0.0
    %3850 = vmatpush1.msra.mxu0 0.0
    %3851 = vmatprep.subr.mxu0 0.0
    %3852 = vmatpush1.msra.mxu0 0.0
    %3853 = vmatprep.subr.mxu0 0.0
    %3854 = vmatpush1.msra.mxu0 0.0
    %3855 = vmatprep.subr.mxu0 0.0
    %3856 = vmatpush1.msra.mxu0 0.0
    %3857 = vmatprep.subr.mxu0 0.0
    %3858 = vmatpush1.msra.mxu0 0.0
    %3859 = vmatprep.subr.mxu0 0.0
    %3860 = vmatpush1.msra.mxu0 0.0
    %3861 = vmatprep.subr.mxu0 0.0
    %3862 = vmatpush1.msra.mxu0 0.0
    %3863 = vmatprep.subr.mxu0 0.0
    %3864 = vmatpush1.msra.mxu0 0.0
    %3865 = vmatprep.subr.mxu0 0.0
    %v3866 = vand.u32 %v3650, 4294901760
    %v3867 = vsub.f32 %v3650, %v3866
    %3868 = vmatpush1.msra.mxu0 %v3867
    %3869 = vmatprep.subr.mxu0 0.0
    %v3870 = vand.u32 %v3649, 4294901760
    %v3871 = vsub.f32 %v3649, %v3870
    %3872 = vmatpush1.msra.mxu0 %v3871
    %3873 = vmatprep.subr.mxu0 0.0
    %v3874 = vand.u32 %v3648, 4294901760
    %v3875 = vsub.f32 %v3648, %v3874
    %3876 = vmatpush1.msra.mxu0 %v3875
    %3877 = vmatprep.subr.mxu0 0.0
    %v3878 = vand.u32 %v3647, 4294901760
    %v3879 = vsub.f32 %v3647, %v3878
    %3880 = vmatpush1.msra.mxu0 %v3879
    %3881 = vmatprep.subr.mxu0 0.0
    %v3882 = vand.u32 %v3646, 4294901760
    %v3883 = vsub.f32 %v3646, %v3882
    %3884 = vmatpush1.msra.mxu0 %v3883
    %3885 = vmatprep.subr.mxu0 0.0
    %v3886 = vand.u32 %v3645, 4294901760
    %v3887 = vsub.f32 %v3645, %v3886
    %3888 = vmatpush1.msra.mxu0 %v3887
    %3889 = vmatprep.subr.mxu0 0.0
    %v3890 = vand.u32 %v3644, 4294901760
    %v3891 = vsub.f32 %v3644, %v3890
    %3892 = vmatpush1.msra.mxu0 %v3891
    %3893 = vmatprep.subr.mxu0 0.0
    %v3894 = vand.u32 %v3643, 4294901760
    %v3895 = vsub.f32 %v3643, %v3894
    %3896 = vmatpush1.msra.mxu0 %v3895
    %3897 = vmatprep.subr.mxu0 0.0
    %3898 = vmatpush2.msra.mxu0 0.0
    %3899 = vmatprep.subr.mxu0 0.0
    %3900 = vmatpush2.msra.mxu0 0.0
    %3901 = vmatprep.subr.mxu0 0.0
    %3902 = vmatpush2.msra.mxu0 0.0
    %3903 = vmatprep.subr.mxu0 0.0
    %3904 = vmatpush2.msra.mxu0 0.0
    %3905 = vmatprep.subr.mxu0 0.0
    %3906 = vmatpush2.msra.mxu0 0.0
    %3907 = vmatprep.subr.mxu0 0.0
    %3908 = vmatpush2.msra.mxu0 0.0
    %3909 = vmatprep.subr.mxu0 0.0
    %3910 = vmatpush2.msra.mxu0 0.0
    %3911 = vmatprep.subr.mxu0 0.0
    %3912 = vmatpush2.msra.mxu0 0.0
    %3913 = vmatprep.subr.mxu0 0.0
    %3914 = vmatpush2.msra.mxu0 0.0
    %3915 = vmatprep.subr.mxu0 0.0
    %3916 = vmatpush2.msra.mxu0 0.0
    %3917 = vmatprep.subr.mxu0 0.0
    %3918 = vmatpush2.msra.mxu0 0.0
    %3919 = vmatprep.subr.mxu0 0.0
    %3920 = vmatpush2.msra.mxu0 0.0
    %3921 = vmatprep.subr.mxu0 0.0
    %3922 = vmatpush2.msra.mxu0 0.0
    %3923 = vmatprep.subr.mxu0 0.0
    %3924 = vmatpush2.msra.mxu0 0.0
    %3925 = vmatprep.subr.mxu0 0.0
    %3926 = vmatpush2.msra.mxu0 0.0
    %3927 = vmatprep.subr.mxu0 0.0
    %3928 = vmatpush2.msra.mxu0 0.0
    %3929 = vmatprep.mubr.f32.mxu0 0.0
    %v3930 = vand.u32 %v3653, 4294901760
    %v3931 = vsub.f32 %v3653, %v3930
    %3932 = vmatmul.mubr.f32.gmra.mxu0 %v3931
    %v3933 = vpop.f32.mrf.mxu0
    %v3934 = vadd.f32 %v3846, %v3933
    %v3935 = vpop.f32.mrf.mxu0
    %3936 = vdwg.mxu0
    %3937 = vmatprep.subr.mxu0 0.0
    %3938 = vmatpush1.msra.mxu0 0.0
    %3939 = vmatprep.subr.mxu0 0.0
    %3940 = vmatpush1.msra.mxu0 0.0
    %3941 = vmatprep.subr.mxu0 0.0
    %3942 = vmatpush1.msra.mxu0 0.0
    %3943 = vmatprep.subr.mxu0 0.0
    %3944 = vmatpush1.msra.mxu0 0.0
    %3945 = vmatprep.subr.mxu0 0.0
    %3946 = vmatpush1.msra.mxu0 0.0
    %3947 = vmatprep.subr.mxu0 0.0
    %3948 = vmatpush1.msra.mxu0 0.0
    %3949 = vmatprep.subr.mxu0 0.0
    %3950 = vmatpush1.msra.mxu0 0.0
    %3951 = vmatprep.subr.mxu0 0.0
    %3952 = vmatpush1.msra.mxu0 0.0
    %3953 = vmatprep.subr.mxu0 0.0
    %v3954 = vand.u32 %v3650, 4294901760
    %3955 = vmatpush1.msra.mxu0 %v3954
    %3956 = vmatprep.subr.mxu0 0.0
    %v3957 = vand.u32 %v3649, 4294901760
    %3958 = vmatpush1.msra.mxu0 %v3957
    %3959 = vmatprep.subr.mxu0 0.0
    %v3960 = vand.u32 %v3648, 4294901760
    %3961 = vmatpush1.msra.mxu0 %v3960
    %3962 = vmatprep.subr.mxu0 0.0
    %v3963 = vand.u32 %v3647, 4294901760
    %3964 = vmatpush1.msra.mxu0 %v3963
    %3965 = vmatprep.subr.mxu0 0.0
    %v3966 = vand.u32 %v3646, 4294901760
    %3967 = vmatpush1.msra.mxu0 %v3966
    %3968 = vmatprep.subr.mxu0 0.0
    %v3969 = vand.u32 %v3645, 4294901760
    %3970 = vmatpush1.msra.mxu0 %v3969
    %3971 = vmatprep.subr.mxu0 0.0
    %v3972 = vand.u32 %v3644, 4294901760
    %3973 = vmatpush1.msra.mxu0 %v3972
    %3974 = vmatprep.subr.mxu0 0.0
    %v3975 = vand.u32 %v3643, 4294901760
    %3976 = vmatpush1.msra.mxu0 %v3975
    %3977 = vmatprep.subr.mxu0 0.0
    %3978 = vmatpush2.msra.mxu0 0.0
    %3979 = vmatprep.subr.mxu0 0.0
    %3980 = vmatpush2.msra.mxu0 0.0
    %3981 = vmatprep.subr.mxu0 0.0
    %3982 = vmatpush2.msra.mxu0 0.0
    %3983 = vmatprep.subr.mxu0 0.0
    %3984 = vmatpush2.msra.mxu0 0.0
    %3985 = vmatprep.subr.mxu0 0.0
    %3986 = vmatpush2.msra.mxu0 0.0
    %3987 = vmatprep.subr.mxu0 0.0
    %3988 = vmatpush2.msra.mxu0 0.0
    %3989 = vmatprep.subr.mxu0 0.0
    %3990 = vmatpush2.msra.mxu0 0.0
    %3991 = vmatprep.subr.mxu0 0.0
    %3992 = vmatpush2.msra.mxu0 0.0
    %3993 = vmatprep.subr.mxu0 0.0
    %3994 = vmatpush2.msra.mxu0 0.0
    %3995 = vmatprep.subr.mxu0 0.0
    %3996 = vmatpush2.msra.mxu0 0.0
    %3997 = vmatprep.subr.mxu0 0.0
    %3998 = vmatpush2.msra.mxu0 0.0
    %3999 = vmatprep.subr.mxu0 0.0
    %4000 = vmatpush2.msra.mxu0 0.0
    %4001 = vmatprep.subr.mxu0 0.0
    %4002 = vmatpush2.msra.mxu0 0.0
    %4003 = vmatprep.subr.mxu0 0.0
    %4004 = vmatpush2.msra.mxu0 0.0
    %4005 = vmatprep.subr.mxu0 0.0
    %4006 = vmatpush2.msra.mxu0 0.0
    %4007 = vmatprep.subr.mxu0 0.0
    %4008 = vmatpush2.msra.mxu0 0.0
    %4009 = vmatprep.mubr.f32.mxu0 0.0
    %v4010 = vand.u32 %v3653, 4294901760
    %v4011 = vsub.f32 %v3653, %v4010
    %v4012 = vand.u32 %v4011, 4294901760
    %4013 = vmatmul.mubr.f32.gmra.mxu0 %v4012
    %v4014 = vpop.f32.mrf.mxu0
    %v4015 = vadd.f32 %v3934, %v4014
    %v4016 = vpop.f32.mrf.mxu0
    %4017 = vdwg.mxu0
    %4018 = vmatprep.subr.mxu0 0.0
    %4019 = vmatpush1.msra.mxu0 0.0
    %4020 = vmatprep.subr.mxu0 0.0
    %4021 = vmatpush1.msra.mxu0 0.0
    %4022 = vmatprep.subr.mxu0 0.0
    %4023 = vmatpush1.msra.mxu0 0.0
    %4024 = vmatprep.subr.mxu0 0.0
    %4025 = vmatpush1.msra.mxu0 0.0
    %4026 = vmatprep.subr.mxu0 0.0
    %4027 = vmatpush1.msra.mxu0 0.0
    %4028 = vmatprep.subr.mxu0 0.0
    %4029 = vmatpush1.msra.mxu0 0.0
    %4030 = vmatprep.subr.mxu0 0.0
    %4031 = vmatpush1.msra.mxu0 0.0
    %4032 = vmatprep.subr.mxu0 0.0
    %4033 = vmatpush1.msra.mxu0 0.0
    %4034 = vmatprep.subr.mxu0 0.0
    %v4035 = vand.u32 %v3650, 4294901760
    %v4036 = vsub.f32 %v3650, %v4035
    %v4037 = vand.u32 %v4036, 4294901760
    %4038 = vmatpush1.msra.mxu0 %v4037
    %4039 = vmatprep.subr.mxu0 0.0
    %v4040 = vand.u32 %v3649, 4294901760
    %v4041 = vsub.f32 %v3649, %v4040
    %v4042 = vand.u32 %v4041, 4294901760
    %4043 = vmatpush1.msra.mxu0 %v4042
    %4044 = vmatprep.subr.mxu0 0.0
    %v4045 = vand.u32 %v3648, 4294901760
    %v4046 = vsub.f32 %v3648, %v4045
    %v4047 = vand.u32 %v4046, 4294901760
    %4048 = vmatpush1.msra.mxu0 %v4047
    %4049 = vmatprep.subr.mxu0 0.0
    %v4050 = vand.u32 %v3647, 4294901760
    %v4051 = vsub.f32 %v3647, %v4050
    %v4052 = vand.u32 %v4051, 4294901760
    %4053 = vmatpush1.msra.mxu0 %v4052
    %4054 = vmatprep.subr.mxu0 0.0
    %v4055 = vand.u32 %v3646, 4294901760
    %v4056 = vsub.f32 %v3646, %v4055
    %v4057 = vand.u32 %v4056, 4294901760
    %4058 = vmatpush1.msra.mxu0 %v4057
    %4059 = vmatprep.subr.mxu0 0.0
    %v4060 = vand.u32 %v3645, 4294901760
    %v4061 = vsub.f32 %v3645, %v4060
    %v4062 = vand.u32 %v4061, 4294901760
    %4063 = vmatpush1.msra.mxu0 %v4062
    %4064 = vmatprep.subr.mxu0 0.0
    %v4065 = vand.u32 %v3644, 4294901760
    %v4066 = vsub.f32 %v3644, %v4065
    %v4067 = vand.u32 %v4066, 4294901760
    %4068 = vmatpush1.msra.mxu0 %v4067
    %4069 = vmatprep.subr.mxu0 0.0
    %v4070 = vand.u32 %v3643, 4294901760
    %v4071 = vsub.f32 %v3643, %v4070
    %v4072 = vand.u32 %v4071, 4294901760
    %4073 = vmatpush1.msra.mxu0 %v4072
    %4074 = vmatprep.subr.mxu0 0.0
    %4075 = vmatpush2.msra.mxu0 0.0
    %4076 = vmatprep.subr.mxu0 0.0
    %4077 = vmatpush2.msra.mxu0 0.0
    %4078 = vmatprep.subr.mxu0 0.0
    %4079 = vmatpush2.msra.mxu0 0.0
    %4080 = vmatprep.subr.mxu0 0.0
    %4081 = vmatpush2.msra.mxu0 0.0
    %4082 = vmatprep.subr.mxu0 0.0
    %4083 = vmatpush2.msra.mxu0 0.0
    %4084 = vmatprep.subr.mxu0 0.0
    %4085 = vmatpush2.msra.mxu0 0.0
    %4086 = vmatprep.subr.mxu0 0.0
    %4087 = vmatpush2.msra.mxu0 0.0
    %4088 = vmatprep.subr.mxu0 0.0
    %4089 = vmatpush2.msra.mxu0 0.0
    %4090 = vmatprep.subr.mxu0 0.0
    %4091 = vmatpush2.msra.mxu0 0.0
    %4092 = vmatprep.subr.mxu0 0.0
    %4093 = vmatpush2.msra.mxu0 0.0
    %4094 = vmatprep.subr.mxu0 0.0
    %4095 = vmatpush2.msra.mxu0 0.0
    %4096 = vmatprep.subr.mxu0 0.0
    %4097 = vmatpush2.msra.mxu0 0.0
    %4098 = vmatprep.subr.mxu0 0.0
    %4099 = vmatpush2.msra.mxu0 0.0
    %4100 = vmatprep.subr.mxu0 0.0
    %4101 = vmatpush2.msra.mxu0 0.0
    %4102 = vmatprep.subr.mxu0 0.0
    %4103 = vmatpush2.msra.mxu0 0.0
    %4104 = vmatprep.subr.mxu0 0.0
    %4105 = vmatpush2.msra.mxu0 0.0
    %4106 = vmatprep.mubr.f32.mxu0 0.0
    %v4107 = vand.u32 %v3653, 4294901760
    %4108 = vmatmul.mubr.f32.gmra.mxu0 %v4107
    %v4109 = vpop.f32.mrf.mxu0
    %v4110 = vadd.f32 %v4015, %v4109
    %v4111 = vpop.f32.mrf.mxu0
    %4112 = vdwg.mxu0
    %4113 = vmatprep.subr.mxu0 0.0
    %4114 = vmatpush1.msra.mxu0 0.0
    %4115 = vmatprep.subr.mxu0 0.0
    %4116 = vmatpush1.msra.mxu0 0.0
    %4117 = vmatprep.subr.mxu0 0.0
    %4118 = vmatpush1.msra.mxu0 0.0
    %4119 = vmatprep.subr.mxu0 0.0
    %4120 = vmatpush1.msra.mxu0 0.0
    %4121 = vmatprep.subr.mxu0 0.0
    %4122 = vmatpush1.msra.mxu0 0.0
    %4123 = vmatprep.subr.mxu0 0.0
    %4124 = vmatpush1.msra.mxu0 0.0
    %4125 = vmatprep.subr.mxu0 0.0
    %4126 = vmatpush1.msra.mxu0 0.0
    %4127 = vmatprep.subr.mxu0 0.0
    %4128 = vmatpush1.msra.mxu0 0.0
    %4129 = vmatprep.subr.mxu0 0.0
    %v4130 = vand.u32 %v3650, 4294901760
    %4131 = vmatpush1.msra.mxu0 %v4130
    %4132 = vmatprep.subr.mxu0 0.0
    %v4133 = vand.u32 %v3649, 4294901760
    %4134 = vmatpush1.msra.mxu0 %v4133
    %4135 = vmatprep.subr.mxu0 0.0
    %v4136 = vand.u32 %v3648, 4294901760
    %4137 = vmatpush1.msra.mxu0 %v4136
    %4138 = vmatprep.subr.mxu0 0.0
    %v4139 = vand.u32 %v3647, 4294901760
    %4140 = vmatpush1.msra.mxu0 %v4139
    %4141 = vmatprep.subr.mxu0 0.0
    %v4142 = vand.u32 %v3646, 4294901760
    %4143 = vmatpush1.msra.mxu0 %v4142
    %4144 = vmatprep.subr.mxu0 0.0
    %v4145 = vand.u32 %v3645, 4294901760
    %4146 = vmatpush1.msra.mxu0 %v4145
    %4147 = vmatprep.subr.mxu0 0.0
    %v4148 = vand.u32 %v3644, 4294901760
    %4149 = vmatpush1.msra.mxu0 %v4148
    %4150 = vmatprep.subr.mxu0 0.0
    %v4151 = vand.u32 %v3643, 4294901760
    %4152 = vmatpush1.msra.mxu0 %v4151
    %4153 = vmatprep.subr.mxu0 0.0
    %4154 = vmatpush2.msra.mxu0 0.0
    %4155 = vmatprep.subr.mxu0 0.0
    %4156 = vmatpush2.msra.mxu0 0.0
    %4157 = vmatprep.subr.mxu0 0.0
    %4158 = vmatpush2.msra.mxu0 0.0
    %4159 = vmatprep.subr.mxu0 0.0
    %4160 = vmatpush2.msra.mxu0 0.0
    %4161 = vmatprep.subr.mxu0 0.0
    %4162 = vmatpush2.msra.mxu0 0.0
    %4163 = vmatprep.subr.mxu0 0.0
    %4164 = vmatpush2.msra.mxu0 0.0
    %4165 = vmatprep.subr.mxu0 0.0
    %4166 = vmatpush2.msra.mxu0 0.0
    %4167 = vmatprep.subr.mxu0 0.0
    %4168 = vmatpush2.msra.mxu0 0.0
    %4169 = vmatprep.subr.mxu0 0.0
    %4170 = vmatpush2.msra.mxu0 0.0
    %4171 = vmatprep.subr.mxu0 0.0
    %4172 = vmatpush2.msra.mxu0 0.0
    %4173 = vmatprep.subr.mxu0 0.0
    %4174 = vmatpush2.msra.mxu0 0.0
    %4175 = vmatprep.subr.mxu0 0.0
    %4176 = vmatpush2.msra.mxu0 0.0
    %4177 = vmatprep.subr.mxu0 0.0
    %4178 = vmatpush2.msra.mxu0 0.0
    %4179 = vmatprep.subr.mxu0 0.0
    %4180 = vmatpush2.msra.mxu0 0.0
    %4181 = vmatprep.subr.mxu0 0.0
    %4182 = vmatpush2.msra.mxu0 0.0
    %4183 = vmatprep.subr.mxu0 0.0
    %4184 = vmatpush2.msra.mxu0 0.0
    %4185 = vmatprep.mubr.f32.mxu0 0.0
    %v4186 = vand.u32 %v3653, 4294901760
    %4187 = vmatmul.mubr.f32.gmra.mxu0 %v4186
    %v4188 = vpop.f32.mrf.mxu0
    %v4189 = vadd.f32 %v4110, %v4188
    %v4190 = vpop.f32.mrf.mxu0
    %4191 = vdwg.mxu0
    %v4192 = vmax.f32 %v4189, 0.0
    %v4193 = vld [vmem:[%s3] sm:$0xf]
    %vm4194 = vcmask 31744
    %v4196 = vsel %vm4194, %v4192, 0
    %vm4198 = vcmask 1043456
    %v4200 = vsel %vm4198, %v4193, 0
    %4202 = vmatprep.subr.mxu0 0.0
    %4203 = vmatpush1.msra.mxu0 0.0
    %4204 = vmatprep.subr.mxu0 0.0
    %4205 = vmatpush1.msra.mxu0 0.0
    %4206 = vmatprep.subr.mxu0 0.0
    %4207 = vmatpush1.msra.mxu0 0.0
    %4208 = vmatprep.subr.mxu0 0.0
    %4209 = vmatpush1.msra.mxu0 0.0
    %4210 = vmatprep.subr.mxu0 0.0
    %4211 = vmatpush1.msra.mxu0 0.0
    %4212 = vmatprep.subr.mxu0 0.0
    %4213 = vmatpush1.msra.mxu0 0.0
    %4214 = vmatprep.subr.mxu0 0.0
    %4215 = vmatpush1.msra.mxu0 0.0
    %4216 = vmatprep.subr.mxu0 0.0
    %4217 = vmatpush1.msra.mxu0 0.0
    %4218 = vmatprep.subr.mxu0 0.0
    %4219 = vmatpush1.msra.mxu0 0.0
    %4220 = vmatprep.subr.mxu0 0.0
    %4221 = vmatpush1.msra.mxu0 0.0
    %4222 = vmatprep.subr.mxu0 0.0
    %4223 = vmatpush1.msra.mxu0 0.0
    %4224 = vmatprep.subr.mxu0 0.0
    %4225 = vmatpush1.msra.mxu0 0.0
    %4226 = vmatprep.subr.mxu0 0.0
    %4227 = vmatpush1.msra.mxu0 0.0
    %4228 = vmatprep.subr.mxu0 0.0
    %4229 = vmatpush1.msra.mxu0 0.0
    %4230 = vmatprep.subr.mxu0 0.0
    %4231 = vmatpush1.msra.mxu0 0.0
    %4232 = vmatprep.subr.mxu0 0.0
    %v4233 = vand.u32 %v4200, 4294901760
    %4234 = vmatpush1.msra.mxu0 %v4233
    %4235 = vmatprep.subr.mxu0 0.0
    %4236 = vmatpush2.msra.mxu0 0.0
    %4237 = vmatprep.subr.mxu0 0.0
    %4238 = vmatpush2.msra.mxu0 0.0
    %4239 = vmatprep.subr.mxu0 0.0
    %4240 = vmatpush2.msra.mxu0 0.0
    %4241 = vmatprep.subr.mxu0 0.0
    %4242 = vmatpush2.msra.mxu0 0.0
    %4243 = vmatprep.subr.mxu0 0.0
    %4244 = vmatpush2.msra.mxu0 0.0
    %4245 = vmatprep.subr.mxu0 0.0
    %4246 = vmatpush2.msra.mxu0 0.0
    %4247 = vmatprep.subr.mxu0 0.0
    %4248 = vmatpush2.msra.mxu0 0.0
    %4249 = vmatprep.subr.mxu0 0.0
    %4250 = vmatpush2.msra.mxu0 0.0
    %4251 = vmatprep.subr.mxu0 0.0
    %4252 = vmatpush2.msra.mxu0 0.0
    %4253 = vmatprep.subr.mxu0 0.0
    %4254 = vmatpush2.msra.mxu0 0.0
    %4255 = vmatprep.subr.mxu0 0.0
    %4256 = vmatpush2.msra.mxu0 0.0
    %4257 = vmatprep.subr.mxu0 0.0
    %4258 = vmatpush2.msra.mxu0 0.0
    %4259 = vmatprep.subr.mxu0 0.0
    %4260 = vmatpush2.msra.mxu0 0.0
    %4261 = vmatprep.subr.mxu0 0.0
    %4262 = vmatpush2.msra.mxu0 0.0
    %4263 = vmatprep.subr.mxu0 0.0
    %4264 = vmatpush2.msra.mxu0 0.0
    %4265 = vmatprep.subr.mxu0 0.0
    %4266 = vmatpush2.msra.mxu0 0.0
    %4267 = vmatprep.mubr.f32.mxu0 0.0
    %v4268 = vand.u32 %v4196, 4294901760
    %v4269 = vsub.f32 %v4196, %v4268
    %v4270 = vand.u32 %v4269, 4294901760
    %v4271 = vsub.f32 %v4269, %v4270
    %v4272 = vand.u32 %v4271, 4294901760
    %4273 = vmatmul.mubr.f32.gmra.mxu0 %v4272
    %v4274 = vpop.f32.mrf.mxu0
    %v4275 = vadd.f32 0.0, %v4274
    %v4276 = vpop.f32.mrf.mxu0
    %4277 = vdwg.mxu0
    %4278 = vmatprep.subr.mxu0 0.0
    %4279 = vmatpush1.msra.mxu0 0.0
    %4280 = vmatprep.subr.mxu0 0.0
    %4281 = vmatpush1.msra.mxu0 0.0
    %4282 = vmatprep.subr.mxu0 0.0
    %4283 = vmatpush1.msra.mxu0 0.0
    %4284 = vmatprep.subr.mxu0 0.0
    %4285 = vmatpush1.msra.mxu0 0.0
    %4286 = vmatprep.subr.mxu0 0.0
    %4287 = vmatpush1.msra.mxu0 0.0
    %4288 = vmatprep.subr.mxu0 0.0
    %4289 = vmatpush1.msra.mxu0 0.0
    %4290 = vmatprep.subr.mxu0 0.0
    %4291 = vmatpush1.msra.mxu0 0.0
    %4292 = vmatprep.subr.mxu0 0.0
    %4293 = vmatpush1.msra.mxu0 0.0
    %4294 = vmatprep.subr.mxu0 0.0
    %4295 = vmatpush1.msra.mxu0 0.0
    %4296 = vmatprep.subr.mxu0 0.0
    %4297 = vmatpush1.msra.mxu0 0.0
    %4298 = vmatprep.subr.mxu0 0.0
    %4299 = vmatpush1.msra.mxu0 0.0
    %4300 = vmatprep.subr.mxu0 0.0
    %4301 = vmatpush1.msra.mxu0 0.0
    %4302 = vmatprep.subr.mxu0 0.0
    %4303 = vmatpush1.msra.mxu0 0.0
    %4304 = vmatprep.subr.mxu0 0.0
    %4305 = vmatpush1.msra.mxu0 0.0
    %4306 = vmatprep.subr.mxu0 0.0
    %4307 = vmatpush1.msra.mxu0 0.0
    %4308 = vmatprep.subr.mxu0 0.0
    %v4309 = vand.u32 %v4200, 4294901760
    %v4310 = vsub.f32 %v4200, %v4309
    %v4311 = vand.u32 %v4310, 4294901760
    %v4312 = vsub.f32 %v4310, %v4311
    %v4313 = vand.u32 %v4312, 4294901760
    %4314 = vmatpush1.msra.mxu0 %v4313
    %4315 = vmatprep.subr.mxu0 0.0
    %4316 = vmatpush2.msra.mxu0 0.0
    %4317 = vmatprep.subr.mxu0 0.0
    %4318 = vmatpush2.msra.mxu0 0.0
    %4319 = vmatprep.subr.mxu0 0.0
    %4320 = vmatpush2.msra.mxu0 0.0
    %4321 = vmatprep.subr.mxu0 0.0
    %4322 = vmatpush2.msra.mxu0 0.0
    %4323 = vmatprep.subr.mxu0 0.0
    %4324 = vmatpush2.msra.mxu0 0.0
    %4325 = vmatprep.subr.mxu0 0.0
    %4326 = vmatpush2.msra.mxu0 0.0
    %4327 = vmatprep.subr.mxu0 0.0
    %4328 = vmatpush2.msra.mxu0 0.0
    %4329 = vmatprep.subr.mxu0 0.0
    %4330 = vmatpush2.msra.mxu0 0.0
    %4331 = vmatprep.subr.mxu0 0.0
    %4332 = vmatpush2.msra.mxu0 0.0
    %4333 = vmatprep.subr.mxu0 0.0
    %4334 = vmatpush2.msra.mxu0 0.0
    %4335 = vmatprep.subr.mxu0 0.0
    %4336 = vmatpush2.msra.mxu0 0.0
    %4337 = vmatprep.subr.mxu0 0.0
    %4338 = vmatpush2.msra.mxu0 0.0
    %4339 = vmatprep.subr.mxu0 0.0
    %4340 = vmatpush2.msra.mxu0 0.0
    %4341 = vmatprep.subr.mxu0 0.0
    %4342 = vmatpush2.msra.mxu0 0.0
    %4343 = vmatprep.subr.mxu0 0.0
    %4344 = vmatpush2.msra.mxu0 0.0
    %4345 = vmatprep.subr.mxu0 0.0
    %4346 = vmatpush2.msra.mxu0 0.0
    %4347 = vmatprep.mubr.f32.mxu0 0.0
    %v4348 = vand.u32 %v4196, 4294901760
    %4349 = vmatmul.mubr.f32.gmra.mxu0 %v4348
    %v4350 = vpop.f32.mrf.mxu0
    %v4351 = vadd.f32 %v4275, %v4350
    %v4352 = vpop.f32.mrf.mxu0
    %4353 = vdwg.mxu0
    %4354 = vmatprep.subr.mxu0 0.0
    %4355 = vmatpush1.msra.mxu0 0.0
    %4356 = vmatprep.subr.mxu0 0.0
    %4357 = vmatpush1.msra.mxu0 0.0
    %4358 = vmatprep.subr.mxu0 0.0
    %4359 = vmatpush1.msra.mxu0 0.0
    %4360 = vmatprep.subr.mxu0 0.0
    %4361 = vmatpush1.msra.mxu0 0.0
    %4362 = vmatprep.subr.mxu0 0.0
    %4363 = vmatpush1.msra.mxu0 0.0
    %4364 = vmatprep.subr.mxu0 0.0
    %4365 = vmatpush1.msra.mxu0 0.0
    %4366 = vmatprep.subr.mxu0 0.0
    %4367 = vmatpush1.msra.mxu0 0.0
    %4368 = vmatprep.subr.mxu0 0.0
    %4369 = vmatpush1.msra.mxu0 0.0
    %4370 = vmatprep.subr.mxu0 0.0
    %4371 = vmatpush1.msra.mxu0 0.0
    %4372 = vmatprep.subr.mxu0 0.0
    %4373 = vmatpush1.msra.mxu0 0.0
    %4374 = vmatprep.subr.mxu0 0.0
    %4375 = vmatpush1.msra.mxu0 0.0
    %4376 = vmatprep.subr.mxu0 0.0
    %4377 = vmatpush1.msra.mxu0 0.0
    %4378 = vmatprep.subr.mxu0 0.0
    %4379 = vmatpush1.msra.mxu0 0.0
    %4380 = vmatprep.subr.mxu0 0.0
    %4381 = vmatpush1.msra.mxu0 0.0
    %4382 = vmatprep.subr.mxu0 0.0
    %4383 = vmatpush1.msra.mxu0 0.0
    %4384 = vmatprep.subr.mxu0 0.0
    %v4385 = vand.u32 %v4200, 4294901760
    %v4386 = vsub.f32 %v4200, %v4385
    %4387 = vmatpush1.msra.mxu0 %v4386
    %4388 = vmatprep.subr.mxu0 0.0
    %4389 = vmatpush2.msra.mxu0 0.0
    %4390 = vmatprep.subr.mxu0 0.0
    %4391 = vmatpush2.msra.mxu0 0.0
    %4392 = vmatprep.subr.mxu0 0.0
    %4393 = vmatpush2.msra.mxu0 0.0
    %4394 = vmatprep.subr.mxu0 0.0
    %4395 = vmatpush2.msra.mxu0 0.0
    %4396 = vmatprep.subr.mxu0 0.0
    %4397 = vmatpush2.msra.mxu0 0.0
    %4398 = vmatprep.subr.mxu0 0.0
    %4399 = vmatpush2.msra.mxu0 0.0
    %4400 = vmatprep.subr.mxu0 0.0
    %4401 = vmatpush2.msra.mxu0 0.0
    %4402 = vmatprep.subr.mxu0 0.0
    %4403 = vmatpush2.msra.mxu0 0.0
    %4404 = vmatprep.subr.mxu0 0.0
    %4405 = vmatpush2.msra.mxu0 0.0
    %4406 = vmatprep.subr.mxu0 0.0
    %4407 = vmatpush2.msra.mxu0 0.0
    %4408 = vmatprep.subr.mxu0 0.0
    %4409 = vmatpush2.msra.mxu0 0.0
    %4410 = vmatprep.subr.mxu0 0.0
    %4411 = vmatpush2.msra.mxu0 0.0
    %4412 = vmatprep.subr.mxu0 0.0
    %4413 = vmatpush2.msra.mxu0 0.0
    %4414 = vmatprep.subr.mxu0 0.0
    %4415 = vmatpush2.msra.mxu0 0.0
    %4416 = vmatprep.subr.mxu0 0.0
    %4417 = vmatpush2.msra.mxu0 0.0
    %4418 = vmatprep.subr.mxu0 0.0
    %4419 = vmatpush2.msra.mxu0 0.0
    %4420 = vmatprep.mubr.f32.mxu0 0.0
    %v4421 = vand.u32 %v4196, 4294901760
    %v4422 = vsub.f32 %v4196, %v4421
    %4423 = vmatmul.mubr.f32.gmra.mxu0 %v4422
    %v4424 = vpop.f32.mrf.mxu0
    %v4425 = vadd.f32 %v4351, %v4424
    %v4426 = vpop.f32.mrf.mxu0
    %4427 = vdwg.mxu0
    %4428 = vmatprep.subr.mxu0 0.0
    %4429 = vmatpush1.msra.mxu0 0.0
    %4430 = vmatprep.subr.mxu0 0.0
    %4431 = vmatpush1.msra.mxu0 0.0
    %4432 = vmatprep.subr.mxu0 0.0
    %4433 = vmatpush1.msra.mxu0 0.0
    %4434 = vmatprep.subr.mxu0 0.0
    %4435 = vmatpush1.msra.mxu0 0.0
    %4436 = vmatprep.subr.mxu0 0.0
    %4437 = vmatpush1.msra.mxu0 0.0
    %4438 = vmatprep.subr.mxu0 0.0
    %4439 = vmatpush1.msra.mxu0 0.0
    %4440 = vmatprep.subr.mxu0 0.0
    %4441 = vmatpush1.msra.mxu0 0.0
    %4442 = vmatprep.subr.mxu0 0.0
    %4443 = vmatpush1.msra.mxu0 0.0
    %4444 = vmatprep.subr.mxu0 0.0
    %4445 = vmatpush1.msra.mxu0 0.0
    %4446 = vmatprep.subr.mxu0 0.0
    %4447 = vmatpush1.msra.mxu0 0.0
    %4448 = vmatprep.subr.mxu0 0.0
    %4449 = vmatpush1.msra.mxu0 0.0
    %4450 = vmatprep.subr.mxu0 0.0
    %4451 = vmatpush1.msra.mxu0 0.0
    %4452 = vmatprep.subr.mxu0 0.0
    %4453 = vmatpush1.msra.mxu0 0.0
    %4454 = vmatprep.subr.mxu0 0.0
    %4455 = vmatpush1.msra.mxu0 0.0
    %4456 = vmatprep.subr.mxu0 0.0
    %4457 = vmatpush1.msra.mxu0 0.0
    %4458 = vmatprep.subr.mxu0 0.0
    %v4459 = vand.u32 %v4200, 4294901760
    %4460 = vmatpush1.msra.mxu0 %v4459
    %4461 = vmatprep.subr.mxu0 0.0
    %4462 = vmatpush2.msra.mxu0 0.0
    %4463 = vmatprep.subr.mxu0 0.0
    %4464 = vmatpush2.msra.mxu0 0.0
    %4465 = vmatprep.subr.mxu0 0.0
    %4466 = vmatpush2.msra.mxu0 0.0
    %4467 = vmatprep.subr.mxu0 0.0
    %4468 = vmatpush2.msra.mxu0 0.0
    %4469 = vmatprep.subr.mxu0 0.0
    %4470 = vmatpush2.msra.mxu0 0.0
    %4471 = vmatprep.subr.mxu0 0.0
    %4472 = vmatpush2.msra.mxu0 0.0
    %4473 = vmatprep.subr.mxu0 0.0
    %4474 = vmatpush2.msra.mxu0 0.0
    %4475 = vmatprep.subr.mxu0 0.0
    %4476 = vmatpush2.msra.mxu0 0.0
    %4477 = vmatprep.subr.mxu0 0.0
    %4478 = vmatpush2.msra.mxu0 0.0
    %4479 = vmatprep.subr.mxu0 0.0
    %4480 = vmatpush2.msra.mxu0 0.0
    %4481 = vmatprep.subr.mxu0 0.0
    %4482 = vmatpush2.msra.mxu0 0.0
    %4483 = vmatprep.subr.mxu0 0.0
    %4484 = vmatpush2.msra.mxu0 0.0
    %4485 = vmatprep.subr.mxu0 0.0
    %4486 = vmatpush2.msra.mxu0 0.0
    %4487 = vmatprep.subr.mxu0 0.0
    %4488 = vmatpush2.msra.mxu0 0.0
    %4489 = vmatprep.subr.mxu0 0.0
    %4490 = vmatpush2.msra.mxu0 0.0
    %4491 = vmatprep.subr.mxu0 0.0
    %4492 = vmatpush2.msra.mxu0 0.0
    %4493 = vmatprep.mubr.f32.mxu0 0.0
    %v4494 = vand.u32 %v4196, 4294901760
    %v4495 = vsub.f32 %v4196, %v4494
    %v4496 = vand.u32 %v4495, 4294901760
    %4497 = vmatmul.mubr.f32.gmra.mxu0 %v4496
    %v4498 = vpop.f32.mrf.mxu0
    %v4499 = vadd.f32 %v4425, %v4498
    %v4500 = vpop.f32.mrf.mxu0
    %4501 = vdwg.mxu0
    %4502 = vmatprep.subr.mxu0 0.0
    %4503 = vmatpush1.msra.mxu0 0.0
    %4504 = vmatprep.subr.mxu0 0.0
    %4505 = vmatpush1.msra.mxu0 0.0
    %4506 = vmatprep.subr.mxu0 0.0
    %4507 = vmatpush1.msra.mxu0 0.0
    %4508 = vmatprep.subr.mxu0 0.0
    %4509 = vmatpush1.msra.mxu0 0.0
    %4510 = vmatprep.subr.mxu0 0.0
    %4511 = vmatpush1.msra.mxu0 0.0
    %4512 = vmatprep.subr.mxu0 0.0
    %4513 = vmatpush1.msra.mxu0 0.0
    %4514 = vmatprep.subr.mxu0 0.0
    %4515 = vmatpush1.msra.mxu0 0.0
    %4516 = vmatprep.subr.mxu0 0.0
    %4517 = vmatpush1.msra.mxu0 0.0
    %4518 = vmatprep.subr.mxu0 0.0
    %4519 = vmatpush1.msra.mxu0 0.0
    %4520 = vmatprep.subr.mxu0 0.0
    %4521 = vmatpush1.msra.mxu0 0.0
    %4522 = vmatprep.subr.mxu0 0.0
    %4523 = vmatpush1.msra.mxu0 0.0
    %4524 = vmatprep.subr.mxu0 0.0
    %4525 = vmatpush1.msra.mxu0 0.0
    %4526 = vmatprep.subr.mxu0 0.0
    %4527 = vmatpush1.msra.mxu0 0.0
    %4528 = vmatprep.subr.mxu0 0.0
    %4529 = vmatpush1.msra.mxu0 0.0
    %4530 = vmatprep.subr.mxu0 0.0
    %4531 = vmatpush1.msra.mxu0 0.0
    %4532 = vmatprep.subr.mxu0 0.0
    %v4533 = vand.u32 %v4200, 4294901760
    %v4534 = vsub.f32 %v4200, %v4533
    %v4535 = vand.u32 %v4534, 4294901760
    %4536 = vmatpush1.msra.mxu0 %v4535
    %4537 = vmatprep.subr.mxu0 0.0
    %4538 = vmatpush2.msra.mxu0 0.0
    %4539 = vmatprep.subr.mxu0 0.0
    %4540 = vmatpush2.msra.mxu0 0.0
    %4541 = vmatprep.subr.mxu0 0.0
    %4542 = vmatpush2.msra.mxu0 0.0
    %4543 = vmatprep.subr.mxu0 0.0
    %4544 = vmatpush2.msra.mxu0 0.0
    %4545 = vmatprep.subr.mxu0 0.0
    %4546 = vmatpush2.msra.mxu0 0.0
    %4547 = vmatprep.subr.mxu0 0.0
    %4548 = vmatpush2.msra.mxu0 0.0
    %4549 = vmatprep.subr.mxu0 0.0
    %4550 = vmatpush2.msra.mxu0 0.0
    %4551 = vmatprep.subr.mxu0 0.0
    %4552 = vmatpush2.msra.mxu0 0.0
    %4553 = vmatprep.subr.mxu0 0.0
    %4554 = vmatpush2.msra.mxu0 0.0
    %4555 = vmatprep.subr.mxu0 0.0
    %4556 = vmatpush2.msra.mxu0 0.0
    %4557 = vmatprep.subr.mxu0 0.0
    %4558 = vmatpush2.msra.mxu0 0.0
    %4559 = vmatprep.subr.mxu0 0.0
    %4560 = vmatpush2.msra.mxu0 0.0
    %4561 = vmatprep.subr.mxu0 0.0
    %4562 = vmatpush2.msra.mxu0 0.0
    %4563 = vmatprep.subr.mxu0 0.0
    %4564 = vmatpush2.msra.mxu0 0.0
    %4565 = vmatprep.subr.mxu0 0.0
    %4566 = vmatpush2.msra.mxu0 0.0
    %4567 = vmatprep.subr.mxu0 0.0
    %4568 = vmatpush2.msra.mxu0 0.0
    %4569 = vmatprep.mubr.f32.mxu0 0.0
    %v4570 = vand.u32 %v4196, 4294901760
    %4571 = vmatmul.mubr.f32.gmra.mxu0 %v4570
    %v4572 = vpop.f32.mrf.mxu0
    %v4573 = vadd.f32 %v4499, %v4572
    %v4574 = vpop.f32.mrf.mxu0
    %4575 = vdwg.mxu0
    %4576 = vmatprep.subr.mxu0 0.0
    %4577 = vmatpush1.msra.mxu0 0.0
    %4578 = vmatprep.subr.mxu0 0.0
    %4579 = vmatpush1.msra.mxu0 0.0
    %4580 = vmatprep.subr.mxu0 0.0
    %4581 = vmatpush1.msra.mxu0 0.0
    %4582 = vmatprep.subr.mxu0 0.0
    %4583 = vmatpush1.msra.mxu0 0.0
    %4584 = vmatprep.subr.mxu0 0.0
    %4585 = vmatpush1.msra.mxu0 0.0
    %4586 = vmatprep.subr.mxu0 0.0
    %4587 = vmatpush1.msra.mxu0 0.0
    %4588 = vmatprep.subr.mxu0 0.0
    %4589 = vmatpush1.msra.mxu0 0.0
    %4590 = vmatprep.subr.mxu0 0.0
    %4591 = vmatpush1.msra.mxu0 0.0
    %4592 = vmatprep.subr.mxu0 0.0
    %4593 = vmatpush1.msra.mxu0 0.0
    %4594 = vmatprep.subr.mxu0 0.0
    %4595 = vmatpush1.msra.mxu0 0.0
    %4596 = vmatprep.subr.mxu0 0.0
    %4597 = vmatpush1.msra.mxu0 0.0
    %4598 = vmatprep.subr.mxu0 0.0
    %4599 = vmatpush1.msra.mxu0 0.0
    %4600 = vmatprep.subr.mxu0 0.0
    %4601 = vmatpush1.msra.mxu0 0.0
    %4602 = vmatprep.subr.mxu0 0.0
    %4603 = vmatpush1.msra.mxu0 0.0
    %4604 = vmatprep.subr.mxu0 0.0
    %4605 = vmatpush1.msra.mxu0 0.0
    %4606 = vmatprep.subr.mxu0 0.0
    %v4607 = vand.u32 %v4200, 4294901760
    %4608 = vmatpush1.msra.mxu0 %v4607
    %4609 = vmatprep.subr.mxu0 0.0
    %4610 = vmatpush2.msra.mxu0 0.0
    %4611 = vmatprep.subr.mxu0 0.0
    %4612 = vmatpush2.msra.mxu0 0.0
    %4613 = vmatprep.subr.mxu0 0.0
    %4614 = vmatpush2.msra.mxu0 0.0
    %4615 = vmatprep.subr.mxu0 0.0
    %4616 = vmatpush2.msra.mxu0 0.0
    %4617 = vmatprep.subr.mxu0 0.0
    %4618 = vmatpush2.msra.mxu0 0.0
    %4619 = vmatprep.subr.mxu0 0.0
    %4620 = vmatpush2.msra.mxu0 0.0
    %4621 = vmatprep.subr.mxu0 0.0
    %4622 = vmatpush2.msra.mxu0 0.0
    %4623 = vmatprep.subr.mxu0 0.0
    %4624 = vmatpush2.msra.mxu0 0.0
    %4625 = vmatprep.subr.mxu0 0.0
    %4626 = vmatpush2.msra.mxu0 0.0
    %4627 = vmatprep.subr.mxu0 0.0
    %4628 = vmatpush2.msra.mxu0 0.0
    %4629 = vmatprep.subr.mxu0 0.0
    %4630 = vmatpush2.msra.mxu0 0.0
    %4631 = vmatprep.subr.mxu0 0.0
    %4632 = vmatpush2.msra.mxu0 0.0
    %4633 = vmatprep.subr.mxu0 0.0
    %4634 = vmatpush2.msra.mxu0 0.0
    %4635 = vmatprep.subr.mxu0 0.0
    %4636 = vmatpush2.msra.mxu0 0.0
    %4637 = vmatprep.subr.mxu0 0.0
    %4638 = vmatpush2.msra.mxu0 0.0
    %4639 = vmatprep.subr.mxu0 0.0
    %4640 = vmatpush2.msra.mxu0 0.0
    %4641 = vmatprep.mubr.f32.mxu0 0.0
    %v4642 = vand.u32 %v4196, 4294901760
    %4643 = vmatmul.mubr.f32.gmra.mxu0 %v4642
    %v4644 = vpop.f32.mrf.mxu0
    %v4645 = vadd.f32 %v4573, %v4644
    %v4646 = vpop.f32.mrf.mxu0
    %4647 = vdwg.mxu0
    %v4648 = vxor.u32 %v4645, 2147483648
    %v4649 = vmul.f32 %v4648, 1.442695
    %v4650 = vpow.pop %v4649
    %v4651 = vadd.f32 %v4650, 1.0
    %v4652 = vrcp.pop %v4651
    %v4653 = vmul.f32 1.0, %v4652
    %v4654 = vld [vmem:[%s4] sm:$0xff]
    %v4655 = vld [vmem:[%s4 + $0x8] sm:$0xff]
    %v4656 = vld [vmem:[%s4 + $0x10] sm:$0xff]
    %v4657 = vld [vmem:[%s4 + $0x18] sm:$0xff]
    %v4658 = vld [vmem:[%s4 + $0x20] sm:$0xff]
    %v4659 = vld [vmem:[%s4 + $0x28] sm:$0xff]
    %v4660 = vld [vmem:[%s4 + $0x30] sm:$0xff]
    %v4661 = vld [vmem:[%s4 + $0x38] sm:$0xff]
    %v4662 = vld [vmem:[%s4 + $0x40] sm:$0xff]
    %v4663 = vld [vmem:[%s4 + $0x48] sm:$0xff]
    %v4664 = vld [vmem:[%s4 + $0x50] sm:$0xff]
    %v4665 = vld [vmem:[%s4 + $0x58] sm:$0xff]
    %v4666 = vld [vmem:[%s4 + $0x60] sm:$0xff]
    %v4667 = vld [vmem:[%s4 + $0x68] sm:$0xff]
    %v4668 = vld [vmem:[%s4 + $0x70] sm:$0xff]
    %v4669 = vld [vmem:[%s4 + $0x78] sm:$0xff]
    %v4670 = vld [vmem:[%s4 + $0x80] sm:$0xff]
    %v4671 = vld [vmem:[%s4 + $0x88] sm:$0xff]
    %v4672 = vld [vmem:[%s4 + $0x90] sm:$0xff]
    %v4673 = vld [vmem:[%s4 + $0x98] sm:$0xff]
    %v4674 = vld [vmem:[%s4 + $0xa0] sm:$0xff]
    %v4675 = vld [vmem:[%s4 + $0xa8] sm:$0xff]
    %v4676 = vld [vmem:[%s4 + $0xb0] sm:$0xff]
    %v4677 = vld [vmem:[%s4 + $0xb8] sm:$0xff]
    %v4678 = vld [vmem:[%s4 + $0xc0] sm:$0xff]
    %v4679 = vld [vmem:[%s4 + $0xc8] sm:$0xff]
    %v4680 = vld [vmem:[%s4 + $0xd0] sm:$0xff]
    %v4681 = vld [vmem:[%s4 + $0xd8] sm:$0xff]
    %v4682 = vld [vmem:[%s4 + $0xe0] sm:$0xff]
    %v4683 = vld [vmem:[%s4 + $0xe8] sm:$0xff]
    %v4684 = vld [vmem:[%s4 + $0xf0] sm:$0xff]
    %v4685 = vld [vmem:[%s4 + $0xf8] sm:$0xff]
    %v4686 = vld [vmem:[%s4 + $0x100] sm:$0xff]
    %v4687 = vld [vmem:[%s4 + $0x108] sm:$0xff]
    %v4688 = vld [vmem:[%s4 + $0x110] sm:$0xff]
    %v4689 = vld [vmem:[%s4 + $0x118] sm:$0xff]
    %v4690 = vld [vmem:[%s4 + $0x120] sm:$0xff]
    %v4691 = vld [vmem:[%s4 + $0x128] sm:$0xff]
    %v4692 = vld [vmem:[%s4 + $0x130] sm:$0xff]
    %v4693 = vld [vmem:[%s4 + $0x138] sm:$0xff]
    %v4694 = vld [vmem:[%s4 + $0x140] sm:$0xff]
    %v4695 = vld [vmem:[%s4 + $0x148] sm:$0xff]
    %v4696 = vld [vmem:[%s4 + $0x150] sm:$0xff]
    %v4697 = vld [vmem:[%s4 + $0x158] sm:$0xff]
    %v4698 = vld [vmem:[%s4 + $0x160] sm:$0xff]
    %v4699 = vld [vmem:[%s4 + $0x168] sm:$0xff]
    %v4700 = vld [vmem:[%s4 + $0x170] sm:$0xff]
    %v4701 = vld [vmem:[%s4 + $0x178] sm:$0xff]
    %v4702 = vld [vmem:[%s4 + $0x180] sm:$0xff]
    %v4703 = vld [vmem:[%s4 + $0x188] sm:$0xff]
    %v4704 = vld [vmem:[%s4 + $0x190] sm:$0xff]
    %v4705 = vld [vmem:[%s4 + $0x198] sm:$0xff]
    %v4706 = vld [vmem:[%s4 + $0x1a0] sm:$0xff]
    %v4707 = vld [vmem:[%s4 + $0x1a8] sm:$0xff]
    %v4708 = vld [vmem:[%s4 + $0x1b0] sm:$0xff]
    %v4709 = vld [vmem:[%s4 + $0x1b8] sm:$0xff]
    %v4710 = vld [vmem:[%s4 + $0x1c0] sm:$0xff]
    %v4711 = vld [vmem:[%s4 + $0x1c8] sm:$0xff]
    %v4712 = vld [vmem:[%s4 + $0x1d0] sm:$0xff]
    %v4713 = vld [vmem:[%s4 + $0x1d8] sm:$0xff]
    %v4714 = vld [vmem:[%s4 + $0x1e0] sm:$0xff]
    %v4715 = vld [vmem:[%s4 + $0x1e8] sm:$0xff]
    %v4716 = vld [vmem:[%s4 + $0x1f0] sm:$0xff]
    %v4717 = vld [vmem:[%s4 + $0x1f8] sm:$0xff]
    %v4719 = vsel %vm3651, %v4653, 0
    %4721 = vmatprep.subr.mxu0 0.0
    %4722 = vmatpush1.msra.mxu0 0.0
    %4723 = vmatprep.subr.mxu0 0.0
    %4724 = vmatpush1.msra.mxu0 0.0
    %4725 = vmatprep.subr.mxu0 0.0
    %4726 = vmatpush1.msra.mxu0 0.0
    %4727 = vmatprep.subr.mxu0 0.0
    %4728 = vmatpush1.msra.mxu0 0.0
    %4729 = vmatprep.subr.mxu0 0.0
    %4730 = vmatpush1.msra.mxu0 0.0
    %4731 = vmatprep.subr.mxu0 0.0
    %4732 = vmatpush1.msra.mxu0 0.0
    %4733 = vmatprep.subr.mxu0 0.0
    %4734 = vmatpush1.msra.mxu0 0.0
    %4735 = vmatprep.subr.mxu0 0.0
    %4736 = vmatpush1.msra.mxu0 0.0
    %v4737 = vand.u32 %v4711, 4294901760
    %4738 = vmatprep.subr.mxu0 %v4737
    %v4739 = vand.u32 %v4710, 4294901760
    %4740 = vmatpush1.msra.mxu0 %v4739
    %v4741 = vand.u32 %v4703, 4294901760
    %4742 = vmatprep.subr.mxu0 %v4741
    %v4743 = vand.u32 %v4702, 4294901760
    %4744 = vmatpush1.msra.mxu0 %v4743
    %v4745 = vand.u32 %v4695, 4294901760
    %4746 = vmatprep.subr.mxu0 %v4745
    %v4747 = vand.u32 %v4694, 4294901760
    %4748 = vmatpush1.msra.mxu0 %v4747
    %v4749 = vand.u32 %v4687, 4294901760
    %4750 = vmatprep.subr.mxu0 %v4749
    %v4751 = vand.u32 %v4686, 4294901760
    %4752 = vmatpush1.msra.mxu0 %v4751
    %v4753 = vand.u32 %v4679, 4294901760
    %4754 = vmatprep.subr.mxu0 %v4753
    %v4755 = vand.u32 %v4678, 4294901760
    %4756 = vmatpush1.msra.mxu0 %v4755
    %v4757 = vand.u32 %v4671, 4294901760
    %4758 = vmatprep.subr.mxu0 %v4757
    %v4759 = vand.u32 %v4670, 4294901760
    %4760 = vmatpush1.msra.mxu0 %v4759
    %v4761 = vand.u32 %v4663, 4294901760
    %4762 = vmatprep.subr.mxu0 %v4761
    %v4763 = vand.u32 %v4662, 4294901760
    %4764 = vmatpush1.msra.mxu0 %v4763
    %v4765 = vand.u32 %v4655, 4294901760
    %4766 = vmatprep.subr.mxu0 %v4765
    %v4767 = vand.u32 %v4654, 4294901760
    %4768 = vmatpush1.msra.mxu0 %v4767
    %4769 = vmatprep.subr.mxu0 0.0
    %4770 = vmatpush2.msra.mxu0 0.0
    %4771 = vmatprep.subr.mxu0 0.0
    %4772 = vmatpush2.msra.mxu0 0.0
    %4773 = vmatprep.subr.mxu0 0.0
    %4774 = vmatpush2.msra.mxu0 0.0
    %4775 = vmatprep.subr.mxu0 0.0
    %4776 = vmatpush2.msra.mxu0 0.0
    %4777 = vmatprep.subr.mxu0 0.0
    %4778 = vmatpush2.msra.mxu0 0.0
    %4779 = vmatprep.subr.mxu0 0.0
    %4780 = vmatpush2.msra.mxu0 0.0
    %4781 = vmatprep.subr.mxu0 0.0
    %4782 = vmatpush2.msra.mxu0 0.0
    %4783 = vmatprep.subr.mxu0 0.0
    %4784 = vmatpush2.msra.mxu0 0.0
    %4785 = vmatprep.subr.mxu0 0.0
    %4786 = vmatpush2.msra.mxu0 0.0
    %4787 = vmatprep.subr.mxu0 0.0
    %4788 = vmatpush2.msra.mxu0 0.0
    %4789 = vmatprep.subr.mxu0 0.0
    %4790 = vmatpush2.msra.mxu0 0.0
    %4791 = vmatprep.subr.mxu0 0.0
    %4792 = vmatpush2.msra.mxu0 0.0
    %4793 = vmatprep.subr.mxu0 0.0
    %4794 = vmatpush2.msra.mxu0 0.0
    %4795 = vmatprep.subr.mxu0 0.0
    %4796 = vmatpush2.msra.mxu0 0.0
    %4797 = vmatprep.subr.mxu0 0.0
    %4798 = vmatpush2.msra.mxu0 0.0
    %4799 = vmatprep.subr.mxu0 0.0
    %4800 = vmatpush2.msra.mxu0 0.0
    %4801 = vmatprep.mubr.f32.mxu0 0.0
    %v4802 = vand.u32 %v4719, 4294901760
    %v4803 = vsub.f32 %v4719, %v4802
    %v4804 = vand.u32 %v4803, 4294901760
    %v4805 = vsub.f32 %v4803, %v4804
    %v4806 = vand.u32 %v4805, 4294901760
    %4807 = vmatmul.mubr.f32.gmra.mxu0 %v4806
    %v4808 = vpop.f32.mrf.mxu0
    %v4809 = vadd.f32 0.0, %v4808
    %v4810 = vpop.f32.mrf.mxu0
    %v4811 = vadd.f32 0.0, %v4810
    %4812 = vdwg.mxu0
    %4813 = vmatprep.subr.mxu0 0.0
    %4814 = vmatpush1.msra.mxu0 0.0
    %4815 = vmatprep.subr.mxu0 0.0
    %4816 = vmatpush1.msra.mxu0 0.0
    %4817 = vmatprep.subr.mxu0 0.0
    %4818 = vmatpush1.msra.mxu0 0.0
    %4819 = vmatprep.subr.mxu0 0.0
    %4820 = vmatpush1.msra.mxu0 0.0
    %4821 = vmatprep.subr.mxu0 0.0
    %4822 = vmatpush1.msra.mxu0 0.0
    %4823 = vmatprep.subr.mxu0 0.0
    %4824 = vmatpush1.msra.mxu0 0.0
    %4825 = vmatprep.subr.mxu0 0.0
    %4826 = vmatpush1.msra.mxu0 0.0
    %4827 = vmatprep.subr.mxu0 0.0
    %4828 = vmatpush1.msra.mxu0 0.0
    %v4829 = vand.u32 %v4711, 4294901760
    %v4830 = vsub.f32 %v4711, %v4829
    %v4831 = vand.u32 %v4830, 4294901760
    %v4832 = vsub.f32 %v4830, %v4831
    %v4833 = vand.u32 %v4832, 4294901760
    %4834 = vmatprep.subr.mxu0 %v4833
    %v4835 = vand.u32 %v4710, 4294901760
    %v4836 = vsub.f32 %v4710, %v4835
    %v4837 = vand.u32 %v4836, 4294901760
    %v4838 = vsub.f32 %v4836, %v4837
    %v4839 = vand.u32 %v4838, 4294901760
    %4840 = vmatpush1.msra.mxu0 %v4839
    %v4841 = vand.u32 %v4703, 4294901760
    %v4842 = vsub.f32 %v4703, %v4841
    %v4843 = vand.u32 %v4842, 4294901760
    %v4844 = vsub.f32 %v4842, %v4843
    %v4845 = vand.u32 %v4844, 4294901760
    %4846 = vmatprep.subr.mxu0 %v4845
    %v4847 = vand.u32 %v4702, 4294901760
    %v4848 = vsub.f32 %v4702, %v4847
    %v4849 = vand.u32 %v4848, 4294901760
    %v4850 = vsub.f32 %v4848, %v4849
    %v4851 = vand.u32 %v4850, 4294901760
    %4852 = vmatpush1.msra.mxu0 %v4851
    %v4853 = vand.u32 %v4695, 4294901760
    %v4854 = vsub.f32 %v4695, %v4853
    %v4855 = vand.u32 %v4854, 4294901760
    %v4856 = vsub.f32 %v4854, %v4855
    %v4857 = vand.u32 %v4856, 4294901760
    %4858 = vmatprep.subr.mxu0 %v4857
    %v4859 = vand.u32 %v4694, 4294901760
    %v4860 = vsub.f32 %v4694, %v4859
    %v4861 = vand.u32 %v4860, 4294901760
    %v4862 = vsub.f32 %v4860, %v4861
    %v4863 = vand.u32 %v4862, 4294901760
    %4864 = vmatpush1.msra.mxu0 %v4863
    %v4865 = vand.u32 %v4687, 4294901760
    %v4866 = vsub.f32 %v4687, %v4865
    %v4867 = vand.u32 %v4866, 4294901760
    %v4868 = vsub.f32 %v4866, %v4867
    %v4869 = vand.u32 %v4868, 4294901760
    %4870 = vmatprep.subr.mxu0 %v4869
    %v4871 = vand.u32 %v4686, 4294901760
    %v4872 = vsub.f32 %v4686, %v4871
    %v4873 = vand.u32 %v4872, 4294901760
    %v4874 = vsub.f32 %v4872, %v4873
    %v4875 = vand.u32 %v4874, 4294901760
    %4876 = vmatpush1.msra.mxu0 %v4875
    %v4877 = vand.u32 %v4679, 4294901760
    %v4878 = vsub.f32 %v4679, %v4877
    %v4879 = vand.u32 %v4878, 4294901760
    %v4880 = vsub.f32 %v4878, %v4879
    %v4881 = vand.u32 %v4880, 4294901760
    %4882 = vmatprep.subr.mxu0 %v4881
    %v4883 = vand.u32 %v4678, 4294901760
    %v4884 = vsub.f32 %v4678, %v4883
    %v4885 = vand.u32 %v4884, 4294901760
    %v4886 = vsub.f32 %v4884, %v4885
    %v4887 = vand.u32 %v4886, 4294901760
    %4888 = vmatpush1.msra.mxu0 %v4887
    %v4889 = vand.u32 %v4671, 4294901760
    %v4890 = vsub.f32 %v4671, %v4889
    %v4891 = vand.u32 %v4890, 4294901760
    %v4892 = vsub.f32 %v4890, %v4891
    %v4893 = vand.u32 %v4892, 4294901760
    %4894 = vmatprep.subr.mxu0 %v4893
    %v4895 = vand.u32 %v4670, 4294901760
    %v4896 = vsub.f32 %v4670, %v4895
    %v4897 = vand.u32 %v4896, 4294901760
    %v4898 = vsub.f32 %v4896, %v4897
    %v4899 = vand.u32 %v4898, 4294901760
    %4900 = vmatpush1.msra.mxu0 %v4899
    %v4901 = vand.u32 %v4663, 4294901760
    %v4902 = vsub.f32 %v4663, %v4901
    %v4903 = vand.u32 %v4902, 4294901760
    %v4904 = vsub.f32 %v4902, %v4903
    %v4905 = vand.u32 %v4904, 4294901760
    %4906 = vmatprep.subr.mxu0 %v4905
    %v4907 = vand.u32 %v4662, 4294901760
    %v4908 = vsub.f32 %v4662, %v4907
    %v4909 = vand.u32 %v4908, 4294901760
    %v4910 = vsub.f32 %v4908, %v4909
    %v4911 = vand.u32 %v4910, 4294901760
    %4912 = vmatpush1.msra.mxu0 %v4911
    %v4913 = vand.u32 %v4655, 4294901760
    %v4914 = vsub.f32 %v4655, %v4913
    %v4915 = vand.u32 %v4914, 4294901760
    %v4916 = vsub.f32 %v4914, %v4915
    %v4917 = vand.u32 %v4916, 4294901760
    %4918 = vmatprep.subr.mxu0 %v4917
    %v4919 = vand.u32 %v4654, 4294901760
    %v4920 = vsub.f32 %v4654, %v4919
    %v4921 = vand.u32 %v4920, 4294901760
    %v4922 = vsub.f32 %v4920, %v4921
    %v4923 = vand.u32 %v4922, 4294901760
    %4924 = vmatpush1.msra.mxu0 %v4923
    %4925 = vmatprep.subr.mxu0 0.0
    %4926 = vmatpush2.msra.mxu0 0.0
    %4927 = vmatprep.subr.mxu0 0.0
    %4928 = vmatpush2.msra.mxu0 0.0
    %4929 = vmatprep.subr.mxu0 0.0
    %4930 = vmatpush2.msra.mxu0 0.0
    %4931 = vmatprep.subr.mxu0 0.0
    %4932 = vmatpush2.msra.mxu0 0.0
    %4933 = vmatprep.subr.mxu0 0.0
    %4934 = vmatpush2.msra.mxu0 0.0
    %4935 = vmatprep.subr.mxu0 0.0
    %4936 = vmatpush2.msra.mxu0 0.0
    %4937 = vmatprep.subr.mxu0 0.0
    %4938 = vmatpush2.msra.mxu0 0.0
    %4939 = vmatprep.subr.mxu0 0.0
    %4940 = vmatpush2.msra.mxu0 0.0
    %4941 = vmatprep.subr.mxu0 0.0
    %4942 = vmatpush2.msra.mxu0 0.0
    %4943 = vmatprep.subr.mxu0 0.0
    %4944 = vmatpush2.msra.mxu0 0.0
    %4945 = vmatprep.subr.mxu0 0.0
    %4946 = vmatpush2.msra.mxu0 0.0
    %4947 = vmatprep.subr.mxu0 0.0
    %4948 = vmatpush2.msra.mxu0 0.0
    %4949 = vmatprep.subr.mxu0 0.0
    %4950 = vmatpush2.msra.mxu0 0.0
    %4951 = vmatprep.subr.mxu0 0.0
    %4952 = vmatpush2.msra.mxu0 0.0
    %4953 = vmatprep.subr.mxu0 0.0
    %4954 = vmatpush2.msra.mxu0 0.0
    %4955 = vmatprep.subr.mxu0 0.0
    %4956 = vmatpush2.msra.mxu0 0.0
    %4957 = vmatprep.mubr.f32.mxu0 0.0
    %v4958 = vand.u32 %v4719, 4294901760
    %4959 = vmatmul.mubr.f32.gmra.mxu0 %v4958
    %v4960 = vpop.f32.mrf.mxu0
    %v4961 = vadd.f32 %v4809, %v4960
    %v4962 = vpop.f32.mrf.mxu0
    %v4963 = vadd.f32 %v4811, %v4962
    %4964 = vdwg.mxu0
    %4965 = vmatprep.subr.mxu0 0.0
    %4966 = vmatpush1.msra.mxu0 0.0
    %4967 = vmatprep.subr.mxu0 0.0
    %4968 = vmatpush1.msra.mxu0 0.0
    %4969 = vmatprep.subr.mxu0 0.0
    %4970 = vmatpush1.msra.mxu0 0.0
    %4971 = vmatprep.subr.mxu0 0.0
    %4972 = vmatpush1.msra.mxu0 0.0
    %4973 = vmatprep.subr.mxu0 0.0
    %4974 = vmatpush1.msra.mxu0 0.0
    %4975 = vmatprep.subr.mxu0 0.0
    %4976 = vmatpush1.msra.mxu0 0.0
    %4977 = vmatprep.subr.mxu0 0.0
    %4978 = vmatpush1.msra.mxu0 0.0
    %4979 = vmatprep.subr.mxu0 0.0
    %4980 = vmatpush1.msra.mxu0 0.0
    %v4981 = vand.u32 %v4711, 4294901760
    %v4982 = vsub.f32 %v4711, %v4981
    %4983 = vmatprep.subr.mxu0 %v4982
    %v4984 = vand.u32 %v4710, 4294901760
    %v4985 = vsub.f32 %v4710, %v4984
    %4986 = vmatpush1.msra.mxu0 %v4985
    %v4987 = vand.u32 %v4703, 4294901760
    %v4988 = vsub.f32 %v4703, %v4987
    %4989 = vmatprep.subr.mxu0 %v4988
    %v4990 = vand.u32 %v4702, 4294901760
    %v4991 = vsub.f32 %v4702, %v4990
    %4992 = vmatpush1.msra.mxu0 %v4991
    %v4993 = vand.u32 %v4695, 4294901760
    %v4994 = vsub.f32 %v4695, %v4993
    %4995 = vmatprep.subr.mxu0 %v4994
    %v4996 = vand.u32 %v4694, 4294901760
    %v4997 = vsub.f32 %v4694, %v4996
    %4998 = vmatpush1.msra.mxu0 %v4997
    %v4999 = vand.u32 %v4687, 4294901760
    %v5000 = vsub.f32 %v4687, %v4999
    %5001 = vmatprep.subr.mxu0 %v5000
    %v5002 = vand.u32 %v4686, 4294901760
    %v5003 = vsub.f32 %v4686, %v5002
    %5004 = vmatpush1.msra.mxu0 %v5003
    %v5005 = vand.u32 %v4679, 4294901760
    %v5006 = vsub.f32 %v4679, %v5005
    %5007 = vmatprep.subr.mxu0 %v5006
    %v5008 = vand.u32 %v4678, 4294901760
    %v5009 = vsub.f32 %v4678, %v5008
    %5010 = vmatpush1.msra.mxu0 %v5009
    %v5011 = vand.u32 %v4671, 4294901760
    %v5012 = vsub.f32 %v4671, %v5011
    %5013 = vmatprep.subr.mxu0 %v5012
    %v5014 = vand.u32 %v4670, 4294901760
    %v5015 = vsub.f32 %v4670, %v5014
    %5016 = vmatpush1.msra.mxu0 %v5015
    %v5017 = vand.u32 %v4663, 4294901760
    %v5018 = vsub.f32 %v4663, %v5017
    %5019 = vmatprep.subr.mxu0 %v5018
    %v5020 = vand.u32 %v4662, 4294901760
    %v5021 = vsub.f32 %v4662, %v5020
    %5022 = vmatpush1.msra.mxu0 %v5021
    %v5023 = vand.u32 %v4655, 4294901760
    %v5024 = vsub.f32 %v4655, %v5023
    %5025 = vmatprep.subr.mxu0 %v5024
    %v5026 = vand.u32 %v4654, 4294901760
    %v5027 = vsub.f32 %v4654, %v5026
    %5028 = vmatpush1.msra.mxu0 %v5027
    %5029 = vmatprep.subr.mxu0 0.0
    %5030 = vmatpush2.msra.mxu0 0.0
    %5031 = vmatprep.subr.mxu0 0.0
    %5032 = vmatpush2.msra.mxu0 0.0
    %5033 = vmatprep.subr.mxu0 0.0
    %5034 = vmatpush2.msra.mxu0 0.0
    %5035 = vmatprep.subr.mxu0 0.0
    %5036 = vmatpush2.msra.mxu0 0.0
    %5037 = vmatprep.subr.mxu0 0.0
    %5038 = vmatpush2.msra.mxu0 0.0
    %5039 = vmatprep.subr.mxu0 0.0
    %5040 = vmatpush2.msra.mxu0 0.0
    %5041 = vmatprep.subr.mxu0 0.0
    %5042 = vmatpush2.msra.mxu0 0.0
    %5043 = vmatprep.subr.mxu0 0.0
    %5044 = vmatpush2.msra.mxu0 0.0
    %5045 = vmatprep.subr.mxu0 0.0
    %5046 = vmatpush2.msra.mxu0 0.0
    %5047 = vmatprep.subr.mxu0 0.0
    %5048 = vmatpush2.msra.mxu0 0.0
    %5049 = vmatprep.subr.mxu0 0.0
    %5050 = vmatpush2.msra.mxu0 0.0
    %5051 = vmatprep.subr.mxu0 0.0
    %5052 = vmatpush2.msra.mxu0 0.0
    %5053 = vmatprep.subr.mxu0 0.0
    %5054 = vmatpush2.msra.mxu0 0.0
    %5055 = vmatprep.subr.mxu0 0.0
    %5056 = vmatpush2.msra.mxu0 0.0
    %5057 = vmatprep.subr.mxu0 0.0
    %5058 = vmatpush2.msra.mxu0 0.0
    %5059 = vmatprep.subr.mxu0 0.0
    %5060 = vmatpush2.msra.mxu0 0.0
    %5061 = vmatprep.mubr.f32.mxu0 0.0
    %v5062 = vand.u32 %v4719, 4294901760
    %v5063 = vsub.f32 %v4719, %v5062
    %5064 = vmatmul.mubr.f32.gmra.mxu0 %v5063
    %v5065 = vpop.f32.mrf.mxu0
    %v5066 = vadd.f32 %v4961, %v5065
    %v5067 = vpop.f32.mrf.mxu0
    %v5068 = vadd.f32 %v4963, %v5067
    %5069 = vdwg.mxu0
    %5070 = vmatprep.subr.mxu0 0.0
    %5071 = vmatpush1.msra.mxu0 0.0
    %5072 = vmatprep.subr.mxu0 0.0
    %5073 = vmatpush1.msra.mxu0 0.0
    %5074 = vmatprep.subr.mxu0 0.0
    %5075 = vmatpush1.msra.mxu0 0.0
    %5076 = vmatprep.subr.mxu0 0.0
    %5077 = vmatpush1.msra.mxu0 0.0
    %5078 = vmatprep.subr.mxu0 0.0
    %5079 = vmatpush1.msra.mxu0 0.0
    %5080 = vmatprep.subr.mxu0 0.0
    %5081 = vmatpush1.msra.mxu0 0.0
    %5082 = vmatprep.subr.mxu0 0.0
    %5083 = vmatpush1.msra.mxu0 0.0
    %5084 = vmatprep.subr.mxu0 0.0
    %5085 = vmatpush1.msra.mxu0 0.0
    %v5086 = vand.u32 %v4711, 4294901760
    %5087 = vmatprep.subr.mxu0 %v5086
    %v5088 = vand.u32 %v4710, 4294901760
    %5089 = vmatpush1.msra.mxu0 %v5088
    %v5090 = vand.u32 %v4703, 4294901760
    %5091 = vmatprep.subr.mxu0 %v5090
    %v5092 = vand.u32 %v4702, 4294901760
    %5093 = vmatpush1.msra.mxu0 %v5092
    %v5094 = vand.u32 %v4695, 4294901760
    %5095 = vmatprep.subr.mxu0 %v5094
    %v5096 = vand.u32 %v4694, 4294901760
    %5097 = vmatpush1.msra.mxu0 %v5096
    %v5098 = vand.u32 %v4687, 4294901760
    %5099 = vmatprep.subr.mxu0 %v5098
    %v5100 = vand.u32 %v4686, 4294901760
    %5101 = vmatpush1.msra.mxu0 %v5100
    %v5102 = vand.u32 %v4679, 4294901760
    %5103 = vmatprep.subr.mxu0 %v5102
    %v5104 = vand.u32 %v4678, 4294901760
    %5105 = vmatpush1.msra.mxu0 %v5104
    %v5106 = vand.u32 %v4671, 4294901760
    %5107 = vmatprep.subr.mxu0 %v5106
    %v5108 = vand.u32 %v4670, 4294901760
    %5109 = vmatpush1.msra.mxu0 %v5108
    %v5110 = vand.u32 %v4663, 4294901760
    %5111 = vmatprep.subr.mxu0 %v5110
    %v5112 = vand.u32 %v4662, 4294901760
    %5113 = vmatpush1.msra.mxu0 %v5112
    %v5114 = vand.u32 %v4655, 4294901760
    %5115 = vmatprep.subr.mxu0 %v5114
    %v5116 = vand.u32 %v4654, 4294901760
    %5117 = vmatpush1.msra.mxu0 %v5116
    %5118 = vmatprep.subr.mxu0 0.0
    %5119 = vmatpush2.msra.mxu0 0.0
    %5120 = vmatprep.subr.mxu0 0.0
    %5121 = vmatpush2.msra.mxu0 0.0
    %5122 = vmatprep.subr.mxu0 0.0
    %5123 = vmatpush2.msra.mxu0 0.0
    %5124 = vmatprep.subr.mxu0 0.0
    %5125 = vmatpush2.msra.mxu0 0.0
    %5126 = vmatprep.subr.mxu0 0.0
    %5127 = vmatpush2.msra.mxu0 0.0
    %5128 = vmatprep.subr.mxu0 0.0
    %5129 = vmatpush2.msra.mxu0 0.0
    %5130 = vmatprep.subr.mxu0 0.0
    %5131 = vmatpush2.msra.mxu0 0.0
    %5132 = vmatprep.subr.mxu0 0.0
    %5133 = vmatpush2.msra.mxu0 0.0
    %5134 = vmatprep.subr.mxu0 0.0
    %5135 = vmatpush2.msra.mxu0 0.0
    %5136 = vmatprep.subr.mxu0 0.0
    %5137 = vmatpush2.msra.mxu0 0.0
    %5138 = vmatprep.subr.mxu0 0.0
    %5139 = vmatpush2.msra.mxu0 0.0
    %5140 = vmatprep.subr.mxu0 0.0
    %5141 = vmatpush2.msra.mxu0 0.0
    %5142 = vmatprep.subr.mxu0 0.0
    %5143 = vmatpush2.msra.mxu0 0.0
    %5144 = vmatprep.subr.mxu0 0.0
    %5145 = vmatpush2.msra.mxu0 0.0
    %5146 = vmatprep.subr.mxu0 0.0
    %5147 = vmatpush2.msra.mxu0 0.0
    %5148 = vmatprep.subr.mxu0 0.0
    %5149 = vmatpush2.msra.mxu0 0.0
    %5150 = vmatprep.mubr.f32.mxu0 0.0
    %v5151 = vand.u32 %v4719, 4294901760
    %v5152 = vsub.f32 %v4719, %v5151
    %v5153 = vand.u32 %v5152, 4294901760
    %5154 = vmatmul.mubr.f32.gmra.mxu0 %v5153
    %v5155 = vpop.f32.mrf.mxu0
    %v5156 = vadd.f32 %v5066, %v5155
    %v5157 = vpop.f32.mrf.mxu0
    %v5158 = vadd.f32 %v5068, %v5157
    %5159 = vdwg.mxu0
    %5160 = vmatprep.subr.mxu0 0.0
    %5161 = vmatpush1.msra.mxu0 0.0
    %5162 = vmatprep.subr.mxu0 0.0
    %5163 = vmatpush1.msra.mxu0 0.0
    %5164 = vmatprep.subr.mxu0 0.0
    %5165 = vmatpush1.msra.mxu0 0.0
    %5166 = vmatprep.subr.mxu0 0.0
    %5167 = vmatpush1.msra.mxu0 0.0
    %5168 = vmatprep.subr.mxu0 0.0
    %5169 = vmatpush1.msra.mxu0 0.0
    %5170 = vmatprep.subr.mxu0 0.0
    %5171 = vmatpush1.msra.mxu0 0.0
    %5172 = vmatprep.subr.mxu0 0.0
    %5173 = vmatpush1.msra.mxu0 0.0
    %5174 = vmatprep.subr.mxu0 0.0
    %5175 = vmatpush1.msra.mxu0 0.0
    %v5176 = vand.u32 %v4711, 4294901760
    %v5177 = vsub.f32 %v4711, %v5176
    %v5178 = vand.u32 %v5177, 4294901760
    %5179 = vmatprep.subr.mxu0 %v5178
    %v5180 = vand.u32 %v4710, 4294901760
    %v5181 = vsub.f32 %v4710, %v5180
    %v5182 = vand.u32 %v5181, 4294901760
    %5183 = vmatpush1.msra.mxu0 %v5182
    %v5184 = vand.u32 %v4703, 4294901760
    %v5185 = vsub.f32 %v4703, %v5184
    %v5186 = vand.u32 %v5185, 4294901760
    %5187 = vmatprep.subr.mxu0 %v5186
    %v5188 = vand.u32 %v4702, 4294901760
    %v5189 = vsub.f32 %v4702, %v5188
    %v5190 = vand.u32 %v5189, 4294901760
    %5191 = vmatpush1.msra.mxu0 %v5190
    %v5192 = vand.u32 %v4695, 4294901760
    %v5193 = vsub.f32 %v4695, %v5192
    %v5194 = vand.u32 %v5193, 4294901760
    %5195 = vmatprep.subr.mxu0 %v5194
    %v5196 = vand.u32 %v4694, 4294901760
    %v5197 = vsub.f32 %v4694, %v5196
    %v5198 = vand.u32 %v5197, 4294901760
    %5199 = vmatpush1.msra.mxu0 %v5198
    %v5200 = vand.u32 %v4687, 4294901760
    %v5201 = vsub.f32 %v4687, %v5200
    %v5202 = vand.u32 %v5201, 4294901760
    %5203 = vmatprep.subr.mxu0 %v5202
    %v5204 = vand.u32 %v4686, 4294901760
    %v5205 = vsub.f32 %v4686, %v5204
    %v5206 = vand.u32 %v5205, 4294901760
    %5207 = vmatpush1.msra.mxu0 %v5206
    %v5208 = vand.u32 %v4679, 4294901760
    %v5209 = vsub.f32 %v4679, %v5208
    %v5210 = vand.u32 %v5209, 4294901760
    %5211 = vmatprep.subr.mxu0 %v5210
    %v5212 = vand.u32 %v4678, 4294901760
    %v5213 = vsub.f32 %v4678, %v5212
    %v5214 = vand.u32 %v5213, 4294901760
    %5215 = vmatpush1.msra.mxu0 %v5214
    %v5216 = vand.u32 %v4671, 4294901760
    %v5217 = vsub.f32 %v4671, %v5216
    %v5218 = vand.u32 %v5217, 4294901760
    %5219 = vmatprep.subr.mxu0 %v5218
    %v5220 = vand.u32 %v4670, 4294901760
    %v5221 = vsub.f32 %v4670, %v5220
    %v5222 = vand.u32 %v5221, 4294901760
    %5223 = vmatpush1.msra.mxu0 %v5222
    %v5224 = vand.u32 %v4663, 4294901760
    %v5225 = vsub.f32 %v4663, %v5224
    %v5226 = vand.u32 %v5225, 4294901760
    %5227 = vmatprep.subr.mxu0 %v5226
    %v5228 = vand.u32 %v4662, 4294901760
    %v5229 = vsub.f32 %v4662, %v5228
    %v5230 = vand.u32 %v5229, 4294901760
    %5231 = vmatpush1.msra.mxu0 %v5230
    %v5232 = vand.u32 %v4655, 4294901760
    %v5233 = vsub.f32 %v4655, %v5232
    %v5234 = vand.u32 %v5233, 4294901760
    %5235 = vmatprep.subr.mxu0 %v5234
    %v5236 = vand.u32 %v4654, 4294901760
    %v5237 = vsub.f32 %v4654, %v5236
    %v5238 = vand.u32 %v5237, 4294901760
    %5239 = vmatpush1.msra.mxu0 %v5238
    %5240 = vmatprep.subr.mxu0 0.0
    %5241 = vmatpush2.msra.mxu0 0.0
    %5242 = vmatprep.subr.mxu0 0.0
    %5243 = vmatpush2.msra.mxu0 0.0
    %5244 = vmatprep.subr.mxu0 0.0
    %5245 = vmatpush2.msra.mxu0 0.0
    %5246 = vmatprep.subr.mxu0 0.0
    %5247 = vmatpush2.msra.mxu0 0.0
    %5248 = vmatprep.subr.mxu0 0.0
    %5249 = vmatpush2.msra.mxu0 0.0
    %5250 = vmatprep.subr.mxu0 0.0
    %5251 = vmatpush2.msra.mxu0 0.0
    %5252 = vmatprep.subr.mxu0 0.0
    %5253 = vmatpush2.msra.mxu0 0.0
    %5254 = vmatprep.subr.mxu0 0.0
    %5255 = vmatpush2.msra.mxu0 0.0
    %5256 = vmatprep.subr.mxu0 0.0
    %5257 = vmatpush2.msra.mxu0 0.0
    %5258 = vmatprep.subr.mxu0 0.0
    %5259 = vmatpush2.msra.mxu0 0.0
    %5260 = vmatprep.subr.mxu0 0.0
    %5261 = vmatpush2.msra.mxu0 0.0
    %5262 = vmatprep.subr.mxu0 0.0
    %5263 = vmatpush2.msra.mxu0 0.0
    %5264 = vmatprep.subr.mxu0 0.0
    %5265 = vmatpush2.msra.mxu0 0.0
    %5266 = vmatprep.subr.mxu0 0.0
    %5267 = vmatpush2.msra.mxu0 0.0
    %5268 = vmatprep.subr.mxu0 0.0
    %5269 = vmatpush2.msra.mxu0 0.0
    %5270 = vmatprep.subr.mxu0 0.0
    %5271 = vmatpush2.msra.mxu0 0.0
    %5272 = vmatprep.mubr.f32.mxu0 0.0
    %v5273 = vand.u32 %v4719, 4294901760
    %5274 = vmatmul.mubr.f32.gmra.mxu0 %v5273
    %v5275 = vpop.f32.mrf.mxu0
    %v5276 = vadd.f32 %v5156, %v5275
    %v5277 = vpop.f32.mrf.mxu0
    %v5278 = vadd.f32 %v5158, %v5277
    %5279 = vdwg.mxu0
    %5280 = vmatprep.subr.mxu0 0.0
    %5281 = vmatpush1.msra.mxu0 0.0
    %5282 = vmatprep.subr.mxu0 0.0
    %5283 = vmatpush1.msra.mxu0 0.0
    %5284 = vmatprep.subr.mxu0 0.0
    %5285 = vmatpush1.msra.mxu0 0.0
    %5286 = vmatprep.subr.mxu0 0.0
    %5287 = vmatpush1.msra.mxu0 0.0
    %5288 = vmatprep.subr.mxu0 0.0
    %5289 = vmatpush1.msra.mxu0 0.0
    %5290 = vmatprep.subr.mxu0 0.0
    %5291 = vmatpush1.msra.mxu0 0.0
    %5292 = vmatprep.subr.mxu0 0.0
    %5293 = vmatpush1.msra.mxu0 0.0
    %5294 = vmatprep.subr.mxu0 0.0
    %5295 = vmatpush1.msra.mxu0 0.0
    %v5296 = vand.u32 %v4711, 4294901760
    %5297 = vmatprep.subr.mxu0 %v5296
    %v5298 = vand.u32 %v4710, 4294901760
    %5299 = vmatpush1.msra.mxu0 %v5298
    %v5300 = vand.u32 %v4703, 4294901760
    %5301 = vmatprep.subr.mxu0 %v5300
    %v5302 = vand.u32 %v4702, 4294901760
    %5303 = vmatpush1.msra.mxu0 %v5302
    %v5304 = vand.u32 %v4695, 4294901760
    %5305 = vmatprep.subr.mxu0 %v5304
    %v5306 = vand.u32 %v4694, 4294901760
    %5307 = vmatpush1.msra.mxu0 %v5306
    %v5308 = vand.u32 %v4687, 4294901760
    %5309 = vmatprep.subr.mxu0 %v5308
    %v5310 = vand.u32 %v4686, 4294901760
    %5311 = vmatpush1.msra.mxu0 %v5310
    %v5312 = vand.u32 %v4679, 4294901760
    %5313 = vmatprep.subr.mxu0 %v5312
    %v5314 = vand.u32 %v4678, 4294901760
    %5315 = vmatpush1.msra.mxu0 %v5314
    %v5316 = vand.u32 %v4671, 4294901760
    %5317 = vmatprep.subr.mxu0 %v5316
    %v5318 = vand.u32 %v4670, 4294901760
    %5319 = vmatpush1.msra.mxu0 %v5318
    %v5320 = vand.u32 %v4663, 4294901760
    %5321 = vmatprep.subr.mxu0 %v5320
    %v5322 = vand.u32 %v4662, 4294901760
    %5323 = vmatpush1.msra.mxu0 %v5322
    %v5324 = vand.u32 %v4655, 4294901760
    %5325 = vmatprep.subr.mxu0 %v5324
    %v5326 = vand.u32 %v4654, 4294901760
    %5327 = vmatpush1.msra.mxu0 %v5326
    %5328 = vmatprep.subr.mxu0 0.0
    %5329 = vmatpush2.msra.mxu0 0.0
    %5330 = vmatprep.subr.mxu0 0.0
    %5331 = vmatpush2.msra.mxu0 0.0
    %5332 = vmatprep.subr.mxu0 0.0
    %5333 = vmatpush2.msra.mxu0 0.0
    %5334 = vmatprep.subr.mxu0 0.0
    %5335 = vmatpush2.msra.mxu0 0.0
    %5336 = vmatprep.subr.mxu0 0.0
    %5337 = vmatpush2.msra.mxu0 0.0
    %5338 = vmatprep.subr.mxu0 0.0
    %5339 = vmatpush2.msra.mxu0 0.0
    %5340 = vmatprep.subr.mxu0 0.0
    %5341 = vmatpush2.msra.mxu0 0.0
    %5342 = vmatprep.subr.mxu0 0.0
    %5343 = vmatpush2.msra.mxu0 0.0
    %5344 = vmatprep.subr.mxu0 0.0
    %5345 = vmatpush2.msra.mxu0 0.0
    %5346 = vmatprep.subr.mxu0 0.0
    %5347 = vmatpush2.msra.mxu0 0.0
    %5348 = vmatprep.subr.mxu0 0.0
    %5349 = vmatpush2.msra.mxu0 0.0
    %5350 = vmatprep.subr.mxu0 0.0
    %5351 = vmatpush2.msra.mxu0 0.0
    %5352 = vmatprep.subr.mxu0 0.0
    %5353 = vmatpush2.msra.mxu0 0.0
    %5354 = vmatprep.subr.mxu0 0.0
    %5355 = vmatpush2.msra.mxu0 0.0
    %5356 = vmatprep.subr.mxu0 0.0
    %5357 = vmatpush2.msra.mxu0 0.0
    %5358 = vmatprep.subr.mxu0 0.0
    %5359 = vmatpush2.msra.mxu0 0.0
    %5360 = vmatprep.mubr.f32.mxu0 0.0
    %v5361 = vand.u32 %v4719, 4294901760
    %5362 = vmatmul.mubr.f32.gmra.mxu0 %v5361
    %v5363 = vpop.f32.mrf.mxu0
    %v5364 = vadd.f32 %v5276, %v5363
    %v5365 = vpop.f32.mrf.mxu0
    %v5366 = vadd.f32 %v5278, %v5365
    %5367 = vdwg.mxu0
    %5368 = vmatprep.subr.mxu0 0.0
    %5369 = vmatpush1.msra.mxu0 0.0
    %5370 = vmatprep.subr.mxu0 0.0
    %5371 = vmatpush1.msra.mxu0 0.0
    %5372 = vmatprep.subr.mxu0 0.0
    %5373 = vmatpush1.msra.mxu0 0.0
    %5374 = vmatprep.subr.mxu0 0.0
    %5375 = vmatpush1.msra.mxu0 0.0
    %5376 = vmatprep.subr.mxu0 0.0
    %5377 = vmatpush1.msra.mxu0 0.0
    %5378 = vmatprep.subr.mxu0 0.0
    %5379 = vmatpush1.msra.mxu0 0.0
    %5380 = vmatprep.subr.mxu0 0.0
    %5381 = vmatpush1.msra.mxu0 0.0
    %5382 = vmatprep.subr.mxu0 0.0
    %5383 = vmatpush1.msra.mxu0 0.0
    %v5384 = vand.u32 %v4713, 4294901760
    %5385 = vmatprep.subr.mxu0 %v5384
    %v5386 = vand.u32 %v4712, 4294901760
    %5387 = vmatpush1.msra.mxu0 %v5386
    %v5388 = vand.u32 %v4705, 4294901760
    %5389 = vmatprep.subr.mxu0 %v5388
    %v5390 = vand.u32 %v4704, 4294901760
    %5391 = vmatpush1.msra.mxu0 %v5390
    %v5392 = vand.u32 %v4697, 4294901760
    %5393 = vmatprep.subr.mxu0 %v5392
    %v5394 = vand.u32 %v4696, 4294901760
    %5395 = vmatpush1.msra.mxu0 %v5394
    %v5396 = vand.u32 %v4689, 4294901760
    %5397 = vmatprep.subr.mxu0 %v5396
    %v5398 = vand.u32 %v4688, 4294901760
    %5399 = vmatpush1.msra.mxu0 %v5398
    %v5400 = vand.u32 %v4681, 4294901760
    %5401 = vmatprep.subr.mxu0 %v5400
    %v5402 = vand.u32 %v4680, 4294901760
    %5403 = vmatpush1.msra.mxu0 %v5402
    %v5404 = vand.u32 %v4673, 4294901760
    %5405 = vmatprep.subr.mxu0 %v5404
    %v5406 = vand.u32 %v4672, 4294901760
    %5407 = vmatpush1.msra.mxu0 %v5406
    %v5408 = vand.u32 %v4665, 4294901760
    %5409 = vmatprep.subr.mxu0 %v5408
    %v5410 = vand.u32 %v4664, 4294901760
    %5411 = vmatpush1.msra.mxu0 %v5410
    %v5412 = vand.u32 %v4657, 4294901760
    %5413 = vmatprep.subr.mxu0 %v5412
    %v5414 = vand.u32 %v4656, 4294901760
    %5415 = vmatpush1.msra.mxu0 %v5414
    %5416 = vmatprep.subr.mxu0 0.0
    %5417 = vmatpush2.msra.mxu0 0.0
    %5418 = vmatprep.subr.mxu0 0.0
    %5419 = vmatpush2.msra.mxu0 0.0
    %5420 = vmatprep.subr.mxu0 0.0
    %5421 = vmatpush2.msra.mxu0 0.0
    %5422 = vmatprep.subr.mxu0 0.0
    %5423 = vmatpush2.msra.mxu0 0.0
    %5424 = vmatprep.subr.mxu0 0.0
    %5425 = vmatpush2.msra.mxu0 0.0
    %5426 = vmatprep.subr.mxu0 0.0
    %5427 = vmatpush2.msra.mxu0 0.0
    %5428 = vmatprep.subr.mxu0 0.0
    %5429 = vmatpush2.msra.mxu0 0.0
    %5430 = vmatprep.subr.mxu0 0.0
    %5431 = vmatpush2.msra.mxu0 0.0
    %5432 = vmatprep.subr.mxu0 0.0
    %5433 = vmatpush2.msra.mxu0 0.0
    %5434 = vmatprep.subr.mxu0 0.0
    %5435 = vmatpush2.msra.mxu0 0.0
    %5436 = vmatprep.subr.mxu0 0.0
    %5437 = vmatpush2.msra.mxu0 0.0
    %5438 = vmatprep.subr.mxu0 0.0
    %5439 = vmatpush2.msra.mxu0 0.0
    %5440 = vmatprep.subr.mxu0 0.0
    %5441 = vmatpush2.msra.mxu0 0.0
    %5442 = vmatprep.subr.mxu0 0.0
    %5443 = vmatpush2.msra.mxu0 0.0
    %5444 = vmatprep.subr.mxu0 0.0
    %5445 = vmatpush2.msra.mxu0 0.0
    %5446 = vmatprep.subr.mxu0 0.0
    %5447 = vmatpush2.msra.mxu0 0.0
    %5448 = vmatprep.mubr.f32.mxu0 0.0
    %v5449 = vand.u32 %v4719, 4294901760
    %v5450 = vsub.f32 %v4719, %v5449
    %v5451 = vand.u32 %v5450, 4294901760
    %v5452 = vsub.f32 %v5450, %v5451
    %v5453 = vand.u32 %v5452, 4294901760
    %5454 = vmatmul.mubr.f32.gmra.mxu0 %v5453
    %v5455 = vpop.f32.mrf.mxu0
    %v5456 = vadd.f32 0.0, %v5455
    %v5457 = vpop.f32.mrf.mxu0
    %v5458 = vadd.f32 0.0, %v5457
    %5459 = vdwg.mxu0
    %5460 = vmatprep.subr.mxu0 0.0
    %5461 = vmatpush1.msra.mxu0 0.0
    %5462 = vmatprep.subr.mxu0 0.0
    %5463 = vmatpush1.msra.mxu0 0.0
    %5464 = vmatprep.subr.mxu0 0.0
    %5465 = vmatpush1.msra.mxu0 0.0
    %5466 = vmatprep.subr.mxu0 0.0
    %5467 = vmatpush1.msra.mxu0 0.0
    %5468 = vmatprep.subr.mxu0 0.0
    %5469 = vmatpush1.msra.mxu0 0.0
    %5470 = vmatprep.subr.mxu0 0.0
    %5471 = vmatpush1.msra.mxu0 0.0
    %5472 = vmatprep.subr.mxu0 0.0
    %5473 = vmatpush1.msra.mxu0 0.0
    %5474 = vmatprep.subr.mxu0 0.0
    %5475 = vmatpush1.msra.mxu0 0.0
    %v5476 = vand.u32 %v4713, 4294901760
    %v5477 = vsub.f32 %v4713, %v5476
    %v5478 = vand.u32 %v5477, 4294901760
    %v5479 = vsub.f32 %v5477, %v5478
    %v5480 = vand.u32 %v5479, 4294901760
    %5481 = vmatprep.subr.mxu0 %v5480
    %v5482 = vand.u32 %v4712, 4294901760
    %v5483 = vsub.f32 %v4712, %v5482
    %v5484 = vand.u32 %v5483, 4294901760
    %v5485 = vsub.f32 %v5483, %v5484
    %v5486 = vand.u32 %v5485, 4294901760
    %5487 = vmatpush1.msra.mxu0 %v5486
    %v5488 = vand.u32 %v4705, 4294901760
    %v5489 = vsub.f32 %v4705, %v5488
    %v5490 = vand.u32 %v5489, 4294901760
    %v5491 = vsub.f32 %v5489, %v5490
    %v5492 = vand.u32 %v5491, 4294901760
    %5493 = vmatprep.subr.mxu0 %v5492
    %v5494 = vand.u32 %v4704, 4294901760
    %v5495 = vsub.f32 %v4704, %v5494
    %v5496 = vand.u32 %v5495, 4294901760
    %v5497 = vsub.f32 %v5495, %v5496
    %v5498 = vand.u32 %v5497, 4294901760
    %5499 = vmatpush1.msra.mxu0 %v5498
    %v5500 = vand.u32 %v4697, 4294901760
    %v5501 = vsub.f32 %v4697, %v5500
    %v5502 = vand.u32 %v5501, 4294901760
    %v5503 = vsub.f32 %v5501, %v5502
    %v5504 = vand.u32 %v5503, 4294901760
    %5505 = vmatprep.subr.mxu0 %v5504
    %v5506 = vand.u32 %v4696, 4294901760
    %v5507 = vsub.f32 %v4696, %v5506
    %v5508 = vand.u32 %v5507, 4294901760
    %v5509 = vsub.f32 %v5507, %v5508
    %v5510 = vand.u32 %v5509, 4294901760
    %5511 = vmatpush1.msra.mxu0 %v5510
    %v5512 = vand.u32 %v4689, 4294901760
    %v5513 = vsub.f32 %v4689, %v5512
    %v5514 = vand.u32 %v5513, 4294901760
    %v5515 = vsub.f32 %v5513, %v5514
    %v5516 = vand.u32 %v5515, 4294901760
    %5517 = vmatprep.subr.mxu0 %v5516
    %v5518 = vand.u32 %v4688, 4294901760
    %v5519 = vsub.f32 %v4688, %v5518
    %v5520 = vand.u32 %v5519, 4294901760
    %v5521 = vsub.f32 %v5519, %v5520
    %v5522 = vand.u32 %v5521, 4294901760
    %5523 = vmatpush1.msra.mxu0 %v5522
    %v5524 = vand.u32 %v4681, 4294901760
    %v5525 = vsub.f32 %v4681, %v5524
    %v5526 = vand.u32 %v5525, 4294901760
    %v5527 = vsub.f32 %v5525, %v5526
    %v5528 = vand.u32 %v5527, 4294901760
    %5529 = vmatprep.subr.mxu0 %v5528
    %v5530 = vand.u32 %v4680, 4294901760
    %v5531 = vsub.f32 %v4680, %v5530
    %v5532 = vand.u32 %v5531, 4294901760
    %v5533 = vsub.f32 %v5531, %v5532
    %v5534 = vand.u32 %v5533, 4294901760
    %5535 = vmatpush1.msra.mxu0 %v5534
    %v5536 = vand.u32 %v4673, 4294901760
    %v5537 = vsub.f32 %v4673, %v5536
    %v5538 = vand.u32 %v5537, 4294901760
    %v5539 = vsub.f32 %v5537, %v5538
    %v5540 = vand.u32 %v5539, 4294901760
    %5541 = vmatprep.subr.mxu0 %v5540
    %v5542 = vand.u32 %v4672, 4294901760
    %v5543 = vsub.f32 %v4672, %v5542
    %v5544 = vand.u32 %v5543, 4294901760
    %v5545 = vsub.f32 %v5543, %v5544
    %v5546 = vand.u32 %v5545, 4294901760
    %5547 = vmatpush1.msra.mxu0 %v5546
    %v5548 = vand.u32 %v4665, 4294901760
    %v5549 = vsub.f32 %v4665, %v5548
    %v5550 = vand.u32 %v5549, 4294901760
    %v5551 = vsub.f32 %v5549, %v5550
    %v5552 = vand.u32 %v5551, 4294901760
    %5553 = vmatprep.subr.mxu0 %v5552
    %v5554 = vand.u32 %v4664, 4294901760
    %v5555 = vsub.f32 %v4664, %v5554
    %v5556 = vand.u32 %v5555, 4294901760
    %v5557 = vsub.f32 %v5555, %v5556
    %v5558 = vand.u32 %v5557, 4294901760
    %5559 = vmatpush1.msra.mxu0 %v5558
    %v5560 = vand.u32 %v4657, 4294901760
    %v5561 = vsub.f32 %v4657, %v5560
    %v5562 = vand.u32 %v5561, 4294901760
    %v5563 = vsub.f32 %v5561, %v5562
    %v5564 = vand.u32 %v5563, 4294901760
    %5565 = vmatprep.subr.mxu0 %v5564
    %v5566 = vand.u32 %v4656, 4294901760
    %v5567 = vsub.f32 %v4656, %v5566
    %v5568 = vand.u32 %v5567, 4294901760
    %v5569 = vsub.f32 %v5567, %v5568
    %v5570 = vand.u32 %v5569, 4294901760
    %5571 = vmatpush1.msra.mxu0 %v5570
    %5572 = vmatprep.subr.mxu0 0.0
    %5573 = vmatpush2.msra.mxu0 0.0
    %5574 = vmatprep.subr.mxu0 0.0
    %5575 = vmatpush2.msra.mxu0 0.0
    %5576 = vmatprep.subr.mxu0 0.0
    %5577 = vmatpush2.msra.mxu0 0.0
    %5578 = vmatprep.subr.mxu0 0.0
    %5579 = vmatpush2.msra.mxu0 0.0
    %5580 = vmatprep.subr.mxu0 0.0
    %5581 = vmatpush2.msra.mxu0 0.0
    %5582 = vmatprep.subr.mxu0 0.0
    %5583 = vmatpush2.msra.mxu0 0.0
    %5584 = vmatprep.subr.mxu0 0.0
    %5585 = vmatpush2.msra.mxu0 0.0
    %5586 = vmatprep.subr.mxu0 0.0
    %5587 = vmatpush2.msra.mxu0 0.0
    %5588 = vmatprep.subr.mxu0 0.0
    %5589 = vmatpush2.msra.mxu0 0.0
    %5590 = vmatprep.subr.mxu0 0.0
    %5591 = vmatpush2.msra.mxu0 0.0
    %5592 = vmatprep.subr.mxu0 0.0
    %5593 = vmatpush2.msra.mxu0 0.0
    %5594 = vmatprep.subr.mxu0 0.0
    %5595 = vmatpush2.msra.mxu0 0.0
    %5596 = vmatprep.subr.mxu0 0.0
    %5597 = vmatpush2.msra.mxu0 0.0
    %5598 = vmatprep.subr.mxu0 0.0
    %5599 = vmatpush2.msra.mxu0 0.0
    %5600 = vmatprep.subr.mxu0 0.0
    %5601 = vmatpush2.msra.mxu0 0.0
    %5602 = vmatprep.subr.mxu0 0.0
    %5603 = vmatpush2.msra.mxu0 0.0
    %5604 = vmatprep.mubr.f32.mxu0 0.0
    %v5605 = vand.u32 %v4719, 4294901760
    %5606 = vmatmul.mubr.f32.gmra.mxu0 %v5605
    %v5607 = vpop.f32.mrf.mxu0
    %v5608 = vadd.f32 %v5456, %v5607
    %v5609 = vpop.f32.mrf.mxu0
    %v5610 = vadd.f32 %v5458, %v5609
    %5611 = vdwg.mxu0
    %5612 = vmatprep.subr.mxu0 0.0
    %5613 = vmatpush1.msra.mxu0 0.0
    %5614 = vmatprep.subr.mxu0 0.0
    %5615 = vmatpush1.msra.mxu0 0.0
    %5616 = vmatprep.subr.mxu0 0.0
    %5617 = vmatpush1.msra.mxu0 0.0
    %5618 = vmatprep.subr.mxu0 0.0
    %5619 = vmatpush1.msra.mxu0 0.0
    %5620 = vmatprep.subr.mxu0 0.0
    %5621 = vmatpush1.msra.mxu0 0.0
    %5622 = vmatprep.subr.mxu0 0.0
    %5623 = vmatpush1.msra.mxu0 0.0
    %5624 = vmatprep.subr.mxu0 0.0
    %5625 = vmatpush1.msra.mxu0 0.0
    %5626 = vmatprep.subr.mxu0 0.0
    %5627 = vmatpush1.msra.mxu0 0.0
    %v5628 = vand.u32 %v4713, 4294901760
    %v5629 = vsub.f32 %v4713, %v5628
    %5630 = vmatprep.subr.mxu0 %v5629
    %v5631 = vand.u32 %v4712, 4294901760
    %v5632 = vsub.f32 %v4712, %v5631
    %5633 = vmatpush1.msra.mxu0 %v5632
    %v5634 = vand.u32 %v4705, 4294901760
    %v5635 = vsub.f32 %v4705, %v5634
    %5636 = vmatprep.subr.mxu0 %v5635
    %v5637 = vand.u32 %v4704, 4294901760
    %v5638 = vsub.f32 %v4704, %v5637
    %5639 = vmatpush1.msra.mxu0 %v5638
    %v5640 = vand.u32 %v4697, 4294901760
    %v5641 = vsub.f32 %v4697, %v5640
    %5642 = vmatprep.subr.mxu0 %v5641
    %v5643 = vand.u32 %v4696, 4294901760
    %v5644 = vsub.f32 %v4696, %v5643
    %5645 = vmatpush1.msra.mxu0 %v5644
    %v5646 = vand.u32 %v4689, 4294901760
    %v5647 = vsub.f32 %v4689, %v5646
    %5648 = vmatprep.subr.mxu0 %v5647
    %v5649 = vand.u32 %v4688, 4294901760
    %v5650 = vsub.f32 %v4688, %v5649
    %5651 = vmatpush1.msra.mxu0 %v5650
    %v5652 = vand.u32 %v4681, 4294901760
    %v5653 = vsub.f32 %v4681, %v5652
    %5654 = vmatprep.subr.mxu0 %v5653
    %v5655 = vand.u32 %v4680, 4294901760
    %v5656 = vsub.f32 %v4680, %v5655
    %5657 = vmatpush1.msra.mxu0 %v5656
    %v5658 = vand.u32 %v4673, 4294901760
    %v5659 = vsub.f32 %v4673, %v5658
    %5660 = vmatprep.subr.mxu0 %v5659
    %v5661 = vand.u32 %v4672, 4294901760
    %v5662 = vsub.f32 %v4672, %v5661
    %5663 = vmatpush1.msra.mxu0 %v5662
    %v5664 = vand.u32 %v4665, 4294901760
    %v5665 = vsub.f32 %v4665, %v5664
    %5666 = vmatprep.subr.mxu0 %v5665
    %v5667 = vand.u32 %v4664, 4294901760
    %v5668 = vsub.f32 %v4664, %v5667
    %5669 = vmatpush1.msra.mxu0 %v5668
    %v5670 = vand.u32 %v4657, 4294901760
    %v5671 = vsub.f32 %v4657, %v5670
    %5672 = vmatprep.subr.mxu0 %v5671
    %v5673 = vand.u32 %v4656, 4294901760
    %v5674 = vsub.f32 %v4656, %v5673
    %5675 = vmatpush1.msra.mxu0 %v5674
    %5676 = vmatprep.subr.mxu0 0.0
    %5677 = vmatpush2.msra.mxu0 0.0
    %5678 = vmatprep.subr.mxu0 0.0
    %5679 = vmatpush2.msra.mxu0 0.0
    %5680 = vmatprep.subr.mxu0 0.0
    %5681 = vmatpush2.msra.mxu0 0.0
    %5682 = vmatprep.subr.mxu0 0.0
    %5683 = vmatpush2.msra.mxu0 0.0
    %5684 = vmatprep.subr.mxu0 0.0
    %5685 = vmatpush2.msra.mxu0 0.0
    %5686 = vmatprep.subr.mxu0 0.0
    %5687 = vmatpush2.msra.mxu0 0.0
    %5688 = vmatprep.subr.mxu0 0.0
    %5689 = vmatpush2.msra.mxu0 0.0
    %5690 = vmatprep.subr.mxu0 0.0
    %5691 = vmatpush2.msra.mxu0 0.0
    %5692 = vmatprep.subr.mxu0 0.0
    %5693 = vmatpush2.msra.mxu0 0.0
    %5694 = vmatprep.subr.mxu0 0.0
    %5695 = vmatpush2.msra.mxu0 0.0
    %5696 = vmatprep.subr.mxu0 0.0
    %5697 = vmatpush2.msra.mxu0 0.0
    %5698 = vmatprep.subr.mxu0 0.0
    %5699 = vmatpush2.msra.mxu0 0.0
    %5700 = vmatprep.subr.mxu0 0.0
    %5701 = vmatpush2.msra.mxu0 0.0
    %5702 = vmatprep.subr.mxu0 0.0
    %5703 = vmatpush2.msra.mxu0 0.0
    %5704 = vmatprep.subr.mxu0 0.0
    %5705 = vmatpush2.msra.mxu0 0.0
    %5706 = vmatprep.subr.mxu0 0.0
    %5707 = vmatpush2.msra.mxu0 0.0
    %5708 = vmatprep.mubr.f32.mxu0 0.0
    %v5709 = vand.u32 %v4719, 4294901760
    %v5710 = vsub.f32 %v4719, %v5709
    %5711 = vmatmul.mubr.f32.gmra.mxu0 %v5710
    %v5712 = vpop.f32.mrf.mxu0
    %v5713 = vadd.f32 %v5608, %v5712
    %v5714 = vpop.f32.mrf.mxu0
    %v5715 = vadd.f32 %v5610, %v5714
    %5716 = vdwg.mxu0
    %5717 = vmatprep.subr.mxu0 0.0
    %5718 = vmatpush1.msra.mxu0 0.0
    %5719 = vmatprep.subr.mxu0 0.0
    %5720 = vmatpush1.msra.mxu0 0.0
    %5721 = vmatprep.subr.mxu0 0.0
    %5722 = vmatpush1.msra.mxu0 0.0
    %5723 = vmatprep.subr.mxu0 0.0
    %5724 = vmatpush1.msra.mxu0 0.0
    %5725 = vmatprep.subr.mxu0 0.0
    %5726 = vmatpush1.msra.mxu0 0.0
    %5727 = vmatprep.subr.mxu0 0.0
    %5728 = vmatpush1.msra.mxu0 0.0
    %5729 = vmatprep.subr.mxu0 0.0
    %5730 = vmatpush1.msra.mxu0 0.0
    %5731 = vmatprep.subr.mxu0 0.0
    %5732 = vmatpush1.msra.mxu0 0.0
    %v5733 = vand.u32 %v4713, 4294901760
    %5734 = vmatprep.subr.mxu0 %v5733
    %v5735 = vand.u32 %v4712, 4294901760
    %5736 = vmatpush1.msra.mxu0 %v5735
    %v5737 = vand.u32 %v4705, 4294901760
    %5738 = vmatprep.subr.mxu0 %v5737
    %v5739 = vand.u32 %v4704, 4294901760
    %5740 = vmatpush1.msra.mxu0 %v5739
    %v5741 = vand.u32 %v4697, 4294901760
    %5742 = vmatprep.subr.mxu0 %v5741
    %v5743 = vand.u32 %v4696, 4294901760
    %5744 = vmatpush1.msra.mxu0 %v5743
    %v5745 = vand.u32 %v4689, 4294901760
    %5746 = vmatprep.subr.mxu0 %v5745
    %v5747 = vand.u32 %v4688, 4294901760
    %5748 = vmatpush1.msra.mxu0 %v5747
    %v5749 = vand.u32 %v4681, 4294901760
    %5750 = vmatprep.subr.mxu0 %v5749
    %v5751 = vand.u32 %v4680, 4294901760
    %5752 = vmatpush1.msra.mxu0 %v5751
    %v5753 = vand.u32 %v4673, 4294901760
    %5754 = vmatprep.subr.mxu0 %v5753
    %v5755 = vand.u32 %v4672, 4294901760
    %5756 = vmatpush1.msra.mxu0 %v5755
    %v5757 = vand.u32 %v4665, 4294901760
    %5758 = vmatprep.subr.mxu0 %v5757
    %v5759 = vand.u32 %v4664, 4294901760
    %5760 = vmatpush1.msra.mxu0 %v5759
    %v5761 = vand.u32 %v4657, 4294901760
    %5762 = vmatprep.subr.mxu0 %v5761
    %v5763 = vand.u32 %v4656, 4294901760
    %5764 = vmatpush1.msra.mxu0 %v5763
    %5765 = vmatprep.subr.mxu0 0.0
    %5766 = vmatpush2.msra.mxu0 0.0
    %5767 = vmatprep.subr.mxu0 0.0
    %5768 = vmatpush2.msra.mxu0 0.0
    %5769 = vmatprep.subr.mxu0 0.0
    %5770 = vmatpush2.msra.mxu0 0.0
    %5771 = vmatprep.subr.mxu0 0.0
    %5772 = vmatpush2.msra.mxu0 0.0
    %5773 = vmatprep.subr.mxu0 0.0
    %5774 = vmatpush2.msra.mxu0 0.0
    %5775 = vmatprep.subr.mxu0 0.0
    %5776 = vmatpush2.msra.mxu0 0.0
    %5777 = vmatprep.subr.mxu0 0.0
    %5778 = vmatpush2.msra.mxu0 0.0
    %5779 = vmatprep.subr.mxu0 0.0
    %5780 = vmatpush2.msra.mxu0 0.0
    %5781 = vmatprep.subr.mxu0 0.0
    %5782 = vmatpush2.msra.mxu0 0.0
    %5783 = vmatprep.subr.mxu0 0.0
    %5784 = vmatpush2.msra.mxu0 0.0
    %5785 = vmatprep.subr.mxu0 0.0
    %5786 = vmatpush2.msra.mxu0 0.0
    %5787 = vmatprep.subr.mxu0 0.0
    %5788 = vmatpush2.msra.mxu0 0.0
    %5789 = vmatprep.subr.mxu0 0.0
    %5790 = vmatpush2.msra.mxu0 0.0
    %5791 = vmatprep.subr.mxu0 0.0
    %5792 = vmatpush2.msra.mxu0 0.0
    %5793 = vmatprep.subr.mxu0 0.0
    %5794 = vmatpush2.msra.mxu0 0.0
    %5795 = vmatprep.subr.mxu0 0.0
    %5796 = vmatpush2.msra.mxu0 0.0
    %5797 = vmatprep.mubr.f32.mxu0 0.0
    %v5798 = vand.u32 %v4719, 4294901760
    %v5799 = vsub.f32 %v4719, %v5798
    %v5800 = vand.u32 %v5799, 4294901760
    %5801 = vmatmul.mubr.f32.gmra.mxu0 %v5800
    %v5802 = vpop.f32.mrf.mxu0
    %v5803 = vadd.f32 %v5713, %v5802
    %v5804 = vpop.f32.mrf.mxu0
    %v5805 = vadd.f32 %v5715, %v5804
    %5806 = vdwg.mxu0
    %5807 = vmatprep.subr.mxu0 0.0
    %5808 = vmatpush1.msra.mxu0 0.0
    %5809 = vmatprep.subr.mxu0 0.0
    %5810 = vmatpush1.msra.mxu0 0.0
    %5811 = vmatprep.subr.mxu0 0.0
    %5812 = vmatpush1.msra.mxu0 0.0
    %5813 = vmatprep.subr.mxu0 0.0
    %5814 = vmatpush1.msra.mxu0 0.0
    %5815 = vmatprep.subr.mxu0 0.0
    %5816 = vmatpush1.msra.mxu0 0.0
    %5817 = vmatprep.subr.mxu0 0.0
    %5818 = vmatpush1.msra.mxu0 0.0
    %5819 = vmatprep.subr.mxu0 0.0
    %5820 = vmatpush1.msra.mxu0 0.0
    %5821 = vmatprep.subr.mxu0 0.0
    %5822 = vmatpush1.msra.mxu0 0.0
    %v5823 = vand.u32 %v4713, 4294901760
    %v5824 = vsub.f32 %v4713, %v5823
    %v5825 = vand.u32 %v5824, 4294901760
    %5826 = vmatprep.subr.mxu0 %v5825
    %v5827 = vand.u32 %v4712, 4294901760
    %v5828 = vsub.f32 %v4712, %v5827
    %v5829 = vand.u32 %v5828, 4294901760
    %5830 = vmatpush1.msra.mxu0 %v5829
    %v5831 = vand.u32 %v4705, 4294901760
    %v5832 = vsub.f32 %v4705, %v5831
    %v5833 = vand.u32 %v5832, 4294901760
    %5834 = vmatprep.subr.mxu0 %v5833
    %v5835 = vand.u32 %v4704, 4294901760
    %v5836 = vsub.f32 %v4704, %v5835
    %v5837 = vand.u32 %v5836, 4294901760
    %5838 = vmatpush1.msra.mxu0 %v5837
    %v5839 = vand.u32 %v4697, 4294901760
    %v5840 = vsub.f32 %v4697, %v5839
    %v5841 = vand.u32 %v5840, 4294901760
    %5842 = vmatprep.subr.mxu0 %v5841
    %v5843 = vand.u32 %v4696, 4294901760
    %v5844 = vsub.f32 %v4696, %v5843
    %v5845 = vand.u32 %v5844, 4294901760
    %5846 = vmatpush1.msra.mxu0 %v5845
    %v5847 = vand.u32 %v4689, 4294901760
    %v5848 = vsub.f32 %v4689, %v5847
    %v5849 = vand.u32 %v5848, 4294901760
    %5850 = vmatprep.subr.mxu0 %v5849
    %v5851 = vand.u32 %v4688, 4294901760
    %v5852 = vsub.f32 %v4688, %v5851
    %v5853 = vand.u32 %v5852, 4294901760
    %5854 = vmatpush1.msra.mxu0 %v5853
    %v5855 = vand.u32 %v4681, 4294901760
    %v5856 = vsub.f32 %v4681, %v5855
    %v5857 = vand.u32 %v5856, 4294901760
    %5858 = vmatprep.subr.mxu0 %v5857
    %v5859 = vand.u32 %v4680, 4294901760
    %v5860 = vsub.f32 %v4680, %v5859
    %v5861 = vand.u32 %v5860, 4294901760
    %5862 = vmatpush1.msra.mxu0 %v5861
    %v5863 = vand.u32 %v4673, 4294901760
    %v5864 = vsub.f32 %v4673, %v5863
    %v5865 = vand.u32 %v5864, 4294901760
    %5866 = vmatprep.subr.mxu0 %v5865
    %v5867 = vand.u32 %v4672, 4294901760
    %v5868 = vsub.f32 %v4672, %v5867
    %v5869 = vand.u32 %v5868, 4294901760
    %5870 = vmatpush1.msra.mxu0 %v5869
    %v5871 = vand.u32 %v4665, 4294901760
    %v5872 = vsub.f32 %v4665, %v5871
    %v5873 = vand.u32 %v5872, 4294901760
    %5874 = vmatprep.subr.mxu0 %v5873
    %v5875 = vand.u32 %v4664, 4294901760
    %v5876 = vsub.f32 %v4664, %v5875
    %v5877 = vand.u32 %v5876, 4294901760
    %5878 = vmatpush1.msra.mxu0 %v5877
    %v5879 = vand.u32 %v4657, 4294901760
    %v5880 = vsub.f32 %v4657, %v5879
    %v5881 = vand.u32 %v5880, 4294901760
    %5882 = vmatprep.subr.mxu0 %v5881
    %v5883 = vand.u32 %v4656, 4294901760
    %v5884 = vsub.f32 %v4656, %v5883
    %v5885 = vand.u32 %v5884, 4294901760
    %5886 = vmatpush1.msra.mxu0 %v5885
    %5887 = vmatprep.subr.mxu0 0.0
    %5888 = vmatpush2.msra.mxu0 0.0
    %5889 = vmatprep.subr.mxu0 0.0
    %5890 = vmatpush2.msra.mxu0 0.0
    %5891 = vmatprep.subr.mxu0 0.0
    %5892 = vmatpush2.msra.mxu0 0.0
    %5893 = vmatprep.subr.mxu0 0.0
    %5894 = vmatpush2.msra.mxu0 0.0
    %5895 = vmatprep.subr.mxu0 0.0
    %5896 = vmatpush2.msra.mxu0 0.0
    %5897 = vmatprep.subr.mxu0 0.0
    %5898 = vmatpush2.msra.mxu0 0.0
    %5899 = vmatprep.subr.mxu0 0.0
    %5900 = vmatpush2.msra.mxu0 0.0
    %5901 = vmatprep.subr.mxu0 0.0
    %5902 = vmatpush2.msra.mxu0 0.0
    %5903 = vmatprep.subr.mxu0 0.0
    %5904 = vmatpush2.msra.mxu0 0.0
    %5905 = vmatprep.subr.mxu0 0.0
    %5906 = vmatpush2.msra.mxu0 0.0
    %5907 = vmatprep.subr.mxu0 0.0
    %5908 = vmatpush2.msra.mxu0 0.0
    %5909 = vmatprep.subr.mxu0 0.0
    %5910 = vmatpush2.msra.mxu0 0.0
    %5911 = vmatprep.subr.mxu0 0.0
    %5912 = vmatpush2.msra.mxu0 0.0
    %5913 = vmatprep.subr.mxu0 0.0
    %5914 = vmatpush2.msra.mxu0 0.0
    %5915 = vmatprep.subr.mxu0 0.0
    %5916 = vmatpush2.msra.mxu0 0.0
    %5917 = vmatprep.subr.mxu0 0.0
    %5918 = vmatpush2.msra.mxu0 0.0
    %5919 = vmatprep.mubr.f32.mxu0 0.0
    %v5920 = vand.u32 %v4719, 4294901760
    %5921 = vmatmul.mubr.f32.gmra.mxu0 %v5920
    %v5922 = vpop.f32.mrf.mxu0
    %v5923 = vadd.f32 %v5803, %v5922
    %v5924 = vpop.f32.mrf.mxu0
    %v5925 = vadd.f32 %v5805, %v5924
    %5926 = vdwg.mxu0
    %5927 = vmatprep.subr.mxu0 0.0
    %5928 = vmatpush1.msra.mxu0 0.0
    %5929 = vmatprep.subr.mxu0 0.0
    %5930 = vmatpush1.msra.mxu0 0.0
    %5931 = vmatprep.subr.mxu0 0.0
    %5932 = vmatpush1.msra.mxu0 0.0
    %5933 = vmatprep.subr.mxu0 0.0
    %5934 = vmatpush1.msra.mxu0 0.0
    %5935 = vmatprep.subr.mxu0 0.0
    %5936 = vmatpush1.msra.mxu0 0.0
    %5937 = vmatprep.subr.mxu0 0.0
    %5938 = vmatpush1.msra.mxu0 0.0
    %5939 = vmatprep.subr.mxu0 0.0
    %5940 = vmatpush1.msra.mxu0 0.0
    %5941 = vmatprep.subr.mxu0 0.0
    %5942 = vmatpush1.msra.mxu0 0.0
    %v5943 = vand.u32 %v4713, 4294901760
    %5944 = vmatprep.subr.mxu0 %v5943
    %v5945 = vand.u32 %v4712, 4294901760
    %5946 = vmatpush1.msra.mxu0 %v5945
    %v5947 = vand.u32 %v4705, 4294901760
    %5948 = vmatprep.subr.mxu0 %v5947
    %v5949 = vand.u32 %v4704, 4294901760
    %5950 = vmatpush1.msra.mxu0 %v5949
    %v5951 = vand.u32 %v4697, 4294901760
    %5952 = vmatprep.subr.mxu0 %v5951
    %v5953 = vand.u32 %v4696, 4294901760
    %5954 = vmatpush1.msra.mxu0 %v5953
    %v5955 = vand.u32 %v4689, 4294901760
    %5956 = vmatprep.subr.mxu0 %v5955
    %v5957 = vand.u32 %v4688, 4294901760
    %5958 = vmatpush1.msra.mxu0 %v5957
    %v5959 = vand.u32 %v4681, 4294901760
    %5960 = vmatprep.subr.mxu0 %v5959
    %v5961 = vand.u32 %v4680, 4294901760
    %5962 = vmatpush1.msra.mxu0 %v5961
    %v5963 = vand.u32 %v4673, 4294901760
    %5964 = vmatprep.subr.mxu0 %v5963
    %v5965 = vand.u32 %v4672, 4294901760
    %5966 = vmatpush1.msra.mxu0 %v5965
    %v5967 = vand.u32 %v4665, 4294901760
    %5968 = vmatprep.subr.mxu0 %v5967
    %v5969 = vand.u32 %v4664, 4294901760
    %5970 = vmatpush1.msra.mxu0 %v5969
    %v5971 = vand.u32 %v4657, 4294901760
    %5972 = vmatprep.subr.mxu0 %v5971
    %v5973 = vand.u32 %v4656, 4294901760
    %5974 = vmatpush1.msra.mxu0 %v5973
    %5975 = vmatprep.subr.mxu0 0.0
    %5976 = vmatpush2.msra.mxu0 0.0
    %5977 = vmatprep.subr.mxu0 0.0
    %5978 = vmatpush2.msra.mxu0 0.0
    %5979 = vmatprep.subr.mxu0 0.0
    %5980 = vmatpush2.msra.mxu0 0.0
    %5981 = vmatprep.subr.mxu0 0.0
    %5982 = vmatpush2.msra.mxu0 0.0
    %5983 = vmatprep.subr.mxu0 0.0
    %5984 = vmatpush2.msra.mxu0 0.0
    %5985 = vmatprep.subr.mxu0 0.0
    %5986 = vmatpush2.msra.mxu0 0.0
    %5987 = vmatprep.subr.mxu0 0.0
    %5988 = vmatpush2.msra.mxu0 0.0
    %5989 = vmatprep.subr.mxu0 0.0
    %5990 = vmatpush2.msra.mxu0 0.0
    %5991 = vmatprep.subr.mxu0 0.0
    %5992 = vmatpush2.msra.mxu0 0.0
    %5993 = vmatprep.subr.mxu0 0.0
    %5994 = vmatpush2.msra.mxu0 0.0
    %5995 = vmatprep.subr.mxu0 0.0
    %5996 = vmatpush2.msra.mxu0 0.0
    %5997 = vmatprep.subr.mxu0 0.0
    %5998 = vmatpush2.msra.mxu0 0.0
    %5999 = vmatprep.subr.mxu0 0.0
    %6000 = vmatpush2.msra.mxu0 0.0
    %6001 = vmatprep.subr.mxu0 0.0
    %6002 = vmatpush2.msra.mxu0 0.0
    %6003 = vmatprep.subr.mxu0 0.0
    %6004 = vmatpush2.msra.mxu0 0.0
    %6005 = vmatprep.subr.mxu0 0.0
    %6006 = vmatpush2.msra.mxu0 0.0
    %6007 = vmatprep.mubr.f32.mxu0 0.0
    %v6008 = vand.u32 %v4719, 4294901760
    %6009 = vmatmul.mubr.f32.gmra.mxu0 %v6008
    %v6010 = vpop.f32.mrf.mxu0
    %v6011 = vadd.f32 %v5923, %v6010
    %v6012 = vpop.f32.mrf.mxu0
    %v6013 = vadd.f32 %v5925, %v6012
    %6014 = vdwg.mxu0
    %6015 = vmatprep.subr.mxu0 0.0
    %6016 = vmatpush1.msra.mxu0 0.0
    %6017 = vmatprep.subr.mxu0 0.0
    %6018 = vmatpush1.msra.mxu0 0.0
    %6019 = vmatprep.subr.mxu0 0.0
    %6020 = vmatpush1.msra.mxu0 0.0
    %6021 = vmatprep.subr.mxu0 0.0
    %6022 = vmatpush1.msra.mxu0 0.0
    %6023 = vmatprep.subr.mxu0 0.0
    %6024 = vmatpush1.msra.mxu0 0.0
    %6025 = vmatprep.subr.mxu0 0.0
    %6026 = vmatpush1.msra.mxu0 0.0
    %6027 = vmatprep.subr.mxu0 0.0
    %6028 = vmatpush1.msra.mxu0 0.0
    %6029 = vmatprep.subr.mxu0 0.0
    %6030 = vmatpush1.msra.mxu0 0.0
    %v6031 = vand.u32 %v4715, 4294901760
    %6032 = vmatprep.subr.mxu0 %v6031
    %v6033 = vand.u32 %v4714, 4294901760
    %6034 = vmatpush1.msra.mxu0 %v6033
    %v6035 = vand.u32 %v4707, 4294901760
    %6036 = vmatprep.subr.mxu0 %v6035
    %v6037 = vand.u32 %v4706, 4294901760
    %6038 = vmatpush1.msra.mxu0 %v6037
    %v6039 = vand.u32 %v4699, 4294901760
    %6040 = vmatprep.subr.mxu0 %v6039
    %v6041 = vand.u32 %v4698, 4294901760
    %6042 = vmatpush1.msra.mxu0 %v6041
    %v6043 = vand.u32 %v4691, 4294901760
    %6044 = vmatprep.subr.mxu0 %v6043
    %v6045 = vand.u32 %v4690, 4294901760
    %6046 = vmatpush1.msra.mxu0 %v6045
    %v6047 = vand.u32 %v4683, 4294901760
    %6048 = vmatprep.subr.mxu0 %v6047
    %v6049 = vand.u32 %v4682, 4294901760
    %6050 = vmatpush1.msra.mxu0 %v6049
    %v6051 = vand.u32 %v4675, 4294901760
    %6052 = vmatprep.subr.mxu0 %v6051
    %v6053 = vand.u32 %v4674, 4294901760
    %6054 = vmatpush1.msra.mxu0 %v6053
    %v6055 = vand.u32 %v4667, 4294901760
    %6056 = vmatprep.subr.mxu0 %v6055
    %v6057 = vand.u32 %v4666, 4294901760
    %6058 = vmatpush1.msra.mxu0 %v6057
    %v6059 = vand.u32 %v4659, 4294901760
    %6060 = vmatprep.subr.mxu0 %v6059
    %v6061 = vand.u32 %v4658, 4294901760
    %6062 = vmatpush1.msra.mxu0 %v6061
    %6063 = vmatprep.subr.mxu0 0.0
    %6064 = vmatpush2.msra.mxu0 0.0
    %6065 = vmatprep.subr.mxu0 0.0
    %6066 = vmatpush2.msra.mxu0 0.0
    %6067 = vmatprep.subr.mxu0 0.0
    %6068 = vmatpush2.msra.mxu0 0.0
    %6069 = vmatprep.subr.mxu0 0.0
    %6070 = vmatpush2.msra.mxu0 0.0
    %6071 = vmatprep.subr.mxu0 0.0
    %6072 = vmatpush2.msra.mxu0 0.0
    %6073 = vmatprep.subr.mxu0 0.0
    %6074 = vmatpush2.msra.mxu0 0.0
    %6075 = vmatprep.subr.mxu0 0.0
    %6076 = vmatpush2.msra.mxu0 0.0
    %6077 = vmatprep.subr.mxu0 0.0
    %6078 = vmatpush2.msra.mxu0 0.0
    %6079 = vmatprep.subr.mxu0 0.0
    %6080 = vmatpush2.msra.mxu0 0.0
    %6081 = vmatprep.subr.mxu0 0.0
    %6082 = vmatpush2.msra.mxu0 0.0
    %6083 = vmatprep.subr.mxu0 0.0
    %6084 = vmatpush2.msra.mxu0 0.0
    %6085 = vmatprep.subr.mxu0 0.0
    %6086 = vmatpush2.msra.mxu0 0.0
    %6087 = vmatprep.subr.mxu0 0.0
    %6088 = vmatpush2.msra.mxu0 0.0
    %6089 = vmatprep.subr.mxu0 0.0
    %6090 = vmatpush2.msra.mxu0 0.0
    %6091 = vmatprep.subr.mxu0 0.0
    %6092 = vmatpush2.msra.mxu0 0.0
    %6093 = vmatprep.subr.mxu0 0.0
    %6094 = vmatpush2.msra.mxu0 0.0
    %6095 = vmatprep.mubr.f32.mxu0 0.0
    %v6096 = vand.u32 %v4719, 4294901760
    %v6097 = vsub.f32 %v4719, %v6096
    %v6098 = vand.u32 %v6097, 4294901760
    %v6099 = vsub.f32 %v6097, %v6098
    %v6100 = vand.u32 %v6099, 4294901760
    %6101 = vmatmul.mubr.f32.gmra.mxu0 %v6100
    %v6102 = vpop.f32.mrf.mxu0
    %v6103 = vadd.f32 0.0, %v6102
    %v6104 = vpop.f32.mrf.mxu0
    %v6105 = vadd.f32 0.0, %v6104
    %6106 = vdwg.mxu0
    %6107 = vmatprep.subr.mxu0 0.0
    %6108 = vmatpush1.msra.mxu0 0.0
    %6109 = vmatprep.subr.mxu0 0.0
    %6110 = vmatpush1.msra.mxu0 0.0
    %6111 = vmatprep.subr.mxu0 0.0
    %6112 = vmatpush1.msra.mxu0 0.0
    %6113 = vmatprep.subr.mxu0 0.0
    %6114 = vmatpush1.msra.mxu0 0.0
    %6115 = vmatprep.subr.mxu0 0.0
    %6116 = vmatpush1.msra.mxu0 0.0
    %6117 = vmatprep.subr.mxu0 0.0
    %6118 = vmatpush1.msra.mxu0 0.0
    %6119 = vmatprep.subr.mxu0 0.0
    %6120 = vmatpush1.msra.mxu0 0.0
    %6121 = vmatprep.subr.mxu0 0.0
    %6122 = vmatpush1.msra.mxu0 0.0
    %v6123 = vand.u32 %v4715, 4294901760
    %v6124 = vsub.f32 %v4715, %v6123
    %v6125 = vand.u32 %v6124, 4294901760
    %v6126 = vsub.f32 %v6124, %v6125
    %v6127 = vand.u32 %v6126, 4294901760
    %6128 = vmatprep.subr.mxu0 %v6127
    %v6129 = vand.u32 %v4714, 4294901760
    %v6130 = vsub.f32 %v4714, %v6129
    %v6131 = vand.u32 %v6130, 4294901760
    %v6132 = vsub.f32 %v6130, %v6131
    %v6133 = vand.u32 %v6132, 4294901760
    %6134 = vmatpush1.msra.mxu0 %v6133
    %v6135 = vand.u32 %v4707, 4294901760
    %v6136 = vsub.f32 %v4707, %v6135
    %v6137 = vand.u32 %v6136, 4294901760
    %v6138 = vsub.f32 %v6136, %v6137
    %v6139 = vand.u32 %v6138, 4294901760
    %6140 = vmatprep.subr.mxu0 %v6139
    %v6141 = vand.u32 %v4706, 4294901760
    %v6142 = vsub.f32 %v4706, %v6141
    %v6143 = vand.u32 %v6142, 4294901760
    %v6144 = vsub.f32 %v6142, %v6143
    %v6145 = vand.u32 %v6144, 4294901760
    %6146 = vmatpush1.msra.mxu0 %v6145
    %v6147 = vand.u32 %v4699, 4294901760
    %v6148 = vsub.f32 %v4699, %v6147
    %v6149 = vand.u32 %v6148, 4294901760
    %v6150 = vsub.f32 %v6148, %v6149
    %v6151 = vand.u32 %v6150, 4294901760
    %6152 = vmatprep.subr.mxu0 %v6151
    %v6153 = vand.u32 %v4698, 4294901760
    %v6154 = vsub.f32 %v4698, %v6153
    %v6155 = vand.u32 %v6154, 4294901760
    %v6156 = vsub.f32 %v6154, %v6155
    %v6157 = vand.u32 %v6156, 4294901760
    %6158 = vmatpush1.msra.mxu0 %v6157
    %v6159 = vand.u32 %v4691, 4294901760
    %v6160 = vsub.f32 %v4691, %v6159
    %v6161 = vand.u32 %v6160, 4294901760
    %v6162 = vsub.f32 %v6160, %v6161
    %v6163 = vand.u32 %v6162, 4294901760
    %6164 = vmatprep.subr.mxu0 %v6163
    %v6165 = vand.u32 %v4690, 4294901760
    %v6166 = vsub.f32 %v4690, %v6165
    %v6167 = vand.u32 %v6166, 4294901760
    %v6168 = vsub.f32 %v6166, %v6167
    %v6169 = vand.u32 %v6168, 4294901760
    %6170 = vmatpush1.msra.mxu0 %v6169
    %v6171 = vand.u32 %v4683, 4294901760
    %v6172 = vsub.f32 %v4683, %v6171
    %v6173 = vand.u32 %v6172, 4294901760
    %v6174 = vsub.f32 %v6172, %v6173
    %v6175 = vand.u32 %v6174, 4294901760
    %6176 = vmatprep.subr.mxu0 %v6175
    %v6177 = vand.u32 %v4682, 4294901760
    %v6178 = vsub.f32 %v4682, %v6177
    %v6179 = vand.u32 %v6178, 4294901760
    %v6180 = vsub.f32 %v6178, %v6179
    %v6181 = vand.u32 %v6180, 4294901760
    %6182 = vmatpush1.msra.mxu0 %v6181
    %v6183 = vand.u32 %v4675, 4294901760
    %v6184 = vsub.f32 %v4675, %v6183
    %v6185 = vand.u32 %v6184, 4294901760
    %v6186 = vsub.f32 %v6184, %v6185
    %v6187 = vand.u32 %v6186, 4294901760
    %6188 = vmatprep.subr.mxu0 %v6187
    %v6189 = vand.u32 %v4674, 4294901760
    %v6190 = vsub.f32 %v4674, %v6189
    %v6191 = vand.u32 %v6190, 4294901760
    %v6192 = vsub.f32 %v6190, %v6191
    %v6193 = vand.u32 %v6192, 4294901760
    %6194 = vmatpush1.msra.mxu0 %v6193
    %v6195 = vand.u32 %v4667, 4294901760
    %v6196 = vsub.f32 %v4667, %v6195
    %v6197 = vand.u32 %v6196, 4294901760
    %v6198 = vsub.f32 %v6196, %v6197
    %v6199 = vand.u32 %v6198, 4294901760
    %6200 = vmatprep.subr.mxu0 %v6199
    %v6201 = vand.u32 %v4666, 4294901760
    %v6202 = vsub.f32 %v4666, %v6201
    %v6203 = vand.u32 %v6202, 4294901760
    %v6204 = vsub.f32 %v6202, %v6203
    %v6205 = vand.u32 %v6204, 4294901760
    %6206 = vmatpush1.msra.mxu0 %v6205
    %v6207 = vand.u32 %v4659, 4294901760
    %v6208 = vsub.f32 %v4659, %v6207
    %v6209 = vand.u32 %v6208, 4294901760
    %v6210 = vsub.f32 %v6208, %v6209
    %v6211 = vand.u32 %v6210, 4294901760
    %6212 = vmatprep.subr.mxu0 %v6211
    %v6213 = vand.u32 %v4658, 4294901760
    %v6214 = vsub.f32 %v4658, %v6213
    %v6215 = vand.u32 %v6214, 4294901760
    %v6216 = vsub.f32 %v6214, %v6215
    %v6217 = vand.u32 %v6216, 4294901760
    %6218 = vmatpush1.msra.mxu0 %v6217
    %6219 = vmatprep.subr.mxu0 0.0
    %6220 = vmatpush2.msra.mxu0 0.0
    %6221 = vmatprep.subr.mxu0 0.0
    %6222 = vmatpush2.msra.mxu0 0.0
    %6223 = vmatprep.subr.mxu0 0.0
    %6224 = vmatpush2.msra.mxu0 0.0
    %6225 = vmatprep.subr.mxu0 0.0
    %6226 = vmatpush2.msra.mxu0 0.0
    %6227 = vmatprep.subr.mxu0 0.0
    %6228 = vmatpush2.msra.mxu0 0.0
    %6229 = vmatprep.subr.mxu0 0.0
    %6230 = vmatpush2.msra.mxu0 0.0
    %6231 = vmatprep.subr.mxu0 0.0
    %6232 = vmatpush2.msra.mxu0 0.0
    %6233 = vmatprep.subr.mxu0 0.0
    %6234 = vmatpush2.msra.mxu0 0.0
    %6235 = vmatprep.subr.mxu0 0.0
    %6236 = vmatpush2.msra.mxu0 0.0
    %6237 = vmatprep.subr.mxu0 0.0
    %6238 = vmatpush2.msra.mxu0 0.0
    %6239 = vmatprep.subr.mxu0 0.0
    %6240 = vmatpush2.msra.mxu0 0.0
    %6241 = vmatprep.subr.mxu0 0.0
    %6242 = vmatpush2.msra.mxu0 0.0
    %6243 = vmatprep.subr.mxu0 0.0
    %6244 = vmatpush2.msra.mxu0 0.0
    %6245 = vmatprep.subr.mxu0 0.0
    %6246 = vmatpush2.msra.mxu0 0.0
    %6247 = vmatprep.subr.mxu0 0.0
    %6248 = vmatpush2.msra.mxu0 0.0
    %6249 = vmatprep.subr.mxu0 0.0
    %6250 = vmatpush2.msra.mxu0 0.0
    %6251 = vmatprep.mubr.f32.mxu0 0.0
    %v6252 = vand.u32 %v4719, 4294901760
    %6253 = vmatmul.mubr.f32.gmra.mxu0 %v6252
    %v6254 = vpop.f32.mrf.mxu0
    %v6255 = vadd.f32 %v6103, %v6254
    %v6256 = vpop.f32.mrf.mxu0
    %v6257 = vadd.f32 %v6105, %v6256
    %6258 = vdwg.mxu0
    %6259 = vmatprep.subr.mxu0 0.0
    %6260 = vmatpush1.msra.mxu0 0.0
    %6261 = vmatprep.subr.mxu0 0.0
    %6262 = vmatpush1.msra.mxu0 0.0
    %6263 = vmatprep.subr.mxu0 0.0
    %6264 = vmatpush1.msra.mxu0 0.0
    %6265 = vmatprep.subr.mxu0 0.0
    %6266 = vmatpush1.msra.mxu0 0.0
    %6267 = vmatprep.subr.mxu0 0.0
    %6268 = vmatpush1.msra.mxu0 0.0
    %6269 = vmatprep.subr.mxu0 0.0
    %6270 = vmatpush1.msra.mxu0 0.0
    %6271 = vmatprep.subr.mxu0 0.0
    %6272 = vmatpush1.msra.mxu0 0.0
    %6273 = vmatprep.subr.mxu0 0.0
    %6274 = vmatpush1.msra.mxu0 0.0
    %v6275 = vand.u32 %v4715, 4294901760
    %v6276 = vsub.f32 %v4715, %v6275
    %6277 = vmatprep.subr.mxu0 %v6276
    %v6278 = vand.u32 %v4714, 4294901760
    %v6279 = vsub.f32 %v4714, %v6278
    %6280 = vmatpush1.msra.mxu0 %v6279
    %v6281 = vand.u32 %v4707, 4294901760
    %v6282 = vsub.f32 %v4707, %v6281
    %6283 = vmatprep.subr.mxu0 %v6282
    %v6284 = vand.u32 %v4706, 4294901760
    %v6285 = vsub.f32 %v4706, %v6284
    %6286 = vmatpush1.msra.mxu0 %v6285
    %v6287 = vand.u32 %v4699, 4294901760
    %v6288 = vsub.f32 %v4699, %v6287
    %6289 = vmatprep.subr.mxu0 %v6288
    %v6290 = vand.u32 %v4698, 4294901760
    %v6291 = vsub.f32 %v4698, %v6290
    %6292 = vmatpush1.msra.mxu0 %v6291
    %v6293 = vand.u32 %v4691, 4294901760
    %v6294 = vsub.f32 %v4691, %v6293
    %6295 = vmatprep.subr.mxu0 %v6294
    %v6296 = vand.u32 %v4690, 4294901760
    %v6297 = vsub.f32 %v4690, %v6296
    %6298 = vmatpush1.msra.mxu0 %v6297
    %v6299 = vand.u32 %v4683, 4294901760
    %v6300 = vsub.f32 %v4683, %v6299
    %6301 = vmatprep.subr.mxu0 %v6300
    %v6302 = vand.u32 %v4682, 4294901760
    %v6303 = vsub.f32 %v4682, %v6302
    %6304 = vmatpush1.msra.mxu0 %v6303
    %v6305 = vand.u32 %v4675, 4294901760
    %v6306 = vsub.f32 %v4675, %v6305
    %6307 = vmatprep.subr.mxu0 %v6306
    %v6308 = vand.u32 %v4674, 4294901760
    %v6309 = vsub.f32 %v4674, %v6308
    %6310 = vmatpush1.msra.mxu0 %v6309
    %v6311 = vand.u32 %v4667, 4294901760
    %v6312 = vsub.f32 %v4667, %v6311
    %6313 = vmatprep.subr.mxu0 %v6312
    %v6314 = vand.u32 %v4666, 4294901760
    %v6315 = vsub.f32 %v4666, %v6314
    %6316 = vmatpush1.msra.mxu0 %v6315
    %v6317 = vand.u32 %v4659, 4294901760
    %v6318 = vsub.f32 %v4659, %v6317
    %6319 = vmatprep.subr.mxu0 %v6318
    %v6320 = vand.u32 %v4658, 4294901760
    %v6321 = vsub.f32 %v4658, %v6320
    %6322 = vmatpush1.msra.mxu0 %v6321
    %6323 = vmatprep.subr.mxu0 0.0
    %6324 = vmatpush2.msra.mxu0 0.0
    %6325 = vmatprep.subr.mxu0 0.0
    %6326 = vmatpush2.msra.mxu0 0.0
    %6327 = vmatprep.subr.mxu0 0.0
    %6328 = vmatpush2.msra.mxu0 0.0
    %6329 = vmatprep.subr.mxu0 0.0
    %6330 = vmatpush2.msra.mxu0 0.0
    %6331 = vmatprep.subr.mxu0 0.0
    %6332 = vmatpush2.msra.mxu0 0.0
    %6333 = vmatprep.subr.mxu0 0.0
    %6334 = vmatpush2.msra.mxu0 0.0
    %6335 = vmatprep.subr.mxu0 0.0
    %6336 = vmatpush2.msra.mxu0 0.0
    %6337 = vmatprep.subr.mxu0 0.0
    %6338 = vmatpush2.msra.mxu0 0.0
    %6339 = vmatprep.subr.mxu0 0.0
    %6340 = vmatpush2.msra.mxu0 0.0
    %6341 = vmatprep.subr.mxu0 0.0
    %6342 = vmatpush2.msra.mxu0 0.0
    %6343 = vmatprep.subr.mxu0 0.0
    %6344 = vmatpush2.msra.mxu0 0.0
    %6345 = vmatprep.subr.mxu0 0.0
    %6346 = vmatpush2.msra.mxu0 0.0
    %6347 = vmatprep.subr.mxu0 0.0
    %6348 = vmatpush2.msra.mxu0 0.0
    %6349 = vmatprep.subr.mxu0 0.0
    %6350 = vmatpush2.msra.mxu0 0.0
    %6351 = vmatprep.subr.mxu0 0.0
    %6352 = vmatpush2.msra.mxu0 0.0
    %6353 = vmatprep.subr.mxu0 0.0
    %6354 = vmatpush2.msra.mxu0 0.0
    %6355 = vmatprep.mubr.f32.mxu0 0.0
    %v6356 = vand.u32 %v4719, 4294901760
    %v6357 = vsub.f32 %v4719, %v6356
    %6358 = vmatmul.mubr.f32.gmra.mxu0 %v6357
    %v6359 = vpop.f32.mrf.mxu0
    %v6360 = vadd.f32 %v6255, %v6359
    %v6361 = vpop.f32.mrf.mxu0
    %v6362 = vadd.f32 %v6257, %v6361
    %6363 = vdwg.mxu0
    %6364 = vmatprep.subr.mxu0 0.0
    %6365 = vmatpush1.msra.mxu0 0.0
    %6366 = vmatprep.subr.mxu0 0.0
    %6367 = vmatpush1.msra.mxu0 0.0
    %6368 = vmatprep.subr.mxu0 0.0
    %6369 = vmatpush1.msra.mxu0 0.0
    %6370 = vmatprep.subr.mxu0 0.0
    %6371 = vmatpush1.msra.mxu0 0.0
    %6372 = vmatprep.subr.mxu0 0.0
    %6373 = vmatpush1.msra.mxu0 0.0
    %6374 = vmatprep.subr.mxu0 0.0
    %6375 = vmatpush1.msra.mxu0 0.0
    %6376 = vmatprep.subr.mxu0 0.0
    %6377 = vmatpush1.msra.mxu0 0.0
    %6378 = vmatprep.subr.mxu0 0.0
    %6379 = vmatpush1.msra.mxu0 0.0
    %v6380 = vand.u32 %v4715, 4294901760
    %6381 = vmatprep.subr.mxu0 %v6380
    %v6382 = vand.u32 %v4714, 4294901760
    %6383 = vmatpush1.msra.mxu0 %v6382
    %v6384 = vand.u32 %v4707, 4294901760
    %6385 = vmatprep.subr.mxu0 %v6384
    %v6386 = vand.u32 %v4706, 4294901760
    %6387 = vmatpush1.msra.mxu0 %v6386
    %v6388 = vand.u32 %v4699, 4294901760
    %6389 = vmatprep.subr.mxu0 %v6388
    %v6390 = vand.u32 %v4698, 4294901760
    %6391 = vmatpush1.msra.mxu0 %v6390
    %v6392 = vand.u32 %v4691, 4294901760
    %6393 = vmatprep.subr.mxu0 %v6392
    %v6394 = vand.u32 %v4690, 4294901760
    %6395 = vmatpush1.msra.mxu0 %v6394
    %v6396 = vand.u32 %v4683, 4294901760
    %6397 = vmatprep.subr.mxu0 %v6396
    %v6398 = vand.u32 %v4682, 4294901760
    %6399 = vmatpush1.msra.mxu0 %v6398
    %v6400 = vand.u32 %v4675, 4294901760
    %6401 = vmatprep.subr.mxu0 %v6400
    %v6402 = vand.u32 %v4674, 4294901760
    %6403 = vmatpush1.msra.mxu0 %v6402
    %v6404 = vand.u32 %v4667, 4294901760
    %6405 = vmatprep.subr.mxu0 %v6404
    %v6406 = vand.u32 %v4666, 4294901760
    %6407 = vmatpush1.msra.mxu0 %v6406
    %v6408 = vand.u32 %v4659, 4294901760
    %6409 = vmatprep.subr.mxu0 %v6408
    %v6410 = vand.u32 %v4658, 4294901760
    %6411 = vmatpush1.msra.mxu0 %v6410
    %6412 = vmatprep.subr.mxu0 0.0
    %6413 = vmatpush2.msra.mxu0 0.0
    %6414 = vmatprep.subr.mxu0 0.0
    %6415 = vmatpush2.msra.mxu0 0.0
    %6416 = vmatprep.subr.mxu0 0.0
    %6417 = vmatpush2.msra.mxu0 0.0
    %6418 = vmatprep.subr.mxu0 0.0
    %6419 = vmatpush2.msra.mxu0 0.0
    %6420 = vmatprep.subr.mxu0 0.0
    %6421 = vmatpush2.msra.mxu0 0.0
    %6422 = vmatprep.subr.mxu0 0.0
    %6423 = vmatpush2.msra.mxu0 0.0
    %6424 = vmatprep.subr.mxu0 0.0
    %6425 = vmatpush2.msra.mxu0 0.0
    %6426 = vmatprep.subr.mxu0 0.0
    %6427 = vmatpush2.msra.mxu0 0.0
    %6428 = vmatprep.subr.mxu0 0.0
    %6429 = vmatpush2.msra.mxu0 0.0
    %6430 = vmatprep.subr.mxu0 0.0
    %6431 = vmatpush2.msra.mxu0 0.0
    %6432 = vmatprep.subr.mxu0 0.0
    %6433 = vmatpush2.msra.mxu0 0.0
    %6434 = vmatprep.subr.mxu0 0.0
    %6435 = vmatpush2.msra.mxu0 0.0
    %6436 = vmatprep.subr.mxu0 0.0
    %6437 = vmatpush2.msra.mxu0 0.0
    %6438 = vmatprep.subr.mxu0 0.0
    %6439 = vmatpush2.msra.mxu0 0.0
    %6440 = vmatprep.subr.mxu0 0.0
    %6441 = vmatpush2.msra.mxu0 0.0
    %6442 = vmatprep.subr.mxu0 0.0
    %6443 = vmatpush2.msra.mxu0 0.0
    %6444 = vmatprep.mubr.f32.mxu0 0.0
    %v6445 = vand.u32 %v4719, 4294901760
    %v6446 = vsub.f32 %v4719, %v6445
    %v6447 = vand.u32 %v6446, 4294901760
    %6448 = vmatmul.mubr.f32.gmra.mxu0 %v6447
    %v6449 = vpop.f32.mrf.mxu0
    %v6450 = vadd.f32 %v6360, %v6449
    %v6451 = vpop.f32.mrf.mxu0
    %v6452 = vadd.f32 %v6362, %v6451
    %6453 = vdwg.mxu0
    %6454 = vmatprep.subr.mxu0 0.0
    %6455 = vmatpush1.msra.mxu0 0.0
    %6456 = vmatprep.subr.mxu0 0.0
    %6457 = vmatpush1.msra.mxu0 0.0
    %6458 = vmatprep.subr.mxu0 0.0
    %6459 = vmatpush1.msra.mxu0 0.0
    %6460 = vmatprep.subr.mxu0 0.0
    %6461 = vmatpush1.msra.mxu0 0.0
    %6462 = vmatprep.subr.mxu0 0.0
    %6463 = vmatpush1.msra.mxu0 0.0
    %6464 = vmatprep.subr.mxu0 0.0
    %6465 = vmatpush1.msra.mxu0 0.0
    %6466 = vmatprep.subr.mxu0 0.0
    %6467 = vmatpush1.msra.mxu0 0.0
    %6468 = vmatprep.subr.mxu0 0.0
    %6469 = vmatpush1.msra.mxu0 0.0
    %v6470 = vand.u32 %v4715, 4294901760
    %v6471 = vsub.f32 %v4715, %v6470
    %v6472 = vand.u32 %v6471, 4294901760
    %6473 = vmatprep.subr.mxu0 %v6472
    %v6474 = vand.u32 %v4714, 4294901760
    %v6475 = vsub.f32 %v4714, %v6474
    %v6476 = vand.u32 %v6475, 4294901760
    %6477 = vmatpush1.msra.mxu0 %v6476
    %v6478 = vand.u32 %v4707, 4294901760
    %v6479 = vsub.f32 %v4707, %v6478
    %v6480 = vand.u32 %v6479, 4294901760
    %6481 = vmatprep.subr.mxu0 %v6480
    %v6482 = vand.u32 %v4706, 4294901760
    %v6483 = vsub.f32 %v4706, %v6482
    %v6484 = vand.u32 %v6483, 4294901760
    %6485 = vmatpush1.msra.mxu0 %v6484
    %v6486 = vand.u32 %v4699, 4294901760
    %v6487 = vsub.f32 %v4699, %v6486
    %v6488 = vand.u32 %v6487, 4294901760
    %6489 = vmatprep.subr.mxu0 %v6488
    %v6490 = vand.u32 %v4698, 4294901760
    %v6491 = vsub.f32 %v4698, %v6490
    %v6492 = vand.u32 %v6491, 4294901760
    %6493 = vmatpush1.msra.mxu0 %v6492
    %v6494 = vand.u32 %v4691, 4294901760
    %v6495 = vsub.f32 %v4691, %v6494
    %v6496 = vand.u32 %v6495, 4294901760
    %6497 = vmatprep.subr.mxu0 %v6496
    %v6498 = vand.u32 %v4690, 4294901760
    %v6499 = vsub.f32 %v4690, %v6498
    %v6500 = vand.u32 %v6499, 4294901760
    %6501 = vmatpush1.msra.mxu0 %v6500
    %v6502 = vand.u32 %v4683, 4294901760
    %v6503 = vsub.f32 %v4683, %v6502
    %v6504 = vand.u32 %v6503, 4294901760
    %6505 = vmatprep.subr.mxu0 %v6504
    %v6506 = vand.u32 %v4682, 4294901760
    %v6507 = vsub.f32 %v4682, %v6506
    %v6508 = vand.u32 %v6507, 4294901760
    %6509 = vmatpush1.msra.mxu0 %v6508
    %v6510 = vand.u32 %v4675, 4294901760
    %v6511 = vsub.f32 %v4675, %v6510
    %v6512 = vand.u32 %v6511, 4294901760
    %6513 = vmatprep.subr.mxu0 %v6512
    %v6514 = vand.u32 %v4674, 4294901760
    %v6515 = vsub.f32 %v4674, %v6514
    %v6516 = vand.u32 %v6515, 4294901760
    %6517 = vmatpush1.msra.mxu0 %v6516
    %v6518 = vand.u32 %v4667, 4294901760
    %v6519 = vsub.f32 %v4667, %v6518
    %v6520 = vand.u32 %v6519, 4294901760
    %6521 = vmatprep.subr.mxu0 %v6520
    %v6522 = vand.u32 %v4666, 4294901760
    %v6523 = vsub.f32 %v4666, %v6522
    %v6524 = vand.u32 %v6523, 4294901760
    %6525 = vmatpush1.msra.mxu0 %v6524
    %v6526 = vand.u32 %v4659, 4294901760
    %v6527 = vsub.f32 %v4659, %v6526
    %v6528 = vand.u32 %v6527, 4294901760
    %6529 = vmatprep.subr.mxu0 %v6528
    %v6530 = vand.u32 %v4658, 4294901760
    %v6531 = vsub.f32 %v4658, %v6530
    %v6532 = vand.u32 %v6531, 4294901760
    %6533 = vmatpush1.msra.mxu0 %v6532
    %6534 = vmatprep.subr.mxu0 0.0
    %6535 = vmatpush2.msra.mxu0 0.0
    %6536 = vmatprep.subr.mxu0 0.0
    %6537 = vmatpush2.msra.mxu0 0.0
    %6538 = vmatprep.subr.mxu0 0.0
    %6539 = vmatpush2.msra.mxu0 0.0
    %6540 = vmatprep.subr.mxu0 0.0
    %6541 = vmatpush2.msra.mxu0 0.0
    %6542 = vmatprep.subr.mxu0 0.0
    %6543 = vmatpush2.msra.mxu0 0.0
    %6544 = vmatprep.subr.mxu0 0.0
    %6545 = vmatpush2.msra.mxu0 0.0
    %6546 = vmatprep.subr.mxu0 0.0
    %6547 = vmatpush2.msra.mxu0 0.0
    %6548 = vmatprep.subr.mxu0 0.0
    %6549 = vmatpush2.msra.mxu0 0.0
    %6550 = vmatprep.subr.mxu0 0.0
    %6551 = vmatpush2.msra.mxu0 0.0
    %6552 = vmatprep.subr.mxu0 0.0
    %6553 = vmatpush2.msra.mxu0 0.0
    %6554 = vmatprep.subr.mxu0 0.0
    %6555 = vmatpush2.msra.mxu0 0.0
    %6556 = vmatprep.subr.mxu0 0.0
    %6557 = vmatpush2.msra.mxu0 0.0
    %6558 = vmatprep.subr.mxu0 0.0
    %6559 = vmatpush2.msra.mxu0 0.0
    %6560 = vmatprep.subr.mxu0 0.0
    %6561 = vmatpush2.msra.mxu0 0.0
    %6562 = vmatprep.subr.mxu0 0.0
    %6563 = vmatpush2.msra.mxu0 0.0
    %6564 = vmatprep.subr.mxu0 0.0
    %6565 = vmatpush2.msra.mxu0 0.0
    %6566 = vmatprep.mubr.f32.mxu0 0.0
    %v6567 = vand.u32 %v4719, 4294901760
    %6568 = vmatmul.mubr.f32.gmra.mxu0 %v6567
    %v6569 = vpop.f32.mrf.mxu0
    %v6570 = vadd.f32 %v6450, %v6569
    %v6571 = vpop.f32.mrf.mxu0
    %v6572 = vadd.f32 %v6452, %v6571
    %6573 = vdwg.mxu0
    %6574 = vmatprep.subr.mxu0 0.0
    %6575 = vmatpush1.msra.mxu0 0.0
    %6576 = vmatprep.subr.mxu0 0.0
    %6577 = vmatpush1.msra.mxu0 0.0
    %6578 = vmatprep.subr.mxu0 0.0
    %6579 = vmatpush1.msra.mxu0 0.0
    %6580 = vmatprep.subr.mxu0 0.0
    %6581 = vmatpush1.msra.mxu0 0.0
    %6582 = vmatprep.subr.mxu0 0.0
    %6583 = vmatpush1.msra.mxu0 0.0
    %6584 = vmatprep.subr.mxu0 0.0
    %6585 = vmatpush1.msra.mxu0 0.0
    %6586 = vmatprep.subr.mxu0 0.0
    %6587 = vmatpush1.msra.mxu0 0.0
    %6588 = vmatprep.subr.mxu0 0.0
    %6589 = vmatpush1.msra.mxu0 0.0
    %v6590 = vand.u32 %v4715, 4294901760
    %6591 = vmatprep.subr.mxu0 %v6590
    %v6592 = vand.u32 %v4714, 4294901760
    %6593 = vmatpush1.msra.mxu0 %v6592
    %v6594 = vand.u32 %v4707, 4294901760
    %6595 = vmatprep.subr.mxu0 %v6594
    %v6596 = vand.u32 %v4706, 4294901760
    %6597 = vmatpush1.msra.mxu0 %v6596
    %v6598 = vand.u32 %v4699, 4294901760
    %6599 = vmatprep.subr.mxu0 %v6598
    %v6600 = vand.u32 %v4698, 4294901760
    %6601 = vmatpush1.msra.mxu0 %v6600
    %v6602 = vand.u32 %v4691, 4294901760
    %6603 = vmatprep.subr.mxu0 %v6602
    %v6604 = vand.u32 %v4690, 4294901760
    %6605 = vmatpush1.msra.mxu0 %v6604
    %v6606 = vand.u32 %v4683, 4294901760
    %6607 = vmatprep.subr.mxu0 %v6606
    %v6608 = vand.u32 %v4682, 4294901760
    %6609 = vmatpush1.msra.mxu0 %v6608
    %v6610 = vand.u32 %v4675, 4294901760
    %6611 = vmatprep.subr.mxu0 %v6610
    %v6612 = vand.u32 %v4674, 4294901760
    %6613 = vmatpush1.msra.mxu0 %v6612
    %v6614 = vand.u32 %v4667, 4294901760
    %6615 = vmatprep.subr.mxu0 %v6614
    %v6616 = vand.u32 %v4666, 4294901760
    %6617 = vmatpush1.msra.mxu0 %v6616
    %v6618 = vand.u32 %v4659, 4294901760
    %6619 = vmatprep.subr.mxu0 %v6618
    %v6620 = vand.u32 %v4658, 4294901760
    %6621 = vmatpush1.msra.mxu0 %v6620
    %6622 = vmatprep.subr.mxu0 0.0
    %6623 = vmatpush2.msra.mxu0 0.0
    %6624 = vmatprep.subr.mxu0 0.0
    %6625 = vmatpush2.msra.mxu0 0.0
    %6626 = vmatprep.subr.mxu0 0.0
    %6627 = vmatpush2.msra.mxu0 0.0
    %6628 = vmatprep.subr.mxu0 0.0
    %6629 = vmatpush2.msra.mxu0 0.0
    %6630 = vmatprep.subr.mxu0 0.0
    %6631 = vmatpush2.msra.mxu0 0.0
    %6632 = vmatprep.subr.mxu0 0.0
    %6633 = vmatpush2.msra.mxu0 0.0
    %6634 = vmatprep.subr.mxu0 0.0
    %6635 = vmatpush2.msra.mxu0 0.0
    %6636 = vmatprep.subr.mxu0 0.0
    %6637 = vmatpush2.msra.mxu0 0.0
    %6638 = vmatprep.subr.mxu0 0.0
    %6639 = vmatpush2.msra.mxu0 0.0
    %6640 = vmatprep.subr.mxu0 0.0
    %6641 = vmatpush2.msra.mxu0 0.0
    %6642 = vmatprep.subr.mxu0 0.0
    %6643 = vmatpush2.msra.mxu0 0.0
    %6644 = vmatprep.subr.mxu0 0.0
    %6645 = vmatpush2.msra.mxu0 0.0
    %6646 = vmatprep.subr.mxu0 0.0
    %6647 = vmatpush2.msra.mxu0 0.0
    %6648 = vmatprep.subr.mxu0 0.0
    %6649 = vmatpush2.msra.mxu0 0.0
    %6650 = vmatprep.subr.mxu0 0.0
    %6651 = vmatpush2.msra.mxu0 0.0
    %6652 = vmatprep.subr.mxu0 0.0
    %6653 = vmatpush2.msra.mxu0 0.0
    %6654 = vmatprep.mubr.f32.mxu0 0.0
    %v6655 = vand.u32 %v4719, 4294901760
    %6656 = vmatmul.mubr.f32.gmra.mxu0 %v6655
    %v6657 = vpop.f32.mrf.mxu0
    %v6658 = vadd.f32 %v6570, %v6657
    %v6659 = vpop.f32.mrf.mxu0
    %v6660 = vadd.f32 %v6572, %v6659
    %6661 = vdwg.mxu0
    %6662 = vmatprep.subr.mxu0 0.0
    %6663 = vmatpush1.msra.mxu0 0.0
    %6664 = vmatprep.subr.mxu0 0.0
    %6665 = vmatpush1.msra.mxu0 0.0
    %6666 = vmatprep.subr.mxu0 0.0
    %6667 = vmatpush1.msra.mxu0 0.0
    %6668 = vmatprep.subr.mxu0 0.0
    %6669 = vmatpush1.msra.mxu0 0.0
    %6670 = vmatprep.subr.mxu0 0.0
    %6671 = vmatpush1.msra.mxu0 0.0
    %6672 = vmatprep.subr.mxu0 0.0
    %6673 = vmatpush1.msra.mxu0 0.0
    %6674 = vmatprep.subr.mxu0 0.0
    %6675 = vmatpush1.msra.mxu0 0.0
    %6676 = vmatprep.subr.mxu0 0.0
    %6677 = vmatpush1.msra.mxu0 0.0
    %v6678 = vand.u32 %v4717, 4294901760
    %6679 = vmatprep.subr.mxu0 %v6678
    %v6680 = vand.u32 %v4716, 4294901760
    %6681 = vmatpush1.msra.mxu0 %v6680
    %v6682 = vand.u32 %v4709, 4294901760
    %6683 = vmatprep.subr.mxu0 %v6682
    %v6684 = vand.u32 %v4708, 4294901760
    %6685 = vmatpush1.msra.mxu0 %v6684
    %v6686 = vand.u32 %v4701, 4294901760
    %6687 = vmatprep.subr.mxu0 %v6686
    %v6688 = vand.u32 %v4700, 4294901760
    %6689 = vmatpush1.msra.mxu0 %v6688
    %v6690 = vand.u32 %v4693, 4294901760
    %6691 = vmatprep.subr.mxu0 %v6690
    %v6692 = vand.u32 %v4692, 4294901760
    %6693 = vmatpush1.msra.mxu0 %v6692
    %v6694 = vand.u32 %v4685, 4294901760
    %6695 = vmatprep.subr.mxu0 %v6694
    %v6696 = vand.u32 %v4684, 4294901760
    %6697 = vmatpush1.msra.mxu0 %v6696
    %v6698 = vand.u32 %v4677, 4294901760
    %6699 = vmatprep.subr.mxu0 %v6698
    %v6700 = vand.u32 %v4676, 4294901760
    %6701 = vmatpush1.msra.mxu0 %v6700
    %v6702 = vand.u32 %v4669, 4294901760
    %6703 = vmatprep.subr.mxu0 %v6702
    %v6704 = vand.u32 %v4668, 4294901760
    %6705 = vmatpush1.msra.mxu0 %v6704
    %v6706 = vand.u32 %v4661, 4294901760
    %6707 = vmatprep.subr.mxu0 %v6706
    %v6708 = vand.u32 %v4660, 4294901760
    %6709 = vmatpush1.msra.mxu0 %v6708
    %6710 = vmatprep.subr.mxu0 0.0
    %6711 = vmatpush2.msra.mxu0 0.0
    %6712 = vmatprep.subr.mxu0 0.0
    %6713 = vmatpush2.msra.mxu0 0.0
    %6714 = vmatprep.subr.mxu0 0.0
    %6715 = vmatpush2.msra.mxu0 0.0
    %6716 = vmatprep.subr.mxu0 0.0
    %6717 = vmatpush2.msra.mxu0 0.0
    %6718 = vmatprep.subr.mxu0 0.0
    %6719 = vmatpush2.msra.mxu0 0.0
    %6720 = vmatprep.subr.mxu0 0.0
    %6721 = vmatpush2.msra.mxu0 0.0
    %6722 = vmatprep.subr.mxu0 0.0
    %6723 = vmatpush2.msra.mxu0 0.0
    %6724 = vmatprep.subr.mxu0 0.0
    %6725 = vmatpush2.msra.mxu0 0.0
    %6726 = vmatprep.subr.mxu0 0.0
    %6727 = vmatpush2.msra.mxu0 0.0
    %6728 = vmatprep.subr.mxu0 0.0
    %6729 = vmatpush2.msra.mxu0 0.0
    %6730 = vmatprep.subr.mxu0 0.0
    %6731 = vmatpush2.msra.mxu0 0.0
    %6732 = vmatprep.subr.mxu0 0.0
    %6733 = vmatpush2.msra.mxu0 0.0
    %6734 = vmatprep.subr.mxu0 0.0
    %6735 = vmatpush2.msra.mxu0 0.0
    %6736 = vmatprep.subr.mxu0 0.0
    %6737 = vmatpush2.msra.mxu0 0.0
    %6738 = vmatprep.subr.mxu0 0.0
    %6739 = vmatpush2.msra.mxu0 0.0
    %6740 = vmatprep.subr.mxu0 0.0
    %6741 = vmatpush2.msra.mxu0 0.0
    %6742 = vmatprep.mubr.f32.mxu0 0.0
    %v6743 = vand.u32 %v4719, 4294901760
    %v6744 = vsub.f32 %v4719, %v6743
    %v6745 = vand.u32 %v6744, 4294901760
    %v6746 = vsub.f32 %v6744, %v6745
    %v6747 = vand.u32 %v6746, 4294901760
    %6748 = vmatmul.mubr.f32.gmra.mxu0 %v6747
    %v6749 = vpop.f32.mrf.mxu0
    %v6750 = vadd.f32 0.0, %v6749
    %v6751 = vpop.f32.mrf.mxu0
    %v6752 = vadd.f32 0.0, %v6751
    %6753 = vdwg.mxu0
    %6754 = vmatprep.subr.mxu0 0.0
    %6755 = vmatpush1.msra.mxu0 0.0
    %6756 = vmatprep.subr.mxu0 0.0
    %6757 = vmatpush1.msra.mxu0 0.0
    %6758 = vmatprep.subr.mxu0 0.0
    %6759 = vmatpush1.msra.mxu0 0.0
    %6760 = vmatprep.subr.mxu0 0.0
    %6761 = vmatpush1.msra.mxu0 0.0
    %6762 = vmatprep.subr.mxu0 0.0
    %6763 = vmatpush1.msra.mxu0 0.0
    %6764 = vmatprep.subr.mxu0 0.0
    %6765 = vmatpush1.msra.mxu0 0.0
    %6766 = vmatprep.subr.mxu0 0.0
    %6767 = vmatpush1.msra.mxu0 0.0
    %6768 = vmatprep.subr.mxu0 0.0
    %6769 = vmatpush1.msra.mxu0 0.0
    %v6770 = vand.u32 %v4717, 4294901760
    %v6771 = vsub.f32 %v4717, %v6770
    %v6772 = vand.u32 %v6771, 4294901760
    %v6773 = vsub.f32 %v6771, %v6772
    %v6774 = vand.u32 %v6773, 4294901760
    %6775 = vmatprep.subr.mxu0 %v6774
    %v6776 = vand.u32 %v4716, 4294901760
    %v6777 = vsub.f32 %v4716, %v6776
    %v6778 = vand.u32 %v6777, 4294901760
    %v6779 = vsub.f32 %v6777, %v6778
    %v6780 = vand.u32 %v6779, 4294901760
    %6781 = vmatpush1.msra.mxu0 %v6780
    %v6782 = vand.u32 %v4709, 4294901760
    %v6783 = vsub.f32 %v4709, %v6782
    %v6784 = vand.u32 %v6783, 4294901760
    %v6785 = vsub.f32 %v6783, %v6784
    %v6786 = vand.u32 %v6785, 4294901760
    %6787 = vmatprep.subr.mxu0 %v6786
    %v6788 = vand.u32 %v4708, 4294901760
    %v6789 = vsub.f32 %v4708, %v6788
    %v6790 = vand.u32 %v6789, 4294901760
    %v6791 = vsub.f32 %v6789, %v6790
    %v6792 = vand.u32 %v6791, 4294901760
    %6793 = vmatpush1.msra.mxu0 %v6792
    %v6794 = vand.u32 %v4701, 4294901760
    %v6795 = vsub.f32 %v4701, %v6794
    %v6796 = vand.u32 %v6795, 4294901760
    %v6797 = vsub.f32 %v6795, %v6796
    %v6798 = vand.u32 %v6797, 4294901760
    %6799 = vmatprep.subr.mxu0 %v6798
    %v6800 = vand.u32 %v4700, 4294901760
    %v6801 = vsub.f32 %v4700, %v6800
    %v6802 = vand.u32 %v6801, 4294901760
    %v6803 = vsub.f32 %v6801, %v6802
    %v6804 = vand.u32 %v6803, 4294901760
    %6805 = vmatpush1.msra.mxu0 %v6804
    %v6806 = vand.u32 %v4693, 4294901760
    %v6807 = vsub.f32 %v4693, %v6806
    %v6808 = vand.u32 %v6807, 4294901760
    %v6809 = vsub.f32 %v6807, %v6808
    %v6810 = vand.u32 %v6809, 4294901760
    %6811 = vmatprep.subr.mxu0 %v6810
    %v6812 = vand.u32 %v4692, 4294901760
    %v6813 = vsub.f32 %v4692, %v6812
    %v6814 = vand.u32 %v6813, 4294901760
    %v6815 = vsub.f32 %v6813, %v6814
    %v6816 = vand.u32 %v6815, 4294901760
    %6817 = vmatpush1.msra.mxu0 %v6816
    %v6818 = vand.u32 %v4685, 4294901760
    %v6819 = vsub.f32 %v4685, %v6818
    %v6820 = vand.u32 %v6819, 4294901760
    %v6821 = vsub.f32 %v6819, %v6820
    %v6822 = vand.u32 %v6821, 4294901760
    %6823 = vmatprep.subr.mxu0 %v6822
    %v6824 = vand.u32 %v4684, 4294901760
    %v6825 = vsub.f32 %v4684, %v6824
    %v6826 = vand.u32 %v6825, 4294901760
    %v6827 = vsub.f32 %v6825, %v6826
    %v6828 = vand.u32 %v6827, 4294901760
    %6829 = vmatpush1.msra.mxu0 %v6828
    %v6830 = vand.u32 %v4677, 4294901760
    %v6831 = vsub.f32 %v4677, %v6830
    %v6832 = vand.u32 %v6831, 4294901760
    %v6833 = vsub.f32 %v6831, %v6832
    %v6834 = vand.u32 %v6833, 4294901760
    %6835 = vmatprep.subr.mxu0 %v6834
    %v6836 = vand.u32 %v4676, 4294901760
    %v6837 = vsub.f32 %v4676, %v6836
    %v6838 = vand.u32 %v6837, 4294901760
    %v6839 = vsub.f32 %v6837, %v6838
    %v6840 = vand.u32 %v6839, 4294901760
    %6841 = vmatpush1.msra.mxu0 %v6840
    %v6842 = vand.u32 %v4669, 4294901760
    %v6843 = vsub.f32 %v4669, %v6842
    %v6844 = vand.u32 %v6843, 4294901760
    %v6845 = vsub.f32 %v6843, %v6844
    %v6846 = vand.u32 %v6845, 4294901760
    %6847 = vmatprep.subr.mxu0 %v6846
    %v6848 = vand.u32 %v4668, 4294901760
    %v6849 = vsub.f32 %v4668, %v6848
    %v6850 = vand.u32 %v6849, 4294901760
    %v6851 = vsub.f32 %v6849, %v6850
    %v6852 = vand.u32 %v6851, 4294901760
    %6853 = vmatpush1.msra.mxu0 %v6852
    %v6854 = vand.u32 %v4661, 4294901760
    %v6855 = vsub.f32 %v4661, %v6854
    %v6856 = vand.u32 %v6855, 4294901760
    %v6857 = vsub.f32 %v6855, %v6856
    %v6858 = vand.u32 %v6857, 4294901760
    %6859 = vmatprep.subr.mxu0 %v6858
    %v6860 = vand.u32 %v4660, 4294901760
    %v6861 = vsub.f32 %v4660, %v6860
    %v6862 = vand.u32 %v6861, 4294901760
    %v6863 = vsub.f32 %v6861, %v6862
    %v6864 = vand.u32 %v6863, 4294901760
    %6865 = vmatpush1.msra.mxu0 %v6864
    %6866 = vmatprep.subr.mxu0 0.0
    %6867 = vmatpush2.msra.mxu0 0.0
    %6868 = vmatprep.subr.mxu0 0.0
    %6869 = vmatpush2.msra.mxu0 0.0
    %6870 = vmatprep.subr.mxu0 0.0
    %6871 = vmatpush2.msra.mxu0 0.0
    %6872 = vmatprep.subr.mxu0 0.0
    %6873 = vmatpush2.msra.mxu0 0.0
    %6874 = vmatprep.subr.mxu0 0.0
    %6875 = vmatpush2.msra.mxu0 0.0
    %6876 = vmatprep.subr.mxu0 0.0
    %6877 = vmatpush2.msra.mxu0 0.0
    %6878 = vmatprep.subr.mxu0 0.0
    %6879 = vmatpush2.msra.mxu0 0.0
    %6880 = vmatprep.subr.mxu0 0.0
    %6881 = vmatpush2.msra.mxu0 0.0
    %6882 = vmatprep.subr.mxu0 0.0
    %6883 = vmatpush2.msra.mxu0 0.0
    %6884 = vmatprep.subr.mxu0 0.0
    %6885 = vmatpush2.msra.mxu0 0.0
    %6886 = vmatprep.subr.mxu0 0.0
    %6887 = vmatpush2.msra.mxu0 0.0
    %6888 = vmatprep.subr.mxu0 0.0
    %6889 = vmatpush2.msra.mxu0 0.0
    %6890 = vmatprep.subr.mxu0 0.0
    %6891 = vmatpush2.msra.mxu0 0.0
    %6892 = vmatprep.subr.mxu0 0.0
    %6893 = vmatpush2.msra.mxu0 0.0
    %6894 = vmatprep.subr.mxu0 0.0
    %6895 = vmatpush2.msra.mxu0 0.0
    %6896 = vmatprep.subr.mxu0 0.0
    %6897 = vmatpush2.msra.mxu0 0.0
    %6898 = vmatprep.mubr.f32.mxu0 0.0
    %v6899 = vand.u32 %v4719, 4294901760
    %6900 = vmatmul.mubr.f32.gmra.mxu0 %v6899
    %v6901 = vpop.f32.mrf.mxu0
    %v6902 = vadd.f32 %v6750, %v6901
    %v6903 = vpop.f32.mrf.mxu0
    %v6904 = vadd.f32 %v6752, %v6903
    %6905 = vdwg.mxu0
    %6906 = vmatprep.subr.mxu0 0.0
    %6907 = vmatpush1.msra.mxu0 0.0
    %6908 = vmatprep.subr.mxu0 0.0
    %6909 = vmatpush1.msra.mxu0 0.0
    %6910 = vmatprep.subr.mxu0 0.0
    %6911 = vmatpush1.msra.mxu0 0.0
    %6912 = vmatprep.subr.mxu0 0.0
    %6913 = vmatpush1.msra.mxu0 0.0
    %6914 = vmatprep.subr.mxu0 0.0
    %6915 = vmatpush1.msra.mxu0 0.0
    %6916 = vmatprep.subr.mxu0 0.0
    %6917 = vmatpush1.msra.mxu0 0.0
    %6918 = vmatprep.subr.mxu0 0.0
    %6919 = vmatpush1.msra.mxu0 0.0
    %6920 = vmatprep.subr.mxu0 0.0
    %6921 = vmatpush1.msra.mxu0 0.0
    %v6922 = vand.u32 %v4717, 4294901760
    %v6923 = vsub.f32 %v4717, %v6922
    %6924 = vmatprep.subr.mxu0 %v6923
    %v6925 = vand.u32 %v4716, 4294901760
    %v6926 = vsub.f32 %v4716, %v6925
    %6927 = vmatpush1.msra.mxu0 %v6926
    %v6928 = vand.u32 %v4709, 4294901760
    %v6929 = vsub.f32 %v4709, %v6928
    %6930 = vmatprep.subr.mxu0 %v6929
    %v6931 = vand.u32 %v4708, 4294901760
    %v6932 = vsub.f32 %v4708, %v6931
    %6933 = vmatpush1.msra.mxu0 %v6932
    %v6934 = vand.u32 %v4701, 4294901760
    %v6935 = vsub.f32 %v4701, %v6934
    %6936 = vmatprep.subr.mxu0 %v6935
    %v6937 = vand.u32 %v4700, 4294901760
    %v6938 = vsub.f32 %v4700, %v6937
    %6939 = vmatpush1.msra.mxu0 %v6938
    %v6940 = vand.u32 %v4693, 4294901760
    %v6941 = vsub.f32 %v4693, %v6940
    %6942 = vmatprep.subr.mxu0 %v6941
    %v6943 = vand.u32 %v4692, 4294901760
    %v6944 = vsub.f32 %v4692, %v6943
    %6945 = vmatpush1.msra.mxu0 %v6944
    %v6946 = vand.u32 %v4685, 4294901760
    %v6947 = vsub.f32 %v4685, %v6946
    %6948 = vmatprep.subr.mxu0 %v6947
    %v6949 = vand.u32 %v4684, 4294901760
    %v6950 = vsub.f32 %v4684, %v6949
    %6951 = vmatpush1.msra.mxu0 %v6950
    %v6952 = vand.u32 %v4677, 4294901760
    %v6953 = vsub.f32 %v4677, %v6952
    %6954 = vmatprep.subr.mxu0 %v6953
    %v6955 = vand.u32 %v4676, 4294901760
    %v6956 = vsub.f32 %v4676, %v6955
    %6957 = vmatpush1.msra.mxu0 %v6956
    %v6958 = vand.u32 %v4669, 4294901760
    %v6959 = vsub.f32 %v4669, %v6958
    %6960 = vmatprep.subr.mxu0 %v6959
    %v6961 = vand.u32 %v4668, 4294901760
    %v6962 = vsub.f32 %v4668, %v6961
    %6963 = vmatpush1.msra.mxu0 %v6962
    %v6964 = vand.u32 %v4661, 4294901760
    %v6965 = vsub.f32 %v4661, %v6964
    %6966 = vmatprep.subr.mxu0 %v6965
    %v6967 = vand.u32 %v4660, 4294901760
    %v6968 = vsub.f32 %v4660, %v6967
    %6969 = vmatpush1.msra.mxu0 %v6968
    %6970 = vmatprep.subr.mxu0 0.0
    %6971 = vmatpush2.msra.mxu0 0.0
    %6972 = vmatprep.subr.mxu0 0.0
    %6973 = vmatpush2.msra.mxu0 0.0
    %6974 = vmatprep.subr.mxu0 0.0
    %6975 = vmatpush2.msra.mxu0 0.0
    %6976 = vmatprep.subr.mxu0 0.0
    %6977 = vmatpush2.msra.mxu0 0.0
    %6978 = vmatprep.subr.mxu0 0.0
    %6979 = vmatpush2.msra.mxu0 0.0
    %6980 = vmatprep.subr.mxu0 0.0
    %6981 = vmatpush2.msra.mxu0 0.0
    %6982 = vmatprep.subr.mxu0 0.0
    %6983 = vmatpush2.msra.mxu0 0.0
    %6984 = vmatprep.subr.mxu0 0.0
    %6985 = vmatpush2.msra.mxu0 0.0
    %6986 = vmatprep.subr.mxu0 0.0
    %6987 = vmatpush2.msra.mxu0 0.0
    %6988 = vmatprep.subr.mxu0 0.0
    %6989 = vmatpush2.msra.mxu0 0.0
    %6990 = vmatprep.subr.mxu0 0.0
    %6991 = vmatpush2.msra.mxu0 0.0
    %6992 = vmatprep.subr.mxu0 0.0
    %6993 = vmatpush2.msra.mxu0 0.0
    %6994 = vmatprep.subr.mxu0 0.0
    %6995 = vmatpush2.msra.mxu0 0.0
    %6996 = vmatprep.subr.mxu0 0.0
    %6997 = vmatpush2.msra.mxu0 0.0
    %6998 = vmatprep.subr.mxu0 0.0
    %6999 = vmatpush2.msra.mxu0 0.0
    %7000 = vmatprep.subr.mxu0 0.0
    %7001 = vmatpush2.msra.mxu0 0.0
    %7002 = vmatprep.mubr.f32.mxu0 0.0
    %v7003 = vand.u32 %v4719, 4294901760
    %v7004 = vsub.f32 %v4719, %v7003
    %7005 = vmatmul.mubr.f32.gmra.mxu0 %v7004
    %v7006 = vpop.f32.mrf.mxu0
    %v7007 = vadd.f32 %v6902, %v7006
    %v7008 = vpop.f32.mrf.mxu0
    %v7009 = vadd.f32 %v6904, %v7008
    %7010 = vdwg.mxu0
    %7011 = vmatprep.subr.mxu0 0.0
    %7012 = vmatpush1.msra.mxu0 0.0
    %7013 = vmatprep.subr.mxu0 0.0
    %7014 = vmatpush1.msra.mxu0 0.0
    %7015 = vmatprep.subr.mxu0 0.0
    %7016 = vmatpush1.msra.mxu0 0.0
    %7017 = vmatprep.subr.mxu0 0.0
    %7018 = vmatpush1.msra.mxu0 0.0
    %7019 = vmatprep.subr.mxu0 0.0
    %7020 = vmatpush1.msra.mxu0 0.0
    %7021 = vmatprep.subr.mxu0 0.0
    %7022 = vmatpush1.msra.mxu0 0.0
    %7023 = vmatprep.subr.mxu0 0.0
    %7024 = vmatpush1.msra.mxu0 0.0
    %7025 = vmatprep.subr.mxu0 0.0
    %7026 = vmatpush1.msra.mxu0 0.0
    %v7027 = vand.u32 %v4717, 4294901760
    %7028 = vmatprep.subr.mxu0 %v7027
    %v7029 = vand.u32 %v4716, 4294901760
    %7030 = vmatpush1.msra.mxu0 %v7029
    %v7031 = vand.u32 %v4709, 4294901760
    %7032 = vmatprep.subr.mxu0 %v7031
    %v7033 = vand.u32 %v4708, 4294901760
    %7034 = vmatpush1.msra.mxu0 %v7033
    %v7035 = vand.u32 %v4701, 4294901760
    %7036 = vmatprep.subr.mxu0 %v7035
    %v7037 = vand.u32 %v4700, 4294901760
    %7038 = vmatpush1.msra.mxu0 %v7037
    %v7039 = vand.u32 %v4693, 4294901760
    %7040 = vmatprep.subr.mxu0 %v7039
    %v7041 = vand.u32 %v4692, 4294901760
    %7042 = vmatpush1.msra.mxu0 %v7041
    %v7043 = vand.u32 %v4685, 4294901760
    %7044 = vmatprep.subr.mxu0 %v7043
    %v7045 = vand.u32 %v4684, 4294901760
    %7046 = vmatpush1.msra.mxu0 %v7045
    %v7047 = vand.u32 %v4677, 4294901760
    %7048 = vmatprep.subr.mxu0 %v7047
    %v7049 = vand.u32 %v4676, 4294901760
    %7050 = vmatpush1.msra.mxu0 %v7049
    %v7051 = vand.u32 %v4669, 4294901760
    %7052 = vmatprep.subr.mxu0 %v7051
    %v7053 = vand.u32 %v4668, 4294901760
    %7054 = vmatpush1.msra.mxu0 %v7053
    %v7055 = vand.u32 %v4661, 4294901760
    %7056 = vmatprep.subr.mxu0 %v7055
    %v7057 = vand.u32 %v4660, 4294901760
    %7058 = vmatpush1.msra.mxu0 %v7057
    %7059 = vmatprep.subr.mxu0 0.0
    %7060 = vmatpush2.msra.mxu0 0.0
    %7061 = vmatprep.subr.mxu0 0.0
    %7062 = vmatpush2.msra.mxu0 0.0
    %7063 = vmatprep.subr.mxu0 0.0
    %7064 = vmatpush2.msra.mxu0 0.0
    %7065 = vmatprep.subr.mxu0 0.0
    %7066 = vmatpush2.msra.mxu0 0.0
    %7067 = vmatprep.subr.mxu0 0.0
    %7068 = vmatpush2.msra.mxu0 0.0
    %7069 = vmatprep.subr.mxu0 0.0
    %7070 = vmatpush2.msra.mxu0 0.0
    %7071 = vmatprep.subr.mxu0 0.0
    %7072 = vmatpush2.msra.mxu0 0.0
    %7073 = vmatprep.subr.mxu0 0.0
    %7074 = vmatpush2.msra.mxu0 0.0
    %7075 = vmatprep.subr.mxu0 0.0
    %7076 = vmatpush2.msra.mxu0 0.0
    %7077 = vmatprep.subr.mxu0 0.0
    %7078 = vmatpush2.msra.mxu0 0.0
    %7079 = vmatprep.subr.mxu0 0.0
    %7080 = vmatpush2.msra.mxu0 0.0
    %7081 = vmatprep.subr.mxu0 0.0
    %7082 = vmatpush2.msra.mxu0 0.0
    %7083 = vmatprep.subr.mxu0 0.0
    %7084 = vmatpush2.msra.mxu0 0.0
    %7085 = vmatprep.subr.mxu0 0.0
    %7086 = vmatpush2.msra.mxu0 0.0
    %7087 = vmatprep.subr.mxu0 0.0
    %7088 = vmatpush2.msra.mxu0 0.0
    %7089 = vmatprep.subr.mxu0 0.0
    %7090 = vmatpush2.msra.mxu0 0.0
    %7091 = vmatprep.mubr.f32.mxu0 0.0
    %v7092 = vand.u32 %v4719, 4294901760
    %v7093 = vsub.f32 %v4719, %v7092
    %v7094 = vand.u32 %v7093, 4294901760
    %7095 = vmatmul.mubr.f32.gmra.mxu0 %v7094
    %v7096 = vpop.f32.mrf.mxu0
    %v7097 = vadd.f32 %v7007, %v7096
    %v7098 = vpop.f32.mrf.mxu0
    %v7099 = vadd.f32 %v7009, %v7098
    %7100 = vdwg.mxu0
    %7101 = vmatprep.subr.mxu0 0.0
    %7102 = vmatpush1.msra.mxu0 0.0
    %7103 = vmatprep.subr.mxu0 0.0
    %7104 = vmatpush1.msra.mxu0 0.0
    %7105 = vmatprep.subr.mxu0 0.0
    %7106 = vmatpush1.msra.mxu0 0.0
    %7107 = vmatprep.subr.mxu0 0.0
    %7108 = vmatpush1.msra.mxu0 0.0
    %7109 = vmatprep.subr.mxu0 0.0
    %7110 = vmatpush1.msra.mxu0 0.0
    %7111 = vmatprep.subr.mxu0 0.0
    %7112 = vmatpush1.msra.mxu0 0.0
    %7113 = vmatprep.subr.mxu0 0.0
    %7114 = vmatpush1.msra.mxu0 0.0
    %7115 = vmatprep.subr.mxu0 0.0
    %7116 = vmatpush1.msra.mxu0 0.0
    %v7117 = vand.u32 %v4717, 4294901760
    %v7118 = vsub.f32 %v4717, %v7117
    %v7119 = vand.u32 %v7118, 4294901760
    %7120 = vmatprep.subr.mxu0 %v7119
    %v7121 = vand.u32 %v4716, 4294901760
    %v7122 = vsub.f32 %v4716, %v7121
    %v7123 = vand.u32 %v7122, 4294901760
    %7124 = vmatpush1.msra.mxu0 %v7123
    %v7125 = vand.u32 %v4709, 4294901760
    %v7126 = vsub.f32 %v4709, %v7125
    %v7127 = vand.u32 %v7126, 4294901760
    %7128 = vmatprep.subr.mxu0 %v7127
    %v7129 = vand.u32 %v4708, 4294901760
    %v7130 = vsub.f32 %v4708, %v7129
    %v7131 = vand.u32 %v7130, 4294901760
    %7132 = vmatpush1.msra.mxu0 %v7131
    %v7133 = vand.u32 %v4701, 4294901760
    %v7134 = vsub.f32 %v4701, %v7133
    %v7135 = vand.u32 %v7134, 4294901760
    %7136 = vmatprep.subr.mxu0 %v7135
    %v7137 = vand.u32 %v4700, 4294901760
    %v7138 = vsub.f32 %v4700, %v7137
    %v7139 = vand.u32 %v7138, 4294901760
    %7140 = vmatpush1.msra.mxu0 %v7139
    %v7141 = vand.u32 %v4693, 4294901760
    %v7142 = vsub.f32 %v4693, %v7141
    %v7143 = vand.u32 %v7142, 4294901760
    %7144 = vmatprep.subr.mxu0 %v7143
    %v7145 = vand.u32 %v4692, 4294901760
    %v7146 = vsub.f32 %v4692, %v7145
    %v7147 = vand.u32 %v7146, 4294901760
    %7148 = vmatpush1.msra.mxu0 %v7147
    %v7149 = vand.u32 %v4685, 4294901760
    %v7150 = vsub.f32 %v4685, %v7149
    %v7151 = vand.u32 %v7150, 4294901760
    %7152 = vmatprep.subr.mxu0 %v7151
    %v7153 = vand.u32 %v4684, 4294901760
    %v7154 = vsub.f32 %v4684, %v7153
    %v7155 = vand.u32 %v7154, 4294901760
    %7156 = vmatpush1.msra.mxu0 %v7155
    %v7157 = vand.u32 %v4677, 4294901760
    %v7158 = vsub.f32 %v4677, %v7157
    %v7159 = vand.u32 %v7158, 4294901760
    %7160 = vmatprep.subr.mxu0 %v7159
    %v7161 = vand.u32 %v4676, 4294901760
    %v7162 = vsub.f32 %v4676, %v7161
    %v7163 = vand.u32 %v7162, 4294901760
    %7164 = vmatpush1.msra.mxu0 %v7163
    %v7165 = vand.u32 %v4669, 4294901760
    %v7166 = vsub.f32 %v4669, %v7165
    %v7167 = vand.u32 %v7166, 4294901760
    %7168 = vmatprep.subr.mxu0 %v7167
    %v7169 = vand.u32 %v4668, 4294901760
    %v7170 = vsub.f32 %v4668, %v7169
    %v7171 = vand.u32 %v7170, 4294901760
    %7172 = vmatpush1.msra.mxu0 %v7171
    %v7173 = vand.u32 %v4661, 4294901760
    %v7174 = vsub.f32 %v4661, %v7173
    %v7175 = vand.u32 %v7174, 4294901760
    %7176 = vmatprep.subr.mxu0 %v7175
    %v7177 = vand.u32 %v4660, 4294901760
    %v7178 = vsub.f32 %v4660, %v7177
    %v7179 = vand.u32 %v7178, 4294901760
    %7180 = vmatpush1.msra.mxu0 %v7179
    %7181 = vmatprep.subr.mxu0 0.0
    %7182 = vmatpush2.msra.mxu0 0.0
    %7183 = vmatprep.subr.mxu0 0.0
    %7184 = vmatpush2.msra.mxu0 0.0
    %7185 = vmatprep.subr.mxu0 0.0
    %7186 = vmatpush2.msra.mxu0 0.0
    %7187 = vmatprep.subr.mxu0 0.0
    %7188 = vmatpush2.msra.mxu0 0.0
    %7189 = vmatprep.subr.mxu0 0.0
    %7190 = vmatpush2.msra.mxu0 0.0
    %7191 = vmatprep.subr.mxu0 0.0
    %7192 = vmatpush2.msra.mxu0 0.0
    %7193 = vmatprep.subr.mxu0 0.0
    %7194 = vmatpush2.msra.mxu0 0.0
    %7195 = vmatprep.subr.mxu0 0.0
    %7196 = vmatpush2.msra.mxu0 0.0
    %7197 = vmatprep.subr.mxu0 0.0
    %7198 = vmatpush2.msra.mxu0 0.0
    %7199 = vmatprep.subr.mxu0 0.0
    %7200 = vmatpush2.msra.mxu0 0.0
    %7201 = vmatprep.subr.mxu0 0.0
    %7202 = vmatpush2.msra.mxu0 0.0
    %7203 = vmatprep.subr.mxu0 0.0
    %7204 = vmatpush2.msra.mxu0 0.0
    %7205 = vmatprep.subr.mxu0 0.0
    %7206 = vmatpush2.msra.mxu0 0.0
    %7207 = vmatprep.subr.mxu0 0.0
    %7208 = vmatpush2.msra.mxu0 0.0
    %7209 = vmatprep.subr.mxu0 0.0
    %7210 = vmatpush2.msra.mxu0 0.0
    %7211 = vmatprep.subr.mxu0 0.0
    %7212 = vmatpush2.msra.mxu0 0.0
    %7213 = vmatprep.mubr.f32.mxu0 0.0
    %v7214 = vand.u32 %v4719, 4294901760
    %7215 = vmatmul.mubr.f32.gmra.mxu0 %v7214
    %v7216 = vpop.f32.mrf.mxu0
    %v7217 = vadd.f32 %v7097, %v7216
    %v7218 = vpop.f32.mrf.mxu0
    %v7219 = vadd.f32 %v7099, %v7218
    %7220 = vdwg.mxu0
    %7221 = vmatprep.subr.mxu0 0.0
    %7222 = vmatpush1.msra.mxu0 0.0
    %7223 = vmatprep.subr.mxu0 0.0
    %7224 = vmatpush1.msra.mxu0 0.0
    %7225 = vmatprep.subr.mxu0 0.0
    %7226 = vmatpush1.msra.mxu0 0.0
    %7227 = vmatprep.subr.mxu0 0.0
    %7228 = vmatpush1.msra.mxu0 0.0
    %7229 = vmatprep.subr.mxu0 0.0
    %7230 = vmatpush1.msra.mxu0 0.0
    %7231 = vmatprep.subr.mxu0 0.0
    %7232 = vmatpush1.msra.mxu0 0.0
    %7233 = vmatprep.subr.mxu0 0.0
    %7234 = vmatpush1.msra.mxu0 0.0
    %7235 = vmatprep.subr.mxu0 0.0
    %7236 = vmatpush1.msra.mxu0 0.0
    %v7237 = vand.u32 %v4717, 4294901760
    %7238 = vmatprep.subr.mxu0 %v7237
    %v7239 = vand.u32 %v4716, 4294901760
    %7240 = vmatpush1.msra.mxu0 %v7239
    %v7241 = vand.u32 %v4709, 4294901760
    %7242 = vmatprep.subr.mxu0 %v7241
    %v7243 = vand.u32 %v4708, 4294901760
    %7244 = vmatpush1.msra.mxu0 %v7243
    %v7245 = vand.u32 %v4701, 4294901760
    %7246 = vmatprep.subr.mxu0 %v7245
    %v7247 = vand.u32 %v4700, 4294901760
    %7248 = vmatpush1.msra.mxu0 %v7247
    %v7249 = vand.u32 %v4693, 4294901760
    %7250 = vmatprep.subr.mxu0 %v7249
    %v7251 = vand.u32 %v4692, 4294901760
    %7252 = vmatpush1.msra.mxu0 %v7251
    %v7253 = vand.u32 %v4685, 4294901760
    %7254 = vmatprep.subr.mxu0 %v7253
    %v7255 = vand.u32 %v4684, 4294901760
    %7256 = vmatpush1.msra.mxu0 %v7255
    %v7257 = vand.u32 %v4677, 4294901760
    %7258 = vmatprep.subr.mxu0 %v7257
    %v7259 = vand.u32 %v4676, 4294901760
    %7260 = vmatpush1.msra.mxu0 %v7259
    %v7261 = vand.u32 %v4669, 4294901760
    %7262 = vmatprep.subr.mxu0 %v7261
    %v7263 = vand.u32 %v4668, 4294901760
    %7264 = vmatpush1.msra.mxu0 %v7263
    %v7265 = vand.u32 %v4661, 4294901760
    %7266 = vmatprep.subr.mxu0 %v7265
    %v7267 = vand.u32 %v4660, 4294901760
    %7268 = vmatpush1.msra.mxu0 %v7267
    %7269 = vmatprep.subr.mxu0 0.0
    %7270 = vmatpush2.msra.mxu0 0.0
    %7271 = vmatprep.subr.mxu0 0.0
    %7272 = vmatpush2.msra.mxu0 0.0
    %7273 = vmatprep.subr.mxu0 0.0
    %7274 = vmatpush2.msra.mxu0 0.0
    %7275 = vmatprep.subr.mxu0 0.0
    %7276 = vmatpush2.msra.mxu0 0.0
    %7277 = vmatprep.subr.mxu0 0.0
    %7278 = vmatpush2.msra.mxu0 0.0
    %7279 = vmatprep.subr.mxu0 0.0
    %7280 = vmatpush2.msra.mxu0 0.0
    %7281 = vmatprep.subr.mxu0 0.0
    %7282 = vmatpush2.msra.mxu0 0.0
    %7283 = vmatprep.subr.mxu0 0.0
    %7284 = vmatpush2.msra.mxu0 0.0
    %7285 = vmatprep.subr.mxu0 0.0
    %7286 = vmatpush2.msra.mxu0 0.0
    %7287 = vmatprep.subr.mxu0 0.0
    %7288 = vmatpush2.msra.mxu0 0.0
    %7289 = vmatprep.subr.mxu0 0.0
    %7290 = vmatpush2.msra.mxu0 0.0
    %7291 = vmatprep.subr.mxu0 0.0
    %7292 = vmatpush2.msra.mxu0 0.0
    %7293 = vmatprep.subr.mxu0 0.0
    %7294 = vmatpush2.msra.mxu0 0.0
    %7295 = vmatprep.subr.mxu0 0.0
    %7296 = vmatpush2.msra.mxu0 0.0
    %7297 = vmatprep.subr.mxu0 0.0
    %7298 = vmatpush2.msra.mxu0 0.0
    %7299 = vmatprep.subr.mxu0 0.0
    %7300 = vmatpush2.msra.mxu0 0.0
    %7301 = vmatprep.mubr.f32.mxu0 0.0
    %v7302 = vand.u32 %v4719, 4294901760
    %7303 = vmatmul.mubr.f32.gmra.mxu0 %v7302
    %v7304 = vpop.f32.mrf.mxu0
    %v7305 = vadd.f32 %v7217, %v7304
    %v7306 = vpop.f32.mrf.mxu0
    %v7307 = vadd.f32 %v7219, %v7306
    %7308 = vdwg.mxu0
    %v7317 = vcombine.low %v5364, %v5366
    %v7318 = vcombine.low %v6011, %v6013
    %v7320 = vunpack.c.l.s4 1983009808
    %v7321 = vunpack.c.0.s8 %v7320
    %v7322 = vlaneseq
    %v7323 = vshrl.u32 %v7322, 7
    %v7324 = vsub.s32 %v7321, %v7323
    %v7325 = vrot.slane %v7317, %v7324
    %v7327 = vunpack.c.l.s4 1983009808
    %v7328 = vunpack.c.0.s8 %v7327
    %v7329 = vlaneseq
    %v7330 = vshrl.u32 %v7329, 7
    %v7331 = vsub.s32 %v7328, %v7330
    %v7332 = vrot.slane %v7318, %v7331
    %v7333 = vcombine.low %v7325, %v7332
    %v7334 = vcombine.low %v6658, %v6660
    %v7335 = vcombine.low %v7305, %v7307
    %v7337 = vunpack.c.l.s4 1983009808
    %v7338 = vunpack.c.0.s8 %v7337
    %v7339 = vlaneseq
    %v7340 = vshrl.u32 %v7339, 7
    %v7341 = vsub.s32 %v7338, %v7340
    %v7342 = vrot.slane %v7334, %v7341
    %v7344 = vunpack.c.l.s4 1983009808
    %v7345 = vunpack.c.0.s8 %v7344
    %v7346 = vlaneseq
    %v7347 = vshrl.u32 %v7346, 7
    %v7348 = vsub.s32 %v7345, %v7347
    %v7349 = vrot.slane %v7335, %v7348
    %v7350 = vcombine.low %v7342, %v7349
    %v7353 = vmul.f32 %v21, %v7333
    %v7354 = vmul.f32 %v22, %v7350
    %7355 = vst [vmem:[#allocation2] sm:$0xff] %v7353
    %7356 = vst [vmem:[#allocation2 + $0x8] sm:$0xff] %v7354
    // Predicated region
    $region22: #{tpu_custom_call.1} parent=1 // pred_check
      _
    $region23: #{tpu_custom_call.1} parent=1 // pred_check_branch
      %7358 = sbr.rel (0) target = $region25
    $region24: #{tpu_custom_call.1} parent=1 // pred_region
      %s7360 = ssub.s32 256, 256
      %7361 = vsyncadd [#allocation3], %s7360
      %s7363 = sshll.u32 [#allocation2], 4
      %s7364 = int_to_ptr.vmem [resolvable:$true] %s7363
      %7366 = dma.vmem_to_hbm [thread:$0]  %s7364, 256, %s5, [#allocation3]
    $region25: #{tpu_custom_call.1} parent=1 // pred_fallthru
      _
    // Predicated region
    $region26: #{tpu_custom_call.1} parent=1 // pred_check
      _
    $region27: #{tpu_custom_call.1} parent=1 // pred_check_branch
      %7368 = sbr.rel (0) target = $region29
    $region28: #{tpu_custom_call.1} parent=1 // pred_region
      %7369 = dma.done [#allocation3], 256
    $region29: #{tpu_custom_call.1} parent=1 // pred_fallthru
      _
    %7370 = vsyncpa [#allocation3], 1

</llo_original>
